<compile_context>
chip_gen: v7x
topology: tpu7x:2x2x1
jax: 0.10.0
libtpu: 0.0.40
codegen_flags: <defaults>
</compile_context>

<pallas_src>
import jax
import jax.numpy as jnp
from jax import lax
from jax.experimental import pallas as pl
from jax.experimental.pallas import tpu as pltpu

LANES = 128


def _rows_per_chunk(H, W, target_rows=256):
    """Largest divisor r of H such that r*W <= target_rows (falls back to 1)."""
    best = 1
    for r in range(1, H + 1):
        if H % r == 0 and r * W <= target_rows:
            best = r
    return best


def residual_block_pallas(x_nhwc, w1_hwio, w2_hwio, s1, b1, s2, b2):
    N, H, W, Cin = x_nhwc.shape
    Cout = w1_hwio.shape[-1]
    assert Cin == Cout, "module's conv2 / residual require Cin == Cout, stride=1"
    assert W <= 256, "row-chunking assumes W <= 256 (tile W for larger images)"
    Cp = ((Cout + LANES - 1) // LANES) * LANES
    HW = H * W
    rows_pc = _rows_per_chunk(H, W)       # image rows per matmul chunk
    RC = rows_pc * W                      # spatial positions per chunk
    n_chunks = H // rows_pc

    # ---- parameter prep (plain JAX, done once) -------------------------------
    def prep_w(w_hwio, scale):
        # Fold eval-mode BN scale into the conv weights, zero-pad channels to
        # Cp, stack the 9 taps (dy*3+dx) along the contraction axis, and split
        # into bf16 hi/lo so the MXU can run bf16 with ~f32 accuracy.
        w = (w_hwio * scale.reshape(1, 1, 1, -1)).astype(jnp.float32)
        w = jnp.pad(w, ((0, 0), (0, 0), (0, Cp - Cin), (0, Cp - Cout)))
        w = w.reshape(9 * Cp, Cp)                       # [(dy,dx,cin) , cout]
        w_hi = w.astype(jnp.bfloat16)
        w_lo = (w - w_hi.astype(jnp.float32)).astype(jnp.bfloat16)
        return w_hi, w_lo

    w1h, w1l = prep_w(w1_hwio, s1)
    w2h, w2l = prep_w(w2_hwio, s2)
    b1p = jnp.pad(b1, (0, Cp - Cout)).reshape(1, Cp).astype(jnp.float32)
    b2p = jnp.pad(b2, (0, Cp - Cout)).reshape(1, Cp).astype(jnp.float32)
    # Pre-flattened (N, H*W, Cp) so the kernel load/store path has no reshapes.
    xp = jnp.pad(x_nhwc, ((0, 0), (0, 0), (0, 0), (0, Cp - Cin))
                 ).reshape(N, HW, Cp).astype(jnp.float32)

    # ---- the kernel (closure over static geometry) ----------------------------
    def kernel(x_ref, w1h_ref, w1l_ref, w2h_ref, w2l_ref, b1_ref, b2_ref,
               out_ref, xpad_ref, ypad_ref):
        # Per grid step (one batch element):
        #   x_ref    : (HW, Cp)        input, channels zero-padded (lane axis)
        #   w*_ref   : (9*Cp, Cp) bf16 taps stacked along K, BN scale folded
        #   b*_ref   : (1, Cp)         folded conv-bias + BN shift
        #   out_ref  : (HW, Cp)
        #   *pad_ref : ((H+4)*W, Cp)   H-padded, row-flattened scratch:
        #              flat rows [2W, 2W+HW) hold data, 2W zero halo rows on
        #              each side keep every tap's flat slice in bounds.
        zero_halo = jnp.zeros((2 * W, Cp), jnp.float32)

        # Stage input into the H-padded scratch (aligned stores only; only the
        # 4 halo rows are zeroed, never the whole scratch).
        xpad_ref[pl.ds(0, 2 * W), :] = zero_halo
        xpad_ref[pl.ds((H + 2) * W, 2 * W), :] = zero_halo
        xpad_ref[pl.ds(2 * W, HW), :] = x_ref[...]
        ypad_ref[pl.ds(0, 2 * W), :] = zero_halo
        ypad_ref[pl.ds((H + 2) * W, 2 * W), :] = zero_halo

        # (RC, 1) column-validity masks for the W-shifted taps (broadcast over
        # lanes in the select; hoisted once, reused by both convs / all chunks).
        col = lax.broadcasted_iota(jnp.int32, (RC, 1), 0) % W
        mask_l = col >= 1          # tap dx=0 reads column w-1: invalid at w == 0
        mask_r = col <= W - 2      # tap dx=2 reads column w+1: invalid at w == W-1

        def conv_chunk(src_ref, wh_ref, wl_ref, b_ref, c):
            """3x3 stride-1 SAME conv for output rows [c*rows_pc,(c+1)*rows_pc)
            + bias + ReLU, as 3 bf16 MXU matmuls with K = 9*Cp.  Returns
            (RC, Cp) f32."""
            hi_parts, lo_parts = [], []
            for dy in range(3):
                for dx in range(3):
                    # Flat offset of tap (dy, dx) in the padded scratch: scratch
                    # row = image row + 2, so output position p reads flat index
                    # p + (dy+1)*W + (dx-1).
                    off = c * RC + (dy + 1) * W + (dx - 1)
                    s = src_ref[pl.ds(off, RC), :]
                    if dx == 0:
                        s = jnp.where(mask_l, s, 0.0)
                    elif dx == 2:
                        s = jnp.where(mask_r, s, 0.0)
                    hi = s.astype(jnp.bfloat16)
                    lo = (s - hi.astype(jnp.float32)).astype(jnp.bfloat16)
                    hi_parts.append(hi)
                    lo_parts.append(lo)
            # Lane-wise concat: 9 adjacent 128-lane groups (no cross-lane moves).
            p_hi = jnp.concatenate(hi_parts, axis=1)   # (RC, 9*Cp) bf16
            p_lo = jnp.concatenate(lo_parts, axis=1)
            w_hi = wh_ref[...]
            w_lo = wl_ref[...]
            acc = jnp.dot(p_hi, w_hi, preferred_element_type=jnp.float32)
            acc = acc + jnp.dot(p_lo, w_hi, preferred_element_type=jnp.float32)
            acc = acc + jnp.dot(p_hi, w_lo, preferred_element_type=jnp.float32)
            return jnp.maximum(acc + b_ref[...], 0.0)

        # conv1 (+folded BN1) + ReLU  ->  interior of ypad scratch
        for c in range(n_chunks):
            ypad_ref[pl.ds(2 * W + c * RC, RC), :] = conv_chunk(
                xpad_ref, w1h_ref, w1l_ref, b1_ref, c)

        # conv2 (+folded BN2) + ReLU, residual add, final ReLU  ->  output
        for c in range(n_chunks):
            y2 = conv_chunk(ypad_ref, w2h_ref, w2l_ref, b2_ref, c)
            res = x_ref[pl.ds(c * RC, RC), :]
            out_ref[pl.ds(c * RC, RC), :] = jnp.maximum(y2 + res, 0.0)

    out = pl.pallas_call(
        kernel,
        out_shape=jax.ShapeDtypeStruct((N, HW, Cp), jnp.float32),
        grid_spec=pltpu.PrefetchScalarGridSpec(
            num_scalar_prefetch=0,
            grid=(N,),
            in_specs=[
                pl.BlockSpec((None, HW, Cp), lambda n: (n, 0, 0)),
                pl.BlockSpec((9 * Cp, Cp), lambda n: (0, 0)),
                pl.BlockSpec((9 * Cp, Cp), lambda n: (0, 0)),
                pl.BlockSpec((9 * Cp, Cp), lambda n: (0, 0)),
                pl.BlockSpec((9 * Cp, Cp), lambda n: (0, 0)),
                pl.BlockSpec((1, Cp), lambda n: (0, 0)),
                pl.BlockSpec((1, Cp), lambda n: (0, 0)),
            ],
            out_specs=pl.BlockSpec((None, HW, Cp), lambda n: (n, 0, 0)),
            scratch_shapes=[
                pltpu.VMEM(((H + 4) * W, Cp), jnp.float32),
                pltpu.VMEM(((H + 4) * W, Cp), jnp.float32),
            ],
        ),
        compiler_params=pltpu.CompilerParams(
            dimension_semantics=("parallel",),
            vmem_limit_bytes=32 * 1024 * 1024,
        ),
    )(xp, w1h, w1l, w2h, w2l, b1p, b2p)
    return out.reshape(N, H, W, Cp)[..., :Cout]


def _reference(x_nhwc, w1, w2, s1, b1, s2, b2):
    def conv_bn_relu(x, w, s, b):
        z = lax.conv_general_dilated(
            x, w, window_strides=(1, 1), padding="SAME",
            dimension_numbers=("NHWC", "HWIO", "NHWC"))
        return jnp.maximum(z * s.reshape(1, 1, 1, -1) + b.reshape(1, 1, 1, -1), 0.0)
    y1 = conv_bn_relu(x_nhwc, w1, s1, b1)
    y2 = conv_bn_relu(y1, w2, s2, b2)
    return jnp.maximum(y2 + x_nhwc, 0.0)


def _fold_bn(conv_bias, gamma, beta, mean, var, eps=1e-5):
    scale = gamma / jnp.sqrt(var + eps)
    bias = (conv_bias - mean) * scale + beta
    return scale, bias


if __name__ == "__main__":
    key = jax.random.PRNGKey(0)
    N, C, H, W = 2, 4, 16, 16   # in_channels == out_channels (required by module)

    ks = jax.random.split(key, 9)
    # PyTorch-shaped params (OIHW conv weights), deterministic init.
    w1_oihw = jax.random.normal(ks[0], (C, C, 3, 3), jnp.float32) * 0.1
    cb1 = jax.random.normal(ks[1], (C,), jnp.float32) * 0.1
    w2_oihw = jax.random.normal(ks[2], (C, C, 3, 3), jnp.float32) * 0.1
    cb2 = jax.random.normal(ks[3], (C,), jnp.float32) * 0.1
    gamma1 = 1.0 + 0.1 * jax.random.normal(ks[4], (C,), jnp.float32)
    beta1 = 0.1 * jax.random.normal(ks[5], (C,), jnp.float32)
    gamma2 = 1.0 + 0.1 * jax.random.normal(ks[6], (C,), jnp.float32)
    beta2 = 0.1 * jax.random.normal(ks[7], (C,), jnp.float32)
    mean1 = jnp.zeros((C,), jnp.float32)
    var1 = jnp.ones((C,), jnp.float32)
    mean2 = jnp.zeros((C,), jnp.float32)
    var2 = jnp.ones((C,), jnp.float32)

    x_nchw = jax.random.normal(ks[8], (N, C, H, W), jnp.float32)

    # ---- glue: layout conversion + BN folding (plain JAX) ----
    x_nhwc = jnp.transpose(x_nchw, (0, 2, 3, 1))            # NCHW -> NHWC
    w1_hwio = jnp.transpose(w1_oihw, (2, 3, 1, 0))          # OIHW -> HWIO
    w2_hwio = jnp.transpose(w2_oihw, (2, 3, 1, 0))
    s1, b1 = _fold_bn(cb1, gamma1, beta1, mean1, var1)
    s2, b2 = _fold_bn(cb2, gamma2, beta2, mean2, var2)

    out = residual_block_pallas(x_nhwc, w1_hwio, w2_hwio, s1, b1, s2, b2)
    out = jax.block_until_ready(out)

    ref = _reference(x_nhwc, w1_hwio, w2_hwio, s1, b1, s2, b2)
    assert out.shape == (N, H, W, C)
    assert jnp.allclose(out, ref, atol=1e-4, rtol=1e-4), "mismatch vs JAX reference"

    # (output can be transposed back to NCHW with jnp.transpose(out, (0,3,1,2)))
    print("KERNEL_OK")
</pallas_src>

<mosaic_0001>
module attributes {stable_mosaic.version = 11 : i64} {
  func.func @kernel(%arg0: i32, %arg1: memref<1x256x128xf32, #tpu.memory_space<vmem>>, %arg2: memref<1152x128xbf16, #tpu.memory_space<vmem>>, %arg3: memref<1152x128xbf16, #tpu.memory_space<vmem>>, %arg4: memref<1152x128xbf16, #tpu.memory_space<vmem>>, %arg5: memref<1152x128xbf16, #tpu.memory_space<vmem>>, %arg6: memref<1x128xf32, #tpu.memory_space<vmem>>, %arg7: memref<1x128xf32, #tpu.memory_space<vmem>>, %arg8: memref<1x256x128xf32, #tpu.memory_space<vmem>>, %arg9: memref<320x128xf32, #tpu.memory_space<vmem>>, %arg10: memref<320x128xf32, #tpu.memory_space<vmem>>) attributes {dimension_semantics = [#tpu.dimension_semantics<parallel>], iteration_bounds = array<i64: 2>, scalar_prefetch = 0 : i64, scratch_operands = 2 : i64, tpu.core_type = #tpu.core_type<tc>, window_params = [{transform_indices = @transform_0, window_bounds = array<i64: 1, 256, 128>}, {pipeline_mode = #tpu.pipeline_mode<synchronous>, transform_indices = @transform_1, window_bounds = array<i64: 1152, 128>}, {pipeline_mode = #tpu.pipeline_mode<synchronous>, transform_indices = @transform_2, window_bounds = array<i64: 1152, 128>}, {pipeline_mode = #tpu.pipeline_mode<synchronous>, transform_indices = @transform_3, window_bounds = array<i64: 1152, 128>}, {pipeline_mode = #tpu.pipeline_mode<synchronous>, transform_indices = @transform_4, window_bounds = array<i64: 1152, 128>}, {pipeline_mode = #tpu.pipeline_mode<synchronous>, transform_indices = @transform_5, window_bounds = array<i64: 1, 128>}, {pipeline_mode = #tpu.pipeline_mode<synchronous>, transform_indices = @transform_6, window_bounds = array<i64: 1, 128>}, {transform_indices = @transform_7, window_bounds = array<i64: 1, 256, 128>}]} {
    %cst = arith.constant 0.000000e+00 : f32
    %0 = vector.broadcast %cst : f32 to vector<32x128xf32>
    %c0 = arith.constant 0 : index
    %c0_0 = arith.constant 0 : index
    %1 = vector.load %arg9[%c0, %c0_0] : memref<320x128xf32, #tpu.memory_space<vmem>>, vector<32x128xf32>
    tpu.vector_store %arg9[%c0, %c0_0], %0 {strides = array<i32>} : memref<320x128xf32, #tpu.memory_space<vmem>>, vector<32x128xf32>,
    %c288 = arith.constant 288 : index
    %c0_1 = arith.constant 0 : index
    %2 = vector.load %arg9[%c288, %c0_1] : memref<320x128xf32, #tpu.memory_space<vmem>>, vector<32x128xf32>
    tpu.vector_store %arg9[%c288, %c0_1], %0 {strides = array<i32>} : memref<320x128xf32, #tpu.memory_space<vmem>>, vector<32x128xf32>,
    %c0_2 = arith.constant 0 : index
    %c0_3 = arith.constant 0 : index
    %c0_4 = arith.constant 0 : index
    %3 = vector.load %arg1[%c0_2, %c0_3, %c0_4] : memref<1x256x128xf32, #tpu.memory_space<vmem>>, vector<1x256x128xf32>
    %4 = vector.shape_cast %3 : vector<1x256x128xf32> to vector<256x128xf32>
    %c32 = arith.constant 32 : index
    %c0_5 = arith.constant 0 : index
    %5 = vector.load %arg9[%c32, %c0_5] : memref<320x128xf32, #tpu.memory_space<vmem>>, vector<256x128xf32>
    tpu.vector_store %arg9[%c32, %c0_5], %4 {strides = array<i32>} : memref<320x128xf32, #tpu.memory_space<vmem>>, vector<256x128xf32>,
    %c0_6 = arith.constant 0 : index
    %c0_7 = arith.constant 0 : index
    %6 = vector.load %arg10[%c0_6, %c0_7] : memref<320x128xf32, #tpu.memory_space<vmem>>, vector<32x128xf32>
    tpu.vector_store %arg10[%c0_6, %c0_7], %0 {strides = array<i32>} : memref<320x128xf32, #tpu.memory_space<vmem>>, vector<32x128xf32>,
    %c288_8 = arith.constant 288 : index
    %c0_9 = arith.constant 0 : index
    %7 = vector.load %arg10[%c288_8, %c0_9] : memref<320x128xf32, #tpu.memory_space<vmem>>, vector<32x128xf32>
    tpu.vector_store %arg10[%c288_8, %c0_9], %0 {strides = array<i32>} : memref<320x128xf32, #tpu.memory_space<vmem>>, vector<32x128xf32>,
    %8 = tpu.iota {dimensions = array<i32: 0>} : vector<256x1xi32>
    %c16_i32 = arith.constant 16 : i32
    %c0_i32 = arith.constant 0 : i32
    %9 = arith.cmpi eq, %c16_i32, %c0_i32 : i32
    %c1_i32 = arith.constant 1 : i32
    %10 = arith.select %9, %c1_i32, %c16_i32 : i32
    %11 = vector.broadcast %10 : i32 to vector<256x1xi32>
    %12 = arith.remsi %8, %11 : vector<256x1xi32>
    %c0_i32_10 = arith.constant 0 : i32
    %13 = vector.broadcast %c0_i32_10 : i32 to vector<256x1xi32>
    %14 = arith.cmpi ne, %12, %13 : vector<256x1xi32>
    %c0_i32_11 = arith.constant 0 : i32
    %15 = vector.broadcast %c0_i32_11 : i32 to vector<256x1xi32>
    %16 = arith.cmpi slt, %12, %15 : vector<256x1xi32>
    %c0_i32_12 = arith.constant 0 : i32
    %17 = arith.cmpi slt, %10, %c0_i32_12 : i32
    %18 = vector.broadcast %17 : i1 to vector<256x1xi1>
    %19 = vector.broadcast %18 : vector<256x1xi1> to vector<256x1xi1>
    %20 = arith.xori %16, %19 : vector<256x1xi1>
    %21 = arith.andi %20, %14 : vector<256x1xi1>
    %22 = vector.broadcast %10 : i32 to vector<256x1xi32>
    %23 = arith.addi %12, %22 : vector<256x1xi32>
    %24 = arith.select %21, %23, %12 : vector<256x1xi1>, vector<256x1xi32>
    %c1_i32_13 = arith.constant 1 : i32
    %25 = vector.broadcast %c1_i32_13 : i32 to vector<256x1xi32>
    %26 = arith.cmpi sge, %24, %25 : vector<256x1xi32>
    %c14_i32 = arith.constant 14 : i32
    %27 = vector.broadcast %c14_i32 : i32 to vector<256x1xi32>
    %28 = arith.cmpi sle, %24, %27 : vector<256x1xi32>
    %c15 = arith.constant 15 : index
    %c0_14 = arith.constant 0 : index
    %29 = vector.load %arg9[%c15, %c0_14] : memref<320x128xf32, #tpu.memory_space<vmem>>, vector<256x128xf32>
    %cst_15 = arith.constant 0.000000e+00 : f32
    %30 = vector.shape_cast %26 : vector<256x1xi1> to vector<256x1xi1>
    %31 = vector.broadcast %30 : vector<256x1xi1> to vector<256x128xi1>
    %32 = vector.broadcast %cst_15 : f32 to vector<256x128xf32>
    %33 = arith.select %31, %29, %32 : vector<256x128xi1>, vector<256x128xf32>
    %34 = arith.truncf %33 : vector<256x128xf32> to vector<256x128xbf16>
    %35 = arith.extf %34 : vector<256x128xbf16> to vector<256x128xf32>
    %36 = arith.subf %33, %35 : vector<256x128xf32>
    %37 = arith.truncf %36 : vector<256x128xf32> to vector<256x128xbf16>
    %c16 = arith.constant 16 : index
    %c0_16 = arith.constant 0 : index
    %38 = vector.load %arg9[%c16, %c0_16] : memref<320x128xf32, #tpu.memory_space<vmem>>, vector<256x128xf32>
    %39 = arith.truncf %38 : vector<256x128xf32> to vector<256x128xbf16>
    %40 = arith.extf %39 : vector<256x128xbf16> to vector<256x128xf32>
    %41 = arith.subf %38, %40 : vector<256x128xf32>
    %42 = arith.truncf %41 : vector<256x128xf32> to vector<256x128xbf16>
    %c17 = arith.constant 17 : index
    %c0_17 = arith.constant 0 : index
    %43 = vector.load %arg9[%c17, %c0_17] : memref<320x128xf32, #tpu.memory_space<vmem>>, vector<256x128xf32>
    %cst_18 = arith.constant 0.000000e+00 : f32
    %44 = vector.shape_cast %28 : vector<256x1xi1> to vector<256x1xi1>
    %45 = vector.broadcast %44 : vector<256x1xi1> to vector<256x128xi1>
    %46 = vector.broadcast %cst_18 : f32 to vector<256x128xf32>
    %47 = arith.select %45, %43, %46 : vector<256x128xi1>, vector<256x128xf32>
    %48 = arith.truncf %47 : vector<256x128xf32> to vector<256x128xbf16>
    %49 = arith.extf %48 : vector<256x128xbf16> to vector<256x128xf32>
    %50 = arith.subf %47, %49 : vector<256x128xf32>
    %51 = arith.truncf %50 : vector<256x128xf32> to vector<256x128xbf16>
    %c31 = arith.constant 31 : index
    %c0_19 = arith.constant 0 : index
    %52 = vector.load %arg9[%c31, %c0_19] : memref<320x128xf32, #tpu.memory_space<vmem>>, vector<256x128xf32>
    %cst_20 = arith.constant 0.000000e+00 : f32
    %53 = vector.shape_cast %26 : vector<256x1xi1> to vector<256x1xi1>
    %54 = vector.broadcast %53 : vector<256x1xi1> to vector<256x128xi1>
    %55 = vector.broadcast %cst_20 : f32 to vector<256x128xf32>
    %56 = arith.select %54, %52, %55 : vector<256x128xi1>, vector<256x128xf32>
    %57 = arith.truncf %56 : vector<256x128xf32> to vector<256x128xbf16>
    %58 = arith.extf %57 : vector<256x128xbf16> to vector<256x128xf32>
    %59 = arith.subf %56, %58 : vector<256x128xf32>
    %60 = arith.truncf %59 : vector<256x128xf32> to vector<256x128xbf16>
    %c32_21 = arith.constant 32 : index
    %c0_22 = arith.constant 0 : index
    %61 = vector.load %arg9[%c32_21, %c0_22] : memref<320x128xf32, #tpu.memory_space<vmem>>, vector<256x128xf32>
    %62 = arith.truncf %61 : vector<256x128xf32> to vector<256x128xbf16>
    %63 = arith.extf %62 : vector<256x128xbf16> to vector<256x128xf32>
    %64 = arith.subf %61, %63 : vector<256x128xf32>
    %65 = arith.truncf %64 : vector<256x128xf32> to vector<256x128xbf16>
    %c33 = arith.constant 33 : index
    %c0_23 = arith.constant 0 : index
    %66 = vector.load %arg9[%c33, %c0_23] : memref<320x128xf32, #tpu.memory_space<vmem>>, vector<256x128xf32>
    %cst_24 = arith.constant 0.000000e+00 : f32
    %67 = vector.shape_cast %28 : vector<256x1xi1> to vector<256x1xi1>
    %68 = vector.broadcast %67 : vector<256x1xi1> to vector<256x128xi1>
    %69 = vector.broadcast %cst_24 : f32 to vector<256x128xf32>
    %70 = arith.select %68, %66, %69 : vector<256x128xi1>, vector<256x128xf32>
    %71 = arith.truncf %70 : vector<256x128xf32> to vector<256x128xbf16>
    %72 = arith.extf %71 : vector<256x128xbf16> to vector<256x128xf32>
    %73 = arith.subf %70, %72 : vector<256x128xf32>
    %74 = arith.truncf %73 : vector<256x128xf32> to vector<256x128xbf16>
    %c47 = arith.constant 47 : index
    %c0_25 = arith.constant 0 : index
    %75 = vector.load %arg9[%c47, %c0_25] : memref<320x128xf32, #tpu.memory_space<vmem>>, vector<256x128xf32>
    %cst_26 = arith.constant 0.000000e+00 : f32
    %76 = vector.shape_cast %26 : vector<256x1xi1> to vector<256x1xi1>
    %77 = vector.broadcast %76 : vector<256x1xi1> to vector<256x128xi1>
    %78 = vector.broadcast %cst_26 : f32 to vector<256x128xf32>
    %79 = arith.select %77, %75, %78 : vector<256x128xi1>, vector<256x128xf32>
    %80 = arith.truncf %79 : vector<256x128xf32> to vector<256x128xbf16>
    %81 = arith.extf %80 : vector<256x128xbf16> to vector<256x128xf32>
    %82 = arith.subf %79, %81 : vector<256x128xf32>
    %83 = arith.truncf %82 : vector<256x128xf32> to vector<256x128xbf16>
    %c48 = arith.constant 48 : index
    %c0_27 = arith.constant 0 : index
    %84 = vector.load %arg9[%c48, %c0_27] : memref<320x128xf32, #tpu.memory_space<vmem>>, vector<256x128xf32>
    %85 = arith.truncf %84 : vector<256x128xf32> to vector<256x128xbf16>
    %86 = arith.extf %85 : vector<256x128xbf16> to vector<256x128xf32>
    %87 = arith.subf %84, %86 : vector<256x128xf32>
    %88 = arith.truncf %87 : vector<256x128xf32> to vector<256x128xbf16>
    %c49 = arith.constant 49 : index
    %c0_28 = arith.constant 0 : index
    %89 = vector.load %arg9[%c49, %c0_28] : memref<320x128xf32, #tpu.memory_space<vmem>>, vector<256x128xf32>
    %cst_29 = arith.constant 0.000000e+00 : f32
    %90 = vector.shape_cast %28 : vector<256x1xi1> to vector<256x1xi1>
    %91 = vector.broadcast %90 : vector<256x1xi1> to vector<256x128xi1>
    %92 = vector.broadcast %cst_29 : f32 to vector<256x128xf32>
    %93 = arith.select %91, %89, %92 : vector<256x128xi1>, vector<256x128xf32>
    %94 = arith.truncf %93 : vector<256x128xf32> to vector<256x128xbf16>
    %95 = arith.extf %94 : vector<256x128xbf16> to vector<256x128xf32>
    %96 = arith.subf %93, %95 : vector<256x128xf32>
    %97 = arith.truncf %96 : vector<256x128xf32> to vector<256x128xbf16>
    %98 = tpu.concatenate %34, %39, %48, %57, %62, %71, %80, %85, %94 in 1 : vector<256x128xbf16>, vector<256x128xbf16>, vector<256x128xbf16>, vector<256x128xbf16>, vector<256x128xbf16>, vector<256x128xbf16>, vector<256x128xbf16>, vector<256x128xbf16>, vector<256x128xbf16> -> vector<256x1152xbf16>
    %99 = tpu.concatenate %37, %42, %51, %60, %65, %74, %83, %88, %97 in 1 : vector<256x128xbf16>, vector<256x128xbf16>, vector<256x128xbf16>, vector<256x128xbf16>, vector<256x128xbf16>, vector<256x128xbf16>, vector<256x128xbf16>, vector<256x128xbf16>, vector<256x128xbf16> -> vector<256x1152xbf16>
    %c0_30 = arith.constant 0 : index
    %c0_31 = arith.constant 0 : index
    %100 = vector.load %arg2[%c0_30, %c0_31] : memref<1152x128xbf16, #tpu.memory_space<vmem>>, vector<1152x128xbf16>
    %c0_32 = arith.constant 0 : index
    %c0_33 = arith.constant 0 : index
    %101 = vector.load %arg3[%c0_32, %c0_33] : memref<1152x128xbf16, #tpu.memory_space<vmem>>, vector<1152x128xbf16>
    %cst_34 = arith.constant dense<0.000000e+00> : vector<256x128xf32>
    %102 = tpu.matmul %98, %100, %cst_34 {dimension_numbers = #tpu.dot_dimension_numbers<[1], [0], [0], [1], [0, 0, 1, 1], [], []>} : vector<256x1152xbf16>, vector<1152x128xbf16>, vector<256x128xf32> -> vector<256x128xf32>
    %cst_35 = arith.constant dense<0.000000e+00> : vector<256x128xf32>
    %103 = tpu.matmul %99, %100, %cst_35 {dimension_numbers = #tpu.dot_dimension_numbers<[1], [0], [0], [1], [0, 0, 1, 1], [], []>} : vector<256x1152xbf16>, vector<1152x128xbf16>, vector<256x128xf32> -> vector<256x128xf32>
    %104 = arith.addf %102, %103 : vector<256x128xf32>
    %cst_36 = arith.constant dense<0.000000e+00> : vector<256x128xf32>
    %105 = tpu.matmul %98, %101, %cst_36 {dimension_numbers = #tpu.dot_dimension_numbers<[1], [0], [0], [1], [0, 0, 1, 1], [], []>} : vector<256x1152xbf16>, vector<1152x128xbf16>, vector<256x128xf32> -> vector<256x128xf32>
    %106 = arith.addf %104, %105 : vector<256x128xf32>
    %c0_37 = arith.constant 0 : index
    %c0_38 = arith.constant 0 : index
    %107 = vector.load %arg6[%c0_37, %c0_38] : memref<1x128xf32, #tpu.memory_space<vmem>>, vector<1x128xf32>
    %108 = vector.broadcast %107 : vector<1x128xf32> to vector<256x128xf32>
    %109 = arith.addf %106, %108 : vector<256x128xf32>
    %cst_39 = arith.constant 0.000000e+00 : f32
    %110 = vector.broadcast %cst_39 : f32 to vector<256x128xf32>
    %111 = arith.maximumf %109, %110 : vector<256x128xf32>
    %c32_40 = arith.constant 32 : index
    %c0_41 = arith.constant 0 : index
    %112 = vector.load %arg10[%c32_40, %c0_41] : memref<320x128xf32, #tpu.memory_space<vmem>>, vector<256x128xf32>
    tpu.vector_store %arg10[%c32_40, %c0_41], %111 {strides = array<i32>} : memref<320x128xf32, #tpu.memory_space<vmem>>, vector<256x128xf32>,
    %c15_42 = arith.constant 15 : index
    %c0_43 = arith.constant 0 : index
    %113 = vector.load %arg10[%c15_42, %c0_43] : memref<320x128xf32, #tpu.memory_space<vmem>>, vector<256x128xf32>
    %cst_44 = arith.constant 0.000000e+00 : f32
    %114 = vector.shape_cast %26 : vector<256x1xi1> to vector<256x1xi1>
    %115 = vector.broadcast %114 : vector<256x1xi1> to vector<256x128xi1>
    %116 = vector.broadcast %cst_44 : f32 to vector<256x128xf32>
    %117 = arith.select %115, %113, %116 : vector<256x128xi1>, vector<256x128xf32>
    %118 = arith.truncf %117 : vector<256x128xf32> to vector<256x128xbf16>
    %119 = arith.extf %118 : vector<256x128xbf16> to vector<256x128xf32>
    %120 = arith.subf %117, %119 : vector<256x128xf32>
    %121 = arith.truncf %120 : vector<256x128xf32> to vector<256x128xbf16>
    %c16_45 = arith.constant 16 : index
    %c0_46 = arith.constant 0 : index
    %122 = vector.load %arg10[%c16_45, %c0_46] : memref<320x128xf32, #tpu.memory_space<vmem>>, vector<256x128xf32>
    %123 = arith.truncf %122 : vector<256x128xf32> to vector<256x128xbf16>
    %124 = arith.extf %123 : vector<256x128xbf16> to vector<256x128xf32>
    %125 = arith.subf %122, %124 : vector<256x128xf32>
    %126 = arith.truncf %125 : vector<256x128xf32> to vector<256x128xbf16>
    %c17_47 = arith.constant 17 : index
    %c0_48 = arith.constant 0 : index
    %127 = vector.load %arg10[%c17_47, %c0_48] : memref<320x128xf32, #tpu.memory_space<vmem>>, vector<256x128xf32>
    %cst_49 = arith.constant 0.000000e+00 : f32
    %128 = vector.shape_cast %28 : vector<256x1xi1> to vector<256x1xi1>
    %129 = vector.broadcast %128 : vector<256x1xi1> to vector<256x128xi1>
    %130 = vector.broadcast %cst_49 : f32 to vector<256x128xf32>
    %131 = arith.select %129, %127, %130 : vector<256x128xi1>, vector<256x128xf32>
    %132 = arith.truncf %131 : vector<256x128xf32> to vector<256x128xbf16>
    %133 = arith.extf %132 : vector<256x128xbf16> to vector<256x128xf32>
    %134 = arith.subf %131, %133 : vector<256x128xf32>
    %135 = arith.truncf %134 : vector<256x128xf32> to vector<256x128xbf16>
    %c31_50 = arith.constant 31 : index
    %c0_51 = arith.constant 0 : index
    %136 = vector.load %arg10[%c31_50, %c0_51] : memref<320x128xf32, #tpu.memory_space<vmem>>, vector<256x128xf32>
    %cst_52 = arith.constant 0.000000e+00 : f32
    %137 = vector.shape_cast %26 : vector<256x1xi1> to vector<256x1xi1>
    %138 = vector.broadcast %137 : vector<256x1xi1> to vector<256x128xi1>
    %139 = vector.broadcast %cst_52 : f32 to vector<256x128xf32>
    %140 = arith.select %138, %136, %139 : vector<256x128xi1>, vector<256x128xf32>
    %141 = arith.truncf %140 : vector<256x128xf32> to vector<256x128xbf16>
    %142 = arith.extf %141 : vector<256x128xbf16> to vector<256x128xf32>
    %143 = arith.subf %140, %142 : vector<256x128xf32>
    %144 = arith.truncf %143 : vector<256x128xf32> to vector<256x128xbf16>
    %c32_53 = arith.constant 32 : index
    %c0_54 = arith.constant 0 : index
    %145 = vector.load %arg10[%c32_53, %c0_54] : memref<320x128xf32, #tpu.memory_space<vmem>>, vector<256x128xf32>
    %146 = arith.truncf %145 : vector<256x128xf32> to vector<256x128xbf16>
    %147 = arith.extf %146 : vector<256x128xbf16> to vector<256x128xf32>
    %148 = arith.subf %145, %147 : vector<256x128xf32>
    %149 = arith.truncf %148 : vector<256x128xf32> to vector<256x128xbf16>
    %c33_55 = arith.constant 33 : index
    %c0_56 = arith.constant 0 : index
    %150 = vector.load %arg10[%c33_55, %c0_56] : memref<320x128xf32, #tpu.memory_space<vmem>>, vector<256x128xf32>
    %cst_57 = arith.constant 0.000000e+00 : f32
    %151 = vector.shape_cast %28 : vector<256x1xi1> to vector<256x1xi1>
    %152 = vector.broadcast %151 : vector<256x1xi1> to vector<256x128xi1>
    %153 = vector.broadcast %cst_57 : f32 to vector<256x128xf32>
    %154 = arith.select %152, %150, %153 : vector<256x128xi1>, vector<256x128xf32>
    %155 = arith.truncf %154 : vector<256x128xf32> to vector<256x128xbf16>
    %156 = arith.extf %155 : vector<256x128xbf16> to vector<256x128xf32>
    %157 = arith.subf %154, %156 : vector<256x128xf32>
    %158 = arith.truncf %157 : vector<256x128xf32> to vector<256x128xbf16>
    %c47_58 = arith.constant 47 : index
    %c0_59 = arith.constant 0 : index
    %159 = vector.load %arg10[%c47_58, %c0_59] : memref<320x128xf32, #tpu.memory_space<vmem>>, vector<256x128xf32>
    %cst_60 = arith.constant 0.000000e+00 : f32
    %160 = vector.shape_cast %26 : vector<256x1xi1> to vector<256x1xi1>
    %161 = vector.broadcast %160 : vector<256x1xi1> to vector<256x128xi1>
    %162 = vector.broadcast %cst_60 : f32 to vector<256x128xf32>
    %163 = arith.select %161, %159, %162 : vector<256x128xi1>, vector<256x128xf32>
    %164 = arith.truncf %163 : vector<256x128xf32> to vector<256x128xbf16>
    %165 = arith.extf %164 : vector<256x128xbf16> to vector<256x128xf32>
    %166 = arith.subf %163, %165 : vector<256x128xf32>
    %167 = arith.truncf %166 : vector<256x128xf32> to vector<256x128xbf16>
    %c48_61 = arith.constant 48 : index
    %c0_62 = arith.constant 0 : index
    %168 = vector.load %arg10[%c48_61, %c0_62] : memref<320x128xf32, #tpu.memory_space<vmem>>, vector<256x128xf32>
    %169 = arith.truncf %168 : vector<256x128xf32> to vector<256x128xbf16>
    %170 = arith.extf %169 : vector<256x128xbf16> to vector<256x128xf32>
    %171 = arith.subf %168, %170 : vector<256x128xf32>
    %172 = arith.truncf %171 : vector<256x128xf32> to vector<256x128xbf16>
    %c49_63 = arith.constant 49 : index
    %c0_64 = arith.constant 0 : index
    %173 = vector.load %arg10[%c49_63, %c0_64] : memref<320x128xf32, #tpu.memory_space<vmem>>, vector<256x128xf32>
    %cst_65 = arith.constant 0.000000e+00 : f32
    %174 = vector.shape_cast %28 : vector<256x1xi1> to vector<256x1xi1>
    %175 = vector.broadcast %174 : vector<256x1xi1> to vector<256x128xi1>
    %176 = vector.broadcast %cst_65 : f32 to vector<256x128xf32>
    %177 = arith.select %175, %173, %176 : vector<256x128xi1>, vector<256x128xf32>
    %178 = arith.truncf %177 : vector<256x128xf32> to vector<256x128xbf16>
    %179 = arith.extf %178 : vector<256x128xbf16> to vector<256x128xf32>
    %180 = arith.subf %177, %179 : vector<256x128xf32>
    %181 = arith.truncf %180 : vector<256x128xf32> to vector<256x128xbf16>
    %182 = tpu.concatenate %118, %123, %132, %141, %146, %155, %164, %169, %178 in 1 : vector<256x128xbf16>, vector<256x128xbf16>, vector<256x128xbf16>, vector<256x128xbf16>, vector<256x128xbf16>, vector<256x128xbf16>, vector<256x128xbf16>, vector<256x128xbf16>, vector<256x128xbf16> -> vector<256x1152xbf16>
    %183 = tpu.concatenate %121, %126, %135, %144, %149, %158, %167, %172, %181 in 1 : vector<256x128xbf16>, vector<256x128xbf16>, vector<256x128xbf16>, vector<256x128xbf16>, vector<256x128xbf16>, vector<256x128xbf16>, vector<256x128xbf16>, vector<256x128xbf16>, vector<256x128xbf16> -> vector<256x1152xbf16>
    %c0_66 = arith.constant 0 : index
    %c0_67 = arith.constant 0 : index
    %184 = vector.load %arg4[%c0_66, %c0_67] : memref<1152x128xbf16, #tpu.memory_space<vmem>>, vector<1152x128xbf16>
    %c0_68 = arith.constant 0 : index
    %c0_69 = arith.constant 0 : index
    %185 = vector.load %arg5[%c0_68, %c0_69] : memref<1152x128xbf16, #tpu.memory_space<vmem>>, vector<1152x128xbf16>
    %cst_70 = arith.constant dense<0.000000e+00> : vector<256x128xf32>
    %186 = tpu.matmul %182, %184, %cst_70 {dimension_numbers = #tpu.dot_dimension_numbers<[1], [0], [0], [1], [0, 0, 1, 1], [], []>} : vector<256x1152xbf16>, vector<1152x128xbf16>, vector<256x128xf32> -> vector<256x128xf32>
    %cst_71 = arith.constant dense<0.000000e+00> : vector<256x128xf32>
    %187 = tpu.matmul %183, %184, %cst_71 {dimension_numbers = #tpu.dot_dimension_numbers<[1], [0], [0], [1], [0, 0, 1, 1], [], []>} : vector<256x1152xbf16>, vector<1152x128xbf16>, vector<256x128xf32> -> vector<256x128xf32>
    %188 = arith.addf %186, %187 : vector<256x128xf32>
    %cst_72 = arith.constant dense<0.000000e+00> : vector<256x128xf32>
    %189 = tpu.matmul %182, %185, %cst_72 {dimension_numbers = #tpu.dot_dimension_numbers<[1], [0], [0], [1], [0, 0, 1, 1], [], []>} : vector<256x1152xbf16>, vector<1152x128xbf16>, vector<256x128xf32> -> vector<256x128xf32>
    %190 = arith.addf %188, %189 : vector<256x128xf32>
    %c0_73 = arith.constant 0 : index
    %c0_74 = arith.constant 0 : index
    %191 = vector.load %arg7[%c0_73, %c0_74] : memref<1x128xf32, #tpu.memory_space<vmem>>, vector<1x128xf32>
    %192 = vector.broadcast %191 : vector<1x128xf32> to vector<256x128xf32>
    %193 = arith.addf %190, %192 : vector<256x128xf32>
    %cst_75 = arith.constant 0.000000e+00 : f32
    %194 = vector.broadcast %cst_75 : f32 to vector<256x128xf32>
    %195 = arith.maximumf %193, %194 : vector<256x128xf32>
    %c0_76 = arith.constant 0 : index
    %c0_77 = arith.constant 0 : index
    %c0_78 = arith.constant 0 : index
    %196 = vector.load %arg1[%c0_76, %c0_77, %c0_78] : memref<1x256x128xf32, #tpu.memory_space<vmem>>, vector<1x256x128xf32>
    %197 = vector.shape_cast %196 : vector<1x256x128xf32> to vector<256x128xf32>
    %198 = arith.addf %195, %197 : vector<256x128xf32>
    %cst_79 = arith.constant 0.000000e+00 : f32
    %199 = vector.broadcast %cst_79 : f32 to vector<256x128xf32>
    %200 = arith.maximumf %198, %199 : vector<256x128xf32>
    %c0_80 = arith.constant 0 : index
    %c0_81 = arith.constant 0 : index
    %c0_82 = arith.constant 0 : index
    %201 = vector.load %arg8[%c0_80, %c0_81, %c0_82] : memref<1x256x128xf32, #tpu.memory_space<vmem>>, vector<1x256x128xf32>
    %202 = vector.shape_cast %201 : vector<1x256x128xf32> to vector<256x128xf32>
    %203 = vector.shape_cast %200 : vector<256x128xf32> to vector<1x256x128xf32>
    tpu.vector_store %arg8[%c0_80, %c0_81, %c0_82], %203 {strides = array<i32>} : memref<1x256x128xf32, #tpu.memory_space<vmem>>, vector<1x256x128xf32>,
    return
  }
  func.func @transform_0(%arg0: i32) -> (i32, i32, i32) {
    %c0_i32 = arith.constant 0 : i32
    %c0_i32_0 = arith.constant 0 : i32
    %c0_i32_1 = arith.constant 0 : i32
    return %arg0, %c0_i32, %c0_i32_0 : i32, i32, i32
  }
  func.func @transform_1(%arg0: i32) -> (i32, i32) {
    %c0_i32 = arith.constant 0 : i32
    %c0_i32_0 = arith.constant 0 : i32
    %c0_i32_1 = arith.constant 0 : i32
    return %c0_i32, %c0_i32_0 : i32, i32
  }
  func.func @transform_2(%arg0: i32) -> (i32, i32) {
    %c0_i32 = arith.constant 0 : i32
    %c0_i32_0 = arith.constant 0 : i32
    %c0_i32_1 = arith.constant 0 : i32
    return %c0_i32, %c0_i32_0 : i32, i32
  }
  func.func @transform_3(%arg0: i32) -> (i32, i32) {
    %c0_i32 = arith.constant 0 : i32
    %c0_i32_0 = arith.constant 0 : i32
    %c0_i32_1 = arith.constant 0 : i32
    return %c0_i32, %c0_i32_0 : i32, i32
  }
  func.func @transform_4(%arg0: i32) -> (i32, i32) {
    %c0_i32 = arith.constant 0 : i32
    %c0_i32_0 = arith.constant 0 : i32
    %c0_i32_1 = arith.constant 0 : i32
    return %c0_i32, %c0_i32_0 : i32, i32
  }
  func.func @transform_5(%arg0: i32) -> (i32, i32) {
    %c0_i32 = arith.constant 0 : i32
    %c0_i32_0 = arith.constant 0 : i32
    %c0_i32_1 = arith.constant 0 : i32
    return %c0_i32, %c0_i32_0 : i32, i32
  }
  func.func @transform_6(%arg0: i32) -> (i32, i32) {
    %c0_i32 = arith.constant 0 : i32
    %c0_i32_0 = arith.constant 0 : i32
    %c0_i32_1 = arith.constant 0 : i32
    return %c0_i32, %c0_i32_0 : i32, i32
  }
  func.func @transform_7(%arg0: i32) -> (i32, i32, i32) {
    %c0_i32 = arith.constant 0 : i32
    %c0_i32_0 = arith.constant 0 : i32
    %c0_i32_1 = arith.constant 0 : i32
    return %arg0, %c0_i32, %c0_i32_0 : i32, i32, i32
  }
}

</mosaic_0001>

<llo_original>
// kernel: tpu_custom_call.1
$region0: #{tpu_custom_call.1}
  #allocation0 [shape = 'u32[]', space=smem, size = 0x4, offset = 0x4, fixed_abs, tag = 'smem constant byte address 0x4 - core index']
  #allocation1 [shape = 'u32[144,128]{1,0:T(1,128)}', space=vmem, size = 0x12000, scoped, tag = 'internal scratch']
  #allocation2 [shape = 'f32[320,128]{1,0:T(8,128)}', space=vmem, size = 0x28000, scoped, tag = 'scratch operand']
  #allocation3 [shape = 'f32[320,128]{1,0:T(8,128)}', space=vmem, size = 0x28000, scoped, tag = 'scratch operand']
  %s0 = inlined_call_operand.hbm [shape: f32[2,256,128], index: 0, kind: input, shape index: {}]
  %s1 = inlined_call_operand.hbm [shape: bf16[1152,128], index: 1, kind: input, shape index: {}]
  %s2 = inlined_call_operand.hbm [shape: bf16[1152,128], index: 2, kind: input, shape index: {}]
  %s3 = inlined_call_operand.hbm [shape: bf16[1152,128], index: 3, kind: input, shape index: {}]
  %s4 = inlined_call_operand.hbm [shape: bf16[1152,128], index: 4, kind: input, shape index: {}]
  %s5 = inlined_call_operand.vmem [shape: f32[1,128], index: 5, kind: input, shape index: {}]
  %s6 = inlined_call_operand.vmem [shape: f32[1,128], index: 6, kind: input, shape index: {}]
  %s7 = inlined_call_operand.hbm [shape: f32[2,256,128], index: 7, kind: output, shape index: {}]
  %s8 = sld [smem:[#allocation0]]
  $region81: #{tpu_custom_call.1} parent=0
    _
  %s10 = ssub.s32 1, %s8
  %s11 = scalar_select 0, %s10, %s8
  $region1: #{tpu_custom_call.1} parent=0
    #allocation4 [shape = 'u8[262144]{0}', space=vmem, size = 0x40000, scoped, tag = 'input window, operand 0']
    #allocation5 [shape = 's32[2]{0}', space=sflag, size = 0x8, scoped, tag = 'scoped memory for tpu_custom_call.1']
    #allocation6 [shape = 's32[2]{0}', space=sflag, size = 0x8, scoped, tag = 'scoped memory for tpu_custom_call.1']
    #allocation7 [shape = 'u8[294912]{0}', space=vmem, size = 0x48000, scoped, tag = 'input window, operand 1, single buffered']
    #allocation8 [shape = 's32[1]{0}', space=sflag, size = 0x4, scoped, tag = 'scoped memory for tpu_custom_call.1']
    #allocation9 [shape = 'u8[294912]{0}', space=vmem, size = 0x48000, scoped, tag = 'input window, operand 2, single buffered']
    #allocation10 [shape = 'u8[294912]{0}', space=vmem, size = 0x48000, scoped, tag = 'input window, operand 3, single buffered']
    #allocation11 [shape = 's32[1]{0}', space=sflag, size = 0x4, scoped, tag = 'scoped memory for tpu_custom_call.1']
    #allocation12 [shape = 'u8[294912]{0}', space=vmem, size = 0x48000, scoped, tag = 'input window, operand 4, single buffered']
    #allocation13 [shape = 'u8[262144]{0}', space=vmem, size = 0x40000, scoped, tag = 'output window, operand 0']
    %12 = vsyncpa [#allocation5], 0
    %s13 = scalar_lea.sflag [#allocation5], 1
    %14 = vsyncpa %s13, 0
    %15 = vsyncpa [#allocation8], 0
    %16 = vsyncpa [#allocation11], 0
    %17 = vsyncpa [#allocation6], 0
    %s18 = scalar_lea.sflag [#allocation6], 1
    %19 = vsyncpa %s18, 0
    loop: start=0, step=1, limit=4
    $region2: #{tpu_custom_call.1} parent=1 // loop_pre_header
      _
    $region3: #{tpu_custom_call.1} parent=1 // loop_header
      %s21 = sphi 0, %s25
      %p22 = scmp.ge.s32.totalorder %s21, 4
      %s31 = sphi 0, %s33
      %s34 = sphi 0, %s31
      %s35 = sphi 0, %s34
      %s51 = sphi 0, %s35
      %s55 = sphi 0, %s55
      %s57 = sphi 0, %s55
      %s58 = sphi 0, %s57
      %s72 = sphi 0, %s58
      %s76 = sphi 0, %s76
      %s78 = sphi 0, %s76
      %s79 = sphi 0, %s78
      %s93 = sphi 0, %s79
      %s97 = sphi 0, %s97
      %s99 = sphi 0, %s97
      %s100 = sphi 0, %s99
      %s114 = sphi 0, %s100
      %s118 = sphi 0, %s118
      %s120 = sphi 0, %s118
      %s121 = sphi 0, %s120
      %s135 = sphi 0, %s121
      %s139 = sphi 0, %s139
      %s141 = sphi 0, %s139
      %s142 = sphi 0, %s141
      %s156 = sphi 0, %s142
      %s160 = sphi 0, %s160
      %s162 = sphi 0, %s160
      %s163 = sphi 0, %s162
      %s177 = sphi 0, %s163
      %s183 = sphi 0, %s185
      %s186 = sphi 0, %s183
      %s187 = sphi 0, %s186
      %s203 = sphi 0, %s187
    $region4: #{tpu_custom_call.1} parent=1 // loop_header_branch
      %24 = sbr.rel (%p22) target = $region8
    $region5: #{tpu_custom_call.1} parent=1 // loop_body
      %s26 = ssub.s32 %s21, 1
      %s27 = ssub.s32 %s21, 2
      %s28 = sadd.s32 %s21, 1
      %s29 = ssub.s32 %s21, %s28
      %p30 = scmp.eq.s32.totalorder %s29, 0
      %s32 = sadd.s32 %s31, 1
      %s33 = scalar_select %p30, %s31, %s32
      %p36 = pneg %p30
      %p37 = scmp.eq.s32.totalorder %s21, 1
      %p38 = por %p36, %p37
      %p39 = scmp.ne.s32.totalorder %s31, %s34
      %p40 = scmp.eq.s32.totalorder %s21, 0
      %p41 = por %p39, %p40
      %p42 = scmp.ne.s32.totalorder %s31, %s34
      %p43 = scmp.eq.s32.totalorder %s26, 1
      %p44 = por %p42, %p43
      %p45 = scmp.ne.s32.totalorder %s34, %s35
      %p46 = scmp.eq.s32.totalorder %s26, 0
      %p47 = por %p45, %p46
      %p48 = scmp.ne.s32.totalorder %s34, %s35
      %p49 = scmp.eq.s32.totalorder %s27, 1
      %p50 = por %p48, %p49
      %p52 = scmp.ne.s32.totalorder %s35, %s51
      %p53 = scmp.eq.s32.totalorder %s27, 0
      %p54 = por %p52, %p53
      %s56 = sadd.s32 %s55, 1
      %p59 = scmp.eq.s32.totalorder %s21, 1
      %p60 = scmp.ne.s32.totalorder %s55, %s57
      %p61 = scmp.eq.s32.totalorder %s21, 0
      %p62 = por %p60, %p61
      %p63 = scmp.ne.s32.totalorder %s55, %s57
      %p64 = scmp.eq.s32.totalorder %s26, 1
      %p65 = por %p63, %p64
      %p66 = scmp.ne.s32.totalorder %s57, %s58
      %p67 = scmp.eq.s32.totalorder %s26, 0
      %p68 = por %p66, %p67
      %p69 = scmp.ne.s32.totalorder %s57, %s58
      %p70 = scmp.eq.s32.totalorder %s27, 1
      %p71 = por %p69, %p70
      %p73 = scmp.ne.s32.totalorder %s58, %s72
      %p74 = scmp.eq.s32.totalorder %s27, 0
      %p75 = por %p73, %p74
      %s77 = sadd.s32 %s76, 1
      %p80 = scmp.eq.s32.totalorder %s21, 1
      %p81 = scmp.ne.s32.totalorder %s76, %s78
      %p82 = scmp.eq.s32.totalorder %s21, 0
      %p83 = por %p81, %p82
      %p84 = scmp.ne.s32.totalorder %s76, %s78
      %p85 = scmp.eq.s32.totalorder %s26, 1
      %p86 = por %p84, %p85
      %p87 = scmp.ne.s32.totalorder %s78, %s79
      %p88 = scmp.eq.s32.totalorder %s26, 0
      %p89 = por %p87, %p88
      %p90 = scmp.ne.s32.totalorder %s78, %s79
      %p91 = scmp.eq.s32.totalorder %s27, 1
      %p92 = por %p90, %p91
      %p94 = scmp.ne.s32.totalorder %s79, %s93
      %p95 = scmp.eq.s32.totalorder %s27, 0
      %p96 = por %p94, %p95
      %s98 = sadd.s32 %s97, 1
      %p101 = scmp.eq.s32.totalorder %s21, 1
      %p102 = scmp.ne.s32.totalorder %s97, %s99
      %p103 = scmp.eq.s32.totalorder %s21, 0
      %p104 = por %p102, %p103
      %p105 = scmp.ne.s32.totalorder %s97, %s99
      %p106 = scmp.eq.s32.totalorder %s26, 1
      %p107 = por %p105, %p106
      %p108 = scmp.ne.s32.totalorder %s99, %s100
      %p109 = scmp.eq.s32.totalorder %s26, 0
      %p110 = por %p108, %p109
      %p111 = scmp.ne.s32.totalorder %s99, %s100
      %p112 = scmp.eq.s32.totalorder %s27, 1
      %p113 = por %p111, %p112
      %p115 = scmp.ne.s32.totalorder %s100, %s114
      %p116 = scmp.eq.s32.totalorder %s27, 0
      %p117 = por %p115, %p116
      %s119 = sadd.s32 %s118, 1
      %p122 = scmp.eq.s32.totalorder %s21, 1
      %p123 = scmp.ne.s32.totalorder %s118, %s120
      %p124 = scmp.eq.s32.totalorder %s21, 0
      %p125 = por %p123, %p124
      %p126 = scmp.ne.s32.totalorder %s118, %s120
      %p127 = scmp.eq.s32.totalorder %s26, 1
      %p128 = por %p126, %p127
      %p129 = scmp.ne.s32.totalorder %s120, %s121
      %p130 = scmp.eq.s32.totalorder %s26, 0
      %p131 = por %p129, %p130
      %p132 = scmp.ne.s32.totalorder %s120, %s121
      %p133 = scmp.eq.s32.totalorder %s27, 1
      %p134 = por %p132, %p133
      %p136 = scmp.ne.s32.totalorder %s121, %s135
      %p137 = scmp.eq.s32.totalorder %s27, 0
      %p138 = por %p136, %p137
      %s140 = sadd.s32 %s139, 1
      %p143 = scmp.eq.s32.totalorder %s21, 1
      %p144 = scmp.ne.s32.totalorder %s139, %s141
      %p145 = scmp.eq.s32.totalorder %s21, 0
      %p146 = por %p144, %p145
      %p147 = scmp.ne.s32.totalorder %s139, %s141
      %p148 = scmp.eq.s32.totalorder %s26, 1
      %p149 = por %p147, %p148
      %p150 = scmp.ne.s32.totalorder %s141, %s142
      %p151 = scmp.eq.s32.totalorder %s26, 0
      %p152 = por %p150, %p151
      %p153 = scmp.ne.s32.totalorder %s141, %s142
      %p154 = scmp.eq.s32.totalorder %s27, 1
      %p155 = por %p153, %p154
      %p157 = scmp.ne.s32.totalorder %s142, %s156
      %p158 = scmp.eq.s32.totalorder %s27, 0
      %p159 = por %p157, %p158
      %s161 = sadd.s32 %s160, 1
      %p164 = scmp.eq.s32.totalorder %s21, 1
      %p165 = scmp.ne.s32.totalorder %s160, %s162
      %p166 = scmp.eq.s32.totalorder %s21, 0
      %p167 = por %p165, %p166
      %p168 = scmp.ne.s32.totalorder %s160, %s162
      %p169 = scmp.eq.s32.totalorder %s26, 1
      %p170 = por %p168, %p169
      %p171 = scmp.ne.s32.totalorder %s162, %s163
      %p172 = scmp.eq.s32.totalorder %s26, 0
      %p173 = por %p171, %p172
      %p174 = scmp.ne.s32.totalorder %s162, %s163
      %p175 = scmp.eq.s32.totalorder %s27, 1
      %p176 = por %p174, %p175
      %p178 = scmp.ne.s32.totalorder %s163, %s177
      %p179 = scmp.eq.s32.totalorder %s27, 0
      %p180 = por %p178, %p179
      %s181 = ssub.s32 %s21, %s28
      %p182 = scmp.eq.s32.totalorder %s181, 0
      %s184 = sadd.s32 %s183, 1
      %s185 = scalar_select %p182, %s183, %s184
      %p188 = pneg %p182
      %p189 = scmp.eq.s32.totalorder %s21, 1
      %p190 = por %p188, %p189
      %p191 = scmp.ne.s32.totalorder %s183, %s186
      %p192 = scmp.eq.s32.totalorder %s21, 0
      %p193 = por %p191, %p192
      %p194 = scmp.ne.s32.totalorder %s183, %s186
      %p195 = scmp.eq.s32.totalorder %s26, 1
      %p196 = por %p194, %p195
      %p197 = scmp.ne.s32.totalorder %s186, %s187
      %p198 = scmp.eq.s32.totalorder %s26, 0
      %p199 = por %p197, %p198
      %p200 = scmp.ne.s32.totalorder %s186, %s187
      %p201 = scmp.eq.s32.totalorder %s27, 1
      %p202 = por %p200, %p201
      %p204 = scmp.ne.s32.totalorder %s187, %s203
      %p205 = scmp.eq.s32.totalorder %s27, 0
      %p206 = por %p204, %p205
      %p207 = scmp.le.s32.totalorder 1, %s21
      %p208 = scmp.lt.s32.totalorder %s21, 3
      %p209 = pnand %p207, %p208
      %p210 = pneg %p209
      // Predicated region
      $region9: #{tpu_custom_call.1} parent=5 // pred_check
        _
      $region10: #{tpu_custom_call.1} parent=5 // pred_check_branch
        %212 = sbr.rel (%p209) target = $region12
      $region11: #{tpu_custom_call.1} parent=5 // pred_region
        %s213 = ssub.s32 %s21, 1
        // Predicated region
        $region13: #{tpu_custom_call.1} parent=11 // pred_check
          %p214 = pneg %p68
        $region14: #{tpu_custom_call.1} parent=11 // pred_check_branch
          %216 = sbr.rel (%p214) target = $region16
        $region15: #{tpu_custom_call.1} parent=11 // pred_region
          %s218 = ssub.s32 9216, 9216
          %219 = vsyncadd [#allocation8], %s218
          %s220 = sshll.u32 [#allocation7], 4
          %s221 = int_to_ptr.vmem [resolvable:$true] %s220
          %226 = dma.hbm_to_vmem [thread:$0]  %s1, 9216, %s221, [#allocation8], 64, 64, 4
        $region16: #{tpu_custom_call.1} parent=11 // pred_fallthru
          _
        // Predicated region
        $region17: #{tpu_custom_call.1} parent=11 // pred_check
          %p227 = pneg %p89
        $region18: #{tpu_custom_call.1} parent=11 // pred_check_branch
          %229 = sbr.rel (%p227) target = $region20
        $region19: #{tpu_custom_call.1} parent=11 // pred_region
          %s231 = ssub.s32 9216, 9216
          %232 = vsyncadd [#allocation8], %s231
          %s233 = sshll.u32 [#allocation9], 4
          %s234 = int_to_ptr.vmem [resolvable:$true] %s233
          %239 = dma.hbm_to_vmem [thread:$0]  %s2, 9216, %s234, [#allocation8], 64, 64, 4
        $region20: #{tpu_custom_call.1} parent=11 // pred_fallthru
          _
        // Predicated region
        $region21: #{tpu_custom_call.1} parent=11 // pred_check
          %p240 = pneg %p110
        $region22: #{tpu_custom_call.1} parent=11 // pred_check_branch
          %242 = sbr.rel (%p240) target = $region24
        $region23: #{tpu_custom_call.1} parent=11 // pred_region
          %s244 = ssub.s32 9216, 9216
          %245 = vsyncadd [#allocation11], %s244
          %s246 = sshll.u32 [#allocation10], 4
          %s247 = int_to_ptr.vmem [resolvable:$true] %s246
          %252 = dma.hbm_to_vmem [thread:$0]  %s3, 9216, %s247, [#allocation11], 64, 64, 4
        $region24: #{tpu_custom_call.1} parent=11 // pred_fallthru
          _
        // Predicated region
        $region25: #{tpu_custom_call.1} parent=11 // pred_check
          %p253 = pneg %p131
        $region26: #{tpu_custom_call.1} parent=11 // pred_check_branch
          %255 = sbr.rel (%p253) target = $region28
        $region27: #{tpu_custom_call.1} parent=11 // pred_region
          %s257 = ssub.s32 9216, 9216
          %258 = vsyncadd [#allocation11], %s257
          %s259 = sshll.u32 [#allocation12], 4
          %s260 = int_to_ptr.vmem [resolvable:$true] %s259
          %265 = dma.hbm_to_vmem [thread:$0]  %s4, 9216, %s260, [#allocation11], 64, 64, 4
        $region28: #{tpu_custom_call.1} parent=11 // pred_fallthru
          _
        // Predicated region
        $region29: #{tpu_custom_call.1} parent=11 // pred_check
          %p266 = pneg %p152
        $region30: #{tpu_custom_call.1} parent=11 // pred_check_branch
          %268 = sbr.rel (%p266) target = $region32
        $region31: #{tpu_custom_call.1} parent=11 // pred_region
          _
        $region32: #{tpu_custom_call.1} parent=11 // pred_fallthru
          _
        // Predicated region
        $region33: #{tpu_custom_call.1} parent=11 // pred_check
          %p269 = pneg %p173
        $region34: #{tpu_custom_call.1} parent=11 // pred_check_branch
          %271 = sbr.rel (%p269) target = $region36
        $region35: #{tpu_custom_call.1} parent=11 // pred_region
          _
        $region36: #{tpu_custom_call.1} parent=11 // pred_fallthru
          _
      $region12: #{tpu_custom_call.1} parent=5 // pred_fallthru
        _
      %p272 = scmp.lt.s32.totalorder %s21, 2
      // Predicated region
      $region37: #{tpu_custom_call.1} parent=5 // pred_check
        %p273 = pneg %p272
      $region38: #{tpu_custom_call.1} parent=5 // pred_check_branch
        %275 = sbr.rel (%p273) target = $region40
      $region39: #{tpu_custom_call.1} parent=5 // pred_region
        // Predicated region
        $region41: #{tpu_custom_call.1} parent=39 // pred_check
          %p276 = pneg %p41
        $region42: #{tpu_custom_call.1} parent=39 // pred_check_branch
          %278 = sbr.rel (%p276) target = $region44
        $region43: #{tpu_custom_call.1} parent=39 // pred_region
          %s279 = sand.u32 %s31, 1
          %s280 = scalar_lea.sflag [#allocation5], %s279
          %s281 = sand.u32 %s31, 1
          %s282 = smul.addr %s281, 256
          %s283 = scalar_lea.vmem [#allocation4], %s282
          %s285 = ssub.s32 4096, 4096
          %286 = vsyncadd %s280, %s285
          %s287 = smul.addr %s21, 32
          %s288 = smul.addr %s287, 128
          %s289 = scalar_lea.hbm %s0, %s288
          %s290 = sshll.u32 %s283, 4
          %s291 = int_to_ptr.vmem [resolvable:$true] %s290
          %296 = dma.hbm_to_vmem [thread:$0]  %s289, 4096, %s291, %s280, 128, 128, 8
        $region44: #{tpu_custom_call.1} parent=39 // pred_fallthru
          _
      $region40: #{tpu_custom_call.1} parent=5 // pred_fallthru
        _
      %p297 = scmp.le.s32.totalorder 1, %s21
      %p298 = scmp.lt.s32.totalorder %s21, 3
      %p299 = pnand %p297, %p298
      %p300 = pneg %p299
      // Predicated region
      $region45: #{tpu_custom_call.1} parent=5 // pred_check
        _
      $region46: #{tpu_custom_call.1} parent=5 // pred_check_branch
        %302 = sbr.rel (%p299) target = $region48
      $region47: #{tpu_custom_call.1} parent=5 // pred_region
        %s303 = ssub.s32 %s21, 1
        %s304 = sand.u32 %s34, 1
        %s305 = scalar_lea.sflag [#allocation5], %s304
        %s306 = sand.u32 %s34, 1
        %s307 = smul.addr %s306, 256
        %s308 = scalar_lea.vmem [#allocation4], %s307
        // Predicated region
        $region49: #{tpu_custom_call.1} parent=47 // pred_check
          %p309 = pneg %p47
        $region50: #{tpu_custom_call.1} parent=47 // pred_check_branch
          %311 = sbr.rel (%p309) target = $region52
        $region51: #{tpu_custom_call.1} parent=47 // pred_region
          %312 = dma.done %s305, 4096
        $region52: #{tpu_custom_call.1} parent=47 // pred_fallthru
          _
        // Predicated region
        $region53: #{tpu_custom_call.1} parent=47 // pred_check
          %p313 = pneg %p68
        $region54: #{tpu_custom_call.1} parent=47 // pred_check_branch
          %315 = sbr.rel (%p313) target = $region56
        $region55: #{tpu_custom_call.1} parent=47 // pred_region
          %316 = dma.done [#allocation8], 9216
        $region56: #{tpu_custom_call.1} parent=47 // pred_fallthru
          _
        // Predicated region
        $region57: #{tpu_custom_call.1} parent=47 // pred_check
          %p317 = pneg %p89
        $region58: #{tpu_custom_call.1} parent=47 // pred_check_branch
          %319 = sbr.rel (%p317) target = $region60
        $region59: #{tpu_custom_call.1} parent=47 // pred_region
          %320 = dma.done [#allocation8], 9216
        $region60: #{tpu_custom_call.1} parent=47 // pred_fallthru
          _
        // Predicated region
        $region61: #{tpu_custom_call.1} parent=47 // pred_check
          %p321 = pneg %p110
        $region62: #{tpu_custom_call.1} parent=47 // pred_check_branch
          %323 = sbr.rel (%p321) target = $region64
        $region63: #{tpu_custom_call.1} parent=47 // pred_region
          %324 = dma.done [#allocation11], 9216
        $region64: #{tpu_custom_call.1} parent=47 // pred_fallthru
          _
        // Predicated region
        $region65: #{tpu_custom_call.1} parent=47 // pred_check
          %p325 = pneg %p131
        $region66: #{tpu_custom_call.1} parent=47 // pred_check_branch
          %327 = sbr.rel (%p325) target = $region68
        $region67: #{tpu_custom_call.1} parent=47 // pred_region
          %328 = dma.done [#allocation11], 9216
        $region68: #{tpu_custom_call.1} parent=47 // pred_fallthru
          _
        %s329 = sand.u32 %s34, 1
        %s330 = scalar_lea.sflag [#allocation5], %s329
        %s331 = sand.u32 %s34, 1
        %s332 = smul.addr %s331, 256
        %s333 = scalar_lea.vmem [#allocation4], %s332
        %p334 = pneg %p47
        %p335 = pneg %p44
        %p336 = pneg %p68
        %p337 = pneg %p65
        %p338 = pneg %p89
        %p339 = pneg %p86
        %p340 = pneg %p110
        %p341 = pneg %p107
        %p342 = pneg %p131
        %p343 = pneg %p128
        %p344 = pneg %p152
        %p345 = pneg %p149
        %p346 = pneg %p173
        %p347 = pneg %p170
        %p348 = pneg %p199
        %p349 = pneg %p196
        %s350 = sand.u32 %s186, 1
        %s351 = scalar_lea.sflag [#allocation6], %s350
        %s352 = sand.u32 %s186, 1
        %s353 = smul.addr %s352, 256
        %s354 = scalar_lea.vmem [#allocation13], %s353
        %356 = vst [vmem:[#allocation2] sm:$0xff] 0.0
        %357 = vst [vmem:[#allocation2 + $0x8] sm:$0xff] 0.0
        %358 = vst [vmem:[#allocation2 + $0x10] sm:$0xff] 0.0
        %359 = vst [vmem:[#allocation2 + $0x18] sm:$0xff] 0.0
        %360 = vst [vmem:[#allocation2 + $0x120] sm:$0xff] 0.0
        %361 = vst [vmem:[#allocation2 + $0x128] sm:$0xff] 0.0
        %362 = vst [vmem:[#allocation2 + $0x130] sm:$0xff] 0.0
        %363 = vst [vmem:[#allocation2 + $0x138] sm:$0xff] 0.0
        %v364 = vld [vmem:[%s308] sm:$0xff]
        %v365 = vld [vmem:[%s308 + $0x8] sm:$0xff]
        %v366 = vld [vmem:[%s308 + $0x10] sm:$0xff]
        %v367 = vld [vmem:[%s308 + $0x18] sm:$0xff]
        %v368 = vld [vmem:[%s308 + $0x20] sm:$0xff]
        %v369 = vld [vmem:[%s308 + $0x28] sm:$0xff]
        %v370 = vld [vmem:[%s308 + $0x30] sm:$0xff]
        %v371 = vld [vmem:[%s308 + $0x38] sm:$0xff]
        %v372 = vld [vmem:[%s308 + $0x40] sm:$0xff]
        %v373 = vld [vmem:[%s308 + $0x48] sm:$0xff]
        %v374 = vld [vmem:[%s308 + $0x50] sm:$0xff]
        %v375 = vld [vmem:[%s308 + $0x58] sm:$0xff]
        %v376 = vld [vmem:[%s308 + $0x60] sm:$0xff]
        %v377 = vld [vmem:[%s308 + $0x68] sm:$0xff]
        %v378 = vld [vmem:[%s308 + $0x70] sm:$0xff]
        %v379 = vld [vmem:[%s308 + $0x78] sm:$0xff]
        %v380 = vld [vmem:[%s308 + $0x80] sm:$0xff]
        %v381 = vld [vmem:[%s308 + $0x88] sm:$0xff]
        %v382 = vld [vmem:[%s308 + $0x90] sm:$0xff]
        %v383 = vld [vmem:[%s308 + $0x98] sm:$0xff]
        %v384 = vld [vmem:[%s308 + $0xa0] sm:$0xff]
        %v385 = vld [vmem:[%s308 + $0xa8] sm:$0xff]
        %v386 = vld [vmem:[%s308 + $0xb0] sm:$0xff]
        %v387 = vld [vmem:[%s308 + $0xb8] sm:$0xff]
        %v388 = vld [vmem:[%s308 + $0xc0] sm:$0xff]
        %v389 = vld [vmem:[%s308 + $0xc8] sm:$0xff]
        %v390 = vld [vmem:[%s308 + $0xd0] sm:$0xff]
        %v391 = vld [vmem:[%s308 + $0xd8] sm:$0xff]
        %v392 = vld [vmem:[%s308 + $0xe0] sm:$0xff]
        %v393 = vld [vmem:[%s308 + $0xe8] sm:$0xff]
        %v394 = vld [vmem:[%s308 + $0xf0] sm:$0xff]
        %v395 = vld [vmem:[%s308 + $0xf8] sm:$0xff]
        %396 = vst [vmem:[#allocation2 + $0x20] sm:$0xff] %v364
        %397 = vst [vmem:[#allocation2 + $0x28] sm:$0xff] %v365
        %398 = vst [vmem:[#allocation2 + $0x30] sm:$0xff] %v366
        %399 = vst [vmem:[#allocation2 + $0x38] sm:$0xff] %v367
        %400 = vst [vmem:[#allocation2 + $0x40] sm:$0xff] %v368
        %401 = vst [vmem:[#allocation2 + $0x48] sm:$0xff] %v369
        %402 = vst [vmem:[#allocation2 + $0x50] sm:$0xff] %v370
        %403 = vst [vmem:[#allocation2 + $0x58] sm:$0xff] %v371
        %404 = vst [vmem:[#allocation2 + $0x60] sm:$0xff] %v372
        %405 = vst [vmem:[#allocation2 + $0x68] sm:$0xff] %v373
        %406 = vst [vmem:[#allocation2 + $0x70] sm:$0xff] %v374
        %407 = vst [vmem:[#allocation2 + $0x78] sm:$0xff] %v375
        %408 = vst [vmem:[#allocation2 + $0x80] sm:$0xff] %v376
        %409 = vst [vmem:[#allocation2 + $0x88] sm:$0xff] %v377
        %410 = vst [vmem:[#allocation2 + $0x90] sm:$0xff] %v378
        %411 = vst [vmem:[#allocation2 + $0x98] sm:$0xff] %v379
        %412 = vst [vmem:[#allocation2 + $0xa0] sm:$0xff] %v380
        %413 = vst [vmem:[#allocation2 + $0xa8] sm:$0xff] %v381
        %414 = vst [vmem:[#allocation2 + $0xb0] sm:$0xff] %v382
        %415 = vst [vmem:[#allocation2 + $0xb8] sm:$0xff] %v383
        %416 = vst [vmem:[#allocation2 + $0xc0] sm:$0xff] %v384
        %417 = vst [vmem:[#allocation2 + $0xc8] sm:$0xff] %v385
        %418 = vst [vmem:[#allocation2 + $0xd0] sm:$0xff] %v386
        %419 = vst [vmem:[#allocation2 + $0xd8] sm:$0xff] %v387
        %420 = vst [vmem:[#allocation2 + $0xe0] sm:$0xff] %v388
        %421 = vst [vmem:[#allocation2 + $0xe8] sm:$0xff] %v389
        %422 = vst [vmem:[#allocation2 + $0xf0] sm:$0xff] %v390
        %423 = vst [vmem:[#allocation2 + $0xf8] sm:$0xff] %v391
        %424 = vst [vmem:[#allocation2 + $0x100] sm:$0xff] %v392
        %425 = vst [vmem:[#allocation2 + $0x108] sm:$0xff] %v393
        %426 = vst [vmem:[#allocation2 + $0x110] sm:$0xff] %v394
        %427 = vst [vmem:[#allocation2 + $0x118] sm:$0xff] %v395
        %428 = vst [vmem:[#allocation3] sm:$0xff] 0.0
        %429 = vst [vmem:[#allocation3 + $0x8] sm:$0xff] 0.0
        %430 = vst [vmem:[#allocation3 + $0x10] sm:$0xff] 0.0
        %431 = vst [vmem:[#allocation3 + $0x18] sm:$0xff] 0.0
        %432 = vst [vmem:[#allocation3 + $0x120] sm:$0xff] 0.0
        %433 = vst [vmem:[#allocation3 + $0x128] sm:$0xff] 0.0
        %434 = vst [vmem:[#allocation3 + $0x130] sm:$0xff] 0.0
        %435 = vst [vmem:[#allocation3 + $0x138] sm:$0xff] 0.0
        %v436 = vlaneseq
        %v437 = vshrl.u32 %v436, 7
        %v438 = vadd.s32 %v437, 8
        %v439 = vadd.s32 %v437, 16
        %v440 = vadd.s32 %v437, 24
        %v441 = vadd.s32 %v437, 32
        %v442 = vadd.s32 %v437, 40
        %v443 = vadd.s32 %v437, 48
        %v444 = vadd.s32 %v437, 56
        %v445 = vadd.s32 %v437, 64
        %v446 = vadd.s32 %v437, 72
        %v447 = vadd.s32 %v437, 80
        %v448 = vadd.s32 %v437, 88
        %v449 = vadd.s32 %v437, 96
        %v450 = vadd.s32 %v437, 104
        %v451 = vadd.s32 %v437, 112
        %v452 = vadd.s32 %v437, 120
        %v453 = vadd.s32 %v437, 128
        %v454 = vadd.s32 %v437, 136
        %v455 = vadd.s32 %v437, 144
        %v456 = vadd.s32 %v437, 152
        %v457 = vadd.s32 %v437, 160
        %v458 = vadd.s32 %v437, 168
        %v459 = vadd.s32 %v437, 176
        %v460 = vadd.s32 %v437, 184
        %v461 = vadd.s32 %v437, 192
        %v462 = vadd.s32 %v437, 200
        %v463 = vadd.s32 %v437, 208
        %v464 = vadd.s32 %v437, 216
        %v465 = vadd.s32 %v437, 224
        %v466 = vadd.s32 %v437, 232
        %v467 = vadd.s32 %v437, 240
        %v468 = vadd.s32 %v437, 248
        %vm469 = vcmp.lt.s32.totalorder %v437, 0
        %v470 = vsub.s32 0, %v437
        %v471 = vsel %vm469, %v470, %v437
        %v472 = vshrl.u32 %v471, 4
        %v473 = vand.u32 %v471, 15
        %v474 = vsub.s32 0, %v473
        %v475 = vsel %vm469, %v474, %v473
        %vm476 = vcmp.lt.s32.totalorder %v438, 0
        %v477 = vsub.s32 0, %v438
        %v478 = vsel %vm476, %v477, %v438
        %v479 = vshrl.u32 %v478, 4
        %v480 = vand.u32 %v478, 15
        %v481 = vsub.s32 0, %v480
        %v482 = vsel %vm476, %v481, %v480
        %vm483 = vcmp.lt.s32.totalorder %v439, 0
        %v484 = vsub.s32 0, %v439
        %v485 = vsel %vm483, %v484, %v439
        %v486 = vshrl.u32 %v485, 4
        %v487 = vand.u32 %v485, 15
        %v488 = vsub.s32 0, %v487
        %v489 = vsel %vm483, %v488, %v487
        %vm490 = vcmp.lt.s32.totalorder %v440, 0
        %v491 = vsub.s32 0, %v440
        %v492 = vsel %vm490, %v491, %v440
        %v493 = vshrl.u32 %v492, 4
        %v494 = vand.u32 %v492, 15
        %v495 = vsub.s32 0, %v494
        %v496 = vsel %vm490, %v495, %v494
        %vm497 = vcmp.lt.s32.totalorder %v441, 0
        %v498 = vsub.s32 0, %v441
        %v499 = vsel %vm497, %v498, %v441
        %v500 = vshrl.u32 %v499, 4
        %v501 = vand.u32 %v499, 15
        %v502 = vsub.s32 0, %v501
        %v503 = vsel %vm497, %v502, %v501
        %vm504 = vcmp.lt.s32.totalorder %v442, 0
        %v505 = vsub.s32 0, %v442
        %v506 = vsel %vm504, %v505, %v442
        %v507 = vshrl.u32 %v506, 4
        %v508 = vand.u32 %v506, 15
        %v509 = vsub.s32 0, %v508
        %v510 = vsel %vm504, %v509, %v508
        %vm511 = vcmp.lt.s32.totalorder %v443, 0
        %v512 = vsub.s32 0, %v443
        %v513 = vsel %vm511, %v512, %v443
        %v514 = vshrl.u32 %v513, 4
        %v515 = vand.u32 %v513, 15
        %v516 = vsub.s32 0, %v515
        %v517 = vsel %vm511, %v516, %v515
        %vm518 = vcmp.lt.s32.totalorder %v444, 0
        %v519 = vsub.s32 0, %v444
        %v520 = vsel %vm518, %v519, %v444
        %v521 = vshrl.u32 %v520, 4
        %v522 = vand.u32 %v520, 15
        %v523 = vsub.s32 0, %v522
        %v524 = vsel %vm518, %v523, %v522
        %vm525 = vcmp.lt.s32.totalorder %v445, 0
        %v526 = vsub.s32 0, %v445
        %v527 = vsel %vm525, %v526, %v445
        %v528 = vshrl.u32 %v527, 4
        %v529 = vand.u32 %v527, 15
        %v530 = vsub.s32 0, %v529
        %v531 = vsel %vm525, %v530, %v529
        %vm532 = vcmp.lt.s32.totalorder %v446, 0
        %v533 = vsub.s32 0, %v446
        %v534 = vsel %vm532, %v533, %v446
        %v535 = vshrl.u32 %v534, 4
        %v536 = vand.u32 %v534, 15
        %v537 = vsub.s32 0, %v536
        %v538 = vsel %vm532, %v537, %v536
        %vm539 = vcmp.lt.s32.totalorder %v447, 0
        %v540 = vsub.s32 0, %v447
        %v541 = vsel %vm539, %v540, %v447
        %v542 = vshrl.u32 %v541, 4
        %v543 = vand.u32 %v541, 15
        %v544 = vsub.s32 0, %v543
        %v545 = vsel %vm539, %v544, %v543
        %vm546 = vcmp.lt.s32.totalorder %v448, 0
        %v547 = vsub.s32 0, %v448
        %v548 = vsel %vm546, %v547, %v448
        %v549 = vshrl.u32 %v548, 4
        %v550 = vand.u32 %v548, 15
        %v551 = vsub.s32 0, %v550
        %v552 = vsel %vm546, %v551, %v550
        %vm553 = vcmp.lt.s32.totalorder %v449, 0
        %v554 = vsub.s32 0, %v449
        %v555 = vsel %vm553, %v554, %v449
        %v556 = vshrl.u32 %v555, 4
        %v557 = vand.u32 %v555, 15
        %v558 = vsub.s32 0, %v557
        %v559 = vsel %vm553, %v558, %v557
        %vm560 = vcmp.lt.s32.totalorder %v450, 0
        %v561 = vsub.s32 0, %v450
        %v562 = vsel %vm560, %v561, %v450
        %v563 = vshrl.u32 %v562, 4
        %v564 = vand.u32 %v562, 15
        %v565 = vsub.s32 0, %v564
        %v566 = vsel %vm560, %v565, %v564
        %vm567 = vcmp.lt.s32.totalorder %v451, 0
        %v568 = vsub.s32 0, %v451
        %v569 = vsel %vm567, %v568, %v451
        %v570 = vshrl.u32 %v569, 4
        %v571 = vand.u32 %v569, 15
        %v572 = vsub.s32 0, %v571
        %v573 = vsel %vm567, %v572, %v571
        %vm574 = vcmp.lt.s32.totalorder %v452, 0
        %v575 = vsub.s32 0, %v452
        %v576 = vsel %vm574, %v575, %v452
        %v577 = vshrl.u32 %v576, 4
        %v578 = vand.u32 %v576, 15
        %v579 = vsub.s32 0, %v578
        %v580 = vsel %vm574, %v579, %v578
        %vm581 = vcmp.lt.s32.totalorder %v453, 0
        %v582 = vsub.s32 0, %v453
        %v583 = vsel %vm581, %v582, %v453
        %v584 = vshrl.u32 %v583, 4
        %v585 = vand.u32 %v583, 15
        %v586 = vsub.s32 0, %v585
        %v587 = vsel %vm581, %v586, %v585
        %vm588 = vcmp.lt.s32.totalorder %v454, 0
        %v589 = vsub.s32 0, %v454
        %v590 = vsel %vm588, %v589, %v454
        %v591 = vshrl.u32 %v590, 4
        %v592 = vand.u32 %v590, 15
        %v593 = vsub.s32 0, %v592
        %v594 = vsel %vm588, %v593, %v592
        %vm595 = vcmp.lt.s32.totalorder %v455, 0
        %v596 = vsub.s32 0, %v455
        %v597 = vsel %vm595, %v596, %v455
        %v598 = vshrl.u32 %v597, 4
        %v599 = vand.u32 %v597, 15
        %v600 = vsub.s32 0, %v599
        %v601 = vsel %vm595, %v600, %v599
        %vm602 = vcmp.lt.s32.totalorder %v456, 0
        %v603 = vsub.s32 0, %v456
        %v604 = vsel %vm602, %v603, %v456
        %v605 = vshrl.u32 %v604, 4
        %v606 = vand.u32 %v604, 15
        %v607 = vsub.s32 0, %v606
        %v608 = vsel %vm602, %v607, %v606
        %vm609 = vcmp.lt.s32.totalorder %v457, 0
        %v610 = vsub.s32 0, %v457
        %v611 = vsel %vm609, %v610, %v457
        %v612 = vshrl.u32 %v611, 4
        %v613 = vand.u32 %v611, 15
        %v614 = vsub.s32 0, %v613
        %v615 = vsel %vm609, %v614, %v613
        %vm616 = vcmp.lt.s32.totalorder %v458, 0
        %v617 = vsub.s32 0, %v458
        %v618 = vsel %vm616, %v617, %v458
        %v619 = vshrl.u32 %v618, 4
        %v620 = vand.u32 %v618, 15
        %v621 = vsub.s32 0, %v620
        %v622 = vsel %vm616, %v621, %v620
        %vm623 = vcmp.lt.s32.totalorder %v459, 0
        %v624 = vsub.s32 0, %v459
        %v625 = vsel %vm623, %v624, %v459
        %v626 = vshrl.u32 %v625, 4
        %v627 = vand.u32 %v625, 15
        %v628 = vsub.s32 0, %v627
        %v629 = vsel %vm623, %v628, %v627
        %vm630 = vcmp.lt.s32.totalorder %v460, 0
        %v631 = vsub.s32 0, %v460
        %v632 = vsel %vm630, %v631, %v460
        %v633 = vshrl.u32 %v632, 4
        %v634 = vand.u32 %v632, 15
        %v635 = vsub.s32 0, %v634
        %v636 = vsel %vm630, %v635, %v634
        %vm637 = vcmp.lt.s32.totalorder %v461, 0
        %v638 = vsub.s32 0, %v461
        %v639 = vsel %vm637, %v638, %v461
        %v640 = vshrl.u32 %v639, 4
        %v641 = vand.u32 %v639, 15
        %v642 = vsub.s32 0, %v641
        %v643 = vsel %vm637, %v642, %v641
        %vm644 = vcmp.lt.s32.totalorder %v462, 0
        %v645 = vsub.s32 0, %v462
        %v646 = vsel %vm644, %v645, %v462
        %v647 = vshrl.u32 %v646, 4
        %v648 = vand.u32 %v646, 15
        %v649 = vsub.s32 0, %v648
        %v650 = vsel %vm644, %v649, %v648
        %vm651 = vcmp.lt.s32.totalorder %v463, 0
        %v652 = vsub.s32 0, %v463
        %v653 = vsel %vm651, %v652, %v463
        %v654 = vshrl.u32 %v653, 4
        %v655 = vand.u32 %v653, 15
        %v656 = vsub.s32 0, %v655
        %v657 = vsel %vm651, %v656, %v655
        %vm658 = vcmp.lt.s32.totalorder %v464, 0
        %v659 = vsub.s32 0, %v464
        %v660 = vsel %vm658, %v659, %v464
        %v661 = vshrl.u32 %v660, 4
        %v662 = vand.u32 %v660, 15
        %v663 = vsub.s32 0, %v662
        %v664 = vsel %vm658, %v663, %v662
        %vm665 = vcmp.lt.s32.totalorder %v465, 0
        %v666 = vsub.s32 0, %v465
        %v667 = vsel %vm665, %v666, %v465
        %v668 = vshrl.u32 %v667, 4
        %v669 = vand.u32 %v667, 15
        %v670 = vsub.s32 0, %v669
        %v671 = vsel %vm665, %v670, %v669
        %vm672 = vcmp.lt.s32.totalorder %v466, 0
        %v673 = vsub.s32 0, %v466
        %v674 = vsel %vm672, %v673, %v466
        %v675 = vshrl.u32 %v674, 4
        %v676 = vand.u32 %v674, 15
        %v677 = vsub.s32 0, %v676
        %v678 = vsel %vm672, %v677, %v676
        %vm679 = vcmp.lt.s32.totalorder %v467, 0
        %v680 = vsub.s32 0, %v467
        %v681 = vsel %vm679, %v680, %v467
        %v682 = vshrl.u32 %v681, 4
        %v683 = vand.u32 %v681, 15
        %v684 = vsub.s32 0, %v683
        %v685 = vsel %vm679, %v684, %v683
        %vm686 = vcmp.lt.s32.totalorder %v468, 0
        %v687 = vsub.s32 0, %v468
        %v688 = vsel %vm686, %v687, %v468
        %v689 = vshrl.u32 %v688, 4
        %v690 = vand.u32 %v688, 15
        %v691 = vsub.s32 0, %v690
        %v692 = vsel %vm686, %v691, %v690
        %vm693 = vcmp.ne.s32.totalorder %v475, 0
        %vm694 = vcmp.ne.s32.totalorder %v482, 0
        %vm695 = vcmp.ne.s32.totalorder %v489, 0
        %vm696 = vcmp.ne.s32.totalorder %v496, 0
        %vm697 = vcmp.ne.s32.totalorder %v503, 0
        %vm698 = vcmp.ne.s32.totalorder %v510, 0
        %vm699 = vcmp.ne.s32.totalorder %v517, 0
        %vm700 = vcmp.ne.s32.totalorder %v524, 0
        %vm701 = vcmp.ne.s32.totalorder %v531, 0
        %vm702 = vcmp.ne.s32.totalorder %v538, 0
        %vm703 = vcmp.ne.s32.totalorder %v545, 0
        %vm704 = vcmp.ne.s32.totalorder %v552, 0
        %vm705 = vcmp.ne.s32.totalorder %v559, 0
        %vm706 = vcmp.ne.s32.totalorder %v566, 0
        %vm707 = vcmp.ne.s32.totalorder %v573, 0
        %vm708 = vcmp.ne.s32.totalorder %v580, 0
        %vm709 = vcmp.ne.s32.totalorder %v587, 0
        %vm710 = vcmp.ne.s32.totalorder %v594, 0
        %vm711 = vcmp.ne.s32.totalorder %v601, 0
        %vm712 = vcmp.ne.s32.totalorder %v608, 0
        %vm713 = vcmp.ne.s32.totalorder %v615, 0
        %vm714 = vcmp.ne.s32.totalorder %v622, 0
        %vm715 = vcmp.ne.s32.totalorder %v629, 0
        %vm716 = vcmp.ne.s32.totalorder %v636, 0
        %vm717 = vcmp.ne.s32.totalorder %v643, 0
        %vm718 = vcmp.ne.s32.totalorder %v650, 0
        %vm719 = vcmp.ne.s32.totalorder %v657, 0
        %vm720 = vcmp.ne.s32.totalorder %v664, 0
        %vm721 = vcmp.ne.s32.totalorder %v671, 0
        %vm722 = vcmp.ne.s32.totalorder %v678, 0
        %vm723 = vcmp.ne.s32.totalorder %v685, 0
        %vm724 = vcmp.ne.s32.totalorder %v692, 0
        %vm725 = vcmp.lt.s32.totalorder %v475, 0
        %vm726 = vcmp.lt.s32.totalorder %v482, 0
        %vm727 = vcmp.lt.s32.totalorder %v489, 0
        %vm728 = vcmp.lt.s32.totalorder %v496, 0
        %vm729 = vcmp.lt.s32.totalorder %v503, 0
        %vm730 = vcmp.lt.s32.totalorder %v510, 0
        %vm731 = vcmp.lt.s32.totalorder %v517, 0
        %vm732 = vcmp.lt.s32.totalorder %v524, 0
        %vm733 = vcmp.lt.s32.totalorder %v531, 0
        %vm734 = vcmp.lt.s32.totalorder %v538, 0
        %vm735 = vcmp.lt.s32.totalorder %v545, 0
        %vm736 = vcmp.lt.s32.totalorder %v552, 0
        %vm737 = vcmp.lt.s32.totalorder %v559, 0
        %vm738 = vcmp.lt.s32.totalorder %v566, 0
        %vm739 = vcmp.lt.s32.totalorder %v573, 0
        %vm740 = vcmp.lt.s32.totalorder %v580, 0
        %vm741 = vcmp.lt.s32.totalorder %v587, 0
        %vm742 = vcmp.lt.s32.totalorder %v594, 0
        %vm743 = vcmp.lt.s32.totalorder %v601, 0
        %vm744 = vcmp.lt.s32.totalorder %v608, 0
        %vm745 = vcmp.lt.s32.totalorder %v615, 0
        %vm746 = vcmp.lt.s32.totalorder %v622, 0
        %vm747 = vcmp.lt.s32.totalorder %v629, 0
        %vm748 = vcmp.lt.s32.totalorder %v636, 0
        %vm749 = vcmp.lt.s32.totalorder %v643, 0
        %vm750 = vcmp.lt.s32.totalorder %v650, 0
        %vm751 = vcmp.lt.s32.totalorder %v657, 0
        %vm752 = vcmp.lt.s32.totalorder %v664, 0
        %vm753 = vcmp.lt.s32.totalorder %v671, 0
        %vm754 = vcmp.lt.s32.totalorder %v678, 0
        %vm755 = vcmp.lt.s32.totalorder %v685, 0
        %vm756 = vcmp.lt.s32.totalorder %v692, 0
        %vm757 = vmand %vm725, %vm693
        %vm758 = vmand %vm726, %vm694
        %vm759 = vmand %vm727, %vm695
        %vm760 = vmand %vm728, %vm696
        %vm761 = vmand %vm729, %vm697
        %vm762 = vmand %vm730, %vm698
        %vm763 = vmand %vm731, %vm699
        %vm764 = vmand %vm732, %vm700
        %vm765 = vmand %vm733, %vm701
        %vm766 = vmand %vm734, %vm702
        %vm767 = vmand %vm735, %vm703
        %vm768 = vmand %vm736, %vm704
        %vm769 = vmand %vm737, %vm705
        %vm770 = vmand %vm738, %vm706
        %vm771 = vmand %vm739, %vm707
        %vm772 = vmand %vm740, %vm708
        %vm773 = vmand %vm741, %vm709
        %vm774 = vmand %vm742, %vm710
        %vm775 = vmand %vm743, %vm711
        %vm776 = vmand %vm744, %vm712
        %vm777 = vmand %vm745, %vm713
        %vm778 = vmand %vm746, %vm714
        %vm779 = vmand %vm747, %vm715
        %vm780 = vmand %vm748, %vm716
        %vm781 = vmand %vm749, %vm717
        %vm782 = vmand %vm750, %vm718
        %vm783 = vmand %vm751, %vm719
        %vm784 = vmand %vm752, %vm720
        %vm785 = vmand %vm753, %vm721
        %vm786 = vmand %vm754, %vm722
        %vm787 = vmand %vm755, %vm723
        %vm788 = vmand %vm756, %vm724
        %v789 = vadd.s32 %v475, 16
        %v790 = vadd.s32 %v482, 16
        %v791 = vadd.s32 %v489, 16
        %v792 = vadd.s32 %v496, 16
        %v793 = vadd.s32 %v503, 16
        %v794 = vadd.s32 %v510, 16
        %v795 = vadd.s32 %v517, 16
        %v796 = vadd.s32 %v524, 16
        %v797 = vadd.s32 %v531, 16
        %v798 = vadd.s32 %v538, 16
        %v799 = vadd.s32 %v545, 16
        %v800 = vadd.s32 %v552, 16
        %v801 = vadd.s32 %v559, 16
        %v802 = vadd.s32 %v566, 16
        %v803 = vadd.s32 %v573, 16
        %v804 = vadd.s32 %v580, 16
        %v805 = vadd.s32 %v587, 16
        %v806 = vadd.s32 %v594, 16
        %v807 = vadd.s32 %v601, 16
        %v808 = vadd.s32 %v608, 16
        %v809 = vadd.s32 %v615, 16
        %v810 = vadd.s32 %v622, 16
        %v811 = vadd.s32 %v629, 16
        %v812 = vadd.s32 %v636, 16
        %v813 = vadd.s32 %v643, 16
        %v814 = vadd.s32 %v650, 16
        %v815 = vadd.s32 %v657, 16
        %v816 = vadd.s32 %v664, 16
        %v817 = vadd.s32 %v671, 16
        %v818 = vadd.s32 %v678, 16
        %v819 = vadd.s32 %v685, 16
        %v820 = vadd.s32 %v692, 16
        %v821 = vsel %vm757, %v789, %v475
        %v822 = vsel %vm758, %v790, %v482
        %v823 = vsel %vm759, %v791, %v489
        %v824 = vsel %vm760, %v792, %v496
        %v825 = vsel %vm761, %v793, %v503
        %v826 = vsel %vm762, %v794, %v510
        %v827 = vsel %vm763, %v795, %v517
        %v828 = vsel %vm764, %v796, %v524
        %v829 = vsel %vm765, %v797, %v531
        %v830 = vsel %vm766, %v798, %v538
        %v831 = vsel %vm767, %v799, %v545
        %v832 = vsel %vm768, %v800, %v552
        %v833 = vsel %vm769, %v801, %v559
        %v834 = vsel %vm770, %v802, %v566
        %v835 = vsel %vm771, %v803, %v573
        %v836 = vsel %vm772, %v804, %v580
        %v837 = vsel %vm773, %v805, %v587
        %v838 = vsel %vm774, %v806, %v594
        %v839 = vsel %vm775, %v807, %v601
        %v840 = vsel %vm776, %v808, %v608
        %v841 = vsel %vm777, %v809, %v615
        %v842 = vsel %vm778, %v810, %v622
        %v843 = vsel %vm779, %v811, %v629
        %v844 = vsel %vm780, %v812, %v636
        %v845 = vsel %vm781, %v813, %v643
        %v846 = vsel %vm782, %v814, %v650
        %v847 = vsel %vm783, %v815, %v657
        %v848 = vsel %vm784, %v816, %v664
        %v849 = vsel %vm785, %v817, %v671
        %v850 = vsel %vm786, %v818, %v678
        %v851 = vsel %vm787, %v819, %v685
        %v852 = vsel %vm788, %v820, %v692
        %vm853 = vcmp.ge.s32.totalorder %v821, 1
        %vm854 = vcmp.ge.s32.totalorder %v822, 1
        %vm855 = vcmp.ge.s32.totalorder %v823, 1
        %vm856 = vcmp.ge.s32.totalorder %v824, 1
        %vm857 = vcmp.ge.s32.totalorder %v825, 1
        %vm858 = vcmp.ge.s32.totalorder %v826, 1
        %vm859 = vcmp.ge.s32.totalorder %v827, 1
        %vm860 = vcmp.ge.s32.totalorder %v828, 1
        %vm861 = vcmp.ge.s32.totalorder %v829, 1
        %vm862 = vcmp.ge.s32.totalorder %v830, 1
        %vm863 = vcmp.ge.s32.totalorder %v831, 1
        %vm864 = vcmp.ge.s32.totalorder %v832, 1
        %vm865 = vcmp.ge.s32.totalorder %v833, 1
        %vm866 = vcmp.ge.s32.totalorder %v834, 1
        %vm867 = vcmp.ge.s32.totalorder %v835, 1
        %vm868 = vcmp.ge.s32.totalorder %v836, 1
        %vm869 = vcmp.ge.s32.totalorder %v837, 1
        %vm870 = vcmp.ge.s32.totalorder %v838, 1
        %vm871 = vcmp.ge.s32.totalorder %v839, 1
        %vm872 = vcmp.ge.s32.totalorder %v840, 1
        %vm873 = vcmp.ge.s32.totalorder %v841, 1
        %vm874 = vcmp.ge.s32.totalorder %v842, 1
        %vm875 = vcmp.ge.s32.totalorder %v843, 1
        %vm876 = vcmp.ge.s32.totalorder %v844, 1
        %vm877 = vcmp.ge.s32.totalorder %v845, 1
        %vm878 = vcmp.ge.s32.totalorder %v846, 1
        %vm879 = vcmp.ge.s32.totalorder %v847, 1
        %vm880 = vcmp.ge.s32.totalorder %v848, 1
        %vm881 = vcmp.ge.s32.totalorder %v849, 1
        %vm882 = vcmp.ge.s32.totalorder %v850, 1
        %vm883 = vcmp.ge.s32.totalorder %v851, 1
        %vm884 = vcmp.ge.s32.totalorder %v852, 1
        %vm885 = vcmp.le.s32.totalorder %v821, 14
        %vm886 = vcmp.le.s32.totalorder %v822, 14
        %vm887 = vcmp.le.s32.totalorder %v823, 14
        %vm888 = vcmp.le.s32.totalorder %v824, 14
        %vm889 = vcmp.le.s32.totalorder %v825, 14
        %vm890 = vcmp.le.s32.totalorder %v826, 14
        %vm891 = vcmp.le.s32.totalorder %v827, 14
        %vm892 = vcmp.le.s32.totalorder %v828, 14
        %vm893 = vcmp.le.s32.totalorder %v829, 14
        %vm894 = vcmp.le.s32.totalorder %v830, 14
        %vm895 = vcmp.le.s32.totalorder %v831, 14
        %vm896 = vcmp.le.s32.totalorder %v832, 14
        %vm897 = vcmp.le.s32.totalorder %v833, 14
        %vm898 = vcmp.le.s32.totalorder %v834, 14
        %vm899 = vcmp.le.s32.totalorder %v835, 14
        %vm900 = vcmp.le.s32.totalorder %v836, 14
        %vm901 = vcmp.le.s32.totalorder %v837, 14
        %vm902 = vcmp.le.s32.totalorder %v838, 14
        %vm903 = vcmp.le.s32.totalorder %v839, 14
        %vm904 = vcmp.le.s32.totalorder %v840, 14
        %vm905 = vcmp.le.s32.totalorder %v841, 14
        %vm906 = vcmp.le.s32.totalorder %v842, 14
        %vm907 = vcmp.le.s32.totalorder %v843, 14
        %vm908 = vcmp.le.s32.totalorder %v844, 14
        %vm909 = vcmp.le.s32.totalorder %v845, 14
        %vm910 = vcmp.le.s32.totalorder %v846, 14
        %vm911 = vcmp.le.s32.totalorder %v847, 14
        %vm912 = vcmp.le.s32.totalorder %v848, 14
        %vm913 = vcmp.le.s32.totalorder %v849, 14
        %vm914 = vcmp.le.s32.totalorder %v850, 14
        %vm915 = vcmp.le.s32.totalorder %v851, 14
        %vm916 = vcmp.le.s32.totalorder %v852, 14
        %v917 = vld [vmem:[#allocation2 + $0xf] sm:$0xff]
        %v918 = vld [vmem:[#allocation2 + $0x17] sm:$0xff]
        %v919 = vld [vmem:[#allocation2 + $0x1f] sm:$0xff]
        %v920 = vld [vmem:[#allocation2 + $0x27] sm:$0xff]
        %v921 = vld [vmem:[#allocation2 + $0x2f] sm:$0xff]
        %v922 = vld [vmem:[#allocation2 + $0x37] sm:$0xff]
        %v923 = vld [vmem:[#allocation2 + $0x3f] sm:$0xff]
        %v924 = vld [vmem:[#allocation2 + $0x47] sm:$0xff]
        %v925 = vld [vmem:[#allocation2 + $0x4f] sm:$0xff]
        %v926 = vld [vmem:[#allocation2 + $0x57] sm:$0xff]
        %v927 = vld [vmem:[#allocation2 + $0x5f] sm:$0xff]
        %v928 = vld [vmem:[#allocation2 + $0x67] sm:$0xff]
        %v929 = vld [vmem:[#allocation2 + $0x6f] sm:$0xff]
        %v930 = vld [vmem:[#allocation2 + $0x77] sm:$0xff]
        %v931 = vld [vmem:[#allocation2 + $0x7f] sm:$0xff]
        %v932 = vld [vmem:[#allocation2 + $0x87] sm:$0xff]
        %v933 = vld [vmem:[#allocation2 + $0x8f] sm:$0xff]
        %v934 = vld [vmem:[#allocation2 + $0x97] sm:$0xff]
        %v935 = vld [vmem:[#allocation2 + $0x9f] sm:$0xff]
        %v936 = vld [vmem:[#allocation2 + $0xa7] sm:$0xff]
        %v937 = vld [vmem:[#allocation2 + $0xaf] sm:$0xff]
        %v938 = vld [vmem:[#allocation2 + $0xb7] sm:$0xff]
        %v939 = vld [vmem:[#allocation2 + $0xbf] sm:$0xff]
        %v940 = vld [vmem:[#allocation2 + $0xc7] sm:$0xff]
        %v941 = vld [vmem:[#allocation2 + $0xcf] sm:$0xff]
        %v942 = vld [vmem:[#allocation2 + $0xd7] sm:$0xff]
        %v943 = vld [vmem:[#allocation2 + $0xdf] sm:$0xff]
        %v944 = vld [vmem:[#allocation2 + $0xe7] sm:$0xff]
        %v945 = vld [vmem:[#allocation2 + $0xef] sm:$0xff]
        %v946 = vld [vmem:[#allocation2 + $0xf7] sm:$0xff]
        %v947 = vld [vmem:[#allocation2 + $0xff] sm:$0xff]
        %v948 = vld [vmem:[#allocation2 + $0x107] sm:$0xff]
        %v949 = vsel %vm853, 1, 0
        %v950 = vsel %vm854, 1, 0
        %v951 = vsel %vm855, 1, 0
        %v952 = vsel %vm856, 1, 0
        %v953 = vsel %vm857, 1, 0
        %v954 = vsel %vm858, 1, 0
        %v955 = vsel %vm859, 1, 0
        %v956 = vsel %vm860, 1, 0
        %v957 = vsel %vm861, 1, 0
        %v958 = vsel %vm862, 1, 0
        %v959 = vsel %vm863, 1, 0
        %v960 = vsel %vm864, 1, 0
        %v961 = vsel %vm865, 1, 0
        %v962 = vsel %vm866, 1, 0
        %v963 = vsel %vm867, 1, 0
        %v964 = vsel %vm868, 1, 0
        %v965 = vsel %vm869, 1, 0
        %v966 = vsel %vm870, 1, 0
        %v967 = vsel %vm871, 1, 0
        %v968 = vsel %vm872, 1, 0
        %v969 = vsel %vm873, 1, 0
        %v970 = vsel %vm874, 1, 0
        %v971 = vsel %vm875, 1, 0
        %v972 = vsel %vm876, 1, 0
        %v973 = vsel %vm877, 1, 0
        %v974 = vsel %vm878, 1, 0
        %v975 = vsel %vm879, 1, 0
        %v976 = vsel %vm880, 1, 0
        %v977 = vsel %vm881, 1, 0
        %v978 = vsel %vm882, 1, 0
        %v979 = vsel %vm883, 1, 0
        %v980 = vsel %vm884, 1, 0
        %vm981 = vcmp.eq.s32.totalorder %v949, 1
        %vm982 = vcmp.eq.s32.totalorder %v950, 1
        %vm983 = vcmp.eq.s32.totalorder %v951, 1
        %vm984 = vcmp.eq.s32.totalorder %v952, 1
        %vm985 = vcmp.eq.s32.totalorder %v953, 1
        %vm986 = vcmp.eq.s32.totalorder %v954, 1
        %vm987 = vcmp.eq.s32.totalorder %v955, 1
        %vm988 = vcmp.eq.s32.totalorder %v956, 1
        %vm989 = vcmp.eq.s32.totalorder %v957, 1
        %vm990 = vcmp.eq.s32.totalorder %v958, 1
        %vm991 = vcmp.eq.s32.totalorder %v959, 1
        %vm992 = vcmp.eq.s32.totalorder %v960, 1
        %vm993 = vcmp.eq.s32.totalorder %v961, 1
        %vm994 = vcmp.eq.s32.totalorder %v962, 1
        %vm995 = vcmp.eq.s32.totalorder %v963, 1
        %vm996 = vcmp.eq.s32.totalorder %v964, 1
        %vm997 = vcmp.eq.s32.totalorder %v965, 1
        %vm998 = vcmp.eq.s32.totalorder %v966, 1
        %vm999 = vcmp.eq.s32.totalorder %v967, 1
        %vm1000 = vcmp.eq.s32.totalorder %v968, 1
        %vm1001 = vcmp.eq.s32.totalorder %v969, 1
        %vm1002 = vcmp.eq.s32.totalorder %v970, 1
        %vm1003 = vcmp.eq.s32.totalorder %v971, 1
        %vm1004 = vcmp.eq.s32.totalorder %v972, 1
        %vm1005 = vcmp.eq.s32.totalorder %v973, 1
        %vm1006 = vcmp.eq.s32.totalorder %v974, 1
        %vm1007 = vcmp.eq.s32.totalorder %v975, 1
        %vm1008 = vcmp.eq.s32.totalorder %v976, 1
        %vm1009 = vcmp.eq.s32.totalorder %v977, 1
        %vm1010 = vcmp.eq.s32.totalorder %v978, 1
        %vm1011 = vcmp.eq.s32.totalorder %v979, 1
        %vm1012 = vcmp.eq.s32.totalorder %v980, 1
        %v1013 = vsel %vm981, %v917, 0.0
        %v1014 = vsel %vm982, %v918, 0.0
        %v1015 = vsel %vm983, %v919, 0.0
        %v1016 = vsel %vm984, %v920, 0.0
        %v1017 = vsel %vm985, %v921, 0.0
        %v1018 = vsel %vm986, %v922, 0.0
        %v1019 = vsel %vm987, %v923, 0.0
        %v1020 = vsel %vm988, %v924, 0.0
        %v1021 = vsel %vm989, %v925, 0.0
        %v1022 = vsel %vm990, %v926, 0.0
        %v1023 = vsel %vm991, %v927, 0.0
        %v1024 = vsel %vm992, %v928, 0.0
        %v1025 = vsel %vm993, %v929, 0.0
        %v1026 = vsel %vm994, %v930, 0.0
        %v1027 = vsel %vm995, %v931, 0.0
        %v1028 = vsel %vm996, %v932, 0.0
        %v1029 = vsel %vm997, %v933, 0.0
        %v1030 = vsel %vm998, %v934, 0.0
        %v1031 = vsel %vm999, %v935, 0.0
        %v1032 = vsel %vm1000, %v936, 0.0
        %v1033 = vsel %vm1001, %v937, 0.0
        %v1034 = vsel %vm1002, %v938, 0.0
        %v1035 = vsel %vm1003, %v939, 0.0
        %v1036 = vsel %vm1004, %v940, 0.0
        %v1037 = vsel %vm1005, %v941, 0.0
        %v1038 = vsel %vm1006, %v942, 0.0
        %v1039 = vsel %vm1007, %v943, 0.0
        %v1040 = vsel %vm1008, %v944, 0.0
        %v1041 = vsel %vm1009, %v945, 0.0
        %v1042 = vsel %vm1010, %v946, 0.0
        %v1043 = vsel %vm1011, %v947, 0.0
        %v1044 = vsel %vm1012, %v948, 0.0
        %v1045 = vpack.c.bf16 %v1014, %v1013
        %v1046 = vpack.c.bf16 %v1016, %v1015
        %v1047 = vpack.c.bf16 %v1018, %v1017
        %v1048 = vpack.c.bf16 %v1020, %v1019
        %v1049 = vpack.c.bf16 %v1022, %v1021
        %v1050 = vpack.c.bf16 %v1024, %v1023
        %v1051 = vpack.c.bf16 %v1026, %v1025
        %v1052 = vpack.c.bf16 %v1028, %v1027
        %v1053 = vpack.c.bf16 %v1030, %v1029
        %v1054 = vpack.c.bf16 %v1032, %v1031
        %v1055 = vpack.c.bf16 %v1034, %v1033
        %v1056 = vpack.c.bf16 %v1036, %v1035
        %v1057 = vpack.c.bf16 %v1038, %v1037
        %v1058 = vpack.c.bf16 %v1040, %v1039
        %v1059 = vpack.c.bf16 %v1042, %v1041
        %v1060 = vpack.c.bf16 %v1044, %v1043
        %v1061 = vunpack.c.l.bf16 %v1045
        %v1062 = vunpack.c.h.bf16 %v1045
        %v1063 = vunpack.c.l.bf16 %v1046
        %v1064 = vunpack.c.h.bf16 %v1046
        %v1065 = vunpack.c.l.bf16 %v1047
        %v1066 = vunpack.c.h.bf16 %v1047
        %v1067 = vunpack.c.l.bf16 %v1048
        %v1068 = vunpack.c.h.bf16 %v1048
        %v1069 = vunpack.c.l.bf16 %v1049
        %v1070 = vunpack.c.h.bf16 %v1049
        %v1071 = vunpack.c.l.bf16 %v1050
        %v1072 = vunpack.c.h.bf16 %v1050
        %v1073 = vunpack.c.l.bf16 %v1051
        %v1074 = vunpack.c.h.bf16 %v1051
        %v1075 = vunpack.c.l.bf16 %v1052
        %v1076 = vunpack.c.h.bf16 %v1052
        %v1077 = vunpack.c.l.bf16 %v1053
        %v1078 = vunpack.c.h.bf16 %v1053
        %v1079 = vunpack.c.l.bf16 %v1054
        %v1080 = vunpack.c.h.bf16 %v1054
        %v1081 = vunpack.c.l.bf16 %v1055
        %v1082 = vunpack.c.h.bf16 %v1055
        %v1083 = vunpack.c.l.bf16 %v1056
        %v1084 = vunpack.c.h.bf16 %v1056
        %v1085 = vunpack.c.l.bf16 %v1057
        %v1086 = vunpack.c.h.bf16 %v1057
        %v1087 = vunpack.c.l.bf16 %v1058
        %v1088 = vunpack.c.h.bf16 %v1058
        %v1089 = vunpack.c.l.bf16 %v1059
        %v1090 = vunpack.c.h.bf16 %v1059
        %v1091 = vunpack.c.l.bf16 %v1060
        %v1092 = vunpack.c.h.bf16 %v1060
        %v1093 = vsub.f32 %v1013, %v1061
        %v1094 = vsub.f32 %v1014, %v1062
        %v1095 = vsub.f32 %v1015, %v1063
        %v1096 = vsub.f32 %v1016, %v1064
        %v1097 = vsub.f32 %v1017, %v1065
        %v1098 = vsub.f32 %v1018, %v1066
        %v1099 = vsub.f32 %v1019, %v1067
        %v1100 = vsub.f32 %v1020, %v1068
        %v1101 = vsub.f32 %v1021, %v1069
        %v1102 = vsub.f32 %v1022, %v1070
        %v1103 = vsub.f32 %v1023, %v1071
        %v1104 = vsub.f32 %v1024, %v1072
        %v1105 = vsub.f32 %v1025, %v1073
        %v1106 = vsub.f32 %v1026, %v1074
        %v1107 = vsub.f32 %v1027, %v1075
        %v1108 = vsub.f32 %v1028, %v1076
        %v1109 = vsub.f32 %v1029, %v1077
        %v1110 = vsub.f32 %v1030, %v1078
        %v1111 = vsub.f32 %v1031, %v1079
        %v1112 = vsub.f32 %v1032, %v1080
        %v1113 = vsub.f32 %v1033, %v1081
        %v1114 = vsub.f32 %v1034, %v1082
        %v1115 = vsub.f32 %v1035, %v1083
        %v1116 = vsub.f32 %v1036, %v1084
        %v1117 = vsub.f32 %v1037, %v1085
        %v1118 = vsub.f32 %v1038, %v1086
        %v1119 = vsub.f32 %v1039, %v1087
        %v1120 = vsub.f32 %v1040, %v1088
        %v1121 = vsub.f32 %v1041, %v1089
        %v1122 = vsub.f32 %v1042, %v1090
        %v1123 = vsub.f32 %v1043, %v1091
        %v1124 = vsub.f32 %v1044, %v1092
        %v1125 = vpack.c.bf16 %v1094, %v1093
        %v1126 = vpack.c.bf16 %v1096, %v1095
        %v1127 = vpack.c.bf16 %v1098, %v1097
        %v1128 = vpack.c.bf16 %v1100, %v1099
        %v1129 = vpack.c.bf16 %v1102, %v1101
        %v1130 = vpack.c.bf16 %v1104, %v1103
        %v1131 = vpack.c.bf16 %v1106, %v1105
        %v1132 = vpack.c.bf16 %v1108, %v1107
        %v1133 = vpack.c.bf16 %v1110, %v1109
        %v1134 = vpack.c.bf16 %v1112, %v1111
        %v1135 = vpack.c.bf16 %v1114, %v1113
        %v1136 = vpack.c.bf16 %v1116, %v1115
        %v1137 = vpack.c.bf16 %v1118, %v1117
        %v1138 = vpack.c.bf16 %v1120, %v1119
        %v1139 = vpack.c.bf16 %v1122, %v1121
        %v1140 = vpack.c.bf16 %v1124, %v1123
        %v1141 = vld [vmem:[#allocation2 + $0x10] sm:$0xff]
        %v1142 = vld [vmem:[#allocation2 + $0x18] sm:$0xff]
        %v1143 = vld [vmem:[#allocation2 + $0x20] sm:$0xff]
        %v1144 = vld [vmem:[#allocation2 + $0x28] sm:$0xff]
        %v1145 = vld [vmem:[#allocation2 + $0x30] sm:$0xff]
        %v1146 = vld [vmem:[#allocation2 + $0x38] sm:$0xff]
        %v1147 = vld [vmem:[#allocation2 + $0x40] sm:$0xff]
        %v1148 = vld [vmem:[#allocation2 + $0x48] sm:$0xff]
        %v1149 = vld [vmem:[#allocation2 + $0x50] sm:$0xff]
        %v1150 = vld [vmem:[#allocation2 + $0x58] sm:$0xff]
        %v1151 = vld [vmem:[#allocation2 + $0x60] sm:$0xff]
        %v1152 = vld [vmem:[#allocation2 + $0x68] sm:$0xff]
        %v1153 = vld [vmem:[#allocation2 + $0x70] sm:$0xff]
        %v1154 = vld [vmem:[#allocation2 + $0x78] sm:$0xff]
        %v1155 = vld [vmem:[#allocation2 + $0x80] sm:$0xff]
        %v1156 = vld [vmem:[#allocation2 + $0x88] sm:$0xff]
        %v1157 = vld [vmem:[#allocation2 + $0x90] sm:$0xff]
        %v1158 = vld [vmem:[#allocation2 + $0x98] sm:$0xff]
        %v1159 = vld [vmem:[#allocation2 + $0xa0] sm:$0xff]
        %v1160 = vld [vmem:[#allocation2 + $0xa8] sm:$0xff]
        %v1161 = vld [vmem:[#allocation2 + $0xb0] sm:$0xff]
        %v1162 = vld [vmem:[#allocation2 + $0xb8] sm:$0xff]
        %v1163 = vld [vmem:[#allocation2 + $0xc0] sm:$0xff]
        %v1164 = vld [vmem:[#allocation2 + $0xc8] sm:$0xff]
        %v1165 = vld [vmem:[#allocation2 + $0xd0] sm:$0xff]
        %v1166 = vld [vmem:[#allocation2 + $0xd8] sm:$0xff]
        %v1167 = vld [vmem:[#allocation2 + $0xe0] sm:$0xff]
        %v1168 = vld [vmem:[#allocation2 + $0xe8] sm:$0xff]
        %v1169 = vld [vmem:[#allocation2 + $0xf0] sm:$0xff]
        %v1170 = vld [vmem:[#allocation2 + $0xf8] sm:$0xff]
        %v1171 = vld [vmem:[#allocation2 + $0x100] sm:$0xff]
        %v1172 = vld [vmem:[#allocation2 + $0x108] sm:$0xff]
        %v1173 = vpack.c.bf16 %v1142, %v1141
        %v1174 = vpack.c.bf16 %v1144, %v1143
        %v1175 = vpack.c.bf16 %v1146, %v1145
        %v1176 = vpack.c.bf16 %v1148, %v1147
        %v1177 = vpack.c.bf16 %v1150, %v1149
        %v1178 = vpack.c.bf16 %v1152, %v1151
        %v1179 = vpack.c.bf16 %v1154, %v1153
        %v1180 = vpack.c.bf16 %v1156, %v1155
        %v1181 = vpack.c.bf16 %v1158, %v1157
        %v1182 = vpack.c.bf16 %v1160, %v1159
        %v1183 = vpack.c.bf16 %v1162, %v1161
        %v1184 = vpack.c.bf16 %v1164, %v1163
        %v1185 = vpack.c.bf16 %v1166, %v1165
        %v1186 = vpack.c.bf16 %v1168, %v1167
        %v1187 = vpack.c.bf16 %v1170, %v1169
        %v1188 = vpack.c.bf16 %v1172, %v1171
        %v1189 = vunpack.c.l.bf16 %v1173
        %v1190 = vunpack.c.h.bf16 %v1173
        %v1191 = vunpack.c.l.bf16 %v1174
        %v1192 = vunpack.c.h.bf16 %v1174
        %v1193 = vunpack.c.l.bf16 %v1175
        %v1194 = vunpack.c.h.bf16 %v1175
        %v1195 = vunpack.c.l.bf16 %v1176
        %v1196 = vunpack.c.h.bf16 %v1176
        %v1197 = vunpack.c.l.bf16 %v1177
        %v1198 = vunpack.c.h.bf16 %v1177
        %v1199 = vunpack.c.l.bf16 %v1178
        %v1200 = vunpack.c.h.bf16 %v1178
        %v1201 = vunpack.c.l.bf16 %v1179
        %v1202 = vunpack.c.h.bf16 %v1179
        %v1203 = vunpack.c.l.bf16 %v1180
        %v1204 = vunpack.c.h.bf16 %v1180
        %v1205 = vunpack.c.l.bf16 %v1181
        %v1206 = vunpack.c.h.bf16 %v1181
        %v1207 = vunpack.c.l.bf16 %v1182
        %v1208 = vunpack.c.h.bf16 %v1182
        %v1209 = vunpack.c.l.bf16 %v1183
        %v1210 = vunpack.c.h.bf16 %v1183
        %v1211 = vunpack.c.l.bf16 %v1184
        %v1212 = vunpack.c.h.bf16 %v1184
        %v1213 = vunpack.c.l.bf16 %v1185
        %v1214 = vunpack.c.h.bf16 %v1185
        %v1215 = vunpack.c.l.bf16 %v1186
        %v1216 = vunpack.c.h.bf16 %v1186
        %v1217 = vunpack.c.l.bf16 %v1187
        %v1218 = vunpack.c.h.bf16 %v1187
        %v1219 = vunpack.c.l.bf16 %v1188
        %v1220 = vunpack.c.h.bf16 %v1188
        %v1221 = vsub.f32 %v1141, %v1189
        %v1222 = vsub.f32 %v1142, %v1190
        %v1223 = vsub.f32 %v1143, %v1191
        %v1224 = vsub.f32 %v1144, %v1192
        %v1225 = vsub.f32 %v1145, %v1193
        %v1226 = vsub.f32 %v1146, %v1194
        %v1227 = vsub.f32 %v1147, %v1195
        %v1228 = vsub.f32 %v1148, %v1196
        %v1229 = vsub.f32 %v1149, %v1197
        %v1230 = vsub.f32 %v1150, %v1198
        %v1231 = vsub.f32 %v1151, %v1199
        %v1232 = vsub.f32 %v1152, %v1200
        %v1233 = vsub.f32 %v1153, %v1201
        %v1234 = vsub.f32 %v1154, %v1202
        %v1235 = vsub.f32 %v1155, %v1203
        %v1236 = vsub.f32 %v1156, %v1204
        %v1237 = vsub.f32 %v1157, %v1205
        %v1238 = vsub.f32 %v1158, %v1206
        %v1239 = vsub.f32 %v1159, %v1207
        %v1240 = vsub.f32 %v1160, %v1208
        %v1241 = vsub.f32 %v1161, %v1209
        %v1242 = vsub.f32 %v1162, %v1210
        %v1243 = vsub.f32 %v1163, %v1211
        %v1244 = vsub.f32 %v1164, %v1212
        %v1245 = vsub.f32 %v1165, %v1213
        %v1246 = vsub.f32 %v1166, %v1214
        %v1247 = vsub.f32 %v1167, %v1215
        %v1248 = vsub.f32 %v1168, %v1216
        %v1249 = vsub.f32 %v1169, %v1217
        %v1250 = vsub.f32 %v1170, %v1218
        %v1251 = vsub.f32 %v1171, %v1219
        %v1252 = vsub.f32 %v1172, %v1220
        %v1253 = vpack.c.bf16 %v1222, %v1221
        %v1254 = vpack.c.bf16 %v1224, %v1223
        %v1255 = vpack.c.bf16 %v1226, %v1225
        %v1256 = vpack.c.bf16 %v1228, %v1227
        %v1257 = vpack.c.bf16 %v1230, %v1229
        %v1258 = vpack.c.bf16 %v1232, %v1231
        %v1259 = vpack.c.bf16 %v1234, %v1233
        %v1260 = vpack.c.bf16 %v1236, %v1235
        %v1261 = vpack.c.bf16 %v1238, %v1237
        %v1262 = vpack.c.bf16 %v1240, %v1239
        %v1263 = vpack.c.bf16 %v1242, %v1241
        %v1264 = vpack.c.bf16 %v1244, %v1243
        %v1265 = vpack.c.bf16 %v1246, %v1245
        %v1266 = vpack.c.bf16 %v1248, %v1247
        %v1267 = vpack.c.bf16 %v1250, %v1249
        %v1268 = vpack.c.bf16 %v1252, %v1251
        %v1269 = vld [vmem:[#allocation2 + $0x11] sm:$0xff]
        %v1270 = vld [vmem:[#allocation2 + $0x19] sm:$0xff]
        %v1271 = vld [vmem:[#allocation2 + $0x21] sm:$0xff]
        %v1272 = vld [vmem:[#allocation2 + $0x29] sm:$0xff]
        %v1273 = vld [vmem:[#allocation2 + $0x31] sm:$0xff]
        %v1274 = vld [vmem:[#allocation2 + $0x39] sm:$0xff]
        %v1275 = vld [vmem:[#allocation2 + $0x41] sm:$0xff]
        %v1276 = vld [vmem:[#allocation2 + $0x49] sm:$0xff]
        %v1277 = vld [vmem:[#allocation2 + $0x51] sm:$0xff]
        %v1278 = vld [vmem:[#allocation2 + $0x59] sm:$0xff]
        %v1279 = vld [vmem:[#allocation2 + $0x61] sm:$0xff]
        %v1280 = vld [vmem:[#allocation2 + $0x69] sm:$0xff]
        %v1281 = vld [vmem:[#allocation2 + $0x71] sm:$0xff]
        %v1282 = vld [vmem:[#allocation2 + $0x79] sm:$0xff]
        %v1283 = vld [vmem:[#allocation2 + $0x81] sm:$0xff]
        %v1284 = vld [vmem:[#allocation2 + $0x89] sm:$0xff]
        %v1285 = vld [vmem:[#allocation2 + $0x91] sm:$0xff]
        %v1286 = vld [vmem:[#allocation2 + $0x99] sm:$0xff]
        %v1287 = vld [vmem:[#allocation2 + $0xa1] sm:$0xff]
        %v1288 = vld [vmem:[#allocation2 + $0xa9] sm:$0xff]
        %v1289 = vld [vmem:[#allocation2 + $0xb1] sm:$0xff]
        %v1290 = vld [vmem:[#allocation2 + $0xb9] sm:$0xff]
        %v1291 = vld [vmem:[#allocation2 + $0xc1] sm:$0xff]
        %v1292 = vld [vmem:[#allocation2 + $0xc9] sm:$0xff]
        %v1293 = vld [vmem:[#allocation2 + $0xd1] sm:$0xff]
        %v1294 = vld [vmem:[#allocation2 + $0xd9] sm:$0xff]
        %v1295 = vld [vmem:[#allocation2 + $0xe1] sm:$0xff]
        %v1296 = vld [vmem:[#allocation2 + $0xe9] sm:$0xff]
        %v1297 = vld [vmem:[#allocation2 + $0xf1] sm:$0xff]
        %v1298 = vld [vmem:[#allocation2 + $0xf9] sm:$0xff]
        %v1299 = vld [vmem:[#allocation2 + $0x101] sm:$0xff]
        %v1300 = vld [vmem:[#allocation2 + $0x109] sm:$0xff]
        %v1301 = vsel %vm885, 1, 0
        %v1302 = vsel %vm886, 1, 0
        %v1303 = vsel %vm887, 1, 0
        %v1304 = vsel %vm888, 1, 0
        %v1305 = vsel %vm889, 1, 0
        %v1306 = vsel %vm890, 1, 0
        %v1307 = vsel %vm891, 1, 0
        %v1308 = vsel %vm892, 1, 0
        %v1309 = vsel %vm893, 1, 0
        %v1310 = vsel %vm894, 1, 0
        %v1311 = vsel %vm895, 1, 0
        %v1312 = vsel %vm896, 1, 0
        %v1313 = vsel %vm897, 1, 0
        %v1314 = vsel %vm898, 1, 0
        %v1315 = vsel %vm899, 1, 0
        %v1316 = vsel %vm900, 1, 0
        %v1317 = vsel %vm901, 1, 0
        %v1318 = vsel %vm902, 1, 0
        %v1319 = vsel %vm903, 1, 0
        %v1320 = vsel %vm904, 1, 0
        %v1321 = vsel %vm905, 1, 0
        %v1322 = vsel %vm906, 1, 0
        %v1323 = vsel %vm907, 1, 0
        %v1324 = vsel %vm908, 1, 0
        %v1325 = vsel %vm909, 1, 0
        %v1326 = vsel %vm910, 1, 0
        %v1327 = vsel %vm911, 1, 0
        %v1328 = vsel %vm912, 1, 0
        %v1329 = vsel %vm913, 1, 0
        %v1330 = vsel %vm914, 1, 0
        %v1331 = vsel %vm915, 1, 0
        %v1332 = vsel %vm916, 1, 0
        %vm1333 = vcmp.eq.s32.totalorder %v1301, 1
        %vm1334 = vcmp.eq.s32.totalorder %v1302, 1
        %vm1335 = vcmp.eq.s32.totalorder %v1303, 1
        %vm1336 = vcmp.eq.s32.totalorder %v1304, 1
        %vm1337 = vcmp.eq.s32.totalorder %v1305, 1
        %vm1338 = vcmp.eq.s32.totalorder %v1306, 1
        %vm1339 = vcmp.eq.s32.totalorder %v1307, 1
        %vm1340 = vcmp.eq.s32.totalorder %v1308, 1
        %vm1341 = vcmp.eq.s32.totalorder %v1309, 1
        %vm1342 = vcmp.eq.s32.totalorder %v1310, 1
        %vm1343 = vcmp.eq.s32.totalorder %v1311, 1
        %vm1344 = vcmp.eq.s32.totalorder %v1312, 1
        %vm1345 = vcmp.eq.s32.totalorder %v1313, 1
        %vm1346 = vcmp.eq.s32.totalorder %v1314, 1
        %vm1347 = vcmp.eq.s32.totalorder %v1315, 1
        %vm1348 = vcmp.eq.s32.totalorder %v1316, 1
        %vm1349 = vcmp.eq.s32.totalorder %v1317, 1
        %vm1350 = vcmp.eq.s32.totalorder %v1318, 1
        %vm1351 = vcmp.eq.s32.totalorder %v1319, 1
        %vm1352 = vcmp.eq.s32.totalorder %v1320, 1
        %vm1353 = vcmp.eq.s32.totalorder %v1321, 1
        %vm1354 = vcmp.eq.s32.totalorder %v1322, 1
        %vm1355 = vcmp.eq.s32.totalorder %v1323, 1
        %vm1356 = vcmp.eq.s32.totalorder %v1324, 1
        %vm1357 = vcmp.eq.s32.totalorder %v1325, 1
        %vm1358 = vcmp.eq.s32.totalorder %v1326, 1
        %vm1359 = vcmp.eq.s32.totalorder %v1327, 1
        %vm1360 = vcmp.eq.s32.totalorder %v1328, 1
        %vm1361 = vcmp.eq.s32.totalorder %v1329, 1
        %vm1362 = vcmp.eq.s32.totalorder %v1330, 1
        %vm1363 = vcmp.eq.s32.totalorder %v1331, 1
        %vm1364 = vcmp.eq.s32.totalorder %v1332, 1
        %v1365 = vsel %vm1333, %v1269, 0.0
        %v1366 = vsel %vm1334, %v1270, 0.0
        %v1367 = vsel %vm1335, %v1271, 0.0
        %v1368 = vsel %vm1336, %v1272, 0.0
        %v1369 = vsel %vm1337, %v1273, 0.0
        %v1370 = vsel %vm1338, %v1274, 0.0
        %v1371 = vsel %vm1339, %v1275, 0.0
        %v1372 = vsel %vm1340, %v1276, 0.0
        %v1373 = vsel %vm1341, %v1277, 0.0
        %v1374 = vsel %vm1342, %v1278, 0.0
        %v1375 = vsel %vm1343, %v1279, 0.0
        %v1376 = vsel %vm1344, %v1280, 0.0
        %v1377 = vsel %vm1345, %v1281, 0.0
        %v1378 = vsel %vm1346, %v1282, 0.0
        %v1379 = vsel %vm1347, %v1283, 0.0
        %v1380 = vsel %vm1348, %v1284, 0.0
        %v1381 = vsel %vm1349, %v1285, 0.0
        %v1382 = vsel %vm1350, %v1286, 0.0
        %v1383 = vsel %vm1351, %v1287, 0.0
        %v1384 = vsel %vm1352, %v1288, 0.0
        %v1385 = vsel %vm1353, %v1289, 0.0
        %v1386 = vsel %vm1354, %v1290, 0.0
        %v1387 = vsel %vm1355, %v1291, 0.0
        %v1388 = vsel %vm1356, %v1292, 0.0
        %v1389 = vsel %vm1357, %v1293, 0.0
        %v1390 = vsel %vm1358, %v1294, 0.0
        %v1391 = vsel %vm1359, %v1295, 0.0
        %v1392 = vsel %vm1360, %v1296, 0.0
        %v1393 = vsel %vm1361, %v1297, 0.0
        %v1394 = vsel %vm1362, %v1298, 0.0
        %v1395 = vsel %vm1363, %v1299, 0.0
        %v1396 = vsel %vm1364, %v1300, 0.0
        %v1397 = vpack.c.bf16 %v1366, %v1365
        %v1398 = vpack.c.bf16 %v1368, %v1367
        %v1399 = vpack.c.bf16 %v1370, %v1369
        %v1400 = vpack.c.bf16 %v1372, %v1371
        %v1401 = vpack.c.bf16 %v1374, %v1373
        %v1402 = vpack.c.bf16 %v1376, %v1375
        %v1403 = vpack.c.bf16 %v1378, %v1377
        %v1404 = vpack.c.bf16 %v1380, %v1379
        %v1405 = vpack.c.bf16 %v1382, %v1381
        %v1406 = vpack.c.bf16 %v1384, %v1383
        %v1407 = vpack.c.bf16 %v1386, %v1385
        %v1408 = vpack.c.bf16 %v1388, %v1387
        %v1409 = vpack.c.bf16 %v1390, %v1389
        %v1410 = vpack.c.bf16 %v1392, %v1391
        %v1411 = vpack.c.bf16 %v1394, %v1393
        %v1412 = vpack.c.bf16 %v1396, %v1395
        %v1413 = vunpack.c.l.bf16 %v1397
        %v1414 = vunpack.c.h.bf16 %v1397
        %v1415 = vunpack.c.l.bf16 %v1398
        %v1416 = vunpack.c.h.bf16 %v1398
        %v1417 = vunpack.c.l.bf16 %v1399
        %v1418 = vunpack.c.h.bf16 %v1399
        %v1419 = vunpack.c.l.bf16 %v1400
        %v1420 = vunpack.c.h.bf16 %v1400
        %v1421 = vunpack.c.l.bf16 %v1401
        %v1422 = vunpack.c.h.bf16 %v1401
        %v1423 = vunpack.c.l.bf16 %v1402
        %v1424 = vunpack.c.h.bf16 %v1402
        %v1425 = vunpack.c.l.bf16 %v1403
        %v1426 = vunpack.c.h.bf16 %v1403
        %v1427 = vunpack.c.l.bf16 %v1404
        %v1428 = vunpack.c.h.bf16 %v1404
        %v1429 = vunpack.c.l.bf16 %v1405
        %v1430 = vunpack.c.h.bf16 %v1405
        %v1431 = vunpack.c.l.bf16 %v1406
        %v1432 = vunpack.c.h.bf16 %v1406
        %v1433 = vunpack.c.l.bf16 %v1407
        %v1434 = vunpack.c.h.bf16 %v1407
        %v1435 = vunpack.c.l.bf16 %v1408
        %v1436 = vunpack.c.h.bf16 %v1408
        %v1437 = vunpack.c.l.bf16 %v1409
        %v1438 = vunpack.c.h.bf16 %v1409
        %v1439 = vunpack.c.l.bf16 %v1410
        %v1440 = vunpack.c.h.bf16 %v1410
        %v1441 = vunpack.c.l.bf16 %v1411
        %v1442 = vunpack.c.h.bf16 %v1411
        %v1443 = vunpack.c.l.bf16 %v1412
        %v1444 = vunpack.c.h.bf16 %v1412
        %v1445 = vsub.f32 %v1365, %v1413
        %v1446 = vsub.f32 %v1366, %v1414
        %v1447 = vsub.f32 %v1367, %v1415
        %v1448 = vsub.f32 %v1368, %v1416
        %v1449 = vsub.f32 %v1369, %v1417
        %v1450 = vsub.f32 %v1370, %v1418
        %v1451 = vsub.f32 %v1371, %v1419
        %v1452 = vsub.f32 %v1372, %v1420
        %v1453 = vsub.f32 %v1373, %v1421
        %v1454 = vsub.f32 %v1374, %v1422
        %v1455 = vsub.f32 %v1375, %v1423
        %v1456 = vsub.f32 %v1376, %v1424
        %v1457 = vsub.f32 %v1377, %v1425
        %v1458 = vsub.f32 %v1378, %v1426
        %v1459 = vsub.f32 %v1379, %v1427
        %v1460 = vsub.f32 %v1380, %v1428
        %v1461 = vsub.f32 %v1381, %v1429
        %v1462 = vsub.f32 %v1382, %v1430
        %v1463 = vsub.f32 %v1383, %v1431
        %v1464 = vsub.f32 %v1384, %v1432
        %v1465 = vsub.f32 %v1385, %v1433
        %v1466 = vsub.f32 %v1386, %v1434
        %v1467 = vsub.f32 %v1387, %v1435
        %v1468 = vsub.f32 %v1388, %v1436
        %v1469 = vsub.f32 %v1389, %v1437
        %v1470 = vsub.f32 %v1390, %v1438
        %v1471 = vsub.f32 %v1391, %v1439
        %v1472 = vsub.f32 %v1392, %v1440
        %v1473 = vsub.f32 %v1393, %v1441
        %v1474 = vsub.f32 %v1394, %v1442
        %v1475 = vsub.f32 %v1395, %v1443
        %v1476 = vsub.f32 %v1396, %v1444
        %v1477 = vpack.c.bf16 %v1446, %v1445
        %v1478 = vpack.c.bf16 %v1448, %v1447
        %v1479 = vpack.c.bf16 %v1450, %v1449
        %v1480 = vpack.c.bf16 %v1452, %v1451
        %v1481 = vpack.c.bf16 %v1454, %v1453
        %v1482 = vpack.c.bf16 %v1456, %v1455
        %v1483 = vpack.c.bf16 %v1458, %v1457
        %v1484 = vpack.c.bf16 %v1460, %v1459
        %v1485 = vpack.c.bf16 %v1462, %v1461
        %v1486 = vpack.c.bf16 %v1464, %v1463
        %v1487 = vpack.c.bf16 %v1466, %v1465
        %v1488 = vpack.c.bf16 %v1468, %v1467
        %v1489 = vpack.c.bf16 %v1470, %v1469
        %v1490 = vpack.c.bf16 %v1472, %v1471
        %v1491 = vpack.c.bf16 %v1474, %v1473
        %v1492 = vpack.c.bf16 %v1476, %v1475
        %v1493 = vld [vmem:[#allocation2 + $0x10f] sm:$0xff]
        %v1494 = vld [vmem:[#allocation2 + $0x117] sm:$0xff]
        %v1495 = vsel %vm981, %v919, 0.0
        %v1496 = vsel %vm982, %v920, 0.0
        %v1497 = vsel %vm983, %v921, 0.0
        %v1498 = vsel %vm984, %v922, 0.0
        %v1499 = vsel %vm985, %v923, 0.0
        %v1500 = vsel %vm986, %v924, 0.0
        %v1501 = vsel %vm987, %v925, 0.0
        %v1502 = vsel %vm988, %v926, 0.0
        %v1503 = vsel %vm989, %v927, 0.0
        %v1504 = vsel %vm990, %v928, 0.0
        %v1505 = vsel %vm991, %v929, 0.0
        %v1506 = vsel %vm992, %v930, 0.0
        %v1507 = vsel %vm993, %v931, 0.0
        %v1508 = vsel %vm994, %v932, 0.0
        %v1509 = vsel %vm995, %v933, 0.0
        %v1510 = vsel %vm996, %v934, 0.0
        %v1511 = vsel %vm997, %v935, 0.0
        %v1512 = vsel %vm998, %v936, 0.0
        %v1513 = vsel %vm999, %v937, 0.0
        %v1514 = vsel %vm1000, %v938, 0.0
        %v1515 = vsel %vm1001, %v939, 0.0
        %v1516 = vsel %vm1002, %v940, 0.0
        %v1517 = vsel %vm1003, %v941, 0.0
        %v1518 = vsel %vm1004, %v942, 0.0
        %v1519 = vsel %vm1005, %v943, 0.0
        %v1520 = vsel %vm1006, %v944, 0.0
        %v1521 = vsel %vm1007, %v945, 0.0
        %v1522 = vsel %vm1008, %v946, 0.0
        %v1523 = vsel %vm1009, %v947, 0.0
        %v1524 = vsel %vm1010, %v948, 0.0
        %v1525 = vsel %vm1011, %v1493, 0.0
        %v1526 = vsel %vm1012, %v1494, 0.0
        %v1527 = vpack.c.bf16 %v1496, %v1495
        %v1528 = vpack.c.bf16 %v1498, %v1497
        %v1529 = vpack.c.bf16 %v1500, %v1499
        %v1530 = vpack.c.bf16 %v1502, %v1501
        %v1531 = vpack.c.bf16 %v1504, %v1503
        %v1532 = vpack.c.bf16 %v1506, %v1505
        %v1533 = vpack.c.bf16 %v1508, %v1507
        %v1534 = vpack.c.bf16 %v1510, %v1509
        %v1535 = vpack.c.bf16 %v1512, %v1511
        %v1536 = vpack.c.bf16 %v1514, %v1513
        %v1537 = vpack.c.bf16 %v1516, %v1515
        %v1538 = vpack.c.bf16 %v1518, %v1517
        %v1539 = vpack.c.bf16 %v1520, %v1519
        %v1540 = vpack.c.bf16 %v1522, %v1521
        %v1541 = vpack.c.bf16 %v1524, %v1523
        %v1542 = vpack.c.bf16 %v1526, %v1525
        %v1543 = vunpack.c.l.bf16 %v1527
        %v1544 = vunpack.c.h.bf16 %v1527
        %v1545 = vunpack.c.l.bf16 %v1528
        %v1546 = vunpack.c.h.bf16 %v1528
        %v1547 = vunpack.c.l.bf16 %v1529
        %v1548 = vunpack.c.h.bf16 %v1529
        %v1549 = vunpack.c.l.bf16 %v1530
        %v1550 = vunpack.c.h.bf16 %v1530
        %v1551 = vunpack.c.l.bf16 %v1531
        %v1552 = vunpack.c.h.bf16 %v1531
        %v1553 = vunpack.c.l.bf16 %v1532
        %v1554 = vunpack.c.h.bf16 %v1532
        %v1555 = vunpack.c.l.bf16 %v1533
        %v1556 = vunpack.c.h.bf16 %v1533
        %v1557 = vunpack.c.l.bf16 %v1534
        %v1558 = vunpack.c.h.bf16 %v1534
        %v1559 = vunpack.c.l.bf16 %v1535
        %v1560 = vunpack.c.h.bf16 %v1535
        %v1561 = vunpack.c.l.bf16 %v1536
        %v1562 = vunpack.c.h.bf16 %v1536
        %v1563 = vunpack.c.l.bf16 %v1537
        %v1564 = vunpack.c.h.bf16 %v1537
        %v1565 = vunpack.c.l.bf16 %v1538
        %v1566 = vunpack.c.h.bf16 %v1538
        %v1567 = vunpack.c.l.bf16 %v1539
        %v1568 = vunpack.c.h.bf16 %v1539
        %v1569 = vunpack.c.l.bf16 %v1540
        %v1570 = vunpack.c.h.bf16 %v1540
        %v1571 = vunpack.c.l.bf16 %v1541
        %v1572 = vunpack.c.h.bf16 %v1541
        %v1573 = vunpack.c.l.bf16 %v1542
        %v1574 = vunpack.c.h.bf16 %v1542
        %v1575 = vsub.f32 %v1495, %v1543
        %v1576 = vsub.f32 %v1496, %v1544
        %v1577 = vsub.f32 %v1497, %v1545
        %v1578 = vsub.f32 %v1498, %v1546
        %v1579 = vsub.f32 %v1499, %v1547
        %v1580 = vsub.f32 %v1500, %v1548
        %v1581 = vsub.f32 %v1501, %v1549
        %v1582 = vsub.f32 %v1502, %v1550
        %v1583 = vsub.f32 %v1503, %v1551
        %v1584 = vsub.f32 %v1504, %v1552
        %v1585 = vsub.f32 %v1505, %v1553
        %v1586 = vsub.f32 %v1506, %v1554
        %v1587 = vsub.f32 %v1507, %v1555
        %v1588 = vsub.f32 %v1508, %v1556
        %v1589 = vsub.f32 %v1509, %v1557
        %v1590 = vsub.f32 %v1510, %v1558
        %v1591 = vsub.f32 %v1511, %v1559
        %v1592 = vsub.f32 %v1512, %v1560
        %v1593 = vsub.f32 %v1513, %v1561
        %v1594 = vsub.f32 %v1514, %v1562
        %v1595 = vsub.f32 %v1515, %v1563
        %v1596 = vsub.f32 %v1516, %v1564
        %v1597 = vsub.f32 %v1517, %v1565
        %v1598 = vsub.f32 %v1518, %v1566
        %v1599 = vsub.f32 %v1519, %v1567
        %v1600 = vsub.f32 %v1520, %v1568
        %v1601 = vsub.f32 %v1521, %v1569
        %v1602 = vsub.f32 %v1522, %v1570
        %v1603 = vsub.f32 %v1523, %v1571
        %v1604 = vsub.f32 %v1524, %v1572
        %v1605 = vsub.f32 %v1525, %v1573
        %v1606 = vsub.f32 %v1526, %v1574
        %v1607 = vpack.c.bf16 %v1576, %v1575
        %v1608 = vpack.c.bf16 %v1578, %v1577
        %v1609 = vpack.c.bf16 %v1580, %v1579
        %v1610 = vpack.c.bf16 %v1582, %v1581
        %v1611 = vpack.c.bf16 %v1584, %v1583
        %v1612 = vpack.c.bf16 %v1586, %v1585
        %v1613 = vpack.c.bf16 %v1588, %v1587
        %v1614 = vpack.c.bf16 %v1590, %v1589
        %v1615 = vpack.c.bf16 %v1592, %v1591
        %v1616 = vpack.c.bf16 %v1594, %v1593
        %v1617 = vpack.c.bf16 %v1596, %v1595
        %v1618 = vpack.c.bf16 %v1598, %v1597
        %v1619 = vpack.c.bf16 %v1600, %v1599
        %v1620 = vpack.c.bf16 %v1602, %v1601
        %v1621 = vpack.c.bf16 %v1604, %v1603
        %v1622 = vpack.c.bf16 %v1606, %v1605
        %v1623 = vld [vmem:[#allocation2 + $0x110] sm:$0xff]
        %v1624 = vld [vmem:[#allocation2 + $0x118] sm:$0xff]
        %v1625 = vpack.c.bf16 %v1624, %v1623
        %v1626 = vunpack.c.l.bf16 %v1625
        %v1627 = vunpack.c.h.bf16 %v1625
        %v1628 = vsub.f32 %v1623, %v1626
        %v1629 = vsub.f32 %v1624, %v1627
        %v1630 = vpack.c.bf16 %v1629, %v1628
        %v1631 = vld [vmem:[#allocation2 + $0x111] sm:$0xff]
        %v1632 = vld [vmem:[#allocation2 + $0x119] sm:$0xff]
        %v1633 = vsel %vm1333, %v1271, 0.0
        %v1634 = vsel %vm1334, %v1272, 0.0
        %v1635 = vsel %vm1335, %v1273, 0.0
        %v1636 = vsel %vm1336, %v1274, 0.0
        %v1637 = vsel %vm1337, %v1275, 0.0
        %v1638 = vsel %vm1338, %v1276, 0.0
        %v1639 = vsel %vm1339, %v1277, 0.0
        %v1640 = vsel %vm1340, %v1278, 0.0
        %v1641 = vsel %vm1341, %v1279, 0.0
        %v1642 = vsel %vm1342, %v1280, 0.0
        %v1643 = vsel %vm1343, %v1281, 0.0
        %v1644 = vsel %vm1344, %v1282, 0.0
        %v1645 = vsel %vm1345, %v1283, 0.0
        %v1646 = vsel %vm1346, %v1284, 0.0
        %v1647 = vsel %vm1347, %v1285, 0.0
        %v1648 = vsel %vm1348, %v1286, 0.0
        %v1649 = vsel %vm1349, %v1287, 0.0
        %v1650 = vsel %vm1350, %v1288, 0.0
        %v1651 = vsel %vm1351, %v1289, 0.0
        %v1652 = vsel %vm1352, %v1290, 0.0
        %v1653 = vsel %vm1353, %v1291, 0.0
        %v1654 = vsel %vm1354, %v1292, 0.0
        %v1655 = vsel %vm1355, %v1293, 0.0
        %v1656 = vsel %vm1356, %v1294, 0.0
        %v1657 = vsel %vm1357, %v1295, 0.0
        %v1658 = vsel %vm1358, %v1296, 0.0
        %v1659 = vsel %vm1359, %v1297, 0.0
        %v1660 = vsel %vm1360, %v1298, 0.0
        %v1661 = vsel %vm1361, %v1299, 0.0
        %v1662 = vsel %vm1362, %v1300, 0.0
        %v1663 = vsel %vm1363, %v1631, 0.0
        %v1664 = vsel %vm1364, %v1632, 0.0
        %v1665 = vpack.c.bf16 %v1634, %v1633
        %v1666 = vpack.c.bf16 %v1636, %v1635
        %v1667 = vpack.c.bf16 %v1638, %v1637
        %v1668 = vpack.c.bf16 %v1640, %v1639
        %v1669 = vpack.c.bf16 %v1642, %v1641
        %v1670 = vpack.c.bf16 %v1644, %v1643
        %v1671 = vpack.c.bf16 %v1646, %v1645
        %v1672 = vpack.c.bf16 %v1648, %v1647
        %v1673 = vpack.c.bf16 %v1650, %v1649
        %v1674 = vpack.c.bf16 %v1652, %v1651
        %v1675 = vpack.c.bf16 %v1654, %v1653
        %v1676 = vpack.c.bf16 %v1656, %v1655
        %v1677 = vpack.c.bf16 %v1658, %v1657
        %v1678 = vpack.c.bf16 %v1660, %v1659
        %v1679 = vpack.c.bf16 %v1662, %v1661
        %v1680 = vpack.c.bf16 %v1664, %v1663
        %v1681 = vunpack.c.l.bf16 %v1665
        %v1682 = vunpack.c.h.bf16 %v1665
        %v1683 = vunpack.c.l.bf16 %v1666
        %v1684 = vunpack.c.h.bf16 %v1666
        %v1685 = vunpack.c.l.bf16 %v1667
        %v1686 = vunpack.c.h.bf16 %v1667
        %v1687 = vunpack.c.l.bf16 %v1668
        %v1688 = vunpack.c.h.bf16 %v1668
        %v1689 = vunpack.c.l.bf16 %v1669
        %v1690 = vunpack.c.h.bf16 %v1669
        %v1691 = vunpack.c.l.bf16 %v1670
        %v1692 = vunpack.c.h.bf16 %v1670
        %v1693 = vunpack.c.l.bf16 %v1671
        %v1694 = vunpack.c.h.bf16 %v1671
        %v1695 = vunpack.c.l.bf16 %v1672
        %v1696 = vunpack.c.h.bf16 %v1672
        %v1697 = vunpack.c.l.bf16 %v1673
        %v1698 = vunpack.c.h.bf16 %v1673
        %v1699 = vunpack.c.l.bf16 %v1674
        %v1700 = vunpack.c.h.bf16 %v1674
        %v1701 = vunpack.c.l.bf16 %v1675
        %v1702 = vunpack.c.h.bf16 %v1675
        %v1703 = vunpack.c.l.bf16 %v1676
        %v1704 = vunpack.c.h.bf16 %v1676
        %v1705 = vunpack.c.l.bf16 %v1677
        %v1706 = vunpack.c.h.bf16 %v1677
        %v1707 = vunpack.c.l.bf16 %v1678
        %v1708 = vunpack.c.h.bf16 %v1678
        %v1709 = vunpack.c.l.bf16 %v1679
        %v1710 = vunpack.c.h.bf16 %v1679
        %v1711 = vunpack.c.l.bf16 %v1680
        %v1712 = vunpack.c.h.bf16 %v1680
        %v1713 = vsub.f32 %v1633, %v1681
        %v1714 = vsub.f32 %v1634, %v1682
        %v1715 = vsub.f32 %v1635, %v1683
        %v1716 = vsub.f32 %v1636, %v1684
        %v1717 = vsub.f32 %v1637, %v1685
        %v1718 = vsub.f32 %v1638, %v1686
        %v1719 = vsub.f32 %v1639, %v1687
        %v1720 = vsub.f32 %v1640, %v1688
        %v1721 = vsub.f32 %v1641, %v1689
        %v1722 = vsub.f32 %v1642, %v1690
        %v1723 = vsub.f32 %v1643, %v1691
        %v1724 = vsub.f32 %v1644, %v1692
        %v1725 = vsub.f32 %v1645, %v1693
        %v1726 = vsub.f32 %v1646, %v1694
        %v1727 = vsub.f32 %v1647, %v1695
        %v1728 = vsub.f32 %v1648, %v1696
        %v1729 = vsub.f32 %v1649, %v1697
        %v1730 = vsub.f32 %v1650, %v1698
        %v1731 = vsub.f32 %v1651, %v1699
        %v1732 = vsub.f32 %v1652, %v1700
        %v1733 = vsub.f32 %v1653, %v1701
        %v1734 = vsub.f32 %v1654, %v1702
        %v1735 = vsub.f32 %v1655, %v1703
        %v1736 = vsub.f32 %v1656, %v1704
        %v1737 = vsub.f32 %v1657, %v1705
        %v1738 = vsub.f32 %v1658, %v1706
        %v1739 = vsub.f32 %v1659, %v1707
        %v1740 = vsub.f32 %v1660, %v1708
        %v1741 = vsub.f32 %v1661, %v1709
        %v1742 = vsub.f32 %v1662, %v1710
        %v1743 = vsub.f32 %v1663, %v1711
        %v1744 = vsub.f32 %v1664, %v1712
        %v1745 = vpack.c.bf16 %v1714, %v1713
        %v1746 = vpack.c.bf16 %v1716, %v1715
        %v1747 = vpack.c.bf16 %v1718, %v1717
        %v1748 = vpack.c.bf16 %v1720, %v1719
        %v1749 = vpack.c.bf16 %v1722, %v1721
        %v1750 = vpack.c.bf16 %v1724, %v1723
        %v1751 = vpack.c.bf16 %v1726, %v1725
        %v1752 = vpack.c.bf16 %v1728, %v1727
        %v1753 = vpack.c.bf16 %v1730, %v1729
        %v1754 = vpack.c.bf16 %v1732, %v1731
        %v1755 = vpack.c.bf16 %v1734, %v1733
        %v1756 = vpack.c.bf16 %v1736, %v1735
        %v1757 = vpack.c.bf16 %v1738, %v1737
        %v1758 = vpack.c.bf16 %v1740, %v1739
        %v1759 = vpack.c.bf16 %v1742, %v1741
        %v1760 = vpack.c.bf16 %v1744, %v1743
        %v1761 = vld [vmem:[#allocation2 + $0x11f] sm:$0xff]
        %v1762 = vld [vmem:[#allocation2 + $0x127] sm:$0xff]
        %v1763 = vsel %vm981, %v921, 0.0
        %v1764 = vsel %vm982, %v922, 0.0
        %v1765 = vsel %vm983, %v923, 0.0
        %v1766 = vsel %vm984, %v924, 0.0
        %v1767 = vsel %vm985, %v925, 0.0
        %v1768 = vsel %vm986, %v926, 0.0
        %v1769 = vsel %vm987, %v927, 0.0
        %v1770 = vsel %vm988, %v928, 0.0
        %v1771 = vsel %vm989, %v929, 0.0
        %v1772 = vsel %vm990, %v930, 0.0
        %v1773 = vsel %vm991, %v931, 0.0
        %v1774 = vsel %vm992, %v932, 0.0
        %v1775 = vsel %vm993, %v933, 0.0
        %v1776 = vsel %vm994, %v934, 0.0
        %v1777 = vsel %vm995, %v935, 0.0
        %v1778 = vsel %vm996, %v936, 0.0
        %v1779 = vsel %vm997, %v937, 0.0
        %v1780 = vsel %vm998, %v938, 0.0
        %v1781 = vsel %vm999, %v939, 0.0
        %v1782 = vsel %vm1000, %v940, 0.0
        %v1783 = vsel %vm1001, %v941, 0.0
        %v1784 = vsel %vm1002, %v942, 0.0
        %v1785 = vsel %vm1003, %v943, 0.0
        %v1786 = vsel %vm1004, %v944, 0.0
        %v1787 = vsel %vm1005, %v945, 0.0
        %v1788 = vsel %vm1006, %v946, 0.0
        %v1789 = vsel %vm1007, %v947, 0.0
        %v1790 = vsel %vm1008, %v948, 0.0
        %v1791 = vsel %vm1009, %v1493, 0.0
        %v1792 = vsel %vm1010, %v1494, 0.0
        %v1793 = vsel %vm1011, %v1761, 0.0
        %v1794 = vsel %vm1012, %v1762, 0.0
        %v1795 = vpack.c.bf16 %v1764, %v1763
        %v1796 = vpack.c.bf16 %v1766, %v1765
        %v1797 = vpack.c.bf16 %v1768, %v1767
        %v1798 = vpack.c.bf16 %v1770, %v1769
        %v1799 = vpack.c.bf16 %v1772, %v1771
        %v1800 = vpack.c.bf16 %v1774, %v1773
        %v1801 = vpack.c.bf16 %v1776, %v1775
        %v1802 = vpack.c.bf16 %v1778, %v1777
        %v1803 = vpack.c.bf16 %v1780, %v1779
        %v1804 = vpack.c.bf16 %v1782, %v1781
        %v1805 = vpack.c.bf16 %v1784, %v1783
        %v1806 = vpack.c.bf16 %v1786, %v1785
        %v1807 = vpack.c.bf16 %v1788, %v1787
        %v1808 = vpack.c.bf16 %v1790, %v1789
        %v1809 = vpack.c.bf16 %v1792, %v1791
        %v1810 = vpack.c.bf16 %v1794, %v1793
        %v1811 = vunpack.c.l.bf16 %v1795
        %v1812 = vunpack.c.h.bf16 %v1795
        %v1813 = vunpack.c.l.bf16 %v1796
        %v1814 = vunpack.c.h.bf16 %v1796
        %v1815 = vunpack.c.l.bf16 %v1797
        %v1816 = vunpack.c.h.bf16 %v1797
        %v1817 = vunpack.c.l.bf16 %v1798
        %v1818 = vunpack.c.h.bf16 %v1798
        %v1819 = vunpack.c.l.bf16 %v1799
        %v1820 = vunpack.c.h.bf16 %v1799
        %v1821 = vunpack.c.l.bf16 %v1800
        %v1822 = vunpack.c.h.bf16 %v1800
        %v1823 = vunpack.c.l.bf16 %v1801
        %v1824 = vunpack.c.h.bf16 %v1801
        %v1825 = vunpack.c.l.bf16 %v1802
        %v1826 = vunpack.c.h.bf16 %v1802
        %v1827 = vunpack.c.l.bf16 %v1803
        %v1828 = vunpack.c.h.bf16 %v1803
        %v1829 = vunpack.c.l.bf16 %v1804
        %v1830 = vunpack.c.h.bf16 %v1804
        %v1831 = vunpack.c.l.bf16 %v1805
        %v1832 = vunpack.c.h.bf16 %v1805
        %v1833 = vunpack.c.l.bf16 %v1806
        %v1834 = vunpack.c.h.bf16 %v1806
        %v1835 = vunpack.c.l.bf16 %v1807
        %v1836 = vunpack.c.h.bf16 %v1807
        %v1837 = vunpack.c.l.bf16 %v1808
        %v1838 = vunpack.c.h.bf16 %v1808
        %v1839 = vunpack.c.l.bf16 %v1809
        %v1840 = vunpack.c.h.bf16 %v1809
        %v1841 = vunpack.c.l.bf16 %v1810
        %v1842 = vunpack.c.h.bf16 %v1810
        %v1843 = vsub.f32 %v1763, %v1811
        %v1844 = vsub.f32 %v1764, %v1812
        %v1845 = vsub.f32 %v1765, %v1813
        %v1846 = vsub.f32 %v1766, %v1814
        %v1847 = vsub.f32 %v1767, %v1815
        %v1848 = vsub.f32 %v1768, %v1816
        %v1849 = vsub.f32 %v1769, %v1817
        %v1850 = vsub.f32 %v1770, %v1818
        %v1851 = vsub.f32 %v1771, %v1819
        %v1852 = vsub.f32 %v1772, %v1820
        %v1853 = vsub.f32 %v1773, %v1821
        %v1854 = vsub.f32 %v1774, %v1822
        %v1855 = vsub.f32 %v1775, %v1823
        %v1856 = vsub.f32 %v1776, %v1824
        %v1857 = vsub.f32 %v1777, %v1825
        %v1858 = vsub.f32 %v1778, %v1826
        %v1859 = vsub.f32 %v1779, %v1827
        %v1860 = vsub.f32 %v1780, %v1828
        %v1861 = vsub.f32 %v1781, %v1829
        %v1862 = vsub.f32 %v1782, %v1830
        %v1863 = vsub.f32 %v1783, %v1831
        %v1864 = vsub.f32 %v1784, %v1832
        %v1865 = vsub.f32 %v1785, %v1833
        %v1866 = vsub.f32 %v1786, %v1834
        %v1867 = vsub.f32 %v1787, %v1835
        %v1868 = vsub.f32 %v1788, %v1836
        %v1869 = vsub.f32 %v1789, %v1837
        %v1870 = vsub.f32 %v1790, %v1838
        %v1871 = vsub.f32 %v1791, %v1839
        %v1872 = vsub.f32 %v1792, %v1840
        %v1873 = vsub.f32 %v1793, %v1841
        %v1874 = vsub.f32 %v1794, %v1842
        %v1875 = vpack.c.bf16 %v1844, %v1843
        %v1876 = vpack.c.bf16 %v1846, %v1845
        %v1877 = vpack.c.bf16 %v1848, %v1847
        %v1878 = vpack.c.bf16 %v1850, %v1849
        %v1879 = vpack.c.bf16 %v1852, %v1851
        %v1880 = vpack.c.bf16 %v1854, %v1853
        %v1881 = vpack.c.bf16 %v1856, %v1855
        %v1882 = vpack.c.bf16 %v1858, %v1857
        %v1883 = vpack.c.bf16 %v1860, %v1859
        %v1884 = vpack.c.bf16 %v1862, %v1861
        %v1885 = vpack.c.bf16 %v1864, %v1863
        %v1886 = vpack.c.bf16 %v1866, %v1865
        %v1887 = vpack.c.bf16 %v1868, %v1867
        %v1888 = vpack.c.bf16 %v1870, %v1869
        %v1889 = vpack.c.bf16 %v1872, %v1871
        %v1890 = vpack.c.bf16 %v1874, %v1873
        %v1891 = vld [vmem:[#allocation2 + $0x120] sm:$0xff]
        %v1892 = vld [vmem:[#allocation2 + $0x128] sm:$0xff]
        %v1893 = vpack.c.bf16 %v1892, %v1891
        %v1894 = vunpack.c.l.bf16 %v1893
        %v1895 = vunpack.c.h.bf16 %v1893
        %v1896 = vsub.f32 %v1891, %v1894
        %v1897 = vsub.f32 %v1892, %v1895
        %v1898 = vpack.c.bf16 %v1897, %v1896
        %v1899 = vld [vmem:[#allocation2 + $0x121] sm:$0xff]
        %v1900 = vld [vmem:[#allocation2 + $0x129] sm:$0xff]
        %v1901 = vsel %vm1333, %v1273, 0.0
        %v1902 = vsel %vm1334, %v1274, 0.0
        %v1903 = vsel %vm1335, %v1275, 0.0
        %v1904 = vsel %vm1336, %v1276, 0.0
        %v1905 = vsel %vm1337, %v1277, 0.0
        %v1906 = vsel %vm1338, %v1278, 0.0
        %v1907 = vsel %vm1339, %v1279, 0.0
        %v1908 = vsel %vm1340, %v1280, 0.0
        %v1909 = vsel %vm1341, %v1281, 0.0
        %v1910 = vsel %vm1342, %v1282, 0.0
        %v1911 = vsel %vm1343, %v1283, 0.0
        %v1912 = vsel %vm1344, %v1284, 0.0
        %v1913 = vsel %vm1345, %v1285, 0.0
        %v1914 = vsel %vm1346, %v1286, 0.0
        %v1915 = vsel %vm1347, %v1287, 0.0
        %v1916 = vsel %vm1348, %v1288, 0.0
        %v1917 = vsel %vm1349, %v1289, 0.0
        %v1918 = vsel %vm1350, %v1290, 0.0
        %v1919 = vsel %vm1351, %v1291, 0.0
        %v1920 = vsel %vm1352, %v1292, 0.0
        %v1921 = vsel %vm1353, %v1293, 0.0
        %v1922 = vsel %vm1354, %v1294, 0.0
        %v1923 = vsel %vm1355, %v1295, 0.0
        %v1924 = vsel %vm1356, %v1296, 0.0
        %v1925 = vsel %vm1357, %v1297, 0.0
        %v1926 = vsel %vm1358, %v1298, 0.0
        %v1927 = vsel %vm1359, %v1299, 0.0
        %v1928 = vsel %vm1360, %v1300, 0.0
        %v1929 = vsel %vm1361, %v1631, 0.0
        %v1930 = vsel %vm1362, %v1632, 0.0
        %v1931 = vsel %vm1363, %v1899, 0.0
        %v1932 = vsel %vm1364, %v1900, 0.0
        %v1933 = vpack.c.bf16 %v1902, %v1901
        %v1934 = vpack.c.bf16 %v1904, %v1903
        %v1935 = vpack.c.bf16 %v1906, %v1905
        %v1936 = vpack.c.bf16 %v1908, %v1907
        %v1937 = vpack.c.bf16 %v1910, %v1909
        %v1938 = vpack.c.bf16 %v1912, %v1911
        %v1939 = vpack.c.bf16 %v1914, %v1913
        %v1940 = vpack.c.bf16 %v1916, %v1915
        %v1941 = vpack.c.bf16 %v1918, %v1917
        %v1942 = vpack.c.bf16 %v1920, %v1919
        %v1943 = vpack.c.bf16 %v1922, %v1921
        %v1944 = vpack.c.bf16 %v1924, %v1923
        %v1945 = vpack.c.bf16 %v1926, %v1925
        %v1946 = vpack.c.bf16 %v1928, %v1927
        %v1947 = vpack.c.bf16 %v1930, %v1929
        %v1948 = vpack.c.bf16 %v1932, %v1931
        %v1949 = vunpack.c.l.bf16 %v1933
        %v1950 = vunpack.c.h.bf16 %v1933
        %v1951 = vunpack.c.l.bf16 %v1934
        %v1952 = vunpack.c.h.bf16 %v1934
        %v1953 = vunpack.c.l.bf16 %v1935
        %v1954 = vunpack.c.h.bf16 %v1935
        %v1955 = vunpack.c.l.bf16 %v1936
        %v1956 = vunpack.c.h.bf16 %v1936
        %v1957 = vunpack.c.l.bf16 %v1937
        %v1958 = vunpack.c.h.bf16 %v1937
        %v1959 = vunpack.c.l.bf16 %v1938
        %v1960 = vunpack.c.h.bf16 %v1938
        %v1961 = vunpack.c.l.bf16 %v1939
        %v1962 = vunpack.c.h.bf16 %v1939
        %v1963 = vunpack.c.l.bf16 %v1940
        %v1964 = vunpack.c.h.bf16 %v1940
        %v1965 = vunpack.c.l.bf16 %v1941
        %v1966 = vunpack.c.h.bf16 %v1941
        %v1967 = vunpack.c.l.bf16 %v1942
        %v1968 = vunpack.c.h.bf16 %v1942
        %v1969 = vunpack.c.l.bf16 %v1943
        %v1970 = vunpack.c.h.bf16 %v1943
        %v1971 = vunpack.c.l.bf16 %v1944
        %v1972 = vunpack.c.h.bf16 %v1944
        %v1973 = vunpack.c.l.bf16 %v1945
        %v1974 = vunpack.c.h.bf16 %v1945
        %v1975 = vunpack.c.l.bf16 %v1946
        %v1976 = vunpack.c.h.bf16 %v1946
        %v1977 = vunpack.c.l.bf16 %v1947
        %v1978 = vunpack.c.h.bf16 %v1947
        %v1979 = vunpack.c.l.bf16 %v1948
        %v1980 = vunpack.c.h.bf16 %v1948
        %v1981 = vsub.f32 %v1901, %v1949
        %v1982 = vsub.f32 %v1902, %v1950
        %v1983 = vsub.f32 %v1903, %v1951
        %v1984 = vsub.f32 %v1904, %v1952
        %v1985 = vsub.f32 %v1905, %v1953
        %v1986 = vsub.f32 %v1906, %v1954
        %v1987 = vsub.f32 %v1907, %v1955
        %v1988 = vsub.f32 %v1908, %v1956
        %v1989 = vsub.f32 %v1909, %v1957
        %v1990 = vsub.f32 %v1910, %v1958
        %v1991 = vsub.f32 %v1911, %v1959
        %v1992 = vsub.f32 %v1912, %v1960
        %v1993 = vsub.f32 %v1913, %v1961
        %v1994 = vsub.f32 %v1914, %v1962
        %v1995 = vsub.f32 %v1915, %v1963
        %v1996 = vsub.f32 %v1916, %v1964
        %v1997 = vsub.f32 %v1917, %v1965
        %v1998 = vsub.f32 %v1918, %v1966
        %v1999 = vsub.f32 %v1919, %v1967
        %v2000 = vsub.f32 %v1920, %v1968
        %v2001 = vsub.f32 %v1921, %v1969
        %v2002 = vsub.f32 %v1922, %v1970
        %v2003 = vsub.f32 %v1923, %v1971
        %v2004 = vsub.f32 %v1924, %v1972
        %v2005 = vsub.f32 %v1925, %v1973
        %v2006 = vsub.f32 %v1926, %v1974
        %v2007 = vsub.f32 %v1927, %v1975
        %v2008 = vsub.f32 %v1928, %v1976
        %v2009 = vsub.f32 %v1929, %v1977
        %v2010 = vsub.f32 %v1930, %v1978
        %v2011 = vsub.f32 %v1931, %v1979
        %v2012 = vsub.f32 %v1932, %v1980
        %v2013 = vpack.c.bf16 %v1982, %v1981
        %v2014 = vpack.c.bf16 %v1984, %v1983
        %v2015 = vpack.c.bf16 %v1986, %v1985
        %v2016 = vpack.c.bf16 %v1988, %v1987
        %v2017 = vpack.c.bf16 %v1990, %v1989
        %v2018 = vpack.c.bf16 %v1992, %v1991
        %v2019 = vpack.c.bf16 %v1994, %v1993
        %v2020 = vpack.c.bf16 %v1996, %v1995
        %v2021 = vpack.c.bf16 %v1998, %v1997
        %v2022 = vpack.c.bf16 %v2000, %v1999
        %v2023 = vpack.c.bf16 %v2002, %v2001
        %v2024 = vpack.c.bf16 %v2004, %v2003
        %v2025 = vpack.c.bf16 %v2006, %v2005
        %v2026 = vpack.c.bf16 %v2008, %v2007
        %v2027 = vpack.c.bf16 %v2010, %v2009
        %v2028 = vpack.c.bf16 %v2012, %v2011
        %v2029 = vld [vmem:[#allocation7] sm:$0xf]
        %v2030 = vld [vmem:[#allocation7 + $0x4] sm:$0xf]
        %v2031 = vld [vmem:[#allocation7 + $0x8] sm:$0xf]
        %v2032 = vld [vmem:[#allocation7 + $0xc] sm:$0xf]
        %v2033 = vld [vmem:[#allocation7 + $0x10] sm:$0xf]
        %v2034 = vld [vmem:[#allocation7 + $0x14] sm:$0xf]
        %v2035 = vld [vmem:[#allocation7 + $0x18] sm:$0xf]
        %v2036 = vld [vmem:[#allocation7 + $0x1c] sm:$0xf]
        %v2037 = vld [vmem:[#allocation7 + $0x20] sm:$0xf]
        %v2038 = vld [vmem:[#allocation7 + $0x24] sm:$0xf]
        %v2039 = vld [vmem:[#allocation7 + $0x28] sm:$0xf]
        %v2040 = vld [vmem:[#allocation7 + $0x2c] sm:$0xf]
        %v2041 = vld [vmem:[#allocation7 + $0x30] sm:$0xf]
        %v2042 = vld [vmem:[#allocation7 + $0x34] sm:$0xf]
        %v2043 = vld [vmem:[#allocation7 + $0x38] sm:$0xf]
        %v2044 = vld [vmem:[#allocation7 + $0x3c] sm:$0xf]
        %v2045 = vld [vmem:[#allocation7 + $0x40] sm:$0xf]
        %v2046 = vld [vmem:[#allocation7 + $0x44] sm:$0xf]
        %v2047 = vld [vmem:[#allocation7 + $0x48] sm:$0xf]
        %v2048 = vld [vmem:[#allocation7 + $0x4c] sm:$0xf]
        %v2049 = vld [vmem:[#allocation7 + $0x50] sm:$0xf]
        %v2050 = vld [vmem:[#allocation7 + $0x54] sm:$0xf]
        %v2051 = vld [vmem:[#allocation7 + $0x58] sm:$0xf]
        %v2052 = vld [vmem:[#allocation7 + $0x5c] sm:$0xf]
        %v2053 = vld [vmem:[#allocation7 + $0x60] sm:$0xf]
        %v2054 = vld [vmem:[#allocation7 + $0x64] sm:$0xf]
        %v2055 = vld [vmem:[#allocation7 + $0x68] sm:$0xf]
        %v2056 = vld [vmem:[#allocation7 + $0x6c] sm:$0xf]
        %v2057 = vld [vmem:[#allocation7 + $0x70] sm:$0xf]
        %v2058 = vld [vmem:[#allocation7 + $0x74] sm:$0xf]
        %v2059 = vld [vmem:[#allocation7 + $0x78] sm:$0xf]
        %v2060 = vld [vmem:[#allocation7 + $0x7c] sm:$0xf]
        %v2061 = vld [vmem:[#allocation7 + $0x80] sm:$0xf]
        %v2062 = vld [vmem:[#allocation7 + $0x84] sm:$0xf]
        %v2063 = vld [vmem:[#allocation7 + $0x88] sm:$0xf]
        %v2064 = vld [vmem:[#allocation7 + $0x8c] sm:$0xf]
        %v2065 = vld [vmem:[#allocation7 + $0x90] sm:$0xf]
        %v2066 = vld [vmem:[#allocation7 + $0x94] sm:$0xf]
        %v2067 = vld [vmem:[#allocation7 + $0x98] sm:$0xf]
        %v2068 = vld [vmem:[#allocation7 + $0x9c] sm:$0xf]
        %v2069 = vld [vmem:[#allocation7 + $0xa0] sm:$0xf]
        %v2070 = vld [vmem:[#allocation7 + $0xa4] sm:$0xf]
        %v2071 = vld [vmem:[#allocation7 + $0xa8] sm:$0xf]
        %v2072 = vld [vmem:[#allocation7 + $0xac] sm:$0xf]
        %v2073 = vld [vmem:[#allocation7 + $0xb0] sm:$0xf]
        %v2074 = vld [vmem:[#allocation7 + $0xb4] sm:$0xf]
        %v2075 = vld [vmem:[#allocation7 + $0xb8] sm:$0xf]
        %v2076 = vld [vmem:[#allocation7 + $0xbc] sm:$0xf]
        %v2077 = vld [vmem:[#allocation7 + $0xc0] sm:$0xf]
        %v2078 = vld [vmem:[#allocation7 + $0xc4] sm:$0xf]
        %v2079 = vld [vmem:[#allocation7 + $0xc8] sm:$0xf]
        %v2080 = vld [vmem:[#allocation7 + $0xcc] sm:$0xf]
        %v2081 = vld [vmem:[#allocation7 + $0xd0] sm:$0xf]
        %v2082 = vld [vmem:[#allocation7 + $0xd4] sm:$0xf]
        %v2083 = vld [vmem:[#allocation7 + $0xd8] sm:$0xf]
        %v2084 = vld [vmem:[#allocation7 + $0xdc] sm:$0xf]
        %v2085 = vld [vmem:[#allocation7 + $0xe0] sm:$0xf]
        %v2086 = vld [vmem:[#allocation7 + $0xe4] sm:$0xf]
        %v2087 = vld [vmem:[#allocation7 + $0xe8] sm:$0xf]
        %v2088 = vld [vmem:[#allocation7 + $0xec] sm:$0xf]
        %v2089 = vld [vmem:[#allocation7 + $0xf0] sm:$0xf]
        %v2090 = vld [vmem:[#allocation7 + $0xf4] sm:$0xf]
        %v2091 = vld [vmem:[#allocation7 + $0xf8] sm:$0xf]
        %v2092 = vld [vmem:[#allocation7 + $0xfc] sm:$0xf]
        %v2093 = vld [vmem:[#allocation7 + $0x100] sm:$0xf]
        %v2094 = vld [vmem:[#allocation7 + $0x104] sm:$0xf]
        %v2095 = vld [vmem:[#allocation7 + $0x108] sm:$0xf]
        %v2096 = vld [vmem:[#allocation7 + $0x10c] sm:$0xf]
        %v2097 = vld [vmem:[#allocation7 + $0x110] sm:$0xf]
        %v2098 = vld [vmem:[#allocation7 + $0x114] sm:$0xf]
        %v2099 = vld [vmem:[#allocation7 + $0x118] sm:$0xf]
        %v2100 = vld [vmem:[#allocation7 + $0x11c] sm:$0xf]
        %v2101 = vld [vmem:[#allocation7 + $0x120] sm:$0xf]
        %v2102 = vld [vmem:[#allocation7 + $0x124] sm:$0xf]
        %v2103 = vld [vmem:[#allocation7 + $0x128] sm:$0xf]
        %v2104 = vld [vmem:[#allocation7 + $0x12c] sm:$0xf]
        %v2105 = vld [vmem:[#allocation7 + $0x130] sm:$0xf]
        %v2106 = vld [vmem:[#allocation7 + $0x134] sm:$0xf]
        %v2107 = vld [vmem:[#allocation7 + $0x138] sm:$0xf]
        %v2108 = vld [vmem:[#allocation7 + $0x13c] sm:$0xf]
        %v2109 = vld [vmem:[#allocation7 + $0x140] sm:$0xf]
        %v2110 = vld [vmem:[#allocation7 + $0x144] sm:$0xf]
        %v2111 = vld [vmem:[#allocation7 + $0x148] sm:$0xf]
        %v2112 = vld [vmem:[#allocation7 + $0x14c] sm:$0xf]
        %v2113 = vld [vmem:[#allocation7 + $0x150] sm:$0xf]
        %v2114 = vld [vmem:[#allocation7 + $0x154] sm:$0xf]
        %v2115 = vld [vmem:[#allocation7 + $0x158] sm:$0xf]
        %v2116 = vld [vmem:[#allocation7 + $0x15c] sm:$0xf]
        %v2117 = vld [vmem:[#allocation7 + $0x160] sm:$0xf]
        %v2118 = vld [vmem:[#allocation7 + $0x164] sm:$0xf]
        %v2119 = vld [vmem:[#allocation7 + $0x168] sm:$0xf]
        %v2120 = vld [vmem:[#allocation7 + $0x16c] sm:$0xf]
        %v2121 = vld [vmem:[#allocation7 + $0x170] sm:$0xf]
        %v2122 = vld [vmem:[#allocation7 + $0x174] sm:$0xf]
        %v2123 = vld [vmem:[#allocation7 + $0x178] sm:$0xf]
        %v2124 = vld [vmem:[#allocation7 + $0x17c] sm:$0xf]
        %v2125 = vld [vmem:[#allocation7 + $0x180] sm:$0xf]
        %v2126 = vld [vmem:[#allocation7 + $0x184] sm:$0xf]
        %v2127 = vld [vmem:[#allocation7 + $0x188] sm:$0xf]
        %v2128 = vld [vmem:[#allocation7 + $0x18c] sm:$0xf]
        %v2129 = vld [vmem:[#allocation7 + $0x190] sm:$0xf]
        %v2130 = vld [vmem:[#allocation7 + $0x194] sm:$0xf]
        %v2131 = vld [vmem:[#allocation7 + $0x198] sm:$0xf]
        %v2132 = vld [vmem:[#allocation7 + $0x19c] sm:$0xf]
        %v2133 = vld [vmem:[#allocation7 + $0x1a0] sm:$0xf]
        %v2134 = vld [vmem:[#allocation7 + $0x1a4] sm:$0xf]
        %v2135 = vld [vmem:[#allocation7 + $0x1a8] sm:$0xf]
        %v2136 = vld [vmem:[#allocation7 + $0x1ac] sm:$0xf]
        %v2137 = vld [vmem:[#allocation7 + $0x1b0] sm:$0xf]
        %v2138 = vld [vmem:[#allocation7 + $0x1b4] sm:$0xf]
        %v2139 = vld [vmem:[#allocation7 + $0x1b8] sm:$0xf]
        %v2140 = vld [vmem:[#allocation7 + $0x1bc] sm:$0xf]
        %v2141 = vld [vmem:[#allocation7 + $0x1c0] sm:$0xf]
        %v2142 = vld [vmem:[#allocation7 + $0x1c4] sm:$0xf]
        %v2143 = vld [vmem:[#allocation7 + $0x1c8] sm:$0xf]
        %v2144 = vld [vmem:[#allocation7 + $0x1cc] sm:$0xf]
        %v2145 = vld [vmem:[#allocation7 + $0x1d0] sm:$0xf]
        %v2146 = vld [vmem:[#allocation7 + $0x1d4] sm:$0xf]
        %v2147 = vld [vmem:[#allocation7 + $0x1d8] sm:$0xf]
        %v2148 = vld [vmem:[#allocation7 + $0x1dc] sm:$0xf]
        %v2149 = vld [vmem:[#allocation7 + $0x1e0] sm:$0xf]
        %v2150 = vld [vmem:[#allocation7 + $0x1e4] sm:$0xf]
        %v2151 = vld [vmem:[#allocation7 + $0x1e8] sm:$0xf]
        %v2152 = vld [vmem:[#allocation7 + $0x1ec] sm:$0xf]
        %v2153 = vld [vmem:[#allocation7 + $0x1f0] sm:$0xf]
        %v2154 = vld [vmem:[#allocation7 + $0x1f4] sm:$0xf]
        %v2155 = vld [vmem:[#allocation7 + $0x1f8] sm:$0xf]
        %v2156 = vld [vmem:[#allocation7 + $0x1fc] sm:$0xf]
        %v2157 = vld [vmem:[#allocation7 + $0x200] sm:$0xf]
        %v2158 = vld [vmem:[#allocation7 + $0x204] sm:$0xf]
        %v2159 = vld [vmem:[#allocation7 + $0x208] sm:$0xf]
        %v2160 = vld [vmem:[#allocation7 + $0x20c] sm:$0xf]
        %v2161 = vld [vmem:[#allocation7 + $0x210] sm:$0xf]
        %v2162 = vld [vmem:[#allocation7 + $0x214] sm:$0xf]
        %v2163 = vld [vmem:[#allocation7 + $0x218] sm:$0xf]
        %v2164 = vld [vmem:[#allocation7 + $0x21c] sm:$0xf]
        %v2165 = vld [vmem:[#allocation7 + $0x220] sm:$0xf]
        %v2166 = vld [vmem:[#allocation7 + $0x224] sm:$0xf]
        %v2167 = vld [vmem:[#allocation7 + $0x228] sm:$0xf]
        %v2168 = vld [vmem:[#allocation7 + $0x22c] sm:$0xf]
        %v2169 = vld [vmem:[#allocation7 + $0x230] sm:$0xf]
        %v2170 = vld [vmem:[#allocation7 + $0x234] sm:$0xf]
        %v2171 = vld [vmem:[#allocation7 + $0x238] sm:$0xf]
        %v2172 = vld [vmem:[#allocation7 + $0x23c] sm:$0xf]
        %v2173 = vld [vmem:[#allocation9] sm:$0xf]
        %v2174 = vld [vmem:[#allocation9 + $0x4] sm:$0xf]
        %v2175 = vld [vmem:[#allocation9 + $0x8] sm:$0xf]
        %v2176 = vld [vmem:[#allocation9 + $0xc] sm:$0xf]
        %v2177 = vld [vmem:[#allocation9 + $0x10] sm:$0xf]
        %v2178 = vld [vmem:[#allocation9 + $0x14] sm:$0xf]
        %v2179 = vld [vmem:[#allocation9 + $0x18] sm:$0xf]
        %v2180 = vld [vmem:[#allocation9 + $0x1c] sm:$0xf]
        %v2181 = vld [vmem:[#allocation9 + $0x20] sm:$0xf]
        %v2182 = vld [vmem:[#allocation9 + $0x24] sm:$0xf]
        %v2183 = vld [vmem:[#allocation9 + $0x28] sm:$0xf]
        %v2184 = vld [vmem:[#allocation9 + $0x2c] sm:$0xf]
        %v2185 = vld [vmem:[#allocation9 + $0x30] sm:$0xf]
        %v2186 = vld [vmem:[#allocation9 + $0x34] sm:$0xf]
        %v2187 = vld [vmem:[#allocation9 + $0x38] sm:$0xf]
        %v2188 = vld [vmem:[#allocation9 + $0x3c] sm:$0xf]
        %v2189 = vld [vmem:[#allocation9 + $0x40] sm:$0xf]
        %v2190 = vld [vmem:[#allocation9 + $0x44] sm:$0xf]
        %v2191 = vld [vmem:[#allocation9 + $0x48] sm:$0xf]
        %v2192 = vld [vmem:[#allocation9 + $0x4c] sm:$0xf]
        %v2193 = vld [vmem:[#allocation9 + $0x50] sm:$0xf]
        %v2194 = vld [vmem:[#allocation9 + $0x54] sm:$0xf]
        %v2195 = vld [vmem:[#allocation9 + $0x58] sm:$0xf]
        %v2196 = vld [vmem:[#allocation9 + $0x5c] sm:$0xf]
        %v2197 = vld [vmem:[#allocation9 + $0x60] sm:$0xf]
        %v2198 = vld [vmem:[#allocation9 + $0x64] sm:$0xf]
        %v2199 = vld [vmem:[#allocation9 + $0x68] sm:$0xf]
        %v2200 = vld [vmem:[#allocation9 + $0x6c] sm:$0xf]
        %v2201 = vld [vmem:[#allocation9 + $0x70] sm:$0xf]
        %v2202 = vld [vmem:[#allocation9 + $0x74] sm:$0xf]
        %v2203 = vld [vmem:[#allocation9 + $0x78] sm:$0xf]
        %v2204 = vld [vmem:[#allocation9 + $0x7c] sm:$0xf]
        %v2205 = vld [vmem:[#allocation9 + $0x80] sm:$0xf]
        %v2206 = vld [vmem:[#allocation9 + $0x84] sm:$0xf]
        %v2207 = vld [vmem:[#allocation9 + $0x88] sm:$0xf]
        %v2208 = vld [vmem:[#allocation9 + $0x8c] sm:$0xf]
        %v2209 = vld [vmem:[#allocation9 + $0x90] sm:$0xf]
        %v2210 = vld [vmem:[#allocation9 + $0x94] sm:$0xf]
        %v2211 = vld [vmem:[#allocation9 + $0x98] sm:$0xf]
        %v2212 = vld [vmem:[#allocation9 + $0x9c] sm:$0xf]
        %v2213 = vld [vmem:[#allocation9 + $0xa0] sm:$0xf]
        %v2214 = vld [vmem:[#allocation9 + $0xa4] sm:$0xf]
        %v2215 = vld [vmem:[#allocation9 + $0xa8] sm:$0xf]
        %v2216 = vld [vmem:[#allocation9 + $0xac] sm:$0xf]
        %v2217 = vld [vmem:[#allocation9 + $0xb0] sm:$0xf]
        %v2218 = vld [vmem:[#allocation9 + $0xb4] sm:$0xf]
        %v2219 = vld [vmem:[#allocation9 + $0xb8] sm:$0xf]
        %v2220 = vld [vmem:[#allocation9 + $0xbc] sm:$0xf]
        %v2221 = vld [vmem:[#allocation9 + $0xc0] sm:$0xf]
        %v2222 = vld [vmem:[#allocation9 + $0xc4] sm:$0xf]
        %v2223 = vld [vmem:[#allocation9 + $0xc8] sm:$0xf]
        %v2224 = vld [vmem:[#allocation9 + $0xcc] sm:$0xf]
        %v2225 = vld [vmem:[#allocation9 + $0xd0] sm:$0xf]
        %v2226 = vld [vmem:[#allocation9 + $0xd4] sm:$0xf]
        %v2227 = vld [vmem:[#allocation9 + $0xd8] sm:$0xf]
        %v2228 = vld [vmem:[#allocation9 + $0xdc] sm:$0xf]
        %v2229 = vld [vmem:[#allocation9 + $0xe0] sm:$0xf]
        %v2230 = vld [vmem:[#allocation9 + $0xe4] sm:$0xf]
        %v2231 = vld [vmem:[#allocation9 + $0xe8] sm:$0xf]
        %v2232 = vld [vmem:[#allocation9 + $0xec] sm:$0xf]
        %v2233 = vld [vmem:[#allocation9 + $0xf0] sm:$0xf]
        %v2234 = vld [vmem:[#allocation9 + $0xf4] sm:$0xf]
        %v2235 = vld [vmem:[#allocation9 + $0xf8] sm:$0xf]
        %v2236 = vld [vmem:[#allocation9 + $0xfc] sm:$0xf]
        %v2237 = vld [vmem:[#allocation9 + $0x100] sm:$0xf]
        %v2238 = vld [vmem:[#allocation9 + $0x104] sm:$0xf]
        %v2239 = vld [vmem:[#allocation9 + $0x108] sm:$0xf]
        %v2240 = vld [vmem:[#allocation9 + $0x10c] sm:$0xf]
        %v2241 = vld [vmem:[#allocation9 + $0x110] sm:$0xf]
        %v2242 = vld [vmem:[#allocation9 + $0x114] sm:$0xf]
        %v2243 = vld [vmem:[#allocation9 + $0x118] sm:$0xf]
        %v2244 = vld [vmem:[#allocation9 + $0x11c] sm:$0xf]
        %v2245 = vld [vmem:[#allocation9 + $0x120] sm:$0xf]
        %v2246 = vld [vmem:[#allocation9 + $0x124] sm:$0xf]
        %v2247 = vld [vmem:[#allocation9 + $0x128] sm:$0xf]
        %v2248 = vld [vmem:[#allocation9 + $0x12c] sm:$0xf]
        %v2249 = vld [vmem:[#allocation9 + $0x130] sm:$0xf]
        %v2250 = vld [vmem:[#allocation9 + $0x134] sm:$0xf]
        %v2251 = vld [vmem:[#allocation9 + $0x138] sm:$0xf]
        %v2252 = vld [vmem:[#allocation9 + $0x13c] sm:$0xf]
        %v2253 = vld [vmem:[#allocation9 + $0x140] sm:$0xf]
        %v2254 = vld [vmem:[#allocation9 + $0x144] sm:$0xf]
        %v2255 = vld [vmem:[#allocation9 + $0x148] sm:$0xf]
        %v2256 = vld [vmem:[#allocation9 + $0x14c] sm:$0xf]
        %v2257 = vld [vmem:[#allocation9 + $0x150] sm:$0xf]
        %v2258 = vld [vmem:[#allocation9 + $0x154] sm:$0xf]
        %v2259 = vld [vmem:[#allocation9 + $0x158] sm:$0xf]
        %v2260 = vld [vmem:[#allocation9 + $0x15c] sm:$0xf]
        %v2261 = vld [vmem:[#allocation9 + $0x160] sm:$0xf]
        %v2262 = vld [vmem:[#allocation9 + $0x164] sm:$0xf]
        %v2263 = vld [vmem:[#allocation9 + $0x168] sm:$0xf]
        %v2264 = vld [vmem:[#allocation9 + $0x16c] sm:$0xf]
        %v2265 = vld [vmem:[#allocation9 + $0x170] sm:$0xf]
        %v2266 = vld [vmem:[#allocation9 + $0x174] sm:$0xf]
        %v2267 = vld [vmem:[#allocation9 + $0x178] sm:$0xf]
        %v2268 = vld [vmem:[#allocation9 + $0x17c] sm:$0xf]
        %v2269 = vld [vmem:[#allocation9 + $0x180] sm:$0xf]
        %v2270 = vld [vmem:[#allocation9 + $0x184] sm:$0xf]
        %v2271 = vld [vmem:[#allocation9 + $0x188] sm:$0xf]
        %v2272 = vld [vmem:[#allocation9 + $0x18c] sm:$0xf]
        %v2273 = vld [vmem:[#allocation9 + $0x190] sm:$0xf]
        %v2274 = vld [vmem:[#allocation9 + $0x194] sm:$0xf]
        %v2275 = vld [vmem:[#allocation9 + $0x198] sm:$0xf]
        %v2276 = vld [vmem:[#allocation9 + $0x19c] sm:$0xf]
        %v2277 = vld [vmem:[#allocation9 + $0x1a0] sm:$0xf]
        %v2278 = vld [vmem:[#allocation9 + $0x1a4] sm:$0xf]
        %v2279 = vld [vmem:[#allocation9 + $0x1a8] sm:$0xf]
        %v2280 = vld [vmem:[#allocation9 + $0x1ac] sm:$0xf]
        %v2281 = vld [vmem:[#allocation9 + $0x1b0] sm:$0xf]
        %v2282 = vld [vmem:[#allocation9 + $0x1b4] sm:$0xf]
        %v2283 = vld [vmem:[#allocation9 + $0x1b8] sm:$0xf]
        %v2284 = vld [vmem:[#allocation9 + $0x1bc] sm:$0xf]
        %v2285 = vld [vmem:[#allocation9 + $0x1c0] sm:$0xf]
        %v2286 = vld [vmem:[#allocation9 + $0x1c4] sm:$0xf]
        %v2287 = vld [vmem:[#allocation9 + $0x1c8] sm:$0xf]
        %v2288 = vld [vmem:[#allocation9 + $0x1cc] sm:$0xf]
        %v2289 = vld [vmem:[#allocation9 + $0x1d0] sm:$0xf]
        %v2290 = vld [vmem:[#allocation9 + $0x1d4] sm:$0xf]
        %v2291 = vld [vmem:[#allocation9 + $0x1d8] sm:$0xf]
        %v2292 = vld [vmem:[#allocation9 + $0x1dc] sm:$0xf]
        %v2293 = vld [vmem:[#allocation9 + $0x1e0] sm:$0xf]
        %v2294 = vld [vmem:[#allocation9 + $0x1e4] sm:$0xf]
        %v2295 = vld [vmem:[#allocation9 + $0x1e8] sm:$0xf]
        %v2296 = vld [vmem:[#allocation9 + $0x1ec] sm:$0xf]
        %v2297 = vld [vmem:[#allocation9 + $0x1f0] sm:$0xf]
        %v2298 = vld [vmem:[#allocation9 + $0x1f4] sm:$0xf]
        %v2299 = vld [vmem:[#allocation9 + $0x1f8] sm:$0xf]
        %v2300 = vld [vmem:[#allocation9 + $0x1fc] sm:$0xf]
        %v2301 = vld [vmem:[#allocation9 + $0x200] sm:$0xf]
        %v2302 = vld [vmem:[#allocation9 + $0x204] sm:$0xf]
        %v2303 = vld [vmem:[#allocation9 + $0x208] sm:$0xf]
        %v2304 = vld [vmem:[#allocation9 + $0x20c] sm:$0xf]
        %v2305 = vld [vmem:[#allocation9 + $0x210] sm:$0xf]
        %v2306 = vld [vmem:[#allocation9 + $0x214] sm:$0xf]
        %v2307 = vld [vmem:[#allocation9 + $0x218] sm:$0xf]
        %v2308 = vld [vmem:[#allocation9 + $0x21c] sm:$0xf]
        %v2309 = vld [vmem:[#allocation9 + $0x220] sm:$0xf]
        %v2310 = vld [vmem:[#allocation9 + $0x224] sm:$0xf]
        %v2311 = vld [vmem:[#allocation9 + $0x228] sm:$0xf]
        %v2312 = vld [vmem:[#allocation9 + $0x22c] sm:$0xf]
        %v2313 = vld [vmem:[#allocation9 + $0x230] sm:$0xf]
        %v2314 = vld [vmem:[#allocation9 + $0x234] sm:$0xf]
        %v2315 = vld [vmem:[#allocation9 + $0x238] sm:$0xf]
        %v2316 = vld [vmem:[#allocation9 + $0x23c] sm:$0xf]
        %v2461 = vunpack.c.l.b16 %v2029
        %v2462 = vunpack.c.l.b16 %v2030
        %v2463 = vunpack.c.l.b16 %v2031
        %v2464 = vunpack.c.l.b16 %v2032
        %v2465 = vunpack.c.l.b16 %v2033
        %v2466 = vunpack.c.l.b16 %v2034
        %v2467 = vunpack.c.l.b16 %v2035
        %v2468 = vunpack.c.l.b16 %v2036
        %v2469 = vunpack.c.l.b16 %v2037
        %v2470 = vunpack.c.l.b16 %v2038
        %v2471 = vunpack.c.l.b16 %v2039
        %v2472 = vunpack.c.l.b16 %v2040
        %v2473 = vunpack.c.l.b16 %v2041
        %v2474 = vunpack.c.l.b16 %v2042
        %v2475 = vunpack.c.l.b16 %v2043
        %v2476 = vunpack.c.l.b16 %v2044
        %v2477 = vunpack.c.l.b16 %v2045
        %v2478 = vunpack.c.l.b16 %v2046
        %v2479 = vunpack.c.l.b16 %v2047
        %v2480 = vunpack.c.l.b16 %v2048
        %v2481 = vunpack.c.l.b16 %v2049
        %v2482 = vunpack.c.l.b16 %v2050
        %v2483 = vunpack.c.l.b16 %v2051
        %v2484 = vunpack.c.l.b16 %v2052
        %v2485 = vunpack.c.l.b16 %v2053
        %v2486 = vunpack.c.l.b16 %v2054
        %v2487 = vunpack.c.l.b16 %v2055
        %v2488 = vunpack.c.l.b16 %v2056
        %v2489 = vunpack.c.l.b16 %v2057
        %v2490 = vunpack.c.l.b16 %v2058
        %v2491 = vunpack.c.l.b16 %v2059
        %v2492 = vunpack.c.l.b16 %v2060
        %v2493 = vunpack.c.l.b16 %v2061
        %v2494 = vunpack.c.l.b16 %v2062
        %v2495 = vunpack.c.l.b16 %v2063
        %v2496 = vunpack.c.l.b16 %v2064
        %v2497 = vunpack.c.l.b16 %v2065
        %v2498 = vunpack.c.l.b16 %v2066
        %v2499 = vunpack.c.l.b16 %v2067
        %v2500 = vunpack.c.l.b16 %v2068
        %v2501 = vunpack.c.l.b16 %v2069
        %v2502 = vunpack.c.l.b16 %v2070
        %v2503 = vunpack.c.l.b16 %v2071
        %v2504 = vunpack.c.l.b16 %v2072
        %v2505 = vunpack.c.l.b16 %v2073
        %v2506 = vunpack.c.l.b16 %v2074
        %v2507 = vunpack.c.l.b16 %v2075
        %v2508 = vunpack.c.l.b16 %v2076
        %v2509 = vunpack.c.l.b16 %v2077
        %v2510 = vunpack.c.l.b16 %v2078
        %v2511 = vunpack.c.l.b16 %v2079
        %v2512 = vunpack.c.l.b16 %v2080
        %v2513 = vunpack.c.l.b16 %v2081
        %v2514 = vunpack.c.l.b16 %v2082
        %v2515 = vunpack.c.l.b16 %v2083
        %v2516 = vunpack.c.l.b16 %v2084
        %v2517 = vunpack.c.l.b16 %v2085
        %v2518 = vunpack.c.l.b16 %v2086
        %v2519 = vunpack.c.l.b16 %v2087
        %v2520 = vunpack.c.l.b16 %v2088
        %v2521 = vunpack.c.l.b16 %v2089
        %v2522 = vunpack.c.l.b16 %v2090
        %v2523 = vunpack.c.l.b16 %v2091
        %v2524 = vunpack.c.l.b16 %v2092
        %v2525 = vunpack.c.l.b16 %v2093
        %v2526 = vunpack.c.l.b16 %v2094
        %v2527 = vunpack.c.l.b16 %v2095
        %v2528 = vunpack.c.l.b16 %v2096
        %v2529 = vunpack.c.l.b16 %v2097
        %v2530 = vunpack.c.l.b16 %v2098
        %v2531 = vunpack.c.l.b16 %v2099
        %v2532 = vunpack.c.l.b16 %v2100
        %v2533 = vunpack.c.l.b16 %v2101
        %v2534 = vunpack.c.l.b16 %v2102
        %v2535 = vunpack.c.l.b16 %v2103
        %v2536 = vunpack.c.l.b16 %v2104
        %v2537 = vunpack.c.l.b16 %v2105
        %v2538 = vunpack.c.l.b16 %v2106
        %v2539 = vunpack.c.l.b16 %v2107
        %v2540 = vunpack.c.l.b16 %v2108
        %v2541 = vunpack.c.l.b16 %v2109
        %v2542 = vunpack.c.l.b16 %v2110
        %v2543 = vunpack.c.l.b16 %v2111
        %v2544 = vunpack.c.l.b16 %v2112
        %v2545 = vunpack.c.l.b16 %v2113
        %v2546 = vunpack.c.l.b16 %v2114
        %v2547 = vunpack.c.l.b16 %v2115
        %v2548 = vunpack.c.l.b16 %v2116
        %v2549 = vunpack.c.l.b16 %v2117
        %v2550 = vunpack.c.l.b16 %v2118
        %v2551 = vunpack.c.l.b16 %v2119
        %v2552 = vunpack.c.l.b16 %v2120
        %v2553 = vunpack.c.l.b16 %v2121
        %v2554 = vunpack.c.l.b16 %v2122
        %v2555 = vunpack.c.l.b16 %v2123
        %v2556 = vunpack.c.l.b16 %v2124
        %v2557 = vunpack.c.l.b16 %v2125
        %v2558 = vunpack.c.l.b16 %v2126
        %v2559 = vunpack.c.l.b16 %v2127
        %v2560 = vunpack.c.l.b16 %v2128
        %v2561 = vunpack.c.l.b16 %v2129
        %v2562 = vunpack.c.l.b16 %v2130
        %v2563 = vunpack.c.l.b16 %v2131
        %v2564 = vunpack.c.l.b16 %v2132
        %v2565 = vunpack.c.l.b16 %v2133
        %v2566 = vunpack.c.l.b16 %v2134
        %v2567 = vunpack.c.l.b16 %v2135
        %v2568 = vunpack.c.l.b16 %v2136
        %v2569 = vunpack.c.l.b16 %v2137
        %v2570 = vunpack.c.l.b16 %v2138
        %v2571 = vunpack.c.l.b16 %v2139
        %v2572 = vunpack.c.l.b16 %v2140
        %v2573 = vunpack.c.l.b16 %v2141
        %v2574 = vunpack.c.l.b16 %v2142
        %v2575 = vunpack.c.l.b16 %v2143
        %v2576 = vunpack.c.l.b16 %v2144
        %v2577 = vunpack.c.l.b16 %v2145
        %v2578 = vunpack.c.l.b16 %v2146
        %v2579 = vunpack.c.l.b16 %v2147
        %v2580 = vunpack.c.l.b16 %v2148
        %v2581 = vunpack.c.l.b16 %v2149
        %v2582 = vunpack.c.l.b16 %v2150
        %v2583 = vunpack.c.l.b16 %v2151
        %v2584 = vunpack.c.l.b16 %v2152
        %v2585 = vunpack.c.l.b16 %v2153
        %v2586 = vunpack.c.l.b16 %v2154
        %v2587 = vunpack.c.l.b16 %v2155
        %v2588 = vunpack.c.l.b16 %v2156
        %v2589 = vunpack.c.l.b16 %v2157
        %v2590 = vunpack.c.l.b16 %v2158
        %v2591 = vunpack.c.l.b16 %v2159
        %v2592 = vunpack.c.l.b16 %v2160
        %v2593 = vunpack.c.l.b16 %v2161
        %v2594 = vunpack.c.l.b16 %v2162
        %v2595 = vunpack.c.l.b16 %v2163
        %v2596 = vunpack.c.l.b16 %v2164
        %v2597 = vunpack.c.l.b16 %v2165
        %v2598 = vunpack.c.l.b16 %v2166
        %v2599 = vunpack.c.l.b16 %v2167
        %v2600 = vunpack.c.l.b16 %v2168
        %v2601 = vunpack.c.l.b16 %v2169
        %v2602 = vunpack.c.l.b16 %v2170
        %v2603 = vunpack.c.l.b16 %v2171
        %v2604 = vunpack.c.l.b16 %v2172
        %v2605 = vpack.c.b16 %v2462, %v2461
        %v2606 = vpack.c.b16 %v2464, %v2463
        %v2607 = vpack.c.b16 %v2466, %v2465
        %v2608 = vpack.c.b16 %v2468, %v2467
        %v2609 = vpack.c.b16 %v2470, %v2469
        %v2610 = vpack.c.b16 %v2472, %v2471
        %v2611 = vpack.c.b16 %v2474, %v2473
        %v2612 = vpack.c.b16 %v2476, %v2475
        %v2613 = vpack.c.b16 %v2478, %v2477
        %v2614 = vpack.c.b16 %v2480, %v2479
        %v2615 = vpack.c.b16 %v2482, %v2481
        %v2616 = vpack.c.b16 %v2484, %v2483
        %v2617 = vpack.c.b16 %v2486, %v2485
        %v2618 = vpack.c.b16 %v2488, %v2487
        %v2619 = vpack.c.b16 %v2490, %v2489
        %v2620 = vpack.c.b16 %v2492, %v2491
        %v2621 = vpack.c.b16 %v2494, %v2493
        %v2622 = vpack.c.b16 %v2496, %v2495
        %v2623 = vpack.c.b16 %v2498, %v2497
        %v2624 = vpack.c.b16 %v2500, %v2499
        %v2625 = vpack.c.b16 %v2502, %v2501
        %v2626 = vpack.c.b16 %v2504, %v2503
        %v2627 = vpack.c.b16 %v2506, %v2505
        %v2628 = vpack.c.b16 %v2508, %v2507
        %v2629 = vpack.c.b16 %v2510, %v2509
        %v2630 = vpack.c.b16 %v2512, %v2511
        %v2631 = vpack.c.b16 %v2514, %v2513
        %v2632 = vpack.c.b16 %v2516, %v2515
        %v2633 = vpack.c.b16 %v2518, %v2517
        %v2634 = vpack.c.b16 %v2520, %v2519
        %v2635 = vpack.c.b16 %v2522, %v2521
        %v2636 = vpack.c.b16 %v2524, %v2523
        %v2637 = vpack.c.b16 %v2526, %v2525
        %v2638 = vpack.c.b16 %v2528, %v2527
        %v2639 = vpack.c.b16 %v2530, %v2529
        %v2640 = vpack.c.b16 %v2532, %v2531
        %v2641 = vpack.c.b16 %v2534, %v2533
        %v2642 = vpack.c.b16 %v2536, %v2535
        %v2643 = vpack.c.b16 %v2538, %v2537
        %v2644 = vpack.c.b16 %v2540, %v2539
        %v2645 = vpack.c.b16 %v2542, %v2541
        %v2646 = vpack.c.b16 %v2544, %v2543
        %v2647 = vpack.c.b16 %v2546, %v2545
        %v2648 = vpack.c.b16 %v2548, %v2547
        %v2649 = vpack.c.b16 %v2550, %v2549
        %v2650 = vpack.c.b16 %v2552, %v2551
        %v2651 = vpack.c.b16 %v2554, %v2553
        %v2652 = vpack.c.b16 %v2556, %v2555
        %v2653 = vpack.c.b16 %v2558, %v2557
        %v2654 = vpack.c.b16 %v2560, %v2559
        %v2655 = vpack.c.b16 %v2562, %v2561
        %v2656 = vpack.c.b16 %v2564, %v2563
        %v2657 = vpack.c.b16 %v2566, %v2565
        %v2658 = vpack.c.b16 %v2568, %v2567
        %v2659 = vpack.c.b16 %v2570, %v2569
        %v2660 = vpack.c.b16 %v2572, %v2571
        %v2661 = vpack.c.b16 %v2574, %v2573
        %v2662 = vpack.c.b16 %v2576, %v2575
        %v2663 = vpack.c.b16 %v2578, %v2577
        %v2664 = vpack.c.b16 %v2580, %v2579
        %v2665 = vpack.c.b16 %v2582, %v2581
        %v2666 = vpack.c.b16 %v2584, %v2583
        %v2667 = vpack.c.b16 %v2586, %v2585
        %v2668 = vpack.c.b16 %v2588, %v2587
        %v2669 = vpack.c.b16 %v2590, %v2589
        %v2670 = vpack.c.b16 %v2592, %v2591
        %v2671 = vpack.c.b16 %v2594, %v2593
        %v2672 = vpack.c.b16 %v2596, %v2595
        %v2673 = vpack.c.b16 %v2598, %v2597
        %v2674 = vpack.c.b16 %v2600, %v2599
        %v2675 = vpack.c.b16 %v2602, %v2601
        %v2676 = vpack.c.b16 %v2604, %v2603
        %2749 = vmatprep.subr.bf16.mxu0 0
        %2750 = vmatpush1.bf16.msra.mxu0 %v2605
        %2751 = vmatprep.subr.bf16.mxu0 0
        %2752 = vmatpush1.bf16.msra.mxu0 %v2606
        %2753 = vmatprep.subr.bf16.mxu0 0
        %2754 = vmatpush1.bf16.msra.mxu0 %v2607
        %2755 = vmatprep.subr.bf16.mxu0 0
        %2756 = vmatpush1.bf16.msra.mxu0 %v2608
        %2757 = vmatprep.subr.bf16.mxu0 0
        %2758 = vmatpush1.bf16.msra.mxu0 %v2609
        %2759 = vmatprep.subr.bf16.mxu0 0
        %2760 = vmatpush1.bf16.msra.mxu0 %v2610
        %2761 = vmatprep.subr.bf16.mxu0 0
        %2762 = vmatpush1.bf16.msra.mxu0 %v2611
        %2763 = vmatprep.subr.bf16.mxu0 0
        %2764 = vmatpush1.bf16.msra.mxu0 %v2612
        %2765 = vmatprep.subr.bf16.mxu0 0
        %2766 = vmatpush1.bf16.msra.mxu0 %v2613
        %2767 = vmatprep.subr.bf16.mxu0 0
        %2768 = vmatpush1.bf16.msra.mxu0 %v2614
        %2769 = vmatprep.subr.bf16.mxu0 0
        %2770 = vmatpush1.bf16.msra.mxu0 %v2615
        %2771 = vmatprep.subr.bf16.mxu0 0
        %2772 = vmatpush1.bf16.msra.mxu0 %v2616
        %2773 = vmatprep.subr.bf16.mxu0 0
        %2774 = vmatpush1.bf16.msra.mxu0 %v2617
        %2775 = vmatprep.subr.bf16.mxu0 0
        %2776 = vmatpush1.bf16.msra.mxu0 %v2618
        %2777 = vmatprep.subr.bf16.mxu0 0
        %2778 = vmatpush1.bf16.msra.mxu0 %v2619
        %2779 = vmatprep.subr.bf16.mxu0 0
        %2780 = vmatpush1.bf16.msra.mxu0 %v2620
        %2781 = vmatprep.mubr.bf16.mxu0 %v1253
        %2782 = vmatmul.mubr.bf16.gmra.mrb[0].mxu0 %v1125
        %v2783 = vpop.f32.mrb[0].mxu0
        %v2784 = vadd.f32 0.0, %v2783
        %v2785 = vpop.f32.mrb[0].mxu0
        %v2786 = vpop.f32.mrb[0].mxu0
        %v2787 = vadd.f32 0.0, %v2786
        %v2788 = vpop.f32.mrb[0].mxu0
        %2789 = vmatprep.mubr.bf16.mxu0 %v1254
        %2790 = vmatmul.mubr.bf16.gmra.mrb[0].mxu0 %v1126
        %v2791 = vpop.f32.mrb[0].mxu0
        %v2792 = vadd.f32 0.0, %v2791
        %v2793 = vpop.f32.mrb[0].mxu0
        %v2794 = vpop.f32.mrb[0].mxu0
        %v2795 = vadd.f32 0.0, %v2794
        %v2796 = vpop.f32.mrb[0].mxu0
        %2797 = vmatprep.mubr.bf16.mxu0 %v1255
        %2798 = vmatmul.mubr.bf16.gmra.mrb[0].mxu0 %v1127
        %v2799 = vpop.f32.mrb[0].mxu0
        %v2800 = vadd.f32 0.0, %v2799
        %v2801 = vpop.f32.mrb[0].mxu0
        %v2802 = vpop.f32.mrb[0].mxu0
        %v2803 = vadd.f32 0.0, %v2802
        %v2804 = vpop.f32.mrb[0].mxu0
        %2805 = vmatprep.mubr.bf16.mxu0 %v1256
        %2806 = vmatmul.mubr.bf16.gmra.mrb[0].mxu0 %v1128
        %v2807 = vpop.f32.mrb[0].mxu0
        %v2808 = vadd.f32 0.0, %v2807
        %v2809 = vpop.f32.mrb[0].mxu0
        %v2810 = vpop.f32.mrb[0].mxu0
        %v2811 = vadd.f32 0.0, %v2810
        %v2812 = vpop.f32.mrb[0].mxu0
        %2813 = vmatprep.mubr.bf16.mxu0 %v1257
        %2814 = vmatmul.mubr.bf16.gmra.mrb[0].mxu0 %v1129
        %v2815 = vpop.f32.mrb[0].mxu0
        %v2816 = vadd.f32 0.0, %v2815
        %v2817 = vpop.f32.mrb[0].mxu0
        %v2818 = vpop.f32.mrb[0].mxu0
        %v2819 = vadd.f32 0.0, %v2818
        %v2820 = vpop.f32.mrb[0].mxu0
        %2821 = vmatprep.mubr.bf16.mxu0 %v1258
        %2822 = vmatmul.mubr.bf16.gmra.mrb[0].mxu0 %v1130
        %v2823 = vpop.f32.mrb[0].mxu0
        %v2824 = vadd.f32 0.0, %v2823
        %v2825 = vpop.f32.mrb[0].mxu0
        %v2826 = vpop.f32.mrb[0].mxu0
        %v2827 = vadd.f32 0.0, %v2826
        %v2828 = vpop.f32.mrb[0].mxu0
        %2829 = vmatprep.mubr.bf16.mxu0 %v1259
        %2830 = vmatmul.mubr.bf16.gmra.mrb[0].mxu0 %v1131
        %v2831 = vpop.f32.mrb[0].mxu0
        %v2832 = vadd.f32 0.0, %v2831
        %v2833 = vpop.f32.mrb[0].mxu0
        %v2834 = vpop.f32.mrb[0].mxu0
        %v2835 = vadd.f32 0.0, %v2834
        %v2836 = vpop.f32.mrb[0].mxu0
        %2837 = vmatprep.mubr.bf16.mxu0 %v1260
        %2838 = vmatmul.mubr.bf16.gmra.mrb[0].mxu0 %v1132
        %v2839 = vpop.f32.mrb[0].mxu0
        %v2840 = vadd.f32 0.0, %v2839
        %v2841 = vpop.f32.mrb[0].mxu0
        %v2842 = vpop.f32.mrb[0].mxu0
        %v2843 = vadd.f32 0.0, %v2842
        %v2844 = vpop.f32.mrb[0].mxu0
        %2845 = vmatprep.mubr.bf16.mxu0 %v1261
        %2846 = vmatmul.mubr.bf16.gmra.mrb[0].mxu0 %v1133
        %v2847 = vpop.f32.mrb[0].mxu0
        %v2848 = vadd.f32 0.0, %v2847
        %v2849 = vpop.f32.mrb[0].mxu0
        %v2850 = vpop.f32.mrb[0].mxu0
        %v2851 = vadd.f32 0.0, %v2850
        %v2852 = vpop.f32.mrb[0].mxu0
        %2853 = vmatprep.mubr.bf16.mxu0 %v1262
        %2854 = vmatmul.mubr.bf16.gmra.mrb[0].mxu0 %v1134
        %v2855 = vpop.f32.mrb[0].mxu0
        %v2856 = vadd.f32 0.0, %v2855
        %v2857 = vpop.f32.mrb[0].mxu0
        %v2858 = vpop.f32.mrb[0].mxu0
        %v2859 = vadd.f32 0.0, %v2858
        %v2860 = vpop.f32.mrb[0].mxu0
        %2861 = vmatprep.mubr.bf16.mxu0 %v1263
        %2862 = vmatmul.mubr.bf16.gmra.mrb[0].mxu0 %v1135
        %v2863 = vpop.f32.mrb[0].mxu0
        %v2864 = vadd.f32 0.0, %v2863
        %v2865 = vpop.f32.mrb[0].mxu0
        %v2866 = vpop.f32.mrb[0].mxu0
        %v2867 = vadd.f32 0.0, %v2866
        %v2868 = vpop.f32.mrb[0].mxu0
        %2869 = vmatprep.mubr.bf16.mxu0 %v1264
        %2870 = vmatmul.mubr.bf16.gmra.mrb[0].mxu0 %v1136
        %v2871 = vpop.f32.mrb[0].mxu0
        %v2872 = vadd.f32 0.0, %v2871
        %v2873 = vpop.f32.mrb[0].mxu0
        %v2874 = vpop.f32.mrb[0].mxu0
        %v2875 = vadd.f32 0.0, %v2874
        %v2876 = vpop.f32.mrb[0].mxu0
        %2877 = vmatprep.mubr.bf16.mxu0 %v1265
        %2878 = vmatmul.mubr.bf16.gmra.mrb[0].mxu0 %v1137
        %v2879 = vpop.f32.mrb[0].mxu0
        %v2880 = vadd.f32 0.0, %v2879
        %v2881 = vpop.f32.mrb[0].mxu0
        %v2882 = vpop.f32.mrb[0].mxu0
        %v2883 = vadd.f32 0.0, %v2882
        %v2884 = vpop.f32.mrb[0].mxu0
        %2885 = vmatprep.mubr.bf16.mxu0 %v1266
        %2886 = vmatmul.mubr.bf16.gmra.mrb[0].mxu0 %v1138
        %v2887 = vpop.f32.mrb[0].mxu0
        %v2888 = vadd.f32 0.0, %v2887
        %v2889 = vpop.f32.mrb[0].mxu0
        %v2890 = vpop.f32.mrb[0].mxu0
        %v2891 = vadd.f32 0.0, %v2890
        %v2892 = vpop.f32.mrb[0].mxu0
        %2893 = vmatprep.mubr.bf16.mxu0 %v1267
        %2894 = vmatmul.mubr.bf16.gmra.mrb[0].mxu0 %v1139
        %v2895 = vpop.f32.mrb[0].mxu0
        %v2896 = vadd.f32 0.0, %v2895
        %v2897 = vpop.f32.mrb[0].mxu0
        %v2898 = vpop.f32.mrb[0].mxu0
        %v2899 = vadd.f32 0.0, %v2898
        %v2900 = vpop.f32.mrb[0].mxu0
        %2901 = vmatprep.mubr.bf16.mxu0 %v1268
        %2902 = vmatmul.mubr.bf16.gmra.mrb[0].mxu0 %v1140
        %v2903 = vpop.f32.mrb[0].mxu0
        %v2904 = vadd.f32 0.0, %v2903
        %v2905 = vpop.f32.mrb[0].mxu0
        %v2906 = vpop.f32.mrb[0].mxu0
        %v2907 = vadd.f32 0.0, %v2906
        %v2908 = vpop.f32.mrb[0].mxu0
        %2909 = vdwg.mxu0
        %2910 = vmatprep.subr.bf16.mxu0 0
        %2911 = vmatpush1.bf16.msra.mxu0 %v2621
        %2912 = vmatprep.subr.bf16.mxu0 0
        %2913 = vmatpush1.bf16.msra.mxu0 %v2622
        %2914 = vmatprep.subr.bf16.mxu0 0
        %2915 = vmatpush1.bf16.msra.mxu0 %v2623
        %2916 = vmatprep.subr.bf16.mxu0 0
        %2917 = vmatpush1.bf16.msra.mxu0 %v2624
        %2918 = vmatprep.subr.bf16.mxu0 0
        %2919 = vmatpush1.bf16.msra.mxu0 %v2625
        %2920 = vmatprep.subr.bf16.mxu0 0
        %2921 = vmatpush1.bf16.msra.mxu0 %v2626
        %2922 = vmatprep.subr.bf16.mxu0 0
        %2923 = vmatpush1.bf16.msra.mxu0 %v2627
        %2924 = vmatprep.subr.bf16.mxu0 0
        %2925 = vmatpush1.bf16.msra.mxu0 %v2628
        %2926 = vmatprep.subr.bf16.mxu0 0
        %2927 = vmatpush1.bf16.msra.mxu0 %v2629
        %2928 = vmatprep.subr.bf16.mxu0 0
        %2929 = vmatpush1.bf16.msra.mxu0 %v2630
        %2930 = vmatprep.subr.bf16.mxu0 0
        %2931 = vmatpush1.bf16.msra.mxu0 %v2631
        %2932 = vmatprep.subr.bf16.mxu0 0
        %2933 = vmatpush1.bf16.msra.mxu0 %v2632
        %2934 = vmatprep.subr.bf16.mxu0 0
        %2935 = vmatpush1.bf16.msra.mxu0 %v2633
        %2936 = vmatprep.subr.bf16.mxu0 0
        %2937 = vmatpush1.bf16.msra.mxu0 %v2634
        %2938 = vmatprep.subr.bf16.mxu0 0
        %2939 = vmatpush1.bf16.msra.mxu0 %v2635
        %2940 = vmatprep.subr.bf16.mxu0 0
        %2941 = vmatpush1.bf16.msra.mxu0 %v2636
        %2942 = vmatprep.mubr.bf16.mxu0 %v1607
        %2943 = vmatmul.mubr.bf16.gmra.mrb[0].mxu0 %v1477
        %v2944 = vpop.f32.mrb[0].mxu0
        %v2945 = vadd.f32 %v2784, %v2944
        %v2946 = vpop.f32.mrb[0].mxu0
        %v2947 = vpop.f32.mrb[0].mxu0
        %v2948 = vadd.f32 %v2787, %v2947
        %v2949 = vpop.f32.mrb[0].mxu0
        %2950 = vmatprep.mubr.bf16.mxu0 %v1608
        %2951 = vmatmul.mubr.bf16.gmra.mrb[0].mxu0 %v1478
        %v2952 = vpop.f32.mrb[0].mxu0
        %v2953 = vadd.f32 %v2792, %v2952
        %v2954 = vpop.f32.mrb[0].mxu0
        %v2955 = vpop.f32.mrb[0].mxu0
        %v2956 = vadd.f32 %v2795, %v2955
        %v2957 = vpop.f32.mrb[0].mxu0
        %2958 = vmatprep.mubr.bf16.mxu0 %v1609
        %2959 = vmatmul.mubr.bf16.gmra.mrb[0].mxu0 %v1479
        %v2960 = vpop.f32.mrb[0].mxu0
        %v2961 = vadd.f32 %v2800, %v2960
        %v2962 = vpop.f32.mrb[0].mxu0
        %v2963 = vpop.f32.mrb[0].mxu0
        %v2964 = vadd.f32 %v2803, %v2963
        %v2965 = vpop.f32.mrb[0].mxu0
        %2966 = vmatprep.mubr.bf16.mxu0 %v1610
        %2967 = vmatmul.mubr.bf16.gmra.mrb[0].mxu0 %v1480
        %v2968 = vpop.f32.mrb[0].mxu0
        %v2969 = vadd.f32 %v2808, %v2968
        %v2970 = vpop.f32.mrb[0].mxu0
        %v2971 = vpop.f32.mrb[0].mxu0
        %v2972 = vadd.f32 %v2811, %v2971
        %v2973 = vpop.f32.mrb[0].mxu0
        %2974 = vmatprep.mubr.bf16.mxu0 %v1611
        %2975 = vmatmul.mubr.bf16.gmra.mrb[0].mxu0 %v1481
        %v2976 = vpop.f32.mrb[0].mxu0
        %v2977 = vadd.f32 %v2816, %v2976
        %v2978 = vpop.f32.mrb[0].mxu0
        %v2979 = vpop.f32.mrb[0].mxu0
        %v2980 = vadd.f32 %v2819, %v2979
        %v2981 = vpop.f32.mrb[0].mxu0
        %2982 = vmatprep.mubr.bf16.mxu0 %v1612
        %2983 = vmatmul.mubr.bf16.gmra.mrb[0].mxu0 %v1482
        %v2984 = vpop.f32.mrb[0].mxu0
        %v2985 = vadd.f32 %v2824, %v2984
        %v2986 = vpop.f32.mrb[0].mxu0
        %v2987 = vpop.f32.mrb[0].mxu0
        %v2988 = vadd.f32 %v2827, %v2987
        %v2989 = vpop.f32.mrb[0].mxu0
        %2990 = vmatprep.mubr.bf16.mxu0 %v1613
        %2991 = vmatmul.mubr.bf16.gmra.mrb[0].mxu0 %v1483
        %v2992 = vpop.f32.mrb[0].mxu0
        %v2993 = vadd.f32 %v2832, %v2992
        %v2994 = vpop.f32.mrb[0].mxu0
        %v2995 = vpop.f32.mrb[0].mxu0
        %v2996 = vadd.f32 %v2835, %v2995
        %v2997 = vpop.f32.mrb[0].mxu0
        %2998 = vmatprep.mubr.bf16.mxu0 %v1614
        %2999 = vmatmul.mubr.bf16.gmra.mrb[0].mxu0 %v1484
        %v3000 = vpop.f32.mrb[0].mxu0
        %v3001 = vadd.f32 %v2840, %v3000
        %v3002 = vpop.f32.mrb[0].mxu0
        %v3003 = vpop.f32.mrb[0].mxu0
        %v3004 = vadd.f32 %v2843, %v3003
        %v3005 = vpop.f32.mrb[0].mxu0
        %3006 = vmatprep.mubr.bf16.mxu0 %v1615
        %3007 = vmatmul.mubr.bf16.gmra.mrb[0].mxu0 %v1485
        %v3008 = vpop.f32.mrb[0].mxu0
        %v3009 = vadd.f32 %v2848, %v3008
        %v3010 = vpop.f32.mrb[0].mxu0
        %v3011 = vpop.f32.mrb[0].mxu0
        %v3012 = vadd.f32 %v2851, %v3011
        %v3013 = vpop.f32.mrb[0].mxu0
        %3014 = vmatprep.mubr.bf16.mxu0 %v1616
        %3015 = vmatmul.mubr.bf16.gmra.mrb[0].mxu0 %v1486
        %v3016 = vpop.f32.mrb[0].mxu0
        %v3017 = vadd.f32 %v2856, %v3016
        %v3018 = vpop.f32.mrb[0].mxu0
        %v3019 = vpop.f32.mrb[0].mxu0
        %v3020 = vadd.f32 %v2859, %v3019
        %v3021 = vpop.f32.mrb[0].mxu0
        %3022 = vmatprep.mubr.bf16.mxu0 %v1617
        %3023 = vmatmul.mubr.bf16.gmra.mrb[0].mxu0 %v1487
        %v3024 = vpop.f32.mrb[0].mxu0
        %v3025 = vadd.f32 %v2864, %v3024
        %v3026 = vpop.f32.mrb[0].mxu0
        %v3027 = vpop.f32.mrb[0].mxu0
        %v3028 = vadd.f32 %v2867, %v3027
        %v3029 = vpop.f32.mrb[0].mxu0
        %3030 = vmatprep.mubr.bf16.mxu0 %v1618
        %3031 = vmatmul.mubr.bf16.gmra.mrb[0].mxu0 %v1488
        %v3032 = vpop.f32.mrb[0].mxu0
        %v3033 = vadd.f32 %v2872, %v3032
        %v3034 = vpop.f32.mrb[0].mxu0
        %v3035 = vpop.f32.mrb[0].mxu0
        %v3036 = vadd.f32 %v2875, %v3035
        %v3037 = vpop.f32.mrb[0].mxu0
        %3038 = vmatprep.mubr.bf16.mxu0 %v1619
        %3039 = vmatmul.mubr.bf16.gmra.mrb[0].mxu0 %v1489
        %v3040 = vpop.f32.mrb[0].mxu0
        %v3041 = vadd.f32 %v2880, %v3040
        %v3042 = vpop.f32.mrb[0].mxu0
        %v3043 = vpop.f32.mrb[0].mxu0
        %v3044 = vadd.f32 %v2883, %v3043
        %v3045 = vpop.f32.mrb[0].mxu0
        %3046 = vmatprep.mubr.bf16.mxu0 %v1620
        %3047 = vmatmul.mubr.bf16.gmra.mrb[0].mxu0 %v1490
        %v3048 = vpop.f32.mrb[0].mxu0
        %v3049 = vadd.f32 %v2888, %v3048
        %v3050 = vpop.f32.mrb[0].mxu0
        %v3051 = vpop.f32.mrb[0].mxu0
        %v3052 = vadd.f32 %v2891, %v3051
        %v3053 = vpop.f32.mrb[0].mxu0
        %3054 = vmatprep.mubr.bf16.mxu0 %v1621
        %3055 = vmatmul.mubr.bf16.gmra.mrb[0].mxu0 %v1491
        %v3056 = vpop.f32.mrb[0].mxu0
        %v3057 = vadd.f32 %v2896, %v3056
        %v3058 = vpop.f32.mrb[0].mxu0
        %v3059 = vpop.f32.mrb[0].mxu0
        %v3060 = vadd.f32 %v2899, %v3059
        %v3061 = vpop.f32.mrb[0].mxu0
        %3062 = vmatprep.mubr.bf16.mxu0 %v1622
        %3063 = vmatmul.mubr.bf16.gmra.mrb[0].mxu0 %v1492
        %v3064 = vpop.f32.mrb[0].mxu0
        %v3065 = vadd.f32 %v2904, %v3064
        %v3066 = vpop.f32.mrb[0].mxu0
        %v3067 = vpop.f32.mrb[0].mxu0
        %v3068 = vadd.f32 %v2907, %v3067
        %v3069 = vpop.f32.mrb[0].mxu0
        %3070 = vdwg.mxu0
        %3071 = vmatprep.subr.bf16.mxu0 0
        %3072 = vmatpush1.bf16.msra.mxu0 %v2637
        %3073 = vmatprep.subr.bf16.mxu0 0
        %3074 = vmatpush1.bf16.msra.mxu0 %v2638
        %3075 = vmatprep.subr.bf16.mxu0 0
        %3076 = vmatpush1.bf16.msra.mxu0 %v2639
        %3077 = vmatprep.subr.bf16.mxu0 0
        %3078 = vmatpush1.bf16.msra.mxu0 %v2640
        %3079 = vmatprep.subr.bf16.mxu0 0
        %3080 = vmatpush1.bf16.msra.mxu0 %v2641
        %3081 = vmatprep.subr.bf16.mxu0 0
        %3082 = vmatpush1.bf16.msra.mxu0 %v2642
        %3083 = vmatprep.subr.bf16.mxu0 0
        %3084 = vmatpush1.bf16.msra.mxu0 %v2643
        %3085 = vmatprep.subr.bf16.mxu0 0
        %3086 = vmatpush1.bf16.msra.mxu0 %v2644
        %3087 = vmatprep.subr.bf16.mxu0 0
        %3088 = vmatpush1.bf16.msra.mxu0 %v2645
        %3089 = vmatprep.subr.bf16.mxu0 0
        %3090 = vmatpush1.bf16.msra.mxu0 %v2646
        %3091 = vmatprep.subr.bf16.mxu0 0
        %3092 = vmatpush1.bf16.msra.mxu0 %v2647
        %3093 = vmatprep.subr.bf16.mxu0 0
        %3094 = vmatpush1.bf16.msra.mxu0 %v2648
        %3095 = vmatprep.subr.bf16.mxu0 0
        %3096 = vmatpush1.bf16.msra.mxu0 %v2649
        %3097 = vmatprep.subr.bf16.mxu0 0
        %3098 = vmatpush1.bf16.msra.mxu0 %v2650
        %3099 = vmatprep.subr.bf16.mxu0 0
        %3100 = vmatpush1.bf16.msra.mxu0 %v2651
        %3101 = vmatprep.subr.bf16.mxu0 0
        %3102 = vmatpush1.bf16.msra.mxu0 %v2652
        %3103 = vmatprep.mubr.bf16.mxu0 %v1745
        %3104 = vmatmul.mubr.bf16.gmra.mrb[0].mxu0 %v1254
        %v3105 = vpop.f32.mrb[0].mxu0
        %v3106 = vadd.f32 %v2945, %v3105
        %v3107 = vpop.f32.mrb[0].mxu0
        %v3108 = vpop.f32.mrb[0].mxu0
        %v3109 = vadd.f32 %v2948, %v3108
        %v3110 = vpop.f32.mrb[0].mxu0
        %3111 = vmatprep.mubr.bf16.mxu0 %v1746
        %3112 = vmatmul.mubr.bf16.gmra.mrb[0].mxu0 %v1255
        %v3113 = vpop.f32.mrb[0].mxu0
        %v3114 = vadd.f32 %v2953, %v3113
        %v3115 = vpop.f32.mrb[0].mxu0
        %v3116 = vpop.f32.mrb[0].mxu0
        %v3117 = vadd.f32 %v2956, %v3116
        %v3118 = vpop.f32.mrb[0].mxu0
        %3119 = vmatprep.mubr.bf16.mxu0 %v1747
        %3120 = vmatmul.mubr.bf16.gmra.mrb[0].mxu0 %v1256
        %v3121 = vpop.f32.mrb[0].mxu0
        %v3122 = vadd.f32 %v2961, %v3121
        %v3123 = vpop.f32.mrb[0].mxu0
        %v3124 = vpop.f32.mrb[0].mxu0
        %v3125 = vadd.f32 %v2964, %v3124
        %v3126 = vpop.f32.mrb[0].mxu0
        %3127 = vmatprep.mubr.bf16.mxu0 %v1748
        %3128 = vmatmul.mubr.bf16.gmra.mrb[0].mxu0 %v1257
        %v3129 = vpop.f32.mrb[0].mxu0
        %v3130 = vadd.f32 %v2969, %v3129
        %v3131 = vpop.f32.mrb[0].mxu0
        %v3132 = vpop.f32.mrb[0].mxu0
        %v3133 = vadd.f32 %v2972, %v3132
        %v3134 = vpop.f32.mrb[0].mxu0
        %3135 = vmatprep.mubr.bf16.mxu0 %v1749
        %3136 = vmatmul.mubr.bf16.gmra.mrb[0].mxu0 %v1258
        %v3137 = vpop.f32.mrb[0].mxu0
        %v3138 = vadd.f32 %v2977, %v3137
        %v3139 = vpop.f32.mrb[0].mxu0
        %v3140 = vpop.f32.mrb[0].mxu0
        %v3141 = vadd.f32 %v2980, %v3140
        %v3142 = vpop.f32.mrb[0].mxu0
        %3143 = vmatprep.mubr.bf16.mxu0 %v1750
        %3144 = vmatmul.mubr.bf16.gmra.mrb[0].mxu0 %v1259
        %v3145 = vpop.f32.mrb[0].mxu0
        %v3146 = vadd.f32 %v2985, %v3145
        %v3147 = vpop.f32.mrb[0].mxu0
        %v3148 = vpop.f32.mrb[0].mxu0
        %v3149 = vadd.f32 %v2988, %v3148
        %v3150 = vpop.f32.mrb[0].mxu0
        %3151 = vmatprep.mubr.bf16.mxu0 %v1751
        %3152 = vmatmul.mubr.bf16.gmra.mrb[0].mxu0 %v1260
        %v3153 = vpop.f32.mrb[0].mxu0
        %v3154 = vadd.f32 %v2993, %v3153
        %v3155 = vpop.f32.mrb[0].mxu0
        %v3156 = vpop.f32.mrb[0].mxu0
        %v3157 = vadd.f32 %v2996, %v3156
        %v3158 = vpop.f32.mrb[0].mxu0
        %3159 = vmatprep.mubr.bf16.mxu0 %v1752
        %3160 = vmatmul.mubr.bf16.gmra.mrb[0].mxu0 %v1261
        %v3161 = vpop.f32.mrb[0].mxu0
        %v3162 = vadd.f32 %v3001, %v3161
        %v3163 = vpop.f32.mrb[0].mxu0
        %v3164 = vpop.f32.mrb[0].mxu0
        %v3165 = vadd.f32 %v3004, %v3164
        %v3166 = vpop.f32.mrb[0].mxu0
        %3167 = vmatprep.mubr.bf16.mxu0 %v1753
        %3168 = vmatmul.mubr.bf16.gmra.mrb[0].mxu0 %v1262
        %v3169 = vpop.f32.mrb[0].mxu0
        %v3170 = vadd.f32 %v3009, %v3169
        %v3171 = vpop.f32.mrb[0].mxu0
        %v3172 = vpop.f32.mrb[0].mxu0
        %v3173 = vadd.f32 %v3012, %v3172
        %v3174 = vpop.f32.mrb[0].mxu0
        %3175 = vmatprep.mubr.bf16.mxu0 %v1754
        %3176 = vmatmul.mubr.bf16.gmra.mrb[0].mxu0 %v1263
        %v3177 = vpop.f32.mrb[0].mxu0
        %v3178 = vadd.f32 %v3017, %v3177
        %v3179 = vpop.f32.mrb[0].mxu0
        %v3180 = vpop.f32.mrb[0].mxu0
        %v3181 = vadd.f32 %v3020, %v3180
        %v3182 = vpop.f32.mrb[0].mxu0
        %3183 = vmatprep.mubr.bf16.mxu0 %v1755
        %3184 = vmatmul.mubr.bf16.gmra.mrb[0].mxu0 %v1264
        %v3185 = vpop.f32.mrb[0].mxu0
        %v3186 = vadd.f32 %v3025, %v3185
        %v3187 = vpop.f32.mrb[0].mxu0
        %v3188 = vpop.f32.mrb[0].mxu0
        %v3189 = vadd.f32 %v3028, %v3188
        %v3190 = vpop.f32.mrb[0].mxu0
        %3191 = vmatprep.mubr.bf16.mxu0 %v1756
        %3192 = vmatmul.mubr.bf16.gmra.mrb[0].mxu0 %v1265
        %v3193 = vpop.f32.mrb[0].mxu0
        %v3194 = vadd.f32 %v3033, %v3193
        %v3195 = vpop.f32.mrb[0].mxu0
        %v3196 = vpop.f32.mrb[0].mxu0
        %v3197 = vadd.f32 %v3036, %v3196
        %v3198 = vpop.f32.mrb[0].mxu0
        %3199 = vmatprep.mubr.bf16.mxu0 %v1757
        %3200 = vmatmul.mubr.bf16.gmra.mrb[0].mxu0 %v1266
        %v3201 = vpop.f32.mrb[0].mxu0
        %v3202 = vadd.f32 %v3041, %v3201
        %v3203 = vpop.f32.mrb[0].mxu0
        %v3204 = vpop.f32.mrb[0].mxu0
        %v3205 = vadd.f32 %v3044, %v3204
        %v3206 = vpop.f32.mrb[0].mxu0
        %3207 = vmatprep.mubr.bf16.mxu0 %v1758
        %3208 = vmatmul.mubr.bf16.gmra.mrb[0].mxu0 %v1267
        %v3209 = vpop.f32.mrb[0].mxu0
        %v3210 = vadd.f32 %v3049, %v3209
        %v3211 = vpop.f32.mrb[0].mxu0
        %v3212 = vpop.f32.mrb[0].mxu0
        %v3213 = vadd.f32 %v3052, %v3212
        %v3214 = vpop.f32.mrb[0].mxu0
        %3215 = vmatprep.mubr.bf16.mxu0 %v1759
        %3216 = vmatmul.mubr.bf16.gmra.mrb[0].mxu0 %v1268
        %v3217 = vpop.f32.mrb[0].mxu0
        %v3218 = vadd.f32 %v3057, %v3217
        %v3219 = vpop.f32.mrb[0].mxu0
        %v3220 = vpop.f32.mrb[0].mxu0
        %v3221 = vadd.f32 %v3060, %v3220
        %v3222 = vpop.f32.mrb[0].mxu0
        %3223 = vmatprep.mubr.bf16.mxu0 %v1760
        %3224 = vmatmul.mubr.bf16.gmra.mrb[0].mxu0 %v1630
        %v3225 = vpop.f32.mrb[0].mxu0
        %v3226 = vadd.f32 %v3065, %v3225
        %v3227 = vpop.f32.mrb[0].mxu0
        %v3228 = vpop.f32.mrb[0].mxu0
        %v3229 = vadd.f32 %v3068, %v3228
        %v3230 = vpop.f32.mrb[0].mxu0
        %3231 = vdwg.mxu0
        %3232 = vmatprep.subr.bf16.mxu0 0
        %3233 = vmatpush1.bf16.msra.mxu0 %v2653
        %3234 = vmatprep.subr.bf16.mxu0 0
        %3235 = vmatpush1.bf16.msra.mxu0 %v2654
        %3236 = vmatprep.subr.bf16.mxu0 0
        %3237 = vmatpush1.bf16.msra.mxu0 %v2655
        %3238 = vmatprep.subr.bf16.mxu0 0
        %3239 = vmatpush1.bf16.msra.mxu0 %v2656
        %3240 = vmatprep.subr.bf16.mxu0 0
        %3241 = vmatpush1.bf16.msra.mxu0 %v2657
        %3242 = vmatprep.subr.bf16.mxu0 0
        %3243 = vmatpush1.bf16.msra.mxu0 %v2658
        %3244 = vmatprep.subr.bf16.mxu0 0
        %3245 = vmatpush1.bf16.msra.mxu0 %v2659
        %3246 = vmatprep.subr.bf16.mxu0 0
        %3247 = vmatpush1.bf16.msra.mxu0 %v2660
        %3248 = vmatprep.subr.bf16.mxu0 0
        %3249 = vmatpush1.bf16.msra.mxu0 %v2661
        %3250 = vmatprep.subr.bf16.mxu0 0
        %3251 = vmatpush1.bf16.msra.mxu0 %v2662
        %3252 = vmatprep.subr.bf16.mxu0 0
        %3253 = vmatpush1.bf16.msra.mxu0 %v2663
        %3254 = vmatprep.subr.bf16.mxu0 0
        %3255 = vmatpush1.bf16.msra.mxu0 %v2664
        %3256 = vmatprep.subr.bf16.mxu0 0
        %3257 = vmatpush1.bf16.msra.mxu0 %v2665
        %3258 = vmatprep.subr.bf16.mxu0 0
        %3259 = vmatpush1.bf16.msra.mxu0 %v2666
        %3260 = vmatprep.subr.bf16.mxu0 0
        %3261 = vmatpush1.bf16.msra.mxu0 %v2667
        %3262 = vmatprep.subr.bf16.mxu0 0
        %3263 = vmatpush1.bf16.msra.mxu0 %v2668
        %3264 = vmatprep.mubr.bf16.mxu0 %v1255
        %3265 = vmatmul.mubr.bf16.gmra.mrb[0].mxu0 %v1875
        %v3266 = vpop.f32.mrb[0].mxu0
        %v3267 = vadd.f32 %v3106, %v3266
        %v3268 = vpop.f32.mrb[0].mxu0
        %v3269 = vpop.f32.mrb[0].mxu0
        %v3270 = vadd.f32 %v3109, %v3269
        %v3271 = vpop.f32.mrb[0].mxu0
        %3272 = vmatprep.mubr.bf16.mxu0 %v1256
        %3273 = vmatmul.mubr.bf16.gmra.mrb[0].mxu0 %v1876
        %v3274 = vpop.f32.mrb[0].mxu0
        %v3275 = vadd.f32 %v3114, %v3274
        %v3276 = vpop.f32.mrb[0].mxu0
        %v3277 = vpop.f32.mrb[0].mxu0
        %v3278 = vadd.f32 %v3117, %v3277
        %v3279 = vpop.f32.mrb[0].mxu0
        %3280 = vmatprep.mubr.bf16.mxu0 %v1257
        %3281 = vmatmul.mubr.bf16.gmra.mrb[0].mxu0 %v1877
        %v3282 = vpop.f32.mrb[0].mxu0
        %v3283 = vadd.f32 %v3122, %v3282
        %v3284 = vpop.f32.mrb[0].mxu0
        %v3285 = vpop.f32.mrb[0].mxu0
        %v3286 = vadd.f32 %v3125, %v3285
        %v3287 = vpop.f32.mrb[0].mxu0
        %3288 = vmatprep.mubr.bf16.mxu0 %v1258
        %3289 = vmatmul.mubr.bf16.gmra.mrb[0].mxu0 %v1878
        %v3290 = vpop.f32.mrb[0].mxu0
        %v3291 = vadd.f32 %v3130, %v3290
        %v3292 = vpop.f32.mrb[0].mxu0
        %v3293 = vpop.f32.mrb[0].mxu0
        %v3294 = vadd.f32 %v3133, %v3293
        %v3295 = vpop.f32.mrb[0].mxu0
        %3296 = vmatprep.mubr.bf16.mxu0 %v1259
        %3297 = vmatmul.mubr.bf16.gmra.mrb[0].mxu0 %v1879
        %v3298 = vpop.f32.mrb[0].mxu0
        %v3299 = vadd.f32 %v3138, %v3298
        %v3300 = vpop.f32.mrb[0].mxu0
        %v3301 = vpop.f32.mrb[0].mxu0
        %v3302 = vadd.f32 %v3141, %v3301
        %v3303 = vpop.f32.mrb[0].mxu0
        %3304 = vmatprep.mubr.bf16.mxu0 %v1260
        %3305 = vmatmul.mubr.bf16.gmra.mrb[0].mxu0 %v1880
        %v3306 = vpop.f32.mrb[0].mxu0
        %v3307 = vadd.f32 %v3146, %v3306
        %v3308 = vpop.f32.mrb[0].mxu0
        %v3309 = vpop.f32.mrb[0].mxu0
        %v3310 = vadd.f32 %v3149, %v3309
        %v3311 = vpop.f32.mrb[0].mxu0
        %3312 = vmatprep.mubr.bf16.mxu0 %v1261
        %3313 = vmatmul.mubr.bf16.gmra.mrb[0].mxu0 %v1881
        %v3314 = vpop.f32.mrb[0].mxu0
        %v3315 = vadd.f32 %v3154, %v3314
        %v3316 = vpop.f32.mrb[0].mxu0
        %v3317 = vpop.f32.mrb[0].mxu0
        %v3318 = vadd.f32 %v3157, %v3317
        %v3319 = vpop.f32.mrb[0].mxu0
        %3320 = vmatprep.mubr.bf16.mxu0 %v1262
        %3321 = vmatmul.mubr.bf16.gmra.mrb[0].mxu0 %v1882
        %v3322 = vpop.f32.mrb[0].mxu0
        %v3323 = vadd.f32 %v3162, %v3322
        %v3324 = vpop.f32.mrb[0].mxu0
        %v3325 = vpop.f32.mrb[0].mxu0
        %v3326 = vadd.f32 %v3165, %v3325
        %v3327 = vpop.f32.mrb[0].mxu0
        %3328 = vmatprep.mubr.bf16.mxu0 %v1263
        %3329 = vmatmul.mubr.bf16.gmra.mrb[0].mxu0 %v1883
        %v3330 = vpop.f32.mrb[0].mxu0
        %v3331 = vadd.f32 %v3170, %v3330
        %v3332 = vpop.f32.mrb[0].mxu0
        %v3333 = vpop.f32.mrb[0].mxu0
        %v3334 = vadd.f32 %v3173, %v3333
        %v3335 = vpop.f32.mrb[0].mxu0
        %3336 = vmatprep.mubr.bf16.mxu0 %v1264
        %3337 = vmatmul.mubr.bf16.gmra.mrb[0].mxu0 %v1884
        %v3338 = vpop.f32.mrb[0].mxu0
        %v3339 = vadd.f32 %v3178, %v3338
        %v3340 = vpop.f32.mrb[0].mxu0
        %v3341 = vpop.f32.mrb[0].mxu0
        %v3342 = vadd.f32 %v3181, %v3341
        %v3343 = vpop.f32.mrb[0].mxu0
        %3344 = vmatprep.mubr.bf16.mxu0 %v1265
        %3345 = vmatmul.mubr.bf16.gmra.mrb[0].mxu0 %v1885
        %v3346 = vpop.f32.mrb[0].mxu0
        %v3347 = vadd.f32 %v3186, %v3346
        %v3348 = vpop.f32.mrb[0].mxu0
        %v3349 = vpop.f32.mrb[0].mxu0
        %v3350 = vadd.f32 %v3189, %v3349
        %v3351 = vpop.f32.mrb[0].mxu0
        %3352 = vmatprep.mubr.bf16.mxu0 %v1266
        %3353 = vmatmul.mubr.bf16.gmra.mrb[0].mxu0 %v1886
        %v3354 = vpop.f32.mrb[0].mxu0
        %v3355 = vadd.f32 %v3194, %v3354
        %v3356 = vpop.f32.mrb[0].mxu0
        %v3357 = vpop.f32.mrb[0].mxu0
        %v3358 = vadd.f32 %v3197, %v3357
        %v3359 = vpop.f32.mrb[0].mxu0
        %3360 = vmatprep.mubr.bf16.mxu0 %v1267
        %3361 = vmatmul.mubr.bf16.gmra.mrb[0].mxu0 %v1887
        %v3362 = vpop.f32.mrb[0].mxu0
        %v3363 = vadd.f32 %v3202, %v3362
        %v3364 = vpop.f32.mrb[0].mxu0
        %v3365 = vpop.f32.mrb[0].mxu0
        %v3366 = vadd.f32 %v3205, %v3365
        %v3367 = vpop.f32.mrb[0].mxu0
        %3368 = vmatprep.mubr.bf16.mxu0 %v1268
        %3369 = vmatmul.mubr.bf16.gmra.mrb[0].mxu0 %v1888
        %v3370 = vpop.f32.mrb[0].mxu0
        %v3371 = vadd.f32 %v3210, %v3370
        %v3372 = vpop.f32.mrb[0].mxu0
        %v3373 = vpop.f32.mrb[0].mxu0
        %v3374 = vadd.f32 %v3213, %v3373
        %v3375 = vpop.f32.mrb[0].mxu0
        %3376 = vmatprep.mubr.bf16.mxu0 %v1630
        %3377 = vmatmul.mubr.bf16.gmra.mrb[0].mxu0 %v1889
        %v3378 = vpop.f32.mrb[0].mxu0
        %v3379 = vadd.f32 %v3218, %v3378
        %v3380 = vpop.f32.mrb[0].mxu0
        %v3381 = vpop.f32.mrb[0].mxu0
        %v3382 = vadd.f32 %v3221, %v3381
        %v3383 = vpop.f32.mrb[0].mxu0
        %3384 = vmatprep.mubr.bf16.mxu0 %v1898
        %3385 = vmatmul.mubr.bf16.gmra.mrb[0].mxu0 %v1890
        %v3386 = vpop.f32.mrb[0].mxu0
        %v3387 = vadd.f32 %v3226, %v3386
        %v3388 = vpop.f32.mrb[0].mxu0
        %v3389 = vpop.f32.mrb[0].mxu0
        %v3390 = vadd.f32 %v3229, %v3389
        %v3391 = vpop.f32.mrb[0].mxu0
        %3392 = vdwg.mxu0
        %3393 = vmatprep.subr.bf16.mxu0 0
        %3394 = vmatpush1.bf16.msra.mxu0 %v2669
        %3395 = vmatprep.subr.bf16.mxu0 0
        %3396 = vmatpush1.bf16.msra.mxu0 %v2670
        %3397 = vmatprep.subr.bf16.mxu0 0
        %3398 = vmatpush1.bf16.msra.mxu0 %v2671
        %3399 = vmatprep.subr.bf16.mxu0 0
        %3400 = vmatpush1.bf16.msra.mxu0 %v2672
        %3401 = vmatprep.subr.bf16.mxu0 0
        %3402 = vmatpush1.bf16.msra.mxu0 %v2673
        %3403 = vmatprep.subr.bf16.mxu0 0
        %3404 = vmatpush1.bf16.msra.mxu0 %v2674
        %3405 = vmatprep.subr.bf16.mxu0 0
        %3406 = vmatpush1.bf16.msra.mxu0 %v2675
        %3407 = vmatprep.subr.bf16.mxu0 0
        %3408 = vmatpush1.bf16.msra.mxu0 %v2676
        %3409 = vmatprep.subr.bf16.mxu0 0
        %3410 = vmatpush1.bf16.msra.mxu0 0
        %3411 = vmatprep.subr.bf16.mxu0 0
        %3412 = vmatpush1.bf16.msra.mxu0 0
        %3413 = vmatprep.subr.bf16.mxu0 0
        %3414 = vmatpush1.bf16.msra.mxu0 0
        %3415 = vmatprep.subr.bf16.mxu0 0
        %3416 = vmatpush1.bf16.msra.mxu0 0
        %3417 = vmatprep.subr.bf16.mxu0 0
        %3418 = vmatpush1.bf16.msra.mxu0 0
        %3419 = vmatprep.subr.bf16.mxu0 0
        %3420 = vmatpush1.bf16.msra.mxu0 0
        %3421 = vmatprep.subr.bf16.mxu0 0
        %3422 = vmatpush1.bf16.msra.mxu0 0
        %3423 = vmatprep.subr.bf16.mxu0 0
        %3424 = vmatpush1.bf16.msra.mxu0 0
        %3425 = vmatprep.mubr.bf16.mxu0 0
        %3426 = vmatmul.mubr.bf16.gmra.mrb[0].mxu0 %v2013
        %v3427 = vpop.f32.mrb[0].mxu0
        %v3428 = vadd.f32 %v3267, %v3427
        %v3429 = vpop.f32.mrb[0].mxu0
        %v3430 = vpop.f32.mrb[0].mxu0
        %v3431 = vadd.f32 %v3270, %v3430
        %v3432 = vpop.f32.mrb[0].mxu0
        %3433 = vmatprep.mubr.bf16.mxu0 0
        %3434 = vmatmul.mubr.bf16.gmra.mrb[0].mxu0 %v2014
        %v3435 = vpop.f32.mrb[0].mxu0
        %v3436 = vadd.f32 %v3275, %v3435
        %v3437 = vpop.f32.mrb[0].mxu0
        %v3438 = vpop.f32.mrb[0].mxu0
        %v3439 = vadd.f32 %v3278, %v3438
        %v3440 = vpop.f32.mrb[0].mxu0
        %3441 = vmatprep.mubr.bf16.mxu0 0
        %3442 = vmatmul.mubr.bf16.gmra.mrb[0].mxu0 %v2015
        %v3443 = vpop.f32.mrb[0].mxu0
        %v3444 = vadd.f32 %v3283, %v3443
        %v3445 = vpop.f32.mrb[0].mxu0
        %v3446 = vpop.f32.mrb[0].mxu0
        %v3447 = vadd.f32 %v3286, %v3446
        %v3448 = vpop.f32.mrb[0].mxu0
        %3449 = vmatprep.mubr.bf16.mxu0 0
        %3450 = vmatmul.mubr.bf16.gmra.mrb[0].mxu0 %v2016
        %v3451 = vpop.f32.mrb[0].mxu0
        %v3452 = vadd.f32 %v3291, %v3451
        %v3453 = vpop.f32.mrb[0].mxu0
        %v3454 = vpop.f32.mrb[0].mxu0
        %v3455 = vadd.f32 %v3294, %v3454
        %v3456 = vpop.f32.mrb[0].mxu0
        %3457 = vmatprep.mubr.bf16.mxu0 0
        %3458 = vmatmul.mubr.bf16.gmra.mrb[0].mxu0 %v2017
        %v3459 = vpop.f32.mrb[0].mxu0
        %v3460 = vadd.f32 %v3299, %v3459
        %v3461 = vpop.f32.mrb[0].mxu0
        %v3462 = vpop.f32.mrb[0].mxu0
        %v3463 = vadd.f32 %v3302, %v3462
        %v3464 = vpop.f32.mrb[0].mxu0
        %3465 = vmatprep.mubr.bf16.mxu0 0
        %3466 = vmatmul.mubr.bf16.gmra.mrb[0].mxu0 %v2018
        %v3467 = vpop.f32.mrb[0].mxu0
        %v3468 = vadd.f32 %v3307, %v3467
        %v3469 = vpop.f32.mrb[0].mxu0
        %v3470 = vpop.f32.mrb[0].mxu0
        %v3471 = vadd.f32 %v3310, %v3470
        %v3472 = vpop.f32.mrb[0].mxu0
        %3473 = vmatprep.mubr.bf16.mxu0 0
        %3474 = vmatmul.mubr.bf16.gmra.mrb[0].mxu0 %v2019
        %v3475 = vpop.f32.mrb[0].mxu0
        %v3476 = vadd.f32 %v3315, %v3475
        %v3477 = vpop.f32.mrb[0].mxu0
        %v3478 = vpop.f32.mrb[0].mxu0
        %v3479 = vadd.f32 %v3318, %v3478
        %v3480 = vpop.f32.mrb[0].mxu0
        %3481 = vmatprep.mubr.bf16.mxu0 0
        %3482 = vmatmul.mubr.bf16.gmra.mrb[0].mxu0 %v2020
        %v3483 = vpop.f32.mrb[0].mxu0
        %v3484 = vadd.f32 %v3323, %v3483
        %v3485 = vpop.f32.mrb[0].mxu0
        %v3486 = vpop.f32.mrb[0].mxu0
        %v3487 = vadd.f32 %v3326, %v3486
        %v3488 = vpop.f32.mrb[0].mxu0
        %3489 = vmatprep.mubr.bf16.mxu0 0
        %3490 = vmatmul.mubr.bf16.gmra.mrb[0].mxu0 %v2021
        %v3491 = vpop.f32.mrb[0].mxu0
        %v3492 = vadd.f32 %v3331, %v3491
        %v3493 = vpop.f32.mrb[0].mxu0
        %v3494 = vpop.f32.mrb[0].mxu0
        %v3495 = vadd.f32 %v3334, %v3494
        %v3496 = vpop.f32.mrb[0].mxu0
        %3497 = vmatprep.mubr.bf16.mxu0 0
        %3498 = vmatmul.mubr.bf16.gmra.mrb[0].mxu0 %v2022
        %v3499 = vpop.f32.mrb[0].mxu0
        %v3500 = vadd.f32 %v3339, %v3499
        %v3501 = vpop.f32.mrb[0].mxu0
        %v3502 = vpop.f32.mrb[0].mxu0
        %v3503 = vadd.f32 %v3342, %v3502
        %v3504 = vpop.f32.mrb[0].mxu0
        %3505 = vmatprep.mubr.bf16.mxu0 0
        %3506 = vmatmul.mubr.bf16.gmra.mrb[0].mxu0 %v2023
        %v3507 = vpop.f32.mrb[0].mxu0
        %v3508 = vadd.f32 %v3347, %v3507
        %v3509 = vpop.f32.mrb[0].mxu0
        %v3510 = vpop.f32.mrb[0].mxu0
        %v3511 = vadd.f32 %v3350, %v3510
        %v3512 = vpop.f32.mrb[0].mxu0
        %3513 = vmatprep.mubr.bf16.mxu0 0
        %3514 = vmatmul.mubr.bf16.gmra.mrb[0].mxu0 %v2024
        %v3515 = vpop.f32.mrb[0].mxu0
        %v3516 = vadd.f32 %v3355, %v3515
        %v3517 = vpop.f32.mrb[0].mxu0
        %v3518 = vpop.f32.mrb[0].mxu0
        %v3519 = vadd.f32 %v3358, %v3518
        %v3520 = vpop.f32.mrb[0].mxu0
        %3521 = vmatprep.mubr.bf16.mxu0 0
        %3522 = vmatmul.mubr.bf16.gmra.mrb[0].mxu0 %v2025
        %v3523 = vpop.f32.mrb[0].mxu0
        %v3524 = vadd.f32 %v3363, %v3523
        %v3525 = vpop.f32.mrb[0].mxu0
        %v3526 = vpop.f32.mrb[0].mxu0
        %v3527 = vadd.f32 %v3366, %v3526
        %v3528 = vpop.f32.mrb[0].mxu0
        %3529 = vmatprep.mubr.bf16.mxu0 0
        %3530 = vmatmul.mubr.bf16.gmra.mrb[0].mxu0 %v2026
        %v3531 = vpop.f32.mrb[0].mxu0
        %v3532 = vadd.f32 %v3371, %v3531
        %v3533 = vpop.f32.mrb[0].mxu0
        %v3534 = vpop.f32.mrb[0].mxu0
        %v3535 = vadd.f32 %v3374, %v3534
        %v3536 = vpop.f32.mrb[0].mxu0
        %3537 = vmatprep.mubr.bf16.mxu0 0
        %3538 = vmatmul.mubr.bf16.gmra.mrb[0].mxu0 %v2027
        %v3539 = vpop.f32.mrb[0].mxu0
        %v3540 = vadd.f32 %v3379, %v3539
        %v3541 = vpop.f32.mrb[0].mxu0
        %v3542 = vpop.f32.mrb[0].mxu0
        %v3543 = vadd.f32 %v3382, %v3542
        %v3544 = vpop.f32.mrb[0].mxu0
        %3545 = vmatprep.mubr.bf16.mxu0 0
        %3546 = vmatmul.mubr.bf16.gmra.mrb[0].mxu0 %v2028
        %v3547 = vpop.f32.mrb[0].mxu0
        %v3548 = vadd.f32 %v3387, %v3547
        %v3549 = vpop.f32.mrb[0].mxu0
        %v3550 = vpop.f32.mrb[0].mxu0
        %v3551 = vadd.f32 %v3390, %v3550
        %v3552 = vpop.f32.mrb[0].mxu0
        %3553 = vdwg.mxu0
        %3554 = vmatprep.subr.bf16.mxu0 0
        %3555 = vmatpush1.bf16.msra.mxu0 %v2605
        %3556 = vmatprep.subr.bf16.mxu0 0
        %3557 = vmatpush1.bf16.msra.mxu0 %v2606
        %3558 = vmatprep.subr.bf16.mxu0 0
        %3559 = vmatpush1.bf16.msra.mxu0 %v2607
        %3560 = vmatprep.subr.bf16.mxu0 0
        %3561 = vmatpush1.bf16.msra.mxu0 %v2608
        %3562 = vmatprep.subr.bf16.mxu0 0
        %3563 = vmatpush1.bf16.msra.mxu0 %v2609
        %3564 = vmatprep.subr.bf16.mxu0 0
        %3565 = vmatpush1.bf16.msra.mxu0 %v2610
        %3566 = vmatprep.subr.bf16.mxu0 0
        %3567 = vmatpush1.bf16.msra.mxu0 %v2611
        %3568 = vmatprep.subr.bf16.mxu0 0
        %3569 = vmatpush1.bf16.msra.mxu0 %v2612
        %3570 = vmatprep.subr.bf16.mxu0 0
        %3571 = vmatpush1.bf16.msra.mxu0 %v2613
        %3572 = vmatprep.subr.bf16.mxu0 0
        %3573 = vmatpush1.bf16.msra.mxu0 %v2614
        %3574 = vmatprep.subr.bf16.mxu0 0
        %3575 = vmatpush1.bf16.msra.mxu0 %v2615
        %3576 = vmatprep.subr.bf16.mxu0 0
        %3577 = vmatpush1.bf16.msra.mxu0 %v2616
        %3578 = vmatprep.subr.bf16.mxu0 0
        %3579 = vmatpush1.bf16.msra.mxu0 %v2617
        %3580 = vmatprep.subr.bf16.mxu0 0
        %3581 = vmatpush1.bf16.msra.mxu0 %v2618
        %3582 = vmatprep.subr.bf16.mxu0 0
        %3583 = vmatpush1.bf16.msra.mxu0 %v2619
        %3584 = vmatprep.subr.bf16.mxu0 0
        %3585 = vmatpush1.bf16.msra.mxu0 %v2620
        %3586 = vmatprep.mubr.bf16.mxu0 %v1173
        %3587 = vmatmul.mubr.bf16.gmra.mrb[0].mxu0 %v1045
        %v3588 = vpop.f32.mrb[0].mxu0
        %v3589 = vadd.f32 %v3428, %v3588
        %v3590 = vpop.f32.mrb[0].mxu0
        %v3591 = vpop.f32.mrb[0].mxu0
        %v3592 = vadd.f32 %v3431, %v3591
        %v3593 = vpop.f32.mrb[0].mxu0
        %3594 = vmatprep.mubr.bf16.mxu0 %v1174
        %3595 = vmatmul.mubr.bf16.gmra.mrb[0].mxu0 %v1046
        %v3596 = vpop.f32.mrb[0].mxu0
        %v3597 = vadd.f32 %v3436, %v3596
        %v3598 = vpop.f32.mrb[0].mxu0
        %v3599 = vpop.f32.mrb[0].mxu0
        %v3600 = vadd.f32 %v3439, %v3599
        %v3601 = vpop.f32.mrb[0].mxu0
        %3602 = vmatprep.mubr.bf16.mxu0 %v1175
        %3603 = vmatmul.mubr.bf16.gmra.mrb[0].mxu0 %v1047
        %v3604 = vpop.f32.mrb[0].mxu0
        %v3605 = vadd.f32 %v3444, %v3604
        %v3606 = vpop.f32.mrb[0].mxu0
        %v3607 = vpop.f32.mrb[0].mxu0
        %v3608 = vadd.f32 %v3447, %v3607
        %v3609 = vpop.f32.mrb[0].mxu0
        %3610 = vmatprep.mubr.bf16.mxu0 %v1176
        %3611 = vmatmul.mubr.bf16.gmra.mrb[0].mxu0 %v1048
        %v3612 = vpop.f32.mrb[0].mxu0
        %v3613 = vadd.f32 %v3452, %v3612
        %v3614 = vpop.f32.mrb[0].mxu0
        %v3615 = vpop.f32.mrb[0].mxu0
        %v3616 = vadd.f32 %v3455, %v3615
        %v3617 = vpop.f32.mrb[0].mxu0
        %3618 = vmatprep.mubr.bf16.mxu0 %v1177
        %3619 = vmatmul.mubr.bf16.gmra.mrb[0].mxu0 %v1049
        %v3620 = vpop.f32.mrb[0].mxu0
        %v3621 = vadd.f32 %v3460, %v3620
        %v3622 = vpop.f32.mrb[0].mxu0
        %v3623 = vpop.f32.mrb[0].mxu0
        %v3624 = vadd.f32 %v3463, %v3623
        %v3625 = vpop.f32.mrb[0].mxu0
        %3626 = vmatprep.mubr.bf16.mxu0 %v1178
        %3627 = vmatmul.mubr.bf16.gmra.mrb[0].mxu0 %v1050
        %v3628 = vpop.f32.mrb[0].mxu0
        %v3629 = vadd.f32 %v3468, %v3628
        %v3630 = vpop.f32.mrb[0].mxu0
        %v3631 = vpop.f32.mrb[0].mxu0
        %v3632 = vadd.f32 %v3471, %v3631
        %v3633 = vpop.f32.mrb[0].mxu0
        %3634 = vmatprep.mubr.bf16.mxu0 %v1179
        %3635 = vmatmul.mubr.bf16.gmra.mrb[0].mxu0 %v1051
        %v3636 = vpop.f32.mrb[0].mxu0
        %v3637 = vadd.f32 %v3476, %v3636
        %v3638 = vpop.f32.mrb[0].mxu0
        %v3639 = vpop.f32.mrb[0].mxu0
        %v3640 = vadd.f32 %v3479, %v3639
        %v3641 = vpop.f32.mrb[0].mxu0
        %3642 = vmatprep.mubr.bf16.mxu0 %v1180
        %3643 = vmatmul.mubr.bf16.gmra.mrb[0].mxu0 %v1052
        %v3644 = vpop.f32.mrb[0].mxu0
        %v3645 = vadd.f32 %v3484, %v3644
        %v3646 = vpop.f32.mrb[0].mxu0
        %v3647 = vpop.f32.mrb[0].mxu0
        %v3648 = vadd.f32 %v3487, %v3647
        %v3649 = vpop.f32.mrb[0].mxu0
        %3650 = vmatprep.mubr.bf16.mxu0 %v1181
        %3651 = vmatmul.mubr.bf16.gmra.mrb[0].mxu0 %v1053
        %v3652 = vpop.f32.mrb[0].mxu0
        %v3653 = vadd.f32 %v3492, %v3652
        %v3654 = vpop.f32.mrb[0].mxu0
        %v3655 = vpop.f32.mrb[0].mxu0
        %v3656 = vadd.f32 %v3495, %v3655
        %v3657 = vpop.f32.mrb[0].mxu0
        %3658 = vmatprep.mubr.bf16.mxu0 %v1182
        %3659 = vmatmul.mubr.bf16.gmra.mrb[0].mxu0 %v1054
        %v3660 = vpop.f32.mrb[0].mxu0
        %v3661 = vadd.f32 %v3500, %v3660
        %v3662 = vpop.f32.mrb[0].mxu0
        %v3663 = vpop.f32.mrb[0].mxu0
        %v3664 = vadd.f32 %v3503, %v3663
        %v3665 = vpop.f32.mrb[0].mxu0
        %3666 = vmatprep.mubr.bf16.mxu0 %v1183
        %3667 = vmatmul.mubr.bf16.gmra.mrb[0].mxu0 %v1055
        %v3668 = vpop.f32.mrb[0].mxu0
        %v3669 = vadd.f32 %v3508, %v3668
        %v3670 = vpop.f32.mrb[0].mxu0
        %v3671 = vpop.f32.mrb[0].mxu0
        %v3672 = vadd.f32 %v3511, %v3671
        %v3673 = vpop.f32.mrb[0].mxu0
        %3674 = vmatprep.mubr.bf16.mxu0 %v1184
        %3675 = vmatmul.mubr.bf16.gmra.mrb[0].mxu0 %v1056
        %v3676 = vpop.f32.mrb[0].mxu0
        %v3677 = vadd.f32 %v3516, %v3676
        %v3678 = vpop.f32.mrb[0].mxu0
        %v3679 = vpop.f32.mrb[0].mxu0
        %v3680 = vadd.f32 %v3519, %v3679
        %v3681 = vpop.f32.mrb[0].mxu0
        %3682 = vmatprep.mubr.bf16.mxu0 %v1185
        %3683 = vmatmul.mubr.bf16.gmra.mrb[0].mxu0 %v1057
        %v3684 = vpop.f32.mrb[0].mxu0
        %v3685 = vadd.f32 %v3524, %v3684
        %v3686 = vpop.f32.mrb[0].mxu0
        %v3687 = vpop.f32.mrb[0].mxu0
        %v3688 = vadd.f32 %v3527, %v3687
        %v3689 = vpop.f32.mrb[0].mxu0
        %3690 = vmatprep.mubr.bf16.mxu0 %v1186
        %3691 = vmatmul.mubr.bf16.gmra.mrb[0].mxu0 %v1058
        %v3692 = vpop.f32.mrb[0].mxu0
        %v3693 = vadd.f32 %v3532, %v3692
        %v3694 = vpop.f32.mrb[0].mxu0
        %v3695 = vpop.f32.mrb[0].mxu0
        %v3696 = vadd.f32 %v3535, %v3695
        %v3697 = vpop.f32.mrb[0].mxu0
        %3698 = vmatprep.mubr.bf16.mxu0 %v1187
        %3699 = vmatmul.mubr.bf16.gmra.mrb[0].mxu0 %v1059
        %v3700 = vpop.f32.mrb[0].mxu0
        %v3701 = vadd.f32 %v3540, %v3700
        %v3702 = vpop.f32.mrb[0].mxu0
        %v3703 = vpop.f32.mrb[0].mxu0
        %v3704 = vadd.f32 %v3543, %v3703
        %v3705 = vpop.f32.mrb[0].mxu0
        %3706 = vmatprep.mubr.bf16.mxu0 %v1188
        %3707 = vmatmul.mubr.bf16.gmra.mrb[0].mxu0 %v1060
        %v3708 = vpop.f32.mrb[0].mxu0
        %v3709 = vadd.f32 %v3548, %v3708
        %v3710 = vpop.f32.mrb[0].mxu0
        %v3711 = vpop.f32.mrb[0].mxu0
        %v3712 = vadd.f32 %v3551, %v3711
        %v3713 = vpop.f32.mrb[0].mxu0
        %3714 = vdwg.mxu0
        %3715 = vmatprep.subr.bf16.mxu0 0
        %3716 = vmatpush1.bf16.msra.mxu0 %v2621
        %3717 = vmatprep.subr.bf16.mxu0 0
        %3718 = vmatpush1.bf16.msra.mxu0 %v2622
        %3719 = vmatprep.subr.bf16.mxu0 0
        %3720 = vmatpush1.bf16.msra.mxu0 %v2623
        %3721 = vmatprep.subr.bf16.mxu0 0
        %3722 = vmatpush1.bf16.msra.mxu0 %v2624
        %3723 = vmatprep.subr.bf16.mxu0 0
        %3724 = vmatpush1.bf16.msra.mxu0 %v2625
        %3725 = vmatprep.subr.bf16.mxu0 0
        %3726 = vmatpush1.bf16.msra.mxu0 %v2626
        %3727 = vmatprep.subr.bf16.mxu0 0
        %3728 = vmatpush1.bf16.msra.mxu0 %v2627
        %3729 = vmatprep.subr.bf16.mxu0 0
        %3730 = vmatpush1.bf16.msra.mxu0 %v2628
        %3731 = vmatprep.subr.bf16.mxu0 0
        %3732 = vmatpush1.bf16.msra.mxu0 %v2629
        %3733 = vmatprep.subr.bf16.mxu0 0
        %3734 = vmatpush1.bf16.msra.mxu0 %v2630
        %3735 = vmatprep.subr.bf16.mxu0 0
        %3736 = vmatpush1.bf16.msra.mxu0 %v2631
        %3737 = vmatprep.subr.bf16.mxu0 0
        %3738 = vmatpush1.bf16.msra.mxu0 %v2632
        %3739 = vmatprep.subr.bf16.mxu0 0
        %3740 = vmatpush1.bf16.msra.mxu0 %v2633
        %3741 = vmatprep.subr.bf16.mxu0 0
        %3742 = vmatpush1.bf16.msra.mxu0 %v2634
        %3743 = vmatprep.subr.bf16.mxu0 0
        %3744 = vmatpush1.bf16.msra.mxu0 %v2635
        %3745 = vmatprep.subr.bf16.mxu0 0
        %3746 = vmatpush1.bf16.msra.mxu0 %v2636
        %3747 = vmatprep.mubr.bf16.mxu0 %v1527
        %3748 = vmatmul.mubr.bf16.gmra.mrb[0].mxu0 %v1397
        %v3749 = vpop.f32.mrb[0].mxu0
        %v3750 = vadd.f32 %v3589, %v3749
        %v3751 = vpop.f32.mrb[0].mxu0
        %v3752 = vpop.f32.mrb[0].mxu0
        %v3753 = vadd.f32 %v3592, %v3752
        %v3754 = vpop.f32.mrb[0].mxu0
        %3755 = vmatprep.mubr.bf16.mxu0 %v1528
        %3756 = vmatmul.mubr.bf16.gmra.mrb[0].mxu0 %v1398
        %v3757 = vpop.f32.mrb[0].mxu0
        %v3758 = vadd.f32 %v3597, %v3757
        %v3759 = vpop.f32.mrb[0].mxu0
        %v3760 = vpop.f32.mrb[0].mxu0
        %v3761 = vadd.f32 %v3600, %v3760
        %v3762 = vpop.f32.mrb[0].mxu0
        %3763 = vmatprep.mubr.bf16.mxu0 %v1529
        %3764 = vmatmul.mubr.bf16.gmra.mrb[0].mxu0 %v1399
        %v3765 = vpop.f32.mrb[0].mxu0
        %v3766 = vadd.f32 %v3605, %v3765
        %v3767 = vpop.f32.mrb[0].mxu0
        %v3768 = vpop.f32.mrb[0].mxu0
        %v3769 = vadd.f32 %v3608, %v3768
        %v3770 = vpop.f32.mrb[0].mxu0
        %3771 = vmatprep.mubr.bf16.mxu0 %v1530
        %3772 = vmatmul.mubr.bf16.gmra.mrb[0].mxu0 %v1400
        %v3773 = vpop.f32.mrb[0].mxu0
        %v3774 = vadd.f32 %v3613, %v3773
        %v3775 = vpop.f32.mrb[0].mxu0
        %v3776 = vpop.f32.mrb[0].mxu0
        %v3777 = vadd.f32 %v3616, %v3776
        %v3778 = vpop.f32.mrb[0].mxu0
        %3779 = vmatprep.mubr.bf16.mxu0 %v1531
        %3780 = vmatmul.mubr.bf16.gmra.mrb[0].mxu0 %v1401
        %v3781 = vpop.f32.mrb[0].mxu0
        %v3782 = vadd.f32 %v3621, %v3781
        %v3783 = vpop.f32.mrb[0].mxu0
        %v3784 = vpop.f32.mrb[0].mxu0
        %v3785 = vadd.f32 %v3624, %v3784
        %v3786 = vpop.f32.mrb[0].mxu0
        %3787 = vmatprep.mubr.bf16.mxu0 %v1532
        %3788 = vmatmul.mubr.bf16.gmra.mrb[0].mxu0 %v1402
        %v3789 = vpop.f32.mrb[0].mxu0
        %v3790 = vadd.f32 %v3629, %v3789
        %v3791 = vpop.f32.mrb[0].mxu0
        %v3792 = vpop.f32.mrb[0].mxu0
        %v3793 = vadd.f32 %v3632, %v3792
        %v3794 = vpop.f32.mrb[0].mxu0
        %3795 = vmatprep.mubr.bf16.mxu0 %v1533
        %3796 = vmatmul.mubr.bf16.gmra.mrb[0].mxu0 %v1403
        %v3797 = vpop.f32.mrb[0].mxu0
        %v3798 = vadd.f32 %v3637, %v3797
        %v3799 = vpop.f32.mrb[0].mxu0
        %v3800 = vpop.f32.mrb[0].mxu0
        %v3801 = vadd.f32 %v3640, %v3800
        %v3802 = vpop.f32.mrb[0].mxu0
        %3803 = vmatprep.mubr.bf16.mxu0 %v1534
        %3804 = vmatmul.mubr.bf16.gmra.mrb[0].mxu0 %v1404
        %v3805 = vpop.f32.mrb[0].mxu0
        %v3806 = vadd.f32 %v3645, %v3805
        %v3807 = vpop.f32.mrb[0].mxu0
        %v3808 = vpop.f32.mrb[0].mxu0
        %v3809 = vadd.f32 %v3648, %v3808
        %v3810 = vpop.f32.mrb[0].mxu0
        %3811 = vmatprep.mubr.bf16.mxu0 %v1535
        %3812 = vmatmul.mubr.bf16.gmra.mrb[0].mxu0 %v1405
        %v3813 = vpop.f32.mrb[0].mxu0
        %v3814 = vadd.f32 %v3653, %v3813
        %v3815 = vpop.f32.mrb[0].mxu0
        %v3816 = vpop.f32.mrb[0].mxu0
        %v3817 = vadd.f32 %v3656, %v3816
        %v3818 = vpop.f32.mrb[0].mxu0
        %3819 = vmatprep.mubr.bf16.mxu0 %v1536
        %3820 = vmatmul.mubr.bf16.gmra.mrb[0].mxu0 %v1406
        %v3821 = vpop.f32.mrb[0].mxu0
        %v3822 = vadd.f32 %v3661, %v3821
        %v3823 = vpop.f32.mrb[0].mxu0
        %v3824 = vpop.f32.mrb[0].mxu0
        %v3825 = vadd.f32 %v3664, %v3824
        %v3826 = vpop.f32.mrb[0].mxu0
        %3827 = vmatprep.mubr.bf16.mxu0 %v1537
        %3828 = vmatmul.mubr.bf16.gmra.mrb[0].mxu0 %v1407
        %v3829 = vpop.f32.mrb[0].mxu0
        %v3830 = vadd.f32 %v3669, %v3829
        %v3831 = vpop.f32.mrb[0].mxu0
        %v3832 = vpop.f32.mrb[0].mxu0
        %v3833 = vadd.f32 %v3672, %v3832
        %v3834 = vpop.f32.mrb[0].mxu0
        %3835 = vmatprep.mubr.bf16.mxu0 %v1538
        %3836 = vmatmul.mubr.bf16.gmra.mrb[0].mxu0 %v1408
        %v3837 = vpop.f32.mrb[0].mxu0
        %v3838 = vadd.f32 %v3677, %v3837
        %v3839 = vpop.f32.mrb[0].mxu0
        %v3840 = vpop.f32.mrb[0].mxu0
        %v3841 = vadd.f32 %v3680, %v3840
        %v3842 = vpop.f32.mrb[0].mxu0
        %3843 = vmatprep.mubr.bf16.mxu0 %v1539
        %3844 = vmatmul.mubr.bf16.gmra.mrb[0].mxu0 %v1409
        %v3845 = vpop.f32.mrb[0].mxu0
        %v3846 = vadd.f32 %v3685, %v3845
        %v3847 = vpop.f32.mrb[0].mxu0
        %v3848 = vpop.f32.mrb[0].mxu0
        %v3849 = vadd.f32 %v3688, %v3848
        %v3850 = vpop.f32.mrb[0].mxu0
        %3851 = vmatprep.mubr.bf16.mxu0 %v1540
        %3852 = vmatmul.mubr.bf16.gmra.mrb[0].mxu0 %v1410
        %v3853 = vpop.f32.mrb[0].mxu0
        %v3854 = vadd.f32 %v3693, %v3853
        %v3855 = vpop.f32.mrb[0].mxu0
        %v3856 = vpop.f32.mrb[0].mxu0
        %v3857 = vadd.f32 %v3696, %v3856
        %v3858 = vpop.f32.mrb[0].mxu0
        %3859 = vmatprep.mubr.bf16.mxu0 %v1541
        %3860 = vmatmul.mubr.bf16.gmra.mrb[0].mxu0 %v1411
        %v3861 = vpop.f32.mrb[0].mxu0
        %v3862 = vadd.f32 %v3701, %v3861
        %v3863 = vpop.f32.mrb[0].mxu0
        %v3864 = vpop.f32.mrb[0].mxu0
        %v3865 = vadd.f32 %v3704, %v3864
        %v3866 = vpop.f32.mrb[0].mxu0
        %3867 = vmatprep.mubr.bf16.mxu0 %v1542
        %3868 = vmatmul.mubr.bf16.gmra.mrb[0].mxu0 %v1412
        %v3869 = vpop.f32.mrb[0].mxu0
        %v3870 = vadd.f32 %v3709, %v3869
        %v3871 = vpop.f32.mrb[0].mxu0
        %v3872 = vpop.f32.mrb[0].mxu0
        %v3873 = vadd.f32 %v3712, %v3872
        %v3874 = vpop.f32.mrb[0].mxu0
        %3875 = vdwg.mxu0
        %3876 = vmatprep.subr.bf16.mxu0 0
        %3877 = vmatpush1.bf16.msra.mxu0 %v2637
        %3878 = vmatprep.subr.bf16.mxu0 0
        %3879 = vmatpush1.bf16.msra.mxu0 %v2638
        %3880 = vmatprep.subr.bf16.mxu0 0
        %3881 = vmatpush1.bf16.msra.mxu0 %v2639
        %3882 = vmatprep.subr.bf16.mxu0 0
        %3883 = vmatpush1.bf16.msra.mxu0 %v2640
        %3884 = vmatprep.subr.bf16.mxu0 0
        %3885 = vmatpush1.bf16.msra.mxu0 %v2641
        %3886 = vmatprep.subr.bf16.mxu0 0
        %3887 = vmatpush1.bf16.msra.mxu0 %v2642
        %3888 = vmatprep.subr.bf16.mxu0 0
        %3889 = vmatpush1.bf16.msra.mxu0 %v2643
        %3890 = vmatprep.subr.bf16.mxu0 0
        %3891 = vmatpush1.bf16.msra.mxu0 %v2644
        %3892 = vmatprep.subr.bf16.mxu0 0
        %3893 = vmatpush1.bf16.msra.mxu0 %v2645
        %3894 = vmatprep.subr.bf16.mxu0 0
        %3895 = vmatpush1.bf16.msra.mxu0 %v2646
        %3896 = vmatprep.subr.bf16.mxu0 0
        %3897 = vmatpush1.bf16.msra.mxu0 %v2647
        %3898 = vmatprep.subr.bf16.mxu0 0
        %3899 = vmatpush1.bf16.msra.mxu0 %v2648
        %3900 = vmatprep.subr.bf16.mxu0 0
        %3901 = vmatpush1.bf16.msra.mxu0 %v2649
        %3902 = vmatprep.subr.bf16.mxu0 0
        %3903 = vmatpush1.bf16.msra.mxu0 %v2650
        %3904 = vmatprep.subr.bf16.mxu0 0
        %3905 = vmatpush1.bf16.msra.mxu0 %v2651
        %3906 = vmatprep.subr.bf16.mxu0 0
        %3907 = vmatpush1.bf16.msra.mxu0 %v2652
        %3908 = vmatprep.mubr.bf16.mxu0 %v1665
        %3909 = vmatmul.mubr.bf16.gmra.mrb[0].mxu0 %v1174
        %v3910 = vpop.f32.mrb[0].mxu0
        %v3911 = vadd.f32 %v3750, %v3910
        %v3912 = vpop.f32.mrb[0].mxu0
        %v3913 = vpop.f32.mrb[0].mxu0
        %v3914 = vadd.f32 %v3753, %v3913
        %v3915 = vpop.f32.mrb[0].mxu0
        %3916 = vmatprep.mubr.bf16.mxu0 %v1666
        %3917 = vmatmul.mubr.bf16.gmra.mrb[0].mxu0 %v1175
        %v3918 = vpop.f32.mrb[0].mxu0
        %v3919 = vadd.f32 %v3758, %v3918
        %v3920 = vpop.f32.mrb[0].mxu0
        %v3921 = vpop.f32.mrb[0].mxu0
        %v3922 = vadd.f32 %v3761, %v3921
        %v3923 = vpop.f32.mrb[0].mxu0
        %3924 = vmatprep.mubr.bf16.mxu0 %v1667
        %3925 = vmatmul.mubr.bf16.gmra.mrb[0].mxu0 %v1176
        %v3926 = vpop.f32.mrb[0].mxu0
        %v3927 = vadd.f32 %v3766, %v3926
        %v3928 = vpop.f32.mrb[0].mxu0
        %v3929 = vpop.f32.mrb[0].mxu0
        %v3930 = vadd.f32 %v3769, %v3929
        %v3931 = vpop.f32.mrb[0].mxu0
        %3932 = vmatprep.mubr.bf16.mxu0 %v1668
        %3933 = vmatmul.mubr.bf16.gmra.mrb[0].mxu0 %v1177
        %v3934 = vpop.f32.mrb[0].mxu0
        %v3935 = vadd.f32 %v3774, %v3934
        %v3936 = vpop.f32.mrb[0].mxu0
        %v3937 = vpop.f32.mrb[0].mxu0
        %v3938 = vadd.f32 %v3777, %v3937
        %v3939 = vpop.f32.mrb[0].mxu0
        %3940 = vmatprep.mubr.bf16.mxu0 %v1669
        %3941 = vmatmul.mubr.bf16.gmra.mrb[0].mxu0 %v1178
        %v3942 = vpop.f32.mrb[0].mxu0
        %v3943 = vadd.f32 %v3782, %v3942
        %v3944 = vpop.f32.mrb[0].mxu0
        %v3945 = vpop.f32.mrb[0].mxu0
        %v3946 = vadd.f32 %v3785, %v3945
        %v3947 = vpop.f32.mrb[0].mxu0
        %3948 = vmatprep.mubr.bf16.mxu0 %v1670
        %3949 = vmatmul.mubr.bf16.gmra.mrb[0].mxu0 %v1179
        %v3950 = vpop.f32.mrb[0].mxu0
        %v3951 = vadd.f32 %v3790, %v3950
        %v3952 = vpop.f32.mrb[0].mxu0
        %v3953 = vpop.f32.mrb[0].mxu0
        %v3954 = vadd.f32 %v3793, %v3953
        %v3955 = vpop.f32.mrb[0].mxu0
        %3956 = vmatprep.mubr.bf16.mxu0 %v1671
        %3957 = vmatmul.mubr.bf16.gmra.mrb[0].mxu0 %v1180
        %v3958 = vpop.f32.mrb[0].mxu0
        %v3959 = vadd.f32 %v3798, %v3958
        %v3960 = vpop.f32.mrb[0].mxu0
        %v3961 = vpop.f32.mrb[0].mxu0
        %v3962 = vadd.f32 %v3801, %v3961
        %v3963 = vpop.f32.mrb[0].mxu0
        %3964 = vmatprep.mubr.bf16.mxu0 %v1672
        %3965 = vmatmul.mubr.bf16.gmra.mrb[0].mxu0 %v1181
        %v3966 = vpop.f32.mrb[0].mxu0
        %v3967 = vadd.f32 %v3806, %v3966
        %v3968 = vpop.f32.mrb[0].mxu0
        %v3969 = vpop.f32.mrb[0].mxu0
        %v3970 = vadd.f32 %v3809, %v3969
        %v3971 = vpop.f32.mrb[0].mxu0
        %3972 = vmatprep.mubr.bf16.mxu0 %v1673
        %3973 = vmatmul.mubr.bf16.gmra.mrb[0].mxu0 %v1182
        %v3974 = vpop.f32.mrb[0].mxu0
        %v3975 = vadd.f32 %v3814, %v3974
        %v3976 = vpop.f32.mrb[0].mxu0
        %v3977 = vpop.f32.mrb[0].mxu0
        %v3978 = vadd.f32 %v3817, %v3977
        %v3979 = vpop.f32.mrb[0].mxu0
        %3980 = vmatprep.mubr.bf16.mxu0 %v1674
        %3981 = vmatmul.mubr.bf16.gmra.mrb[0].mxu0 %v1183
        %v3982 = vpop.f32.mrb[0].mxu0
        %v3983 = vadd.f32 %v3822, %v3982
        %v3984 = vpop.f32.mrb[0].mxu0
        %v3985 = vpop.f32.mrb[0].mxu0
        %v3986 = vadd.f32 %v3825, %v3985
        %v3987 = vpop.f32.mrb[0].mxu0
        %3988 = vmatprep.mubr.bf16.mxu0 %v1675
        %3989 = vmatmul.mubr.bf16.gmra.mrb[0].mxu0 %v1184
        %v3990 = vpop.f32.mrb[0].mxu0
        %v3991 = vadd.f32 %v3830, %v3990
        %v3992 = vpop.f32.mrb[0].mxu0
        %v3993 = vpop.f32.mrb[0].mxu0
        %v3994 = vadd.f32 %v3833, %v3993
        %v3995 = vpop.f32.mrb[0].mxu0
        %3996 = vmatprep.mubr.bf16.mxu0 %v1676
        %3997 = vmatmul.mubr.bf16.gmra.mrb[0].mxu0 %v1185
        %v3998 = vpop.f32.mrb[0].mxu0
        %v3999 = vadd.f32 %v3838, %v3998
        %v4000 = vpop.f32.mrb[0].mxu0
        %v4001 = vpop.f32.mrb[0].mxu0
        %v4002 = vadd.f32 %v3841, %v4001
        %v4003 = vpop.f32.mrb[0].mxu0
        %4004 = vmatprep.mubr.bf16.mxu0 %v1677
        %4005 = vmatmul.mubr.bf16.gmra.mrb[0].mxu0 %v1186
        %v4006 = vpop.f32.mrb[0].mxu0
        %v4007 = vadd.f32 %v3846, %v4006
        %v4008 = vpop.f32.mrb[0].mxu0
        %v4009 = vpop.f32.mrb[0].mxu0
        %v4010 = vadd.f32 %v3849, %v4009
        %v4011 = vpop.f32.mrb[0].mxu0
        %4012 = vmatprep.mubr.bf16.mxu0 %v1678
        %4013 = vmatmul.mubr.bf16.gmra.mrb[0].mxu0 %v1187
        %v4014 = vpop.f32.mrb[0].mxu0
        %v4015 = vadd.f32 %v3854, %v4014
        %v4016 = vpop.f32.mrb[0].mxu0
        %v4017 = vpop.f32.mrb[0].mxu0
        %v4018 = vadd.f32 %v3857, %v4017
        %v4019 = vpop.f32.mrb[0].mxu0
        %4020 = vmatprep.mubr.bf16.mxu0 %v1679
        %4021 = vmatmul.mubr.bf16.gmra.mrb[0].mxu0 %v1188
        %v4022 = vpop.f32.mrb[0].mxu0
        %v4023 = vadd.f32 %v3862, %v4022
        %v4024 = vpop.f32.mrb[0].mxu0
        %v4025 = vpop.f32.mrb[0].mxu0
        %v4026 = vadd.f32 %v3865, %v4025
        %v4027 = vpop.f32.mrb[0].mxu0
        %4028 = vmatprep.mubr.bf16.mxu0 %v1680
        %4029 = vmatmul.mubr.bf16.gmra.mrb[0].mxu0 %v1625
        %v4030 = vpop.f32.mrb[0].mxu0
        %v4031 = vadd.f32 %v3870, %v4030
        %v4032 = vpop.f32.mrb[0].mxu0
        %v4033 = vpop.f32.mrb[0].mxu0
        %v4034 = vadd.f32 %v3873, %v4033
        %v4035 = vpop.f32.mrb[0].mxu0
        %4036 = vdwg.mxu0
        %4037 = vmatprep.subr.bf16.mxu0 0
        %4038 = vmatpush1.bf16.msra.mxu0 %v2653
        %4039 = vmatprep.subr.bf16.mxu0 0
        %4040 = vmatpush1.bf16.msra.mxu0 %v2654
        %4041 = vmatprep.subr.bf16.mxu0 0
        %4042 = vmatpush1.bf16.msra.mxu0 %v2655
        %4043 = vmatprep.subr.bf16.mxu0 0
        %4044 = vmatpush1.bf16.msra.mxu0 %v2656
        %4045 = vmatprep.subr.bf16.mxu0 0
        %4046 = vmatpush1.bf16.msra.mxu0 %v2657
        %4047 = vmatprep.subr.bf16.mxu0 0
        %4048 = vmatpush1.bf16.msra.mxu0 %v2658
        %4049 = vmatprep.subr.bf16.mxu0 0
        %4050 = vmatpush1.bf16.msra.mxu0 %v2659
        %4051 = vmatprep.subr.bf16.mxu0 0
        %4052 = vmatpush1.bf16.msra.mxu0 %v2660
        %4053 = vmatprep.subr.bf16.mxu0 0
        %4054 = vmatpush1.bf16.msra.mxu0 %v2661
        %4055 = vmatprep.subr.bf16.mxu0 0
        %4056 = vmatpush1.bf16.msra.mxu0 %v2662
        %4057 = vmatprep.subr.bf16.mxu0 0
        %4058 = vmatpush1.bf16.msra.mxu0 %v2663
        %4059 = vmatprep.subr.bf16.mxu0 0
        %4060 = vmatpush1.bf16.msra.mxu0 %v2664
        %4061 = vmatprep.subr.bf16.mxu0 0
        %4062 = vmatpush1.bf16.msra.mxu0 %v2665
        %4063 = vmatprep.subr.bf16.mxu0 0
        %4064 = vmatpush1.bf16.msra.mxu0 %v2666
        %4065 = vmatprep.subr.bf16.mxu0 0
        %4066 = vmatpush1.bf16.msra.mxu0 %v2667
        %4067 = vmatprep.subr.bf16.mxu0 0
        %4068 = vmatpush1.bf16.msra.mxu0 %v2668
        %4069 = vmatprep.mubr.bf16.mxu0 %v1175
        %4070 = vmatmul.mubr.bf16.gmra.mrb[0].mxu0 %v1795
        %v4071 = vpop.f32.mrb[0].mxu0
        %v4072 = vadd.f32 %v3911, %v4071
        %v4073 = vpop.f32.mrb[0].mxu0
        %v4074 = vpop.f32.mrb[0].mxu0
        %v4075 = vadd.f32 %v3914, %v4074
        %v4076 = vpop.f32.mrb[0].mxu0
        %4077 = vmatprep.mubr.bf16.mxu0 %v1176
        %4078 = vmatmul.mubr.bf16.gmra.mrb[0].mxu0 %v1796
        %v4079 = vpop.f32.mrb[0].mxu0
        %v4080 = vadd.f32 %v3919, %v4079
        %v4081 = vpop.f32.mrb[0].mxu0
        %v4082 = vpop.f32.mrb[0].mxu0
        %v4083 = vadd.f32 %v3922, %v4082
        %v4084 = vpop.f32.mrb[0].mxu0
        %4085 = vmatprep.mubr.bf16.mxu0 %v1177
        %4086 = vmatmul.mubr.bf16.gmra.mrb[0].mxu0 %v1797
        %v4087 = vpop.f32.mrb[0].mxu0
        %v4088 = vadd.f32 %v3927, %v4087
        %v4089 = vpop.f32.mrb[0].mxu0
        %v4090 = vpop.f32.mrb[0].mxu0
        %v4091 = vadd.f32 %v3930, %v4090
        %v4092 = vpop.f32.mrb[0].mxu0
        %4093 = vmatprep.mubr.bf16.mxu0 %v1178
        %4094 = vmatmul.mubr.bf16.gmra.mrb[0].mxu0 %v1798
        %v4095 = vpop.f32.mrb[0].mxu0
        %v4096 = vadd.f32 %v3935, %v4095
        %v4097 = vpop.f32.mrb[0].mxu0
        %v4098 = vpop.f32.mrb[0].mxu0
        %v4099 = vadd.f32 %v3938, %v4098
        %v4100 = vpop.f32.mrb[0].mxu0
        %4101 = vmatprep.mubr.bf16.mxu0 %v1179
        %4102 = vmatmul.mubr.bf16.gmra.mrb[0].mxu0 %v1799
        %v4103 = vpop.f32.mrb[0].mxu0
        %v4104 = vadd.f32 %v3943, %v4103
        %v4105 = vpop.f32.mrb[0].mxu0
        %v4106 = vpop.f32.mrb[0].mxu0
        %v4107 = vadd.f32 %v3946, %v4106
        %v4108 = vpop.f32.mrb[0].mxu0
        %4109 = vmatprep.mubr.bf16.mxu0 %v1180
        %4110 = vmatmul.mubr.bf16.gmra.mrb[0].mxu0 %v1800
        %v4111 = vpop.f32.mrb[0].mxu0
        %v4112 = vadd.f32 %v3951, %v4111
        %v4113 = vpop.f32.mrb[0].mxu0
        %v4114 = vpop.f32.mrb[0].mxu0
        %v4115 = vadd.f32 %v3954, %v4114
        %v4116 = vpop.f32.mrb[0].mxu0
        %4117 = vmatprep.mubr.bf16.mxu0 %v1181
        %4118 = vmatmul.mubr.bf16.gmra.mrb[0].mxu0 %v1801
        %v4119 = vpop.f32.mrb[0].mxu0
        %v4120 = vadd.f32 %v3959, %v4119
        %v4121 = vpop.f32.mrb[0].mxu0
        %v4122 = vpop.f32.mrb[0].mxu0
        %v4123 = vadd.f32 %v3962, %v4122
        %v4124 = vpop.f32.mrb[0].mxu0
        %4125 = vmatprep.mubr.bf16.mxu0 %v1182
        %4126 = vmatmul.mubr.bf16.gmra.mrb[0].mxu0 %v1802
        %v4127 = vpop.f32.mrb[0].mxu0
        %v4128 = vadd.f32 %v3967, %v4127
        %v4129 = vpop.f32.mrb[0].mxu0
        %v4130 = vpop.f32.mrb[0].mxu0
        %v4131 = vadd.f32 %v3970, %v4130
        %v4132 = vpop.f32.mrb[0].mxu0
        %4133 = vmatprep.mubr.bf16.mxu0 %v1183
        %4134 = vmatmul.mubr.bf16.gmra.mrb[0].mxu0 %v1803
        %v4135 = vpop.f32.mrb[0].mxu0
        %v4136 = vadd.f32 %v3975, %v4135
        %v4137 = vpop.f32.mrb[0].mxu0
        %v4138 = vpop.f32.mrb[0].mxu0
        %v4139 = vadd.f32 %v3978, %v4138
        %v4140 = vpop.f32.mrb[0].mxu0
        %4141 = vmatprep.mubr.bf16.mxu0 %v1184
        %4142 = vmatmul.mubr.bf16.gmra.mrb[0].mxu0 %v1804
        %v4143 = vpop.f32.mrb[0].mxu0
        %v4144 = vadd.f32 %v3983, %v4143
        %v4145 = vpop.f32.mrb[0].mxu0
        %v4146 = vpop.f32.mrb[0].mxu0
        %v4147 = vadd.f32 %v3986, %v4146
        %v4148 = vpop.f32.mrb[0].mxu0
        %4149 = vmatprep.mubr.bf16.mxu0 %v1185
        %4150 = vmatmul.mubr.bf16.gmra.mrb[0].mxu0 %v1805
        %v4151 = vpop.f32.mrb[0].mxu0
        %v4152 = vadd.f32 %v3991, %v4151
        %v4153 = vpop.f32.mrb[0].mxu0
        %v4154 = vpop.f32.mrb[0].mxu0
        %v4155 = vadd.f32 %v3994, %v4154
        %v4156 = vpop.f32.mrb[0].mxu0
        %4157 = vmatprep.mubr.bf16.mxu0 %v1186
        %4158 = vmatmul.mubr.bf16.gmra.mrb[0].mxu0 %v1806
        %v4159 = vpop.f32.mrb[0].mxu0
        %v4160 = vadd.f32 %v3999, %v4159
        %v4161 = vpop.f32.mrb[0].mxu0
        %v4162 = vpop.f32.mrb[0].mxu0
        %v4163 = vadd.f32 %v4002, %v4162
        %v4164 = vpop.f32.mrb[0].mxu0
        %4165 = vmatprep.mubr.bf16.mxu0 %v1187
        %4166 = vmatmul.mubr.bf16.gmra.mrb[0].mxu0 %v1807
        %v4167 = vpop.f32.mrb[0].mxu0
        %v4168 = vadd.f32 %v4007, %v4167
        %v4169 = vpop.f32.mrb[0].mxu0
        %v4170 = vpop.f32.mrb[0].mxu0
        %v4171 = vadd.f32 %v4010, %v4170
        %v4172 = vpop.f32.mrb[0].mxu0
        %4173 = vmatprep.mubr.bf16.mxu0 %v1188
        %4174 = vmatmul.mubr.bf16.gmra.mrb[0].mxu0 %v1808
        %v4175 = vpop.f32.mrb[0].mxu0
        %v4176 = vadd.f32 %v4015, %v4175
        %v4177 = vpop.f32.mrb[0].mxu0
        %v4178 = vpop.f32.mrb[0].mxu0
        %v4179 = vadd.f32 %v4018, %v4178
        %v4180 = vpop.f32.mrb[0].mxu0
        %4181 = vmatprep.mubr.bf16.mxu0 %v1625
        %4182 = vmatmul.mubr.bf16.gmra.mrb[0].mxu0 %v1809
        %v4183 = vpop.f32.mrb[0].mxu0
        %v4184 = vadd.f32 %v4023, %v4183
        %v4185 = vpop.f32.mrb[0].mxu0
        %v4186 = vpop.f32.mrb[0].mxu0
        %v4187 = vadd.f32 %v4026, %v4186
        %v4188 = vpop.f32.mrb[0].mxu0
        %4189 = vmatprep.mubr.bf16.mxu0 %v1893
        %4190 = vmatmul.mubr.bf16.gmra.mrb[0].mxu0 %v1810
        %v4191 = vpop.f32.mrb[0].mxu0
        %v4192 = vadd.f32 %v4031, %v4191
        %v4193 = vpop.f32.mrb[0].mxu0
        %v4194 = vpop.f32.mrb[0].mxu0
        %v4195 = vadd.f32 %v4034, %v4194
        %v4196 = vpop.f32.mrb[0].mxu0
        %4197 = vdwg.mxu0
        %4198 = vmatprep.subr.bf16.mxu0 0
        %4199 = vmatpush1.bf16.msra.mxu0 %v2669
        %4200 = vmatprep.subr.bf16.mxu0 0
        %4201 = vmatpush1.bf16.msra.mxu0 %v2670
        %4202 = vmatprep.subr.bf16.mxu0 0
        %4203 = vmatpush1.bf16.msra.mxu0 %v2671
        %4204 = vmatprep.subr.bf16.mxu0 0
        %4205 = vmatpush1.bf16.msra.mxu0 %v2672
        %4206 = vmatprep.subr.bf16.mxu0 0
        %4207 = vmatpush1.bf16.msra.mxu0 %v2673
        %4208 = vmatprep.subr.bf16.mxu0 0
        %4209 = vmatpush1.bf16.msra.mxu0 %v2674
        %4210 = vmatprep.subr.bf16.mxu0 0
        %4211 = vmatpush1.bf16.msra.mxu0 %v2675
        %4212 = vmatprep.subr.bf16.mxu0 0
        %4213 = vmatpush1.bf16.msra.mxu0 %v2676
        %4214 = vmatprep.subr.bf16.mxu0 0
        %4215 = vmatpush1.bf16.msra.mxu0 0
        %4216 = vmatprep.subr.bf16.mxu0 0
        %4217 = vmatpush1.bf16.msra.mxu0 0
        %4218 = vmatprep.subr.bf16.mxu0 0
        %4219 = vmatpush1.bf16.msra.mxu0 0
        %4220 = vmatprep.subr.bf16.mxu0 0
        %4221 = vmatpush1.bf16.msra.mxu0 0
        %4222 = vmatprep.subr.bf16.mxu0 0
        %4223 = vmatpush1.bf16.msra.mxu0 0
        %4224 = vmatprep.subr.bf16.mxu0 0
        %4225 = vmatpush1.bf16.msra.mxu0 0
        %4226 = vmatprep.subr.bf16.mxu0 0
        %4227 = vmatpush1.bf16.msra.mxu0 0
        %4228 = vmatprep.subr.bf16.mxu0 0
        %4229 = vmatpush1.bf16.msra.mxu0 0
        %4230 = vmatprep.mubr.bf16.mxu0 0
        %4231 = vmatmul.mubr.bf16.gmra.mrb[0].mxu0 %v1933
        %v4232 = vpop.f32.mrb[0].mxu0
        %v4233 = vadd.f32 %v4072, %v4232
        %v4234 = vpop.f32.mrb[0].mxu0
        %v4235 = vpop.f32.mrb[0].mxu0
        %v4236 = vadd.f32 %v4075, %v4235
        %v4237 = vpop.f32.mrb[0].mxu0
        %4238 = vmatprep.mubr.bf16.mxu0 0
        %4239 = vmatmul.mubr.bf16.gmra.mrb[0].mxu0 %v1934
        %v4240 = vpop.f32.mrb[0].mxu0
        %v4241 = vadd.f32 %v4080, %v4240
        %v4242 = vpop.f32.mrb[0].mxu0
        %v4243 = vpop.f32.mrb[0].mxu0
        %v4244 = vadd.f32 %v4083, %v4243
        %v4245 = vpop.f32.mrb[0].mxu0
        %4246 = vmatprep.mubr.bf16.mxu0 0
        %4247 = vmatmul.mubr.bf16.gmra.mrb[0].mxu0 %v1935
        %v4248 = vpop.f32.mrb[0].mxu0
        %v4249 = vadd.f32 %v4088, %v4248
        %v4250 = vpop.f32.mrb[0].mxu0
        %v4251 = vpop.f32.mrb[0].mxu0
        %v4252 = vadd.f32 %v4091, %v4251
        %v4253 = vpop.f32.mrb[0].mxu0
        %4254 = vmatprep.mubr.bf16.mxu0 0
        %4255 = vmatmul.mubr.bf16.gmra.mrb[0].mxu0 %v1936
        %v4256 = vpop.f32.mrb[0].mxu0
        %v4257 = vadd.f32 %v4096, %v4256
        %v4258 = vpop.f32.mrb[0].mxu0
        %v4259 = vpop.f32.mrb[0].mxu0
        %v4260 = vadd.f32 %v4099, %v4259
        %v4261 = vpop.f32.mrb[0].mxu0
        %4262 = vmatprep.mubr.bf16.mxu0 0
        %4263 = vmatmul.mubr.bf16.gmra.mrb[0].mxu0 %v1937
        %v4264 = vpop.f32.mrb[0].mxu0
        %v4265 = vadd.f32 %v4104, %v4264
        %v4266 = vpop.f32.mrb[0].mxu0
        %v4267 = vpop.f32.mrb[0].mxu0
        %v4268 = vadd.f32 %v4107, %v4267
        %v4269 = vpop.f32.mrb[0].mxu0
        %4270 = vmatprep.mubr.bf16.mxu0 0
        %4271 = vmatmul.mubr.bf16.gmra.mrb[0].mxu0 %v1938
        %v4272 = vpop.f32.mrb[0].mxu0
        %v4273 = vadd.f32 %v4112, %v4272
        %v4274 = vpop.f32.mrb[0].mxu0
        %v4275 = vpop.f32.mrb[0].mxu0
        %v4276 = vadd.f32 %v4115, %v4275
        %v4277 = vpop.f32.mrb[0].mxu0
        %4278 = vmatprep.mubr.bf16.mxu0 0
        %4279 = vmatmul.mubr.bf16.gmra.mrb[0].mxu0 %v1939
        %v4280 = vpop.f32.mrb[0].mxu0
        %v4281 = vadd.f32 %v4120, %v4280
        %v4282 = vpop.f32.mrb[0].mxu0
        %v4283 = vpop.f32.mrb[0].mxu0
        %v4284 = vadd.f32 %v4123, %v4283
        %v4285 = vpop.f32.mrb[0].mxu0
        %4286 = vmatprep.mubr.bf16.mxu0 0
        %4287 = vmatmul.mubr.bf16.gmra.mrb[0].mxu0 %v1940
        %v4288 = vpop.f32.mrb[0].mxu0
        %v4289 = vadd.f32 %v4128, %v4288
        %v4290 = vpop.f32.mrb[0].mxu0
        %v4291 = vpop.f32.mrb[0].mxu0
        %v4292 = vadd.f32 %v4131, %v4291
        %v4293 = vpop.f32.mrb[0].mxu0
        %4294 = vmatprep.mubr.bf16.mxu0 0
        %4295 = vmatmul.mubr.bf16.gmra.mrb[0].mxu0 %v1941
        %v4296 = vpop.f32.mrb[0].mxu0
        %v4297 = vadd.f32 %v4136, %v4296
        %v4298 = vpop.f32.mrb[0].mxu0
        %v4299 = vpop.f32.mrb[0].mxu0
        %v4300 = vadd.f32 %v4139, %v4299
        %v4301 = vpop.f32.mrb[0].mxu0
        %4302 = vmatprep.mubr.bf16.mxu0 0
        %4303 = vmatmul.mubr.bf16.gmra.mrb[0].mxu0 %v1942
        %v4304 = vpop.f32.mrb[0].mxu0
        %v4305 = vadd.f32 %v4144, %v4304
        %v4306 = vpop.f32.mrb[0].mxu0
        %v4307 = vpop.f32.mrb[0].mxu0
        %v4308 = vadd.f32 %v4147, %v4307
        %v4309 = vpop.f32.mrb[0].mxu0
        %4310 = vmatprep.mubr.bf16.mxu0 0
        %4311 = vmatmul.mubr.bf16.gmra.mrb[0].mxu0 %v1943
        %v4312 = vpop.f32.mrb[0].mxu0
        %v4313 = vadd.f32 %v4152, %v4312
        %v4314 = vpop.f32.mrb[0].mxu0
        %v4315 = vpop.f32.mrb[0].mxu0
        %v4316 = vadd.f32 %v4155, %v4315
        %v4317 = vpop.f32.mrb[0].mxu0
        %4318 = vmatprep.mubr.bf16.mxu0 0
        %4319 = vmatmul.mubr.bf16.gmra.mrb[0].mxu0 %v1944
        %v4320 = vpop.f32.mrb[0].mxu0
        %v4321 = vadd.f32 %v4160, %v4320
        %v4322 = vpop.f32.mrb[0].mxu0
        %v4323 = vpop.f32.mrb[0].mxu0
        %v4324 = vadd.f32 %v4163, %v4323
        %v4325 = vpop.f32.mrb[0].mxu0
        %4326 = vmatprep.mubr.bf16.mxu0 0
        %4327 = vmatmul.mubr.bf16.gmra.mrb[0].mxu0 %v1945
        %v4328 = vpop.f32.mrb[0].mxu0
        %v4329 = vadd.f32 %v4168, %v4328
        %v4330 = vpop.f32.mrb[0].mxu0
        %v4331 = vpop.f32.mrb[0].mxu0
        %v4332 = vadd.f32 %v4171, %v4331
        %v4333 = vpop.f32.mrb[0].mxu0
        %4334 = vmatprep.mubr.bf16.mxu0 0
        %4335 = vmatmul.mubr.bf16.gmra.mrb[0].mxu0 %v1946
        %v4336 = vpop.f32.mrb[0].mxu0
        %v4337 = vadd.f32 %v4176, %v4336
        %v4338 = vpop.f32.mrb[0].mxu0
        %v4339 = vpop.f32.mrb[0].mxu0
        %v4340 = vadd.f32 %v4179, %v4339
        %v4341 = vpop.f32.mrb[0].mxu0
        %4342 = vmatprep.mubr.bf16.mxu0 0
        %4343 = vmatmul.mubr.bf16.gmra.mrb[0].mxu0 %v1947
        %v4344 = vpop.f32.mrb[0].mxu0
        %v4345 = vadd.f32 %v4184, %v4344
        %v4346 = vpop.f32.mrb[0].mxu0
        %v4347 = vpop.f32.mrb[0].mxu0
        %v4348 = vadd.f32 %v4187, %v4347
        %v4349 = vpop.f32.mrb[0].mxu0
        %4350 = vmatprep.mubr.bf16.mxu0 0
        %4351 = vmatmul.mubr.bf16.gmra.mrb[0].mxu0 %v1948
        %v4352 = vpop.f32.mrb[0].mxu0
        %v4353 = vadd.f32 %v4192, %v4352
        %v4354 = vpop.f32.mrb[0].mxu0
        %v4355 = vpop.f32.mrb[0].mxu0
        %v4356 = vadd.f32 %v4195, %v4355
        %v4357 = vpop.f32.mrb[0].mxu0
        %4358 = vdwg.mxu0
        %v4503 = vunpack.c.l.b16 %v2173
        %v4504 = vunpack.c.l.b16 %v2174
        %v4505 = vunpack.c.l.b16 %v2175
        %v4506 = vunpack.c.l.b16 %v2176
        %v4507 = vunpack.c.l.b16 %v2177
        %v4508 = vunpack.c.l.b16 %v2178
        %v4509 = vunpack.c.l.b16 %v2179
        %v4510 = vunpack.c.l.b16 %v2180
        %v4511 = vunpack.c.l.b16 %v2181
        %v4512 = vunpack.c.l.b16 %v2182
        %v4513 = vunpack.c.l.b16 %v2183
        %v4514 = vunpack.c.l.b16 %v2184
        %v4515 = vunpack.c.l.b16 %v2185
        %v4516 = vunpack.c.l.b16 %v2186
        %v4517 = vunpack.c.l.b16 %v2187
        %v4518 = vunpack.c.l.b16 %v2188
        %v4519 = vunpack.c.l.b16 %v2189
        %v4520 = vunpack.c.l.b16 %v2190
        %v4521 = vunpack.c.l.b16 %v2191
        %v4522 = vunpack.c.l.b16 %v2192
        %v4523 = vunpack.c.l.b16 %v2193
        %v4524 = vunpack.c.l.b16 %v2194
        %v4525 = vunpack.c.l.b16 %v2195
        %v4526 = vunpack.c.l.b16 %v2196
        %v4527 = vunpack.c.l.b16 %v2197
        %v4528 = vunpack.c.l.b16 %v2198
        %v4529 = vunpack.c.l.b16 %v2199
        %v4530 = vunpack.c.l.b16 %v2200
        %v4531 = vunpack.c.l.b16 %v2201
        %v4532 = vunpack.c.l.b16 %v2202
        %v4533 = vunpack.c.l.b16 %v2203
        %v4534 = vunpack.c.l.b16 %v2204
        %v4535 = vunpack.c.l.b16 %v2205
        %v4536 = vunpack.c.l.b16 %v2206
        %v4537 = vunpack.c.l.b16 %v2207
        %v4538 = vunpack.c.l.b16 %v2208
        %v4539 = vunpack.c.l.b16 %v2209
        %v4540 = vunpack.c.l.b16 %v2210
        %v4541 = vunpack.c.l.b16 %v2211
        %v4542 = vunpack.c.l.b16 %v2212
        %v4543 = vunpack.c.l.b16 %v2213
        %v4544 = vunpack.c.l.b16 %v2214
        %v4545 = vunpack.c.l.b16 %v2215
        %v4546 = vunpack.c.l.b16 %v2216
        %v4547 = vunpack.c.l.b16 %v2217
        %v4548 = vunpack.c.l.b16 %v2218
        %v4549 = vunpack.c.l.b16 %v2219
        %v4550 = vunpack.c.l.b16 %v2220
        %v4551 = vunpack.c.l.b16 %v2221
        %v4552 = vunpack.c.l.b16 %v2222
        %v4553 = vunpack.c.l.b16 %v2223
        %v4554 = vunpack.c.l.b16 %v2224
        %v4555 = vunpack.c.l.b16 %v2225
        %v4556 = vunpack.c.l.b16 %v2226
        %v4557 = vunpack.c.l.b16 %v2227
        %v4558 = vunpack.c.l.b16 %v2228
        %v4559 = vunpack.c.l.b16 %v2229
        %v4560 = vunpack.c.l.b16 %v2230
        %v4561 = vunpack.c.l.b16 %v2231
        %v4562 = vunpack.c.l.b16 %v2232
        %v4563 = vunpack.c.l.b16 %v2233
        %v4564 = vunpack.c.l.b16 %v2234
        %v4565 = vunpack.c.l.b16 %v2235
        %v4566 = vunpack.c.l.b16 %v2236
        %v4567 = vunpack.c.l.b16 %v2237
        %v4568 = vunpack.c.l.b16 %v2238
        %v4569 = vunpack.c.l.b16 %v2239
        %v4570 = vunpack.c.l.b16 %v2240
        %v4571 = vunpack.c.l.b16 %v2241
        %v4572 = vunpack.c.l.b16 %v2242
        %v4573 = vunpack.c.l.b16 %v2243
        %v4574 = vunpack.c.l.b16 %v2244
        %v4575 = vunpack.c.l.b16 %v2245
        %v4576 = vunpack.c.l.b16 %v2246
        %v4577 = vunpack.c.l.b16 %v2247
        %v4578 = vunpack.c.l.b16 %v2248
        %v4579 = vunpack.c.l.b16 %v2249
        %v4580 = vunpack.c.l.b16 %v2250
        %v4581 = vunpack.c.l.b16 %v2251
        %v4582 = vunpack.c.l.b16 %v2252
        %v4583 = vunpack.c.l.b16 %v2253
        %v4584 = vunpack.c.l.b16 %v2254
        %v4585 = vunpack.c.l.b16 %v2255
        %v4586 = vunpack.c.l.b16 %v2256
        %v4587 = vunpack.c.l.b16 %v2257
        %v4588 = vunpack.c.l.b16 %v2258
        %v4589 = vunpack.c.l.b16 %v2259
        %v4590 = vunpack.c.l.b16 %v2260
        %v4591 = vunpack.c.l.b16 %v2261
        %v4592 = vunpack.c.l.b16 %v2262
        %v4593 = vunpack.c.l.b16 %v2263
        %v4594 = vunpack.c.l.b16 %v2264
        %v4595 = vunpack.c.l.b16 %v2265
        %v4596 = vunpack.c.l.b16 %v2266
        %v4597 = vunpack.c.l.b16 %v2267
        %v4598 = vunpack.c.l.b16 %v2268
        %v4599 = vunpack.c.l.b16 %v2269
        %v4600 = vunpack.c.l.b16 %v2270
        %v4601 = vunpack.c.l.b16 %v2271
        %v4602 = vunpack.c.l.b16 %v2272
        %v4603 = vunpack.c.l.b16 %v2273
        %v4604 = vunpack.c.l.b16 %v2274
        %v4605 = vunpack.c.l.b16 %v2275
        %v4606 = vunpack.c.l.b16 %v2276
        %v4607 = vunpack.c.l.b16 %v2277
        %v4608 = vunpack.c.l.b16 %v2278
        %v4609 = vunpack.c.l.b16 %v2279
        %v4610 = vunpack.c.l.b16 %v2280
        %v4611 = vunpack.c.l.b16 %v2281
        %v4612 = vunpack.c.l.b16 %v2282
        %v4613 = vunpack.c.l.b16 %v2283
        %v4614 = vunpack.c.l.b16 %v2284
        %v4615 = vunpack.c.l.b16 %v2285
        %v4616 = vunpack.c.l.b16 %v2286
        %v4617 = vunpack.c.l.b16 %v2287
        %v4618 = vunpack.c.l.b16 %v2288
        %v4619 = vunpack.c.l.b16 %v2289
        %v4620 = vunpack.c.l.b16 %v2290
        %v4621 = vunpack.c.l.b16 %v2291
        %v4622 = vunpack.c.l.b16 %v2292
        %v4623 = vunpack.c.l.b16 %v2293
        %v4624 = vunpack.c.l.b16 %v2294
        %v4625 = vunpack.c.l.b16 %v2295
        %v4626 = vunpack.c.l.b16 %v2296
        %v4627 = vunpack.c.l.b16 %v2297
        %v4628 = vunpack.c.l.b16 %v2298
        %v4629 = vunpack.c.l.b16 %v2299
        %v4630 = vunpack.c.l.b16 %v2300
        %v4631 = vunpack.c.l.b16 %v2301
        %v4632 = vunpack.c.l.b16 %v2302
        %v4633 = vunpack.c.l.b16 %v2303
        %v4634 = vunpack.c.l.b16 %v2304
        %v4635 = vunpack.c.l.b16 %v2305
        %v4636 = vunpack.c.l.b16 %v2306
        %v4637 = vunpack.c.l.b16 %v2307
        %v4638 = vunpack.c.l.b16 %v2308
        %v4639 = vunpack.c.l.b16 %v2309
        %v4640 = vunpack.c.l.b16 %v2310
        %v4641 = vunpack.c.l.b16 %v2311
        %v4642 = vunpack.c.l.b16 %v2312
        %v4643 = vunpack.c.l.b16 %v2313
        %v4644 = vunpack.c.l.b16 %v2314
        %v4645 = vunpack.c.l.b16 %v2315
        %v4646 = vunpack.c.l.b16 %v2316
        %v4647 = vpack.c.b16 %v4504, %v4503
        %v4648 = vpack.c.b16 %v4506, %v4505
        %v4649 = vpack.c.b16 %v4508, %v4507
        %v4650 = vpack.c.b16 %v4510, %v4509
        %v4651 = vpack.c.b16 %v4512, %v4511
        %v4652 = vpack.c.b16 %v4514, %v4513
        %v4653 = vpack.c.b16 %v4516, %v4515
        %v4654 = vpack.c.b16 %v4518, %v4517
        %v4655 = vpack.c.b16 %v4520, %v4519
        %v4656 = vpack.c.b16 %v4522, %v4521
        %v4657 = vpack.c.b16 %v4524, %v4523
        %v4658 = vpack.c.b16 %v4526, %v4525
        %v4659 = vpack.c.b16 %v4528, %v4527
        %v4660 = vpack.c.b16 %v4530, %v4529
        %v4661 = vpack.c.b16 %v4532, %v4531
        %v4662 = vpack.c.b16 %v4534, %v4533
        %v4663 = vpack.c.b16 %v4536, %v4535
        %v4664 = vpack.c.b16 %v4538, %v4537
        %v4665 = vpack.c.b16 %v4540, %v4539
        %v4666 = vpack.c.b16 %v4542, %v4541
        %v4667 = vpack.c.b16 %v4544, %v4543
        %v4668 = vpack.c.b16 %v4546, %v4545
        %v4669 = vpack.c.b16 %v4548, %v4547
        %v4670 = vpack.c.b16 %v4550, %v4549
        %v4671 = vpack.c.b16 %v4552, %v4551
        %v4672 = vpack.c.b16 %v4554, %v4553
        %v4673 = vpack.c.b16 %v4556, %v4555
        %v4674 = vpack.c.b16 %v4558, %v4557
        %v4675 = vpack.c.b16 %v4560, %v4559
        %v4676 = vpack.c.b16 %v4562, %v4561
        %v4677 = vpack.c.b16 %v4564, %v4563
        %v4678 = vpack.c.b16 %v4566, %v4565
        %v4679 = vpack.c.b16 %v4568, %v4567
        %v4680 = vpack.c.b16 %v4570, %v4569
        %v4681 = vpack.c.b16 %v4572, %v4571
        %v4682 = vpack.c.b16 %v4574, %v4573
        %v4683 = vpack.c.b16 %v4576, %v4575
        %v4684 = vpack.c.b16 %v4578, %v4577
        %v4685 = vpack.c.b16 %v4580, %v4579
        %v4686 = vpack.c.b16 %v4582, %v4581
        %v4687 = vpack.c.b16 %v4584, %v4583
        %v4688 = vpack.c.b16 %v4586, %v4585
        %v4689 = vpack.c.b16 %v4588, %v4587
        %v4690 = vpack.c.b16 %v4590, %v4589
        %v4691 = vpack.c.b16 %v4592, %v4591
        %v4692 = vpack.c.b16 %v4594, %v4593
        %v4693 = vpack.c.b16 %v4596, %v4595
        %v4694 = vpack.c.b16 %v4598, %v4597
        %v4695 = vpack.c.b16 %v4600, %v4599
        %v4696 = vpack.c.b16 %v4602, %v4601
        %v4697 = vpack.c.b16 %v4604, %v4603
        %v4698 = vpack.c.b16 %v4606, %v4605
        %v4699 = vpack.c.b16 %v4608, %v4607
        %v4700 = vpack.c.b16 %v4610, %v4609
        %v4701 = vpack.c.b16 %v4612, %v4611
        %v4702 = vpack.c.b16 %v4614, %v4613
        %v4703 = vpack.c.b16 %v4616, %v4615
        %v4704 = vpack.c.b16 %v4618, %v4617
        %v4705 = vpack.c.b16 %v4620, %v4619
        %v4706 = vpack.c.b16 %v4622, %v4621
        %v4707 = vpack.c.b16 %v4624, %v4623
        %v4708 = vpack.c.b16 %v4626, %v4625
        %v4709 = vpack.c.b16 %v4628, %v4627
        %v4710 = vpack.c.b16 %v4630, %v4629
        %v4711 = vpack.c.b16 %v4632, %v4631
        %v4712 = vpack.c.b16 %v4634, %v4633
        %v4713 = vpack.c.b16 %v4636, %v4635
        %v4714 = vpack.c.b16 %v4638, %v4637
        %v4715 = vpack.c.b16 %v4640, %v4639
        %v4716 = vpack.c.b16 %v4642, %v4641
        %v4717 = vpack.c.b16 %v4644, %v4643
        %v4718 = vpack.c.b16 %v4646, %v4645
        %4791 = vmatprep.subr.bf16.mxu0 0
        %4792 = vmatpush1.bf16.msra.mxu0 %v4647
        %4793 = vmatprep.subr.bf16.mxu0 0
        %4794 = vmatpush1.bf16.msra.mxu0 %v4648
        %4795 = vmatprep.subr.bf16.mxu0 0
        %4796 = vmatpush1.bf16.msra.mxu0 %v4649
        %4797 = vmatprep.subr.bf16.mxu0 0
        %4798 = vmatpush1.bf16.msra.mxu0 %v4650
        %4799 = vmatprep.subr.bf16.mxu0 0
        %4800 = vmatpush1.bf16.msra.mxu0 %v4651
        %4801 = vmatprep.subr.bf16.mxu0 0
        %4802 = vmatpush1.bf16.msra.mxu0 %v4652
        %4803 = vmatprep.subr.bf16.mxu0 0
        %4804 = vmatpush1.bf16.msra.mxu0 %v4653
        %4805 = vmatprep.subr.bf16.mxu0 0
        %4806 = vmatpush1.bf16.msra.mxu0 %v4654
        %4807 = vmatprep.subr.bf16.mxu0 0
        %4808 = vmatpush1.bf16.msra.mxu0 %v4655
        %4809 = vmatprep.subr.bf16.mxu0 0
        %4810 = vmatpush1.bf16.msra.mxu0 %v4656
        %4811 = vmatprep.subr.bf16.mxu0 0
        %4812 = vmatpush1.bf16.msra.mxu0 %v4657
        %4813 = vmatprep.subr.bf16.mxu0 0
        %4814 = vmatpush1.bf16.msra.mxu0 %v4658
        %4815 = vmatprep.subr.bf16.mxu0 0
        %4816 = vmatpush1.bf16.msra.mxu0 %v4659
        %4817 = vmatprep.subr.bf16.mxu0 0
        %4818 = vmatpush1.bf16.msra.mxu0 %v4660
        %4819 = vmatprep.subr.bf16.mxu0 0
        %4820 = vmatpush1.bf16.msra.mxu0 %v4661
        %4821 = vmatprep.subr.bf16.mxu0 0
        %4822 = vmatpush1.bf16.msra.mxu0 %v4662
        %4823 = vmatprep.mubr.bf16.mxu0 %v1173
        %4824 = vmatmul.mubr.bf16.gmra.mrb[0].mxu0 %v1045
        %v4825 = vpop.f32.mrb[0].mxu0
        %v4826 = vadd.f32 0.0, %v4825
        %v4827 = vpop.f32.mrb[0].mxu0
        %v4828 = vpop.f32.mrb[0].mxu0
        %v4829 = vadd.f32 0.0, %v4828
        %v4830 = vpop.f32.mrb[0].mxu0
        %4831 = vmatprep.mubr.bf16.mxu0 %v1174
        %4832 = vmatmul.mubr.bf16.gmra.mrb[0].mxu0 %v1046
        %v4833 = vpop.f32.mrb[0].mxu0
        %v4834 = vadd.f32 0.0, %v4833
        %v4835 = vpop.f32.mrb[0].mxu0
        %v4836 = vpop.f32.mrb[0].mxu0
        %v4837 = vadd.f32 0.0, %v4836
        %v4838 = vpop.f32.mrb[0].mxu0
        %4839 = vmatprep.mubr.bf16.mxu0 %v1175
        %4840 = vmatmul.mubr.bf16.gmra.mrb[0].mxu0 %v1047
        %v4841 = vpop.f32.mrb[0].mxu0
        %v4842 = vadd.f32 0.0, %v4841
        %v4843 = vpop.f32.mrb[0].mxu0
        %v4844 = vpop.f32.mrb[0].mxu0
        %v4845 = vadd.f32 0.0, %v4844
        %v4846 = vpop.f32.mrb[0].mxu0
        %4847 = vmatprep.mubr.bf16.mxu0 %v1176
        %4848 = vmatmul.mubr.bf16.gmra.mrb[0].mxu0 %v1048
        %v4849 = vpop.f32.mrb[0].mxu0
        %v4850 = vadd.f32 0.0, %v4849
        %v4851 = vpop.f32.mrb[0].mxu0
        %v4852 = vpop.f32.mrb[0].mxu0
        %v4853 = vadd.f32 0.0, %v4852
        %v4854 = vpop.f32.mrb[0].mxu0
        %4855 = vmatprep.mubr.bf16.mxu0 %v1177
        %4856 = vmatmul.mubr.bf16.gmra.mrb[0].mxu0 %v1049
        %v4857 = vpop.f32.mrb[0].mxu0
        %v4858 = vadd.f32 0.0, %v4857
        %v4859 = vpop.f32.mrb[0].mxu0
        %v4860 = vpop.f32.mrb[0].mxu0
        %v4861 = vadd.f32 0.0, %v4860
        %v4862 = vpop.f32.mrb[0].mxu0
        %4863 = vmatprep.mubr.bf16.mxu0 %v1178
        %4864 = vmatmul.mubr.bf16.gmra.mrb[0].mxu0 %v1050
        %v4865 = vpop.f32.mrb[0].mxu0
        %v4866 = vadd.f32 0.0, %v4865
        %v4867 = vpop.f32.mrb[0].mxu0
        %v4868 = vpop.f32.mrb[0].mxu0
        %v4869 = vadd.f32 0.0, %v4868
        %v4870 = vpop.f32.mrb[0].mxu0
        %4871 = vmatprep.mubr.bf16.mxu0 %v1179
        %4872 = vmatmul.mubr.bf16.gmra.mrb[0].mxu0 %v1051
        %v4873 = vpop.f32.mrb[0].mxu0
        %v4874 = vadd.f32 0.0, %v4873
        %v4875 = vpop.f32.mrb[0].mxu0
        %v4876 = vpop.f32.mrb[0].mxu0
        %v4877 = vadd.f32 0.0, %v4876
        %v4878 = vpop.f32.mrb[0].mxu0
        %4879 = vmatprep.mubr.bf16.mxu0 %v1180
        %4880 = vmatmul.mubr.bf16.gmra.mrb[0].mxu0 %v1052
        %v4881 = vpop.f32.mrb[0].mxu0
        %v4882 = vadd.f32 0.0, %v4881
        %v4883 = vpop.f32.mrb[0].mxu0
        %v4884 = vpop.f32.mrb[0].mxu0
        %v4885 = vadd.f32 0.0, %v4884
        %v4886 = vpop.f32.mrb[0].mxu0
        %4887 = vmatprep.mubr.bf16.mxu0 %v1181
        %4888 = vmatmul.mubr.bf16.gmra.mrb[0].mxu0 %v1053
        %v4889 = vpop.f32.mrb[0].mxu0
        %v4890 = vadd.f32 0.0, %v4889
        %v4891 = vpop.f32.mrb[0].mxu0
        %v4892 = vpop.f32.mrb[0].mxu0
        %v4893 = vadd.f32 0.0, %v4892
        %v4894 = vpop.f32.mrb[0].mxu0
        %4895 = vmatprep.mubr.bf16.mxu0 %v1182
        %4896 = vmatmul.mubr.bf16.gmra.mrb[0].mxu0 %v1054
        %v4897 = vpop.f32.mrb[0].mxu0
        %v4898 = vadd.f32 0.0, %v4897
        %v4899 = vpop.f32.mrb[0].mxu0
        %v4900 = vpop.f32.mrb[0].mxu0
        %v4901 = vadd.f32 0.0, %v4900
        %v4902 = vpop.f32.mrb[0].mxu0
        %4903 = vmatprep.mubr.bf16.mxu0 %v1183
        %4904 = vmatmul.mubr.bf16.gmra.mrb[0].mxu0 %v1055
        %v4905 = vpop.f32.mrb[0].mxu0
        %v4906 = vadd.f32 0.0, %v4905
        %v4907 = vpop.f32.mrb[0].mxu0
        %v4908 = vpop.f32.mrb[0].mxu0
        %v4909 = vadd.f32 0.0, %v4908
        %v4910 = vpop.f32.mrb[0].mxu0
        %4911 = vmatprep.mubr.bf16.mxu0 %v1184
        %4912 = vmatmul.mubr.bf16.gmra.mrb[0].mxu0 %v1056
        %v4913 = vpop.f32.mrb[0].mxu0
        %v4914 = vadd.f32 0.0, %v4913
        %v4915 = vpop.f32.mrb[0].mxu0
        %v4916 = vpop.f32.mrb[0].mxu0
        %v4917 = vadd.f32 0.0, %v4916
        %v4918 = vpop.f32.mrb[0].mxu0
        %4919 = vmatprep.mubr.bf16.mxu0 %v1185
        %4920 = vmatmul.mubr.bf16.gmra.mrb[0].mxu0 %v1057
        %v4921 = vpop.f32.mrb[0].mxu0
        %v4922 = vadd.f32 0.0, %v4921
        %v4923 = vpop.f32.mrb[0].mxu0
        %v4924 = vpop.f32.mrb[0].mxu0
        %v4925 = vadd.f32 0.0, %v4924
        %v4926 = vpop.f32.mrb[0].mxu0
        %4927 = vmatprep.mubr.bf16.mxu0 %v1186
        %4928 = vmatmul.mubr.bf16.gmra.mrb[0].mxu0 %v1058
        %v4929 = vpop.f32.mrb[0].mxu0
        %v4930 = vadd.f32 0.0, %v4929
        %v4931 = vpop.f32.mrb[0].mxu0
        %v4932 = vpop.f32.mrb[0].mxu0
        %v4933 = vadd.f32 0.0, %v4932
        %v4934 = vpop.f32.mrb[0].mxu0
        %4935 = vmatprep.mubr.bf16.mxu0 %v1187
        %4936 = vmatmul.mubr.bf16.gmra.mrb[0].mxu0 %v1059
        %v4937 = vpop.f32.mrb[0].mxu0
        %v4938 = vadd.f32 0.0, %v4937
        %v4939 = vpop.f32.mrb[0].mxu0
        %v4940 = vpop.f32.mrb[0].mxu0
        %v4941 = vadd.f32 0.0, %v4940
        %v4942 = vpop.f32.mrb[0].mxu0
        %4943 = vmatprep.mubr.bf16.mxu0 %v1188
        %4944 = vmatmul.mubr.bf16.gmra.mrb[0].mxu0 %v1060
        %v4945 = vpop.f32.mrb[0].mxu0
        %v4946 = vadd.f32 0.0, %v4945
        %v4947 = vpop.f32.mrb[0].mxu0
        %v4948 = vpop.f32.mrb[0].mxu0
        %v4949 = vadd.f32 0.0, %v4948
        %v4950 = vpop.f32.mrb[0].mxu0
        %4951 = vdwg.mxu0
        %4952 = vmatprep.subr.bf16.mxu0 0
        %4953 = vmatpush1.bf16.msra.mxu0 %v4663
        %4954 = vmatprep.subr.bf16.mxu0 0
        %4955 = vmatpush1.bf16.msra.mxu0 %v4664
        %4956 = vmatprep.subr.bf16.mxu0 0
        %4957 = vmatpush1.bf16.msra.mxu0 %v4665
        %4958 = vmatprep.subr.bf16.mxu0 0
        %4959 = vmatpush1.bf16.msra.mxu0 %v4666
        %4960 = vmatprep.subr.bf16.mxu0 0
        %4961 = vmatpush1.bf16.msra.mxu0 %v4667
        %4962 = vmatprep.subr.bf16.mxu0 0
        %4963 = vmatpush1.bf16.msra.mxu0 %v4668
        %4964 = vmatprep.subr.bf16.mxu0 0
        %4965 = vmatpush1.bf16.msra.mxu0 %v4669
        %4966 = vmatprep.subr.bf16.mxu0 0
        %4967 = vmatpush1.bf16.msra.mxu0 %v4670
        %4968 = vmatprep.subr.bf16.mxu0 0
        %4969 = vmatpush1.bf16.msra.mxu0 %v4671
        %4970 = vmatprep.subr.bf16.mxu0 0
        %4971 = vmatpush1.bf16.msra.mxu0 %v4672
        %4972 = vmatprep.subr.bf16.mxu0 0
        %4973 = vmatpush1.bf16.msra.mxu0 %v4673
        %4974 = vmatprep.subr.bf16.mxu0 0
        %4975 = vmatpush1.bf16.msra.mxu0 %v4674
        %4976 = vmatprep.subr.bf16.mxu0 0
        %4977 = vmatpush1.bf16.msra.mxu0 %v4675
        %4978 = vmatprep.subr.bf16.mxu0 0
        %4979 = vmatpush1.bf16.msra.mxu0 %v4676
        %4980 = vmatprep.subr.bf16.mxu0 0
        %4981 = vmatpush1.bf16.msra.mxu0 %v4677
        %4982 = vmatprep.subr.bf16.mxu0 0
        %4983 = vmatpush1.bf16.msra.mxu0 %v4678
        %4984 = vmatprep.mubr.bf16.mxu0 %v1527
        %4985 = vmatmul.mubr.bf16.gmra.mrb[0].mxu0 %v1397
        %v4986 = vpop.f32.mrb[0].mxu0
        %v4987 = vadd.f32 %v4826, %v4986
        %v4988 = vpop.f32.mrb[0].mxu0
        %v4989 = vpop.f32.mrb[0].mxu0
        %v4990 = vadd.f32 %v4829, %v4989
        %v4991 = vpop.f32.mrb[0].mxu0
        %4992 = vmatprep.mubr.bf16.mxu0 %v1528
        %4993 = vmatmul.mubr.bf16.gmra.mrb[0].mxu0 %v1398
        %v4994 = vpop.f32.mrb[0].mxu0
        %v4995 = vadd.f32 %v4834, %v4994
        %v4996 = vpop.f32.mrb[0].mxu0
        %v4997 = vpop.f32.mrb[0].mxu0
        %v4998 = vadd.f32 %v4837, %v4997
        %v4999 = vpop.f32.mrb[0].mxu0
        %5000 = vmatprep.mubr.bf16.mxu0 %v1529
        %5001 = vmatmul.mubr.bf16.gmra.mrb[0].mxu0 %v1399
        %v5002 = vpop.f32.mrb[0].mxu0
        %v5003 = vadd.f32 %v4842, %v5002
        %v5004 = vpop.f32.mrb[0].mxu0
        %v5005 = vpop.f32.mrb[0].mxu0
        %v5006 = vadd.f32 %v4845, %v5005
        %v5007 = vpop.f32.mrb[0].mxu0
        %5008 = vmatprep.mubr.bf16.mxu0 %v1530
        %5009 = vmatmul.mubr.bf16.gmra.mrb[0].mxu0 %v1400
        %v5010 = vpop.f32.mrb[0].mxu0
        %v5011 = vadd.f32 %v4850, %v5010
        %v5012 = vpop.f32.mrb[0].mxu0
        %v5013 = vpop.f32.mrb[0].mxu0
        %v5014 = vadd.f32 %v4853, %v5013
        %v5015 = vpop.f32.mrb[0].mxu0
        %5016 = vmatprep.mubr.bf16.mxu0 %v1531
        %5017 = vmatmul.mubr.bf16.gmra.mrb[0].mxu0 %v1401
        %v5018 = vpop.f32.mrb[0].mxu0
        %v5019 = vadd.f32 %v4858, %v5018
        %v5020 = vpop.f32.mrb[0].mxu0
        %v5021 = vpop.f32.mrb[0].mxu0
        %v5022 = vadd.f32 %v4861, %v5021
        %v5023 = vpop.f32.mrb[0].mxu0
        %5024 = vmatprep.mubr.bf16.mxu0 %v1532
        %5025 = vmatmul.mubr.bf16.gmra.mrb[0].mxu0 %v1402
        %v5026 = vpop.f32.mrb[0].mxu0
        %v5027 = vadd.f32 %v4866, %v5026
        %v5028 = vpop.f32.mrb[0].mxu0
        %v5029 = vpop.f32.mrb[0].mxu0
        %v5030 = vadd.f32 %v4869, %v5029
        %v5031 = vpop.f32.mrb[0].mxu0
        %5032 = vmatprep.mubr.bf16.mxu0 %v1533
        %5033 = vmatmul.mubr.bf16.gmra.mrb[0].mxu0 %v1403
        %v5034 = vpop.f32.mrb[0].mxu0
        %v5035 = vadd.f32 %v4874, %v5034
        %v5036 = vpop.f32.mrb[0].mxu0
        %v5037 = vpop.f32.mrb[0].mxu0
        %v5038 = vadd.f32 %v4877, %v5037
        %v5039 = vpop.f32.mrb[0].mxu0
        %5040 = vmatprep.mubr.bf16.mxu0 %v1534
        %5041 = vmatmul.mubr.bf16.gmra.mrb[0].mxu0 %v1404
        %v5042 = vpop.f32.mrb[0].mxu0
        %v5043 = vadd.f32 %v4882, %v5042
        %v5044 = vpop.f32.mrb[0].mxu0
        %v5045 = vpop.f32.mrb[0].mxu0
        %v5046 = vadd.f32 %v4885, %v5045
        %v5047 = vpop.f32.mrb[0].mxu0
        %5048 = vmatprep.mubr.bf16.mxu0 %v1535
        %5049 = vmatmul.mubr.bf16.gmra.mrb[0].mxu0 %v1405
        %v5050 = vpop.f32.mrb[0].mxu0
        %v5051 = vadd.f32 %v4890, %v5050
        %v5052 = vpop.f32.mrb[0].mxu0
        %v5053 = vpop.f32.mrb[0].mxu0
        %v5054 = vadd.f32 %v4893, %v5053
        %v5055 = vpop.f32.mrb[0].mxu0
        %5056 = vmatprep.mubr.bf16.mxu0 %v1536
        %5057 = vmatmul.mubr.bf16.gmra.mrb[0].mxu0 %v1406
        %v5058 = vpop.f32.mrb[0].mxu0
        %v5059 = vadd.f32 %v4898, %v5058
        %v5060 = vpop.f32.mrb[0].mxu0
        %v5061 = vpop.f32.mrb[0].mxu0
        %v5062 = vadd.f32 %v4901, %v5061
        %v5063 = vpop.f32.mrb[0].mxu0
        %5064 = vmatprep.mubr.bf16.mxu0 %v1537
        %5065 = vmatmul.mubr.bf16.gmra.mrb[0].mxu0 %v1407
        %v5066 = vpop.f32.mrb[0].mxu0
        %v5067 = vadd.f32 %v4906, %v5066
        %v5068 = vpop.f32.mrb[0].mxu0
        %v5069 = vpop.f32.mrb[0].mxu0
        %v5070 = vadd.f32 %v4909, %v5069
        %v5071 = vpop.f32.mrb[0].mxu0
        %5072 = vmatprep.mubr.bf16.mxu0 %v1538
        %5073 = vmatmul.mubr.bf16.gmra.mrb[0].mxu0 %v1408
        %v5074 = vpop.f32.mrb[0].mxu0
        %v5075 = vadd.f32 %v4914, %v5074
        %v5076 = vpop.f32.mrb[0].mxu0
        %v5077 = vpop.f32.mrb[0].mxu0
        %v5078 = vadd.f32 %v4917, %v5077
        %v5079 = vpop.f32.mrb[0].mxu0
        %5080 = vmatprep.mubr.bf16.mxu0 %v1539
        %5081 = vmatmul.mubr.bf16.gmra.mrb[0].mxu0 %v1409
        %v5082 = vpop.f32.mrb[0].mxu0
        %v5083 = vadd.f32 %v4922, %v5082
        %v5084 = vpop.f32.mrb[0].mxu0
        %v5085 = vpop.f32.mrb[0].mxu0
        %v5086 = vadd.f32 %v4925, %v5085
        %v5087 = vpop.f32.mrb[0].mxu0
        %5088 = vmatprep.mubr.bf16.mxu0 %v1540
        %5089 = vmatmul.mubr.bf16.gmra.mrb[0].mxu0 %v1410
        %v5090 = vpop.f32.mrb[0].mxu0
        %v5091 = vadd.f32 %v4930, %v5090
        %v5092 = vpop.f32.mrb[0].mxu0
        %v5093 = vpop.f32.mrb[0].mxu0
        %v5094 = vadd.f32 %v4933, %v5093
        %v5095 = vpop.f32.mrb[0].mxu0
        %5096 = vmatprep.mubr.bf16.mxu0 %v1541
        %5097 = vmatmul.mubr.bf16.gmra.mrb[0].mxu0 %v1411
        %v5098 = vpop.f32.mrb[0].mxu0
        %v5099 = vadd.f32 %v4938, %v5098
        %v5100 = vpop.f32.mrb[0].mxu0
        %v5101 = vpop.f32.mrb[0].mxu0
        %v5102 = vadd.f32 %v4941, %v5101
        %v5103 = vpop.f32.mrb[0].mxu0
        %5104 = vmatprep.mubr.bf16.mxu0 %v1542
        %5105 = vmatmul.mubr.bf16.gmra.mrb[0].mxu0 %v1412
        %v5106 = vpop.f32.mrb[0].mxu0
        %v5107 = vadd.f32 %v4946, %v5106
        %v5108 = vpop.f32.mrb[0].mxu0
        %v5109 = vpop.f32.mrb[0].mxu0
        %v5110 = vadd.f32 %v4949, %v5109
        %v5111 = vpop.f32.mrb[0].mxu0
        %5112 = vdwg.mxu0
        %5113 = vmatprep.subr.bf16.mxu0 0
        %5114 = vmatpush1.bf16.msra.mxu0 %v4679
        %5115 = vmatprep.subr.bf16.mxu0 0
        %5116 = vmatpush1.bf16.msra.mxu0 %v4680
        %5117 = vmatprep.subr.bf16.mxu0 0
        %5118 = vmatpush1.bf16.msra.mxu0 %v4681
        %5119 = vmatprep.subr.bf16.mxu0 0
        %5120 = vmatpush1.bf16.msra.mxu0 %v4682
        %5121 = vmatprep.subr.bf16.mxu0 0
        %5122 = vmatpush1.bf16.msra.mxu0 %v4683
        %5123 = vmatprep.subr.bf16.mxu0 0
        %5124 = vmatpush1.bf16.msra.mxu0 %v4684
        %5125 = vmatprep.subr.bf16.mxu0 0
        %5126 = vmatpush1.bf16.msra.mxu0 %v4685
        %5127 = vmatprep.subr.bf16.mxu0 0
        %5128 = vmatpush1.bf16.msra.mxu0 %v4686
        %5129 = vmatprep.subr.bf16.mxu0 0
        %5130 = vmatpush1.bf16.msra.mxu0 %v4687
        %5131 = vmatprep.subr.bf16.mxu0 0
        %5132 = vmatpush1.bf16.msra.mxu0 %v4688
        %5133 = vmatprep.subr.bf16.mxu0 0
        %5134 = vmatpush1.bf16.msra.mxu0 %v4689
        %5135 = vmatprep.subr.bf16.mxu0 0
        %5136 = vmatpush1.bf16.msra.mxu0 %v4690
        %5137 = vmatprep.subr.bf16.mxu0 0
        %5138 = vmatpush1.bf16.msra.mxu0 %v4691
        %5139 = vmatprep.subr.bf16.mxu0 0
        %5140 = vmatpush1.bf16.msra.mxu0 %v4692
        %5141 = vmatprep.subr.bf16.mxu0 0
        %5142 = vmatpush1.bf16.msra.mxu0 %v4693
        %5143 = vmatprep.subr.bf16.mxu0 0
        %5144 = vmatpush1.bf16.msra.mxu0 %v4694
        %5145 = vmatprep.mubr.bf16.mxu0 %v1665
        %5146 = vmatmul.mubr.bf16.gmra.mrb[0].mxu0 %v1174
        %v5147 = vpop.f32.mrb[0].mxu0
        %v5148 = vadd.f32 %v4987, %v5147
        %v5149 = vpop.f32.mrb[0].mxu0
        %v5150 = vpop.f32.mrb[0].mxu0
        %v5151 = vadd.f32 %v4990, %v5150
        %v5152 = vpop.f32.mrb[0].mxu0
        %5153 = vmatprep.mubr.bf16.mxu0 %v1666
        %5154 = vmatmul.mubr.bf16.gmra.mrb[0].mxu0 %v1175
        %v5155 = vpop.f32.mrb[0].mxu0
        %v5156 = vadd.f32 %v4995, %v5155
        %v5157 = vpop.f32.mrb[0].mxu0
        %v5158 = vpop.f32.mrb[0].mxu0
        %v5159 = vadd.f32 %v4998, %v5158
        %v5160 = vpop.f32.mrb[0].mxu0
        %5161 = vmatprep.mubr.bf16.mxu0 %v1667
        %5162 = vmatmul.mubr.bf16.gmra.mrb[0].mxu0 %v1176
        %v5163 = vpop.f32.mrb[0].mxu0
        %v5164 = vadd.f32 %v5003, %v5163
        %v5165 = vpop.f32.mrb[0].mxu0
        %v5166 = vpop.f32.mrb[0].mxu0
        %v5167 = vadd.f32 %v5006, %v5166
        %v5168 = vpop.f32.mrb[0].mxu0
        %5169 = vmatprep.mubr.bf16.mxu0 %v1668
        %5170 = vmatmul.mubr.bf16.gmra.mrb[0].mxu0 %v1177
        %v5171 = vpop.f32.mrb[0].mxu0
        %v5172 = vadd.f32 %v5011, %v5171
        %v5173 = vpop.f32.mrb[0].mxu0
        %v5174 = vpop.f32.mrb[0].mxu0
        %v5175 = vadd.f32 %v5014, %v5174
        %v5176 = vpop.f32.mrb[0].mxu0
        %5177 = vmatprep.mubr.bf16.mxu0 %v1669
        %5178 = vmatmul.mubr.bf16.gmra.mrb[0].mxu0 %v1178
        %v5179 = vpop.f32.mrb[0].mxu0
        %v5180 = vadd.f32 %v5019, %v5179
        %v5181 = vpop.f32.mrb[0].mxu0
        %v5182 = vpop.f32.mrb[0].mxu0
        %v5183 = vadd.f32 %v5022, %v5182
        %v5184 = vpop.f32.mrb[0].mxu0
        %5185 = vmatprep.mubr.bf16.mxu0 %v1670
        %5186 = vmatmul.mubr.bf16.gmra.mrb[0].mxu0 %v1179
        %v5187 = vpop.f32.mrb[0].mxu0
        %v5188 = vadd.f32 %v5027, %v5187
        %v5189 = vpop.f32.mrb[0].mxu0
        %v5190 = vpop.f32.mrb[0].mxu0
        %v5191 = vadd.f32 %v5030, %v5190
        %v5192 = vpop.f32.mrb[0].mxu0
        %5193 = vmatprep.mubr.bf16.mxu0 %v1671
        %5194 = vmatmul.mubr.bf16.gmra.mrb[0].mxu0 %v1180
        %v5195 = vpop.f32.mrb[0].mxu0
        %v5196 = vadd.f32 %v5035, %v5195
        %v5197 = vpop.f32.mrb[0].mxu0
        %v5198 = vpop.f32.mrb[0].mxu0
        %v5199 = vadd.f32 %v5038, %v5198
        %v5200 = vpop.f32.mrb[0].mxu0
        %5201 = vmatprep.mubr.bf16.mxu0 %v1672
        %5202 = vmatmul.mubr.bf16.gmra.mrb[0].mxu0 %v1181
        %v5203 = vpop.f32.mrb[0].mxu0
        %v5204 = vadd.f32 %v5043, %v5203
        %v5205 = vpop.f32.mrb[0].mxu0
        %v5206 = vpop.f32.mrb[0].mxu0
        %v5207 = vadd.f32 %v5046, %v5206
        %v5208 = vpop.f32.mrb[0].mxu0
        %5209 = vmatprep.mubr.bf16.mxu0 %v1673
        %5210 = vmatmul.mubr.bf16.gmra.mrb[0].mxu0 %v1182
        %v5211 = vpop.f32.mrb[0].mxu0
        %v5212 = vadd.f32 %v5051, %v5211
        %v5213 = vpop.f32.mrb[0].mxu0
        %v5214 = vpop.f32.mrb[0].mxu0
        %v5215 = vadd.f32 %v5054, %v5214
        %v5216 = vpop.f32.mrb[0].mxu0
        %5217 = vmatprep.mubr.bf16.mxu0 %v1674
        %5218 = vmatmul.mubr.bf16.gmra.mrb[0].mxu0 %v1183
        %v5219 = vpop.f32.mrb[0].mxu0
        %v5220 = vadd.f32 %v5059, %v5219
        %v5221 = vpop.f32.mrb[0].mxu0
        %v5222 = vpop.f32.mrb[0].mxu0
        %v5223 = vadd.f32 %v5062, %v5222
        %v5224 = vpop.f32.mrb[0].mxu0
        %5225 = vmatprep.mubr.bf16.mxu0 %v1675
        %5226 = vmatmul.mubr.bf16.gmra.mrb[0].mxu0 %v1184
        %v5227 = vpop.f32.mrb[0].mxu0
        %v5228 = vadd.f32 %v5067, %v5227
        %v5229 = vpop.f32.mrb[0].mxu0
        %v5230 = vpop.f32.mrb[0].mxu0
        %v5231 = vadd.f32 %v5070, %v5230
        %v5232 = vpop.f32.mrb[0].mxu0
        %5233 = vmatprep.mubr.bf16.mxu0 %v1676
        %5234 = vmatmul.mubr.bf16.gmra.mrb[0].mxu0 %v1185
        %v5235 = vpop.f32.mrb[0].mxu0
        %v5236 = vadd.f32 %v5075, %v5235
        %v5237 = vpop.f32.mrb[0].mxu0
        %v5238 = vpop.f32.mrb[0].mxu0
        %v5239 = vadd.f32 %v5078, %v5238
        %v5240 = vpop.f32.mrb[0].mxu0
        %5241 = vmatprep.mubr.bf16.mxu0 %v1677
        %5242 = vmatmul.mubr.bf16.gmra.mrb[0].mxu0 %v1186
        %v5243 = vpop.f32.mrb[0].mxu0
        %v5244 = vadd.f32 %v5083, %v5243
        %v5245 = vpop.f32.mrb[0].mxu0
        %v5246 = vpop.f32.mrb[0].mxu0
        %v5247 = vadd.f32 %v5086, %v5246
        %v5248 = vpop.f32.mrb[0].mxu0
        %5249 = vmatprep.mubr.bf16.mxu0 %v1678
        %5250 = vmatmul.mubr.bf16.gmra.mrb[0].mxu0 %v1187
        %v5251 = vpop.f32.mrb[0].mxu0
        %v5252 = vadd.f32 %v5091, %v5251
        %v5253 = vpop.f32.mrb[0].mxu0
        %v5254 = vpop.f32.mrb[0].mxu0
        %v5255 = vadd.f32 %v5094, %v5254
        %v5256 = vpop.f32.mrb[0].mxu0
        %5257 = vmatprep.mubr.bf16.mxu0 %v1679
        %5258 = vmatmul.mubr.bf16.gmra.mrb[0].mxu0 %v1188
        %v5259 = vpop.f32.mrb[0].mxu0
        %v5260 = vadd.f32 %v5099, %v5259
        %v5261 = vpop.f32.mrb[0].mxu0
        %v5262 = vpop.f32.mrb[0].mxu0
        %v5263 = vadd.f32 %v5102, %v5262
        %v5264 = vpop.f32.mrb[0].mxu0
        %5265 = vmatprep.mubr.bf16.mxu0 %v1680
        %5266 = vmatmul.mubr.bf16.gmra.mrb[0].mxu0 %v1625
        %v5267 = vpop.f32.mrb[0].mxu0
        %v5268 = vadd.f32 %v5107, %v5267
        %v5269 = vpop.f32.mrb[0].mxu0
        %v5270 = vpop.f32.mrb[0].mxu0
        %v5271 = vadd.f32 %v5110, %v5270
        %v5272 = vpop.f32.mrb[0].mxu0
        %5273 = vdwg.mxu0
        %5274 = vmatprep.subr.bf16.mxu0 0
        %5275 = vmatpush1.bf16.msra.mxu0 %v4695
        %5276 = vmatprep.subr.bf16.mxu0 0
        %5277 = vmatpush1.bf16.msra.mxu0 %v4696
        %5278 = vmatprep.subr.bf16.mxu0 0
        %5279 = vmatpush1.bf16.msra.mxu0 %v4697
        %5280 = vmatprep.subr.bf16.mxu0 0
        %5281 = vmatpush1.bf16.msra.mxu0 %v4698
        %5282 = vmatprep.subr.bf16.mxu0 0
        %5283 = vmatpush1.bf16.msra.mxu0 %v4699
        %5284 = vmatprep.subr.bf16.mxu0 0
        %5285 = vmatpush1.bf16.msra.mxu0 %v4700
        %5286 = vmatprep.subr.bf16.mxu0 0
        %5287 = vmatpush1.bf16.msra.mxu0 %v4701
        %5288 = vmatprep.subr.bf16.mxu0 0
        %5289 = vmatpush1.bf16.msra.mxu0 %v4702
        %5290 = vmatprep.subr.bf16.mxu0 0
        %5291 = vmatpush1.bf16.msra.mxu0 %v4703
        %5292 = vmatprep.subr.bf16.mxu0 0
        %5293 = vmatpush1.bf16.msra.mxu0 %v4704
        %5294 = vmatprep.subr.bf16.mxu0 0
        %5295 = vmatpush1.bf16.msra.mxu0 %v4705
        %5296 = vmatprep.subr.bf16.mxu0 0
        %5297 = vmatpush1.bf16.msra.mxu0 %v4706
        %5298 = vmatprep.subr.bf16.mxu0 0
        %5299 = vmatpush1.bf16.msra.mxu0 %v4707
        %5300 = vmatprep.subr.bf16.mxu0 0
        %5301 = vmatpush1.bf16.msra.mxu0 %v4708
        %5302 = vmatprep.subr.bf16.mxu0 0
        %5303 = vmatpush1.bf16.msra.mxu0 %v4709
        %5304 = vmatprep.subr.bf16.mxu0 0
        %5305 = vmatpush1.bf16.msra.mxu0 %v4710
        %5306 = vmatprep.mubr.bf16.mxu0 %v1175
        %5307 = vmatmul.mubr.bf16.gmra.mrb[0].mxu0 %v1795
        %v5308 = vpop.f32.mrb[0].mxu0
        %v5309 = vadd.f32 %v5148, %v5308
        %v5310 = vpop.f32.mrb[0].mxu0
        %v5311 = vpop.f32.mrb[0].mxu0
        %v5312 = vadd.f32 %v5151, %v5311
        %v5313 = vpop.f32.mrb[0].mxu0
        %5314 = vmatprep.mubr.bf16.mxu0 %v1176
        %5315 = vmatmul.mubr.bf16.gmra.mrb[0].mxu0 %v1796
        %v5316 = vpop.f32.mrb[0].mxu0
        %v5317 = vadd.f32 %v5156, %v5316
        %v5318 = vpop.f32.mrb[0].mxu0
        %v5319 = vpop.f32.mrb[0].mxu0
        %v5320 = vadd.f32 %v5159, %v5319
        %v5321 = vpop.f32.mrb[0].mxu0
        %5322 = vmatprep.mubr.bf16.mxu0 %v1177
        %5323 = vmatmul.mubr.bf16.gmra.mrb[0].mxu0 %v1797
        %v5324 = vpop.f32.mrb[0].mxu0
        %v5325 = vadd.f32 %v5164, %v5324
        %v5326 = vpop.f32.mrb[0].mxu0
        %v5327 = vpop.f32.mrb[0].mxu0
        %v5328 = vadd.f32 %v5167, %v5327
        %v5329 = vpop.f32.mrb[0].mxu0
        %5330 = vmatprep.mubr.bf16.mxu0 %v1178
        %5331 = vmatmul.mubr.bf16.gmra.mrb[0].mxu0 %v1798
        %v5332 = vpop.f32.mrb[0].mxu0
        %v5333 = vadd.f32 %v5172, %v5332
        %v5334 = vpop.f32.mrb[0].mxu0
        %v5335 = vpop.f32.mrb[0].mxu0
        %v5336 = vadd.f32 %v5175, %v5335
        %v5337 = vpop.f32.mrb[0].mxu0
        %5338 = vmatprep.mubr.bf16.mxu0 %v1179
        %5339 = vmatmul.mubr.bf16.gmra.mrb[0].mxu0 %v1799
        %v5340 = vpop.f32.mrb[0].mxu0
        %v5341 = vadd.f32 %v5180, %v5340
        %v5342 = vpop.f32.mrb[0].mxu0
        %v5343 = vpop.f32.mrb[0].mxu0
        %v5344 = vadd.f32 %v5183, %v5343
        %v5345 = vpop.f32.mrb[0].mxu0
        %5346 = vmatprep.mubr.bf16.mxu0 %v1180
        %5347 = vmatmul.mubr.bf16.gmra.mrb[0].mxu0 %v1800
        %v5348 = vpop.f32.mrb[0].mxu0
        %v5349 = vadd.f32 %v5188, %v5348
        %v5350 = vpop.f32.mrb[0].mxu0
        %v5351 = vpop.f32.mrb[0].mxu0
        %v5352 = vadd.f32 %v5191, %v5351
        %v5353 = vpop.f32.mrb[0].mxu0
        %5354 = vmatprep.mubr.bf16.mxu0 %v1181
        %5355 = vmatmul.mubr.bf16.gmra.mrb[0].mxu0 %v1801
        %v5356 = vpop.f32.mrb[0].mxu0
        %v5357 = vadd.f32 %v5196, %v5356
        %v5358 = vpop.f32.mrb[0].mxu0
        %v5359 = vpop.f32.mrb[0].mxu0
        %v5360 = vadd.f32 %v5199, %v5359
        %v5361 = vpop.f32.mrb[0].mxu0
        %5362 = vmatprep.mubr.bf16.mxu0 %v1182
        %5363 = vmatmul.mubr.bf16.gmra.mrb[0].mxu0 %v1802
        %v5364 = vpop.f32.mrb[0].mxu0
        %v5365 = vadd.f32 %v5204, %v5364
        %v5366 = vpop.f32.mrb[0].mxu0
        %v5367 = vpop.f32.mrb[0].mxu0
        %v5368 = vadd.f32 %v5207, %v5367
        %v5369 = vpop.f32.mrb[0].mxu0
        %5370 = vmatprep.mubr.bf16.mxu0 %v1183
        %5371 = vmatmul.mubr.bf16.gmra.mrb[0].mxu0 %v1803
        %v5372 = vpop.f32.mrb[0].mxu0
        %v5373 = vadd.f32 %v5212, %v5372
        %v5374 = vpop.f32.mrb[0].mxu0
        %v5375 = vpop.f32.mrb[0].mxu0
        %v5376 = vadd.f32 %v5215, %v5375
        %v5377 = vpop.f32.mrb[0].mxu0
        %5378 = vmatprep.mubr.bf16.mxu0 %v1184
        %5379 = vmatmul.mubr.bf16.gmra.mrb[0].mxu0 %v1804
        %v5380 = vpop.f32.mrb[0].mxu0
        %v5381 = vadd.f32 %v5220, %v5380
        %v5382 = vpop.f32.mrb[0].mxu0
        %v5383 = vpop.f32.mrb[0].mxu0
        %v5384 = vadd.f32 %v5223, %v5383
        %v5385 = vpop.f32.mrb[0].mxu0
        %5386 = vmatprep.mubr.bf16.mxu0 %v1185
        %5387 = vmatmul.mubr.bf16.gmra.mrb[0].mxu0 %v1805
        %v5388 = vpop.f32.mrb[0].mxu0
        %v5389 = vadd.f32 %v5228, %v5388
        %v5390 = vpop.f32.mrb[0].mxu0
        %v5391 = vpop.f32.mrb[0].mxu0
        %v5392 = vadd.f32 %v5231, %v5391
        %v5393 = vpop.f32.mrb[0].mxu0
        %5394 = vmatprep.mubr.bf16.mxu0 %v1186
        %5395 = vmatmul.mubr.bf16.gmra.mrb[0].mxu0 %v1806
        %v5396 = vpop.f32.mrb[0].mxu0
        %v5397 = vadd.f32 %v5236, %v5396
        %v5398 = vpop.f32.mrb[0].mxu0
        %v5399 = vpop.f32.mrb[0].mxu0
        %v5400 = vadd.f32 %v5239, %v5399
        %v5401 = vpop.f32.mrb[0].mxu0
        %5402 = vmatprep.mubr.bf16.mxu0 %v1187
        %5403 = vmatmul.mubr.bf16.gmra.mrb[0].mxu0 %v1807
        %v5404 = vpop.f32.mrb[0].mxu0
        %v5405 = vadd.f32 %v5244, %v5404
        %v5406 = vpop.f32.mrb[0].mxu0
        %v5407 = vpop.f32.mrb[0].mxu0
        %v5408 = vadd.f32 %v5247, %v5407
        %v5409 = vpop.f32.mrb[0].mxu0
        %5410 = vmatprep.mubr.bf16.mxu0 %v1188
        %5411 = vmatmul.mubr.bf16.gmra.mrb[0].mxu0 %v1808
        %v5412 = vpop.f32.mrb[0].mxu0
        %v5413 = vadd.f32 %v5252, %v5412
        %v5414 = vpop.f32.mrb[0].mxu0
        %v5415 = vpop.f32.mrb[0].mxu0
        %v5416 = vadd.f32 %v5255, %v5415
        %v5417 = vpop.f32.mrb[0].mxu0
        %5418 = vmatprep.mubr.bf16.mxu0 %v1625
        %5419 = vmatmul.mubr.bf16.gmra.mrb[0].mxu0 %v1809
        %v5420 = vpop.f32.mrb[0].mxu0
        %v5421 = vadd.f32 %v5260, %v5420
        %v5422 = vpop.f32.mrb[0].mxu0
        %v5423 = vpop.f32.mrb[0].mxu0
        %v5424 = vadd.f32 %v5263, %v5423
        %v5425 = vpop.f32.mrb[0].mxu0
        %5426 = vmatprep.mubr.bf16.mxu0 %v1893
        %5427 = vmatmul.mubr.bf16.gmra.mrb[0].mxu0 %v1810
        %v5428 = vpop.f32.mrb[0].mxu0
        %v5429 = vadd.f32 %v5268, %v5428
        %v5430 = vpop.f32.mrb[0].mxu0
        %v5431 = vpop.f32.mrb[0].mxu0
        %v5432 = vadd.f32 %v5271, %v5431
        %v5433 = vpop.f32.mrb[0].mxu0
        %5434 = vdwg.mxu0
        %5435 = vmatprep.subr.bf16.mxu0 0
        %5436 = vmatpush1.bf16.msra.mxu0 %v4711
        %5437 = vmatprep.subr.bf16.mxu0 0
        %5438 = vmatpush1.bf16.msra.mxu0 %v4712
        %5439 = vmatprep.subr.bf16.mxu0 0
        %5440 = vmatpush1.bf16.msra.mxu0 %v4713
        %5441 = vmatprep.subr.bf16.mxu0 0
        %5442 = vmatpush1.bf16.msra.mxu0 %v4714
        %5443 = vmatprep.subr.bf16.mxu0 0
        %5444 = vmatpush1.bf16.msra.mxu0 %v4715
        %5445 = vmatprep.subr.bf16.mxu0 0
        %5446 = vmatpush1.bf16.msra.mxu0 %v4716
        %5447 = vmatprep.subr.bf16.mxu0 0
        %5448 = vmatpush1.bf16.msra.mxu0 %v4717
        %5449 = vmatprep.subr.bf16.mxu0 0
        %5450 = vmatpush1.bf16.msra.mxu0 %v4718
        %5451 = vmatprep.subr.bf16.mxu0 0
        %5452 = vmatpush1.bf16.msra.mxu0 0
        %5453 = vmatprep.subr.bf16.mxu0 0
        %5454 = vmatpush1.bf16.msra.mxu0 0
        %5455 = vmatprep.subr.bf16.mxu0 0
        %5456 = vmatpush1.bf16.msra.mxu0 0
        %5457 = vmatprep.subr.bf16.mxu0 0
        %5458 = vmatpush1.bf16.msra.mxu0 0
        %5459 = vmatprep.subr.bf16.mxu0 0
        %5460 = vmatpush1.bf16.msra.mxu0 0
        %5461 = vmatprep.subr.bf16.mxu0 0
        %5462 = vmatpush1.bf16.msra.mxu0 0
        %5463 = vmatprep.subr.bf16.mxu0 0
        %5464 = vmatpush1.bf16.msra.mxu0 0
        %5465 = vmatprep.subr.bf16.mxu0 0
        %5466 = vmatpush1.bf16.msra.mxu0 0
        %5467 = vmatprep.mubr.bf16.mxu0 0
        %5468 = vmatmul.mubr.bf16.gmra.mrb[0].mxu0 %v1933
        %v5469 = vpop.f32.mrb[0].mxu0
        %v5470 = vadd.f32 %v5309, %v5469
        %v5471 = vpop.f32.mrb[0].mxu0
        %v5472 = vpop.f32.mrb[0].mxu0
        %v5473 = vadd.f32 %v5312, %v5472
        %v5474 = vpop.f32.mrb[0].mxu0
        %5475 = vmatprep.mubr.bf16.mxu0 0
        %5476 = vmatmul.mubr.bf16.gmra.mrb[0].mxu0 %v1934
        %v5477 = vpop.f32.mrb[0].mxu0
        %v5478 = vadd.f32 %v5317, %v5477
        %v5479 = vpop.f32.mrb[0].mxu0
        %v5480 = vpop.f32.mrb[0].mxu0
        %v5481 = vadd.f32 %v5320, %v5480
        %v5482 = vpop.f32.mrb[0].mxu0
        %5483 = vmatprep.mubr.bf16.mxu0 0
        %5484 = vmatmul.mubr.bf16.gmra.mrb[0].mxu0 %v1935
        %v5485 = vpop.f32.mrb[0].mxu0
        %v5486 = vadd.f32 %v5325, %v5485
        %v5487 = vpop.f32.mrb[0].mxu0
        %v5488 = vpop.f32.mrb[0].mxu0
        %v5489 = vadd.f32 %v5328, %v5488
        %v5490 = vpop.f32.mrb[0].mxu0
        %5491 = vmatprep.mubr.bf16.mxu0 0
        %5492 = vmatmul.mubr.bf16.gmra.mrb[0].mxu0 %v1936
        %v5493 = vpop.f32.mrb[0].mxu0
        %v5494 = vadd.f32 %v5333, %v5493
        %v5495 = vpop.f32.mrb[0].mxu0
        %v5496 = vpop.f32.mrb[0].mxu0
        %v5497 = vadd.f32 %v5336, %v5496
        %v5498 = vpop.f32.mrb[0].mxu0
        %5499 = vmatprep.mubr.bf16.mxu0 0
        %5500 = vmatmul.mubr.bf16.gmra.mrb[0].mxu0 %v1937
        %v5501 = vpop.f32.mrb[0].mxu0
        %v5502 = vadd.f32 %v5341, %v5501
        %v5503 = vpop.f32.mrb[0].mxu0
        %v5504 = vpop.f32.mrb[0].mxu0
        %v5505 = vadd.f32 %v5344, %v5504
        %v5506 = vpop.f32.mrb[0].mxu0
        %5507 = vmatprep.mubr.bf16.mxu0 0
        %5508 = vmatmul.mubr.bf16.gmra.mrb[0].mxu0 %v1938
        %v5509 = vpop.f32.mrb[0].mxu0
        %v5510 = vadd.f32 %v5349, %v5509
        %v5511 = vpop.f32.mrb[0].mxu0
        %v5512 = vpop.f32.mrb[0].mxu0
        %v5513 = vadd.f32 %v5352, %v5512
        %v5514 = vpop.f32.mrb[0].mxu0
        %5515 = vmatprep.mubr.bf16.mxu0 0
        %5516 = vmatmul.mubr.bf16.gmra.mrb[0].mxu0 %v1939
        %v5517 = vpop.f32.mrb[0].mxu0
        %v5518 = vadd.f32 %v5357, %v5517
        %v5519 = vpop.f32.mrb[0].mxu0
        %v5520 = vpop.f32.mrb[0].mxu0
        %v5521 = vadd.f32 %v5360, %v5520
        %v5522 = vpop.f32.mrb[0].mxu0
        %5523 = vmatprep.mubr.bf16.mxu0 0
        %5524 = vmatmul.mubr.bf16.gmra.mrb[0].mxu0 %v1940
        %v5525 = vpop.f32.mrb[0].mxu0
        %v5526 = vadd.f32 %v5365, %v5525
        %v5527 = vpop.f32.mrb[0].mxu0
        %v5528 = vpop.f32.mrb[0].mxu0
        %v5529 = vadd.f32 %v5368, %v5528
        %v5530 = vpop.f32.mrb[0].mxu0
        %5531 = vmatprep.mubr.bf16.mxu0 0
        %5532 = vmatmul.mubr.bf16.gmra.mrb[0].mxu0 %v1941
        %v5533 = vpop.f32.mrb[0].mxu0
        %v5534 = vadd.f32 %v5373, %v5533
        %v5535 = vpop.f32.mrb[0].mxu0
        %v5536 = vpop.f32.mrb[0].mxu0
        %v5537 = vadd.f32 %v5376, %v5536
        %v5538 = vpop.f32.mrb[0].mxu0
        %5539 = vmatprep.mubr.bf16.mxu0 0
        %5540 = vmatmul.mubr.bf16.gmra.mrb[0].mxu0 %v1942
        %v5541 = vpop.f32.mrb[0].mxu0
        %v5542 = vadd.f32 %v5381, %v5541
        %v5543 = vpop.f32.mrb[0].mxu0
        %v5544 = vpop.f32.mrb[0].mxu0
        %v5545 = vadd.f32 %v5384, %v5544
        %v5546 = vpop.f32.mrb[0].mxu0
        %5547 = vmatprep.mubr.bf16.mxu0 0
        %5548 = vmatmul.mubr.bf16.gmra.mrb[0].mxu0 %v1943
        %v5549 = vpop.f32.mrb[0].mxu0
        %v5550 = vadd.f32 %v5389, %v5549
        %v5551 = vpop.f32.mrb[0].mxu0
        %v5552 = vpop.f32.mrb[0].mxu0
        %v5553 = vadd.f32 %v5392, %v5552
        %v5554 = vpop.f32.mrb[0].mxu0
        %5555 = vmatprep.mubr.bf16.mxu0 0
        %5556 = vmatmul.mubr.bf16.gmra.mrb[0].mxu0 %v1944
        %v5557 = vpop.f32.mrb[0].mxu0
        %v5558 = vadd.f32 %v5397, %v5557
        %v5559 = vpop.f32.mrb[0].mxu0
        %v5560 = vpop.f32.mrb[0].mxu0
        %v5561 = vadd.f32 %v5400, %v5560
        %v5562 = vpop.f32.mrb[0].mxu0
        %5563 = vmatprep.mubr.bf16.mxu0 0
        %5564 = vmatmul.mubr.bf16.gmra.mrb[0].mxu0 %v1945
        %v5565 = vpop.f32.mrb[0].mxu0
        %v5566 = vadd.f32 %v5405, %v5565
        %v5567 = vpop.f32.mrb[0].mxu0
        %v5568 = vpop.f32.mrb[0].mxu0
        %v5569 = vadd.f32 %v5408, %v5568
        %v5570 = vpop.f32.mrb[0].mxu0
        %5571 = vmatprep.mubr.bf16.mxu0 0
        %5572 = vmatmul.mubr.bf16.gmra.mrb[0].mxu0 %v1946
        %v5573 = vpop.f32.mrb[0].mxu0
        %v5574 = vadd.f32 %v5413, %v5573
        %v5575 = vpop.f32.mrb[0].mxu0
        %v5576 = vpop.f32.mrb[0].mxu0
        %v5577 = vadd.f32 %v5416, %v5576
        %v5578 = vpop.f32.mrb[0].mxu0
        %5579 = vmatprep.mubr.bf16.mxu0 0
        %5580 = vmatmul.mubr.bf16.gmra.mrb[0].mxu0 %v1947
        %v5581 = vpop.f32.mrb[0].mxu0
        %v5582 = vadd.f32 %v5421, %v5581
        %v5583 = vpop.f32.mrb[0].mxu0
        %v5584 = vpop.f32.mrb[0].mxu0
        %v5585 = vadd.f32 %v5424, %v5584
        %v5586 = vpop.f32.mrb[0].mxu0
        %5587 = vmatprep.mubr.bf16.mxu0 0
        %5588 = vmatmul.mubr.bf16.gmra.mrb[0].mxu0 %v1948
        %v5589 = vpop.f32.mrb[0].mxu0
        %v5590 = vadd.f32 %v5429, %v5589
        %v5591 = vpop.f32.mrb[0].mxu0
        %v5592 = vpop.f32.mrb[0].mxu0
        %v5593 = vadd.f32 %v5432, %v5592
        %v5594 = vpop.f32.mrb[0].mxu0
        %5595 = vdwg.mxu0
        %v5596 = vadd.f32 %v4233, %v5470
        %v5597 = vadd.f32 %v4236, %v5473
        %v5598 = vadd.f32 %v4241, %v5478
        %v5599 = vadd.f32 %v4244, %v5481
        %v5600 = vadd.f32 %v4249, %v5486
        %v5601 = vadd.f32 %v4252, %v5489
        %v5602 = vadd.f32 %v4257, %v5494
        %v5603 = vadd.f32 %v4260, %v5497
        %v5604 = vadd.f32 %v4265, %v5502
        %v5605 = vadd.f32 %v4268, %v5505
        %v5606 = vadd.f32 %v4273, %v5510
        %v5607 = vadd.f32 %v4276, %v5513
        %v5608 = vadd.f32 %v4281, %v5518
        %v5609 = vadd.f32 %v4284, %v5521
        %v5610 = vadd.f32 %v4289, %v5526
        %v5611 = vadd.f32 %v4292, %v5529
        %v5612 = vadd.f32 %v4297, %v5534
        %v5613 = vadd.f32 %v4300, %v5537
        %v5614 = vadd.f32 %v4305, %v5542
        %v5615 = vadd.f32 %v4308, %v5545
        %v5616 = vadd.f32 %v4313, %v5550
        %v5617 = vadd.f32 %v4316, %v5553
        %v5618 = vadd.f32 %v4321, %v5558
        %v5619 = vadd.f32 %v4324, %v5561
        %v5620 = vadd.f32 %v4329, %v5566
        %v5621 = vadd.f32 %v4332, %v5569
        %v5622 = vadd.f32 %v4337, %v5574
        %v5623 = vadd.f32 %v4340, %v5577
        %v5624 = vadd.f32 %v4345, %v5582
        %v5625 = vadd.f32 %v4348, %v5585
        %v5626 = vadd.f32 %v4353, %v5590
        %v5627 = vadd.f32 %v4356, %v5593
        %v5628 = vld [vmem:[%s5] sm:$0x1]
        %v5630 = vlaneseq
        %v5631 = vshrl.u32 %v5630, 7
        %v5632 = vsub.s32 0, %v5631
        %v5633 = vrot.slane %v5628, %v5632
        %v5635 = vadd.f32 %v5596, %v5633
        %v5636 = vadd.f32 %v5597, %v5633
        %v5637 = vadd.f32 %v5598, %v5633
        %v5638 = vadd.f32 %v5599, %v5633
        %v5639 = vadd.f32 %v5600, %v5633
        %v5640 = vadd.f32 %v5601, %v5633
        %v5641 = vadd.f32 %v5602, %v5633
        %v5642 = vadd.f32 %v5603, %v5633
        %v5643 = vadd.f32 %v5604, %v5633
        %v5644 = vadd.f32 %v5605, %v5633
        %v5645 = vadd.f32 %v5606, %v5633
        %v5646 = vadd.f32 %v5607, %v5633
        %v5647 = vadd.f32 %v5608, %v5633
        %v5648 = vadd.f32 %v5609, %v5633
        %v5649 = vadd.f32 %v5610, %v5633
        %v5650 = vadd.f32 %v5611, %v5633
        %v5651 = vadd.f32 %v5612, %v5633
        %v5652 = vadd.f32 %v5613, %v5633
        %v5653 = vadd.f32 %v5614, %v5633
        %v5654 = vadd.f32 %v5615, %v5633
        %v5655 = vadd.f32 %v5616, %v5633
        %v5656 = vadd.f32 %v5617, %v5633
        %v5657 = vadd.f32 %v5618, %v5633
        %v5658 = vadd.f32 %v5619, %v5633
        %v5659 = vadd.f32 %v5620, %v5633
        %v5660 = vadd.f32 %v5621, %v5633
        %v5661 = vadd.f32 %v5622, %v5633
        %v5662 = vadd.f32 %v5623, %v5633
        %v5663 = vadd.f32 %v5624, %v5633
        %v5664 = vadd.f32 %v5625, %v5633
        %v5665 = vadd.f32 %v5626, %v5633
        %v5666 = vadd.f32 %v5627, %v5633
        %v5667 = vmax.f32 %v5635, 0.0
        %v5668 = vmax.f32 %v5636, 0.0
        %v5669 = vmax.f32 %v5637, 0.0
        %v5670 = vmax.f32 %v5638, 0.0
        %v5671 = vmax.f32 %v5639, 0.0
        %v5672 = vmax.f32 %v5640, 0.0
        %v5673 = vmax.f32 %v5641, 0.0
        %v5674 = vmax.f32 %v5642, 0.0
        %v5675 = vmax.f32 %v5643, 0.0
        %v5676 = vmax.f32 %v5644, 0.0
        %v5677 = vmax.f32 %v5645, 0.0
        %v5678 = vmax.f32 %v5646, 0.0
        %v5679 = vmax.f32 %v5647, 0.0
        %v5680 = vmax.f32 %v5648, 0.0
        %v5681 = vmax.f32 %v5649, 0.0
        %v5682 = vmax.f32 %v5650, 0.0
        %v5683 = vmax.f32 %v5651, 0.0
        %v5684 = vmax.f32 %v5652, 0.0
        %v5685 = vmax.f32 %v5653, 0.0
        %v5686 = vmax.f32 %v5654, 0.0
        %v5687 = vmax.f32 %v5655, 0.0
        %v5688 = vmax.f32 %v5656, 0.0
        %v5689 = vmax.f32 %v5657, 0.0
        %v5690 = vmax.f32 %v5658, 0.0
        %v5691 = vmax.f32 %v5659, 0.0
        %v5692 = vmax.f32 %v5660, 0.0
        %v5693 = vmax.f32 %v5661, 0.0
        %v5694 = vmax.f32 %v5662, 0.0
        %v5695 = vmax.f32 %v5663, 0.0
        %v5696 = vmax.f32 %v5664, 0.0
        %v5697 = vmax.f32 %v5665, 0.0
        %v5698 = vmax.f32 %v5666, 0.0
        %5699 = vst [vmem:[#allocation3 + $0x20] sm:$0xff] %v5667
        %5700 = vst [vmem:[#allocation3 + $0x28] sm:$0xff] %v5668
        %5701 = vst [vmem:[#allocation3 + $0x30] sm:$0xff] %v5669
        %5702 = vst [vmem:[#allocation3 + $0x38] sm:$0xff] %v5670
        %5703 = vst [vmem:[#allocation3 + $0x40] sm:$0xff] %v5671
        %5704 = vst [vmem:[#allocation3 + $0x48] sm:$0xff] %v5672
        %5705 = vst [vmem:[#allocation3 + $0x50] sm:$0xff] %v5673
        %5706 = vst [vmem:[#allocation3 + $0x58] sm:$0xff] %v5674
        %5707 = vst [vmem:[#allocation3 + $0x60] sm:$0xff] %v5675
        %5708 = vst [vmem:[#allocation3 + $0x68] sm:$0xff] %v5676
        %5709 = vst [vmem:[#allocation3 + $0x70] sm:$0xff] %v5677
        %5710 = vst [vmem:[#allocation3 + $0x78] sm:$0xff] %v5678
        %5711 = vst [vmem:[#allocation3 + $0x80] sm:$0xff] %v5679
        %5712 = vst [vmem:[#allocation3 + $0x88] sm:$0xff] %v5680
        %5713 = vst [vmem:[#allocation3 + $0x90] sm:$0xff] %v5681
        %5714 = vst [vmem:[#allocation3 + $0x98] sm:$0xff] %v5682
        %5715 = vst [vmem:[#allocation3 + $0xa0] sm:$0xff] %v5683
        %5716 = vst [vmem:[#allocation3 + $0xa8] sm:$0xff] %v5684
        %5717 = vst [vmem:[#allocation3 + $0xb0] sm:$0xff] %v5685
        %5718 = vst [vmem:[#allocation3 + $0xb8] sm:$0xff] %v5686
        %5719 = vst [vmem:[#allocation3 + $0xc0] sm:$0xff] %v5687
        %5720 = vst [vmem:[#allocation3 + $0xc8] sm:$0xff] %v5688
        %5721 = vst [vmem:[#allocation3 + $0xd0] sm:$0xff] %v5689
        %5722 = vst [vmem:[#allocation3 + $0xd8] sm:$0xff] %v5690
        %5723 = vst [vmem:[#allocation3 + $0xe0] sm:$0xff] %v5691
        %5724 = vst [vmem:[#allocation3 + $0xe8] sm:$0xff] %v5692
        %5725 = vst [vmem:[#allocation3 + $0xf0] sm:$0xff] %v5693
        %5726 = vst [vmem:[#allocation3 + $0xf8] sm:$0xff] %v5694
        %5727 = vst [vmem:[#allocation3 + $0x100] sm:$0xff] %v5695
        %5728 = vst [vmem:[#allocation3 + $0x108] sm:$0xff] %v5696
        %5729 = vst [vmem:[#allocation3 + $0x110] sm:$0xff] %v5697
        %5730 = vst [vmem:[#allocation3 + $0x118] sm:$0xff] %v5698
        %v5731 = vld [vmem:[#allocation3 + $0xf] sm:$0xff]
        %v5732 = vld [vmem:[#allocation3 + $0x17] sm:$0xff]
        %v5733 = vld [vmem:[#allocation3 + $0x1f] sm:$0xff]
        %v5734 = vld [vmem:[#allocation3 + $0x27] sm:$0xff]
        %v5735 = vld [vmem:[#allocation3 + $0x2f] sm:$0xff]
        %v5736 = vld [vmem:[#allocation3 + $0x37] sm:$0xff]
        %v5737 = vld [vmem:[#allocation3 + $0x3f] sm:$0xff]
        %v5738 = vld [vmem:[#allocation3 + $0x47] sm:$0xff]
        %v5739 = vld [vmem:[#allocation3 + $0x4f] sm:$0xff]
        %v5740 = vld [vmem:[#allocation3 + $0x57] sm:$0xff]
        %v5741 = vld [vmem:[#allocation3 + $0x5f] sm:$0xff]
        %v5742 = vld [vmem:[#allocation3 + $0x67] sm:$0xff]
        %v5743 = vld [vmem:[#allocation3 + $0x6f] sm:$0xff]
        %v5744 = vld [vmem:[#allocation3 + $0x77] sm:$0xff]
        %v5745 = vld [vmem:[#allocation3 + $0x7f] sm:$0xff]
        %v5746 = vld [vmem:[#allocation3 + $0x87] sm:$0xff]
        %v5747 = vld [vmem:[#allocation3 + $0x8f] sm:$0xff]
        %v5748 = vld [vmem:[#allocation3 + $0x97] sm:$0xff]
        %v5749 = vld [vmem:[#allocation3 + $0x9f] sm:$0xff]
        %v5750 = vld [vmem:[#allocation3 + $0xa7] sm:$0xff]
        %v5751 = vld [vmem:[#allocation3 + $0xaf] sm:$0xff]
        %v5752 = vld [vmem:[#allocation3 + $0xb7] sm:$0xff]
        %v5753 = vld [vmem:[#allocation3 + $0xbf] sm:$0xff]
        %v5754 = vld [vmem:[#allocation3 + $0xc7] sm:$0xff]
        %v5755 = vld [vmem:[#allocation3 + $0xcf] sm:$0xff]
        %v5756 = vld [vmem:[#allocation3 + $0xd7] sm:$0xff]
        %v5757 = vld [vmem:[#allocation3 + $0xdf] sm:$0xff]
        %v5758 = vld [vmem:[#allocation3 + $0xe7] sm:$0xff]
        %v5759 = vld [vmem:[#allocation3 + $0xef] sm:$0xff]
        %v5760 = vld [vmem:[#allocation3 + $0xf7] sm:$0xff]
        %v5761 = vld [vmem:[#allocation3 + $0xff] sm:$0xff]
        %v5762 = vld [vmem:[#allocation3 + $0x107] sm:$0xff]
        %v5763 = vsel %vm981, %v5731, 0.0
        %v5764 = vsel %vm982, %v5732, 0.0
        %v5765 = vsel %vm983, %v5733, 0.0
        %v5766 = vsel %vm984, %v5734, 0.0
        %v5767 = vsel %vm985, %v5735, 0.0
        %v5768 = vsel %vm986, %v5736, 0.0
        %v5769 = vsel %vm987, %v5737, 0.0
        %v5770 = vsel %vm988, %v5738, 0.0
        %v5771 = vsel %vm989, %v5739, 0.0
        %v5772 = vsel %vm990, %v5740, 0.0
        %v5773 = vsel %vm991, %v5741, 0.0
        %v5774 = vsel %vm992, %v5742, 0.0
        %v5775 = vsel %vm993, %v5743, 0.0
        %v5776 = vsel %vm994, %v5744, 0.0
        %v5777 = vsel %vm995, %v5745, 0.0
        %v5778 = vsel %vm996, %v5746, 0.0
        %v5779 = vsel %vm997, %v5747, 0.0
        %v5780 = vsel %vm998, %v5748, 0.0
        %v5781 = vsel %vm999, %v5749, 0.0
        %v5782 = vsel %vm1000, %v5750, 0.0
        %v5783 = vsel %vm1001, %v5751, 0.0
        %v5784 = vsel %vm1002, %v5752, 0.0
        %v5785 = vsel %vm1003, %v5753, 0.0
        %v5786 = vsel %vm1004, %v5754, 0.0
        %v5787 = vsel %vm1005, %v5755, 0.0
        %v5788 = vsel %vm1006, %v5756, 0.0
        %v5789 = vsel %vm1007, %v5757, 0.0
        %v5790 = vsel %vm1008, %v5758, 0.0
        %v5791 = vsel %vm1009, %v5759, 0.0
        %v5792 = vsel %vm1010, %v5760, 0.0
        %v5793 = vsel %vm1011, %v5761, 0.0
        %v5794 = vsel %vm1012, %v5762, 0.0
        %v5795 = vpack.c.bf16 %v5764, %v5763
        %v5796 = vpack.c.bf16 %v5766, %v5765
        %v5797 = vpack.c.bf16 %v5768, %v5767
        %v5798 = vpack.c.bf16 %v5770, %v5769
        %v5799 = vpack.c.bf16 %v5772, %v5771
        %v5800 = vpack.c.bf16 %v5774, %v5773
        %v5801 = vpack.c.bf16 %v5776, %v5775
        %v5802 = vpack.c.bf16 %v5778, %v5777
        %v5803 = vpack.c.bf16 %v5780, %v5779
        %v5804 = vpack.c.bf16 %v5782, %v5781
        %v5805 = vpack.c.bf16 %v5784, %v5783
        %v5806 = vpack.c.bf16 %v5786, %v5785
        %v5807 = vpack.c.bf16 %v5788, %v5787
        %v5808 = vpack.c.bf16 %v5790, %v5789
        %v5809 = vpack.c.bf16 %v5792, %v5791
        %v5810 = vpack.c.bf16 %v5794, %v5793
        %v5811 = vunpack.c.l.bf16 %v5795
        %v5812 = vunpack.c.h.bf16 %v5795
        %v5813 = vunpack.c.l.bf16 %v5796
        %v5814 = vunpack.c.h.bf16 %v5796
        %v5815 = vunpack.c.l.bf16 %v5797
        %v5816 = vunpack.c.h.bf16 %v5797
        %v5817 = vunpack.c.l.bf16 %v5798
        %v5818 = vunpack.c.h.bf16 %v5798
        %v5819 = vunpack.c.l.bf16 %v5799
        %v5820 = vunpack.c.h.bf16 %v5799
        %v5821 = vunpack.c.l.bf16 %v5800
        %v5822 = vunpack.c.h.bf16 %v5800
        %v5823 = vunpack.c.l.bf16 %v5801
        %v5824 = vunpack.c.h.bf16 %v5801
        %v5825 = vunpack.c.l.bf16 %v5802
        %v5826 = vunpack.c.h.bf16 %v5802
        %v5827 = vunpack.c.l.bf16 %v5803
        %v5828 = vunpack.c.h.bf16 %v5803
        %v5829 = vunpack.c.l.bf16 %v5804
        %v5830 = vunpack.c.h.bf16 %v5804
        %v5831 = vunpack.c.l.bf16 %v5805
        %v5832 = vunpack.c.h.bf16 %v5805
        %v5833 = vunpack.c.l.bf16 %v5806
        %v5834 = vunpack.c.h.bf16 %v5806
        %v5835 = vunpack.c.l.bf16 %v5807
        %v5836 = vunpack.c.h.bf16 %v5807
        %v5837 = vunpack.c.l.bf16 %v5808
        %v5838 = vunpack.c.h.bf16 %v5808
        %v5839 = vunpack.c.l.bf16 %v5809
        %v5840 = vunpack.c.h.bf16 %v5809
        %v5841 = vunpack.c.l.bf16 %v5810
        %v5842 = vunpack.c.h.bf16 %v5810
        %v5843 = vsub.f32 %v5763, %v5811
        %v5844 = vsub.f32 %v5764, %v5812
        %v5845 = vsub.f32 %v5765, %v5813
        %v5846 = vsub.f32 %v5766, %v5814
        %v5847 = vsub.f32 %v5767, %v5815
        %v5848 = vsub.f32 %v5768, %v5816
        %v5849 = vsub.f32 %v5769, %v5817
        %v5850 = vsub.f32 %v5770, %v5818
        %v5851 = vsub.f32 %v5771, %v5819
        %v5852 = vsub.f32 %v5772, %v5820
        %v5853 = vsub.f32 %v5773, %v5821
        %v5854 = vsub.f32 %v5774, %v5822
        %v5855 = vsub.f32 %v5775, %v5823
        %v5856 = vsub.f32 %v5776, %v5824
        %v5857 = vsub.f32 %v5777, %v5825
        %v5858 = vsub.f32 %v5778, %v5826
        %v5859 = vsub.f32 %v5779, %v5827
        %v5860 = vsub.f32 %v5780, %v5828
        %v5861 = vsub.f32 %v5781, %v5829
        %v5862 = vsub.f32 %v5782, %v5830
        %v5863 = vsub.f32 %v5783, %v5831
        %v5864 = vsub.f32 %v5784, %v5832
        %v5865 = vsub.f32 %v5785, %v5833
        %v5866 = vsub.f32 %v5786, %v5834
        %v5867 = vsub.f32 %v5787, %v5835
        %v5868 = vsub.f32 %v5788, %v5836
        %v5869 = vsub.f32 %v5789, %v5837
        %v5870 = vsub.f32 %v5790, %v5838
        %v5871 = vsub.f32 %v5791, %v5839
        %v5872 = vsub.f32 %v5792, %v5840
        %v5873 = vsub.f32 %v5793, %v5841
        %v5874 = vsub.f32 %v5794, %v5842
        %v5875 = vpack.c.bf16 %v5844, %v5843
        %v5876 = vpack.c.bf16 %v5846, %v5845
        %v5877 = vpack.c.bf16 %v5848, %v5847
        %v5878 = vpack.c.bf16 %v5850, %v5849
        %v5879 = vpack.c.bf16 %v5852, %v5851
        %v5880 = vpack.c.bf16 %v5854, %v5853
        %v5881 = vpack.c.bf16 %v5856, %v5855
        %v5882 = vpack.c.bf16 %v5858, %v5857
        %v5883 = vpack.c.bf16 %v5860, %v5859
        %v5884 = vpack.c.bf16 %v5862, %v5861
        %v5885 = vpack.c.bf16 %v5864, %v5863
        %v5886 = vpack.c.bf16 %v5866, %v5865
        %v5887 = vpack.c.bf16 %v5868, %v5867
        %v5888 = vpack.c.bf16 %v5870, %v5869
        %v5889 = vpack.c.bf16 %v5872, %v5871
        %v5890 = vpack.c.bf16 %v5874, %v5873
        %v5891 = vld [vmem:[#allocation3 + $0x10] sm:$0xff]
        %v5892 = vld [vmem:[#allocation3 + $0x18] sm:$0xff]
        %v5893 = vld [vmem:[#allocation3 + $0x20] sm:$0xff]
        %v5894 = vld [vmem:[#allocation3 + $0x28] sm:$0xff]
        %v5895 = vld [vmem:[#allocation3 + $0x30] sm:$0xff]
        %v5896 = vld [vmem:[#allocation3 + $0x38] sm:$0xff]
        %v5897 = vld [vmem:[#allocation3 + $0x40] sm:$0xff]
        %v5898 = vld [vmem:[#allocation3 + $0x48] sm:$0xff]
        %v5899 = vld [vmem:[#allocation3 + $0x50] sm:$0xff]
        %v5900 = vld [vmem:[#allocation3 + $0x58] sm:$0xff]
        %v5901 = vld [vmem:[#allocation3 + $0x60] sm:$0xff]
        %v5902 = vld [vmem:[#allocation3 + $0x68] sm:$0xff]
        %v5903 = vld [vmem:[#allocation3 + $0x70] sm:$0xff]
        %v5904 = vld [vmem:[#allocation3 + $0x78] sm:$0xff]
        %v5905 = vld [vmem:[#allocation3 + $0x80] sm:$0xff]
        %v5906 = vld [vmem:[#allocation3 + $0x88] sm:$0xff]
        %v5907 = vld [vmem:[#allocation3 + $0x90] sm:$0xff]
        %v5908 = vld [vmem:[#allocation3 + $0x98] sm:$0xff]
        %v5909 = vld [vmem:[#allocation3 + $0xa0] sm:$0xff]
        %v5910 = vld [vmem:[#allocation3 + $0xa8] sm:$0xff]
        %v5911 = vld [vmem:[#allocation3 + $0xb0] sm:$0xff]
        %v5912 = vld [vmem:[#allocation3 + $0xb8] sm:$0xff]
        %v5913 = vld [vmem:[#allocation3 + $0xc0] sm:$0xff]
        %v5914 = vld [vmem:[#allocation3 + $0xc8] sm:$0xff]
        %v5915 = vld [vmem:[#allocation3 + $0xd0] sm:$0xff]
        %v5916 = vld [vmem:[#allocation3 + $0xd8] sm:$0xff]
        %v5917 = vld [vmem:[#allocation3 + $0xe0] sm:$0xff]
        %v5918 = vld [vmem:[#allocation3 + $0xe8] sm:$0xff]
        %v5919 = vld [vmem:[#allocation3 + $0xf0] sm:$0xff]
        %v5920 = vld [vmem:[#allocation3 + $0xf8] sm:$0xff]
        %v5921 = vld [vmem:[#allocation3 + $0x100] sm:$0xff]
        %v5922 = vld [vmem:[#allocation3 + $0x108] sm:$0xff]
        %v5923 = vpack.c.bf16 %v5892, %v5891
        %v5924 = vpack.c.bf16 %v5894, %v5893
        %v5925 = vpack.c.bf16 %v5896, %v5895
        %v5926 = vpack.c.bf16 %v5898, %v5897
        %v5927 = vpack.c.bf16 %v5900, %v5899
        %v5928 = vpack.c.bf16 %v5902, %v5901
        %v5929 = vpack.c.bf16 %v5904, %v5903
        %v5930 = vpack.c.bf16 %v5906, %v5905
        %v5931 = vpack.c.bf16 %v5908, %v5907
        %v5932 = vpack.c.bf16 %v5910, %v5909
        %v5933 = vpack.c.bf16 %v5912, %v5911
        %v5934 = vpack.c.bf16 %v5914, %v5913
        %v5935 = vpack.c.bf16 %v5916, %v5915
        %v5936 = vpack.c.bf16 %v5918, %v5917
        %v5937 = vpack.c.bf16 %v5920, %v5919
        %v5938 = vpack.c.bf16 %v5922, %v5921
        %v5939 = vunpack.c.l.bf16 %v5923
        %v5940 = vunpack.c.h.bf16 %v5923
        %v5941 = vunpack.c.l.bf16 %v5924
        %v5942 = vunpack.c.h.bf16 %v5924
        %v5943 = vunpack.c.l.bf16 %v5925
        %v5944 = vunpack.c.h.bf16 %v5925
        %v5945 = vunpack.c.l.bf16 %v5926
        %v5946 = vunpack.c.h.bf16 %v5926
        %v5947 = vunpack.c.l.bf16 %v5927
        %v5948 = vunpack.c.h.bf16 %v5927
        %v5949 = vunpack.c.l.bf16 %v5928
        %v5950 = vunpack.c.h.bf16 %v5928
        %v5951 = vunpack.c.l.bf16 %v5929
        %v5952 = vunpack.c.h.bf16 %v5929
        %v5953 = vunpack.c.l.bf16 %v5930
        %v5954 = vunpack.c.h.bf16 %v5930
        %v5955 = vunpack.c.l.bf16 %v5931
        %v5956 = vunpack.c.h.bf16 %v5931
        %v5957 = vunpack.c.l.bf16 %v5932
        %v5958 = vunpack.c.h.bf16 %v5932
        %v5959 = vunpack.c.l.bf16 %v5933
        %v5960 = vunpack.c.h.bf16 %v5933
        %v5961 = vunpack.c.l.bf16 %v5934
        %v5962 = vunpack.c.h.bf16 %v5934
        %v5963 = vunpack.c.l.bf16 %v5935
        %v5964 = vunpack.c.h.bf16 %v5935
        %v5965 = vunpack.c.l.bf16 %v5936
        %v5966 = vunpack.c.h.bf16 %v5936
        %v5967 = vunpack.c.l.bf16 %v5937
        %v5968 = vunpack.c.h.bf16 %v5937
        %v5969 = vunpack.c.l.bf16 %v5938
        %v5970 = vunpack.c.h.bf16 %v5938
        %v5971 = vsub.f32 %v5891, %v5939
        %v5972 = vsub.f32 %v5892, %v5940
        %v5973 = vsub.f32 %v5893, %v5941
        %v5974 = vsub.f32 %v5894, %v5942
        %v5975 = vsub.f32 %v5895, %v5943
        %v5976 = vsub.f32 %v5896, %v5944
        %v5977 = vsub.f32 %v5897, %v5945
        %v5978 = vsub.f32 %v5898, %v5946
        %v5979 = vsub.f32 %v5899, %v5947
        %v5980 = vsub.f32 %v5900, %v5948
        %v5981 = vsub.f32 %v5901, %v5949
        %v5982 = vsub.f32 %v5902, %v5950
        %v5983 = vsub.f32 %v5903, %v5951
        %v5984 = vsub.f32 %v5904, %v5952
        %v5985 = vsub.f32 %v5905, %v5953
        %v5986 = vsub.f32 %v5906, %v5954
        %v5987 = vsub.f32 %v5907, %v5955
        %v5988 = vsub.f32 %v5908, %v5956
        %v5989 = vsub.f32 %v5909, %v5957
        %v5990 = vsub.f32 %v5910, %v5958
        %v5991 = vsub.f32 %v5911, %v5959
        %v5992 = vsub.f32 %v5912, %v5960
        %v5993 = vsub.f32 %v5913, %v5961
        %v5994 = vsub.f32 %v5914, %v5962
        %v5995 = vsub.f32 %v5915, %v5963
        %v5996 = vsub.f32 %v5916, %v5964
        %v5997 = vsub.f32 %v5917, %v5965
        %v5998 = vsub.f32 %v5918, %v5966
        %v5999 = vsub.f32 %v5919, %v5967
        %v6000 = vsub.f32 %v5920, %v5968
        %v6001 = vsub.f32 %v5921, %v5969
        %v6002 = vsub.f32 %v5922, %v5970
        %v6003 = vpack.c.bf16 %v5972, %v5971
        %v6004 = vpack.c.bf16 %v5974, %v5973
        %v6005 = vpack.c.bf16 %v5976, %v5975
        %v6006 = vpack.c.bf16 %v5978, %v5977
        %v6007 = vpack.c.bf16 %v5980, %v5979
        %v6008 = vpack.c.bf16 %v5982, %v5981
        %v6009 = vpack.c.bf16 %v5984, %v5983
        %v6010 = vpack.c.bf16 %v5986, %v5985
        %v6011 = vpack.c.bf16 %v5988, %v5987
        %v6012 = vpack.c.bf16 %v5990, %v5989
        %v6013 = vpack.c.bf16 %v5992, %v5991
        %v6014 = vpack.c.bf16 %v5994, %v5993
        %v6015 = vpack.c.bf16 %v5996, %v5995
        %v6016 = vpack.c.bf16 %v5998, %v5997
        %v6017 = vpack.c.bf16 %v6000, %v5999
        %v6018 = vpack.c.bf16 %v6002, %v6001
        %v6019 = vld [vmem:[#allocation3 + $0x11] sm:$0xff]
        %v6020 = vld [vmem:[#allocation3 + $0x19] sm:$0xff]
        %v6021 = vld [vmem:[#allocation3 + $0x21] sm:$0xff]
        %v6022 = vld [vmem:[#allocation3 + $0x29] sm:$0xff]
        %v6023 = vld [vmem:[#allocation3 + $0x31] sm:$0xff]
        %v6024 = vld [vmem:[#allocation3 + $0x39] sm:$0xff]
        %v6025 = vld [vmem:[#allocation3 + $0x41] sm:$0xff]
        %v6026 = vld [vmem:[#allocation3 + $0x49] sm:$0xff]
        %v6027 = vld [vmem:[#allocation3 + $0x51] sm:$0xff]
        %v6028 = vld [vmem:[#allocation3 + $0x59] sm:$0xff]
        %v6029 = vld [vmem:[#allocation3 + $0x61] sm:$0xff]
        %v6030 = vld [vmem:[#allocation3 + $0x69] sm:$0xff]
        %v6031 = vld [vmem:[#allocation3 + $0x71] sm:$0xff]
        %v6032 = vld [vmem:[#allocation3 + $0x79] sm:$0xff]
        %v6033 = vld [vmem:[#allocation3 + $0x81] sm:$0xff]
        %v6034 = vld [vmem:[#allocation3 + $0x89] sm:$0xff]
        %v6035 = vld [vmem:[#allocation3 + $0x91] sm:$0xff]
        %v6036 = vld [vmem:[#allocation3 + $0x99] sm:$0xff]
        %v6037 = vld [vmem:[#allocation3 + $0xa1] sm:$0xff]
        %v6038 = vld [vmem:[#allocation3 + $0xa9] sm:$0xff]
        %v6039 = vld [vmem:[#allocation3 + $0xb1] sm:$0xff]
        %v6040 = vld [vmem:[#allocation3 + $0xb9] sm:$0xff]
        %v6041 = vld [vmem:[#allocation3 + $0xc1] sm:$0xff]
        %v6042 = vld [vmem:[#allocation3 + $0xc9] sm:$0xff]
        %v6043 = vld [vmem:[#allocation3 + $0xd1] sm:$0xff]
        %v6044 = vld [vmem:[#allocation3 + $0xd9] sm:$0xff]
        %v6045 = vld [vmem:[#allocation3 + $0xe1] sm:$0xff]
        %v6046 = vld [vmem:[#allocation3 + $0xe9] sm:$0xff]
        %v6047 = vld [vmem:[#allocation3 + $0xf1] sm:$0xff]
        %v6048 = vld [vmem:[#allocation3 + $0xf9] sm:$0xff]
        %v6049 = vld [vmem:[#allocation3 + $0x101] sm:$0xff]
        %v6050 = vld [vmem:[#allocation3 + $0x109] sm:$0xff]
        %v6051 = vsel %vm1333, %v6019, 0.0
        %v6052 = vsel %vm1334, %v6020, 0.0
        %v6053 = vsel %vm1335, %v6021, 0.0
        %v6054 = vsel %vm1336, %v6022, 0.0
        %v6055 = vsel %vm1337, %v6023, 0.0
        %v6056 = vsel %vm1338, %v6024, 0.0
        %v6057 = vsel %vm1339, %v6025, 0.0
        %v6058 = vsel %vm1340, %v6026, 0.0
        %v6059 = vsel %vm1341, %v6027, 0.0
        %v6060 = vsel %vm1342, %v6028, 0.0
        %v6061 = vsel %vm1343, %v6029, 0.0
        %v6062 = vsel %vm1344, %v6030, 0.0
        %v6063 = vsel %vm1345, %v6031, 0.0
        %v6064 = vsel %vm1346, %v6032, 0.0
        %v6065 = vsel %vm1347, %v6033, 0.0
        %v6066 = vsel %vm1348, %v6034, 0.0
        %v6067 = vsel %vm1349, %v6035, 0.0
        %v6068 = vsel %vm1350, %v6036, 0.0
        %v6069 = vsel %vm1351, %v6037, 0.0
        %v6070 = vsel %vm1352, %v6038, 0.0
        %v6071 = vsel %vm1353, %v6039, 0.0
        %v6072 = vsel %vm1354, %v6040, 0.0
        %v6073 = vsel %vm1355, %v6041, 0.0
        %v6074 = vsel %vm1356, %v6042, 0.0
        %v6075 = vsel %vm1357, %v6043, 0.0
        %v6076 = vsel %vm1358, %v6044, 0.0
        %v6077 = vsel %vm1359, %v6045, 0.0
        %v6078 = vsel %vm1360, %v6046, 0.0
        %v6079 = vsel %vm1361, %v6047, 0.0
        %v6080 = vsel %vm1362, %v6048, 0.0
        %v6081 = vsel %vm1363, %v6049, 0.0
        %v6082 = vsel %vm1364, %v6050, 0.0
        %v6083 = vpack.c.bf16 %v6052, %v6051
        %v6084 = vpack.c.bf16 %v6054, %v6053
        %v6085 = vpack.c.bf16 %v6056, %v6055
        %v6086 = vpack.c.bf16 %v6058, %v6057
        %v6087 = vpack.c.bf16 %v6060, %v6059
        %v6088 = vpack.c.bf16 %v6062, %v6061
        %v6089 = vpack.c.bf16 %v6064, %v6063
        %v6090 = vpack.c.bf16 %v6066, %v6065
        %v6091 = vpack.c.bf16 %v6068, %v6067
        %v6092 = vpack.c.bf16 %v6070, %v6069
        %v6093 = vpack.c.bf16 %v6072, %v6071
        %v6094 = vpack.c.bf16 %v6074, %v6073
        %v6095 = vpack.c.bf16 %v6076, %v6075
        %v6096 = vpack.c.bf16 %v6078, %v6077
        %v6097 = vpack.c.bf16 %v6080, %v6079
        %v6098 = vpack.c.bf16 %v6082, %v6081
        %v6099 = vunpack.c.l.bf16 %v6083
        %v6100 = vunpack.c.h.bf16 %v6083
        %v6101 = vunpack.c.l.bf16 %v6084
        %v6102 = vunpack.c.h.bf16 %v6084
        %v6103 = vunpack.c.l.bf16 %v6085
        %v6104 = vunpack.c.h.bf16 %v6085
        %v6105 = vunpack.c.l.bf16 %v6086
        %v6106 = vunpack.c.h.bf16 %v6086
        %v6107 = vunpack.c.l.bf16 %v6087
        %v6108 = vunpack.c.h.bf16 %v6087
        %v6109 = vunpack.c.l.bf16 %v6088
        %v6110 = vunpack.c.h.bf16 %v6088
        %v6111 = vunpack.c.l.bf16 %v6089
        %v6112 = vunpack.c.h.bf16 %v6089
        %v6113 = vunpack.c.l.bf16 %v6090
        %v6114 = vunpack.c.h.bf16 %v6090
        %v6115 = vunpack.c.l.bf16 %v6091
        %v6116 = vunpack.c.h.bf16 %v6091
        %v6117 = vunpack.c.l.bf16 %v6092
        %v6118 = vunpack.c.h.bf16 %v6092
        %v6119 = vunpack.c.l.bf16 %v6093
        %v6120 = vunpack.c.h.bf16 %v6093
        %v6121 = vunpack.c.l.bf16 %v6094
        %v6122 = vunpack.c.h.bf16 %v6094
        %v6123 = vunpack.c.l.bf16 %v6095
        %v6124 = vunpack.c.h.bf16 %v6095
        %v6125 = vunpack.c.l.bf16 %v6096
        %v6126 = vunpack.c.h.bf16 %v6096
        %v6127 = vunpack.c.l.bf16 %v6097
        %v6128 = vunpack.c.h.bf16 %v6097
        %v6129 = vunpack.c.l.bf16 %v6098
        %v6130 = vunpack.c.h.bf16 %v6098
        %v6131 = vsub.f32 %v6051, %v6099
        %v6132 = vsub.f32 %v6052, %v6100
        %v6133 = vsub.f32 %v6053, %v6101
        %v6134 = vsub.f32 %v6054, %v6102
        %v6135 = vsub.f32 %v6055, %v6103
        %v6136 = vsub.f32 %v6056, %v6104
        %v6137 = vsub.f32 %v6057, %v6105
        %v6138 = vsub.f32 %v6058, %v6106
        %v6139 = vsub.f32 %v6059, %v6107
        %v6140 = vsub.f32 %v6060, %v6108
        %v6141 = vsub.f32 %v6061, %v6109
        %v6142 = vsub.f32 %v6062, %v6110
        %v6143 = vsub.f32 %v6063, %v6111
        %v6144 = vsub.f32 %v6064, %v6112
        %v6145 = vsub.f32 %v6065, %v6113
        %v6146 = vsub.f32 %v6066, %v6114
        %v6147 = vsub.f32 %v6067, %v6115
        %v6148 = vsub.f32 %v6068, %v6116
        %v6149 = vsub.f32 %v6069, %v6117
        %v6150 = vsub.f32 %v6070, %v6118
        %v6151 = vsub.f32 %v6071, %v6119
        %v6152 = vsub.f32 %v6072, %v6120
        %v6153 = vsub.f32 %v6073, %v6121
        %v6154 = vsub.f32 %v6074, %v6122
        %v6155 = vsub.f32 %v6075, %v6123
        %v6156 = vsub.f32 %v6076, %v6124
        %v6157 = vsub.f32 %v6077, %v6125
        %v6158 = vsub.f32 %v6078, %v6126
        %v6159 = vsub.f32 %v6079, %v6127
        %v6160 = vsub.f32 %v6080, %v6128
        %v6161 = vsub.f32 %v6081, %v6129
        %v6162 = vsub.f32 %v6082, %v6130
        %v6163 = vpack.c.bf16 %v6132, %v6131
        %v6164 = vpack.c.bf16 %v6134, %v6133
        %v6165 = vpack.c.bf16 %v6136, %v6135
        %v6166 = vpack.c.bf16 %v6138, %v6137
        %v6167 = vpack.c.bf16 %v6140, %v6139
        %v6168 = vpack.c.bf16 %v6142, %v6141
        %v6169 = vpack.c.bf16 %v6144, %v6143
        %v6170 = vpack.c.bf16 %v6146, %v6145
        %v6171 = vpack.c.bf16 %v6148, %v6147
        %v6172 = vpack.c.bf16 %v6150, %v6149
        %v6173 = vpack.c.bf16 %v6152, %v6151
        %v6174 = vpack.c.bf16 %v6154, %v6153
        %v6175 = vpack.c.bf16 %v6156, %v6155
        %v6176 = vpack.c.bf16 %v6158, %v6157
        %v6177 = vpack.c.bf16 %v6160, %v6159
        %v6178 = vpack.c.bf16 %v6162, %v6161
        %v6179 = vld [vmem:[#allocation3 + $0x10f] sm:$0xff]
        %v6180 = vld [vmem:[#allocation3 + $0x117] sm:$0xff]
        %v6181 = vsel %vm981, %v5733, 0.0
        %v6182 = vsel %vm982, %v5734, 0.0
        %v6183 = vsel %vm983, %v5735, 0.0
        %v6184 = vsel %vm984, %v5736, 0.0
        %v6185 = vsel %vm985, %v5737, 0.0
        %v6186 = vsel %vm986, %v5738, 0.0
        %v6187 = vsel %vm987, %v5739, 0.0
        %v6188 = vsel %vm988, %v5740, 0.0
        %v6189 = vsel %vm989, %v5741, 0.0
        %v6190 = vsel %vm990, %v5742, 0.0
        %v6191 = vsel %vm991, %v5743, 0.0
        %v6192 = vsel %vm992, %v5744, 0.0
        %v6193 = vsel %vm993, %v5745, 0.0
        %v6194 = vsel %vm994, %v5746, 0.0
        %v6195 = vsel %vm995, %v5747, 0.0
        %v6196 = vsel %vm996, %v5748, 0.0
        %v6197 = vsel %vm997, %v5749, 0.0
        %v6198 = vsel %vm998, %v5750, 0.0
        %v6199 = vsel %vm999, %v5751, 0.0
        %v6200 = vsel %vm1000, %v5752, 0.0
        %v6201 = vsel %vm1001, %v5753, 0.0
        %v6202 = vsel %vm1002, %v5754, 0.0
        %v6203 = vsel %vm1003, %v5755, 0.0
        %v6204 = vsel %vm1004, %v5756, 0.0
        %v6205 = vsel %vm1005, %v5757, 0.0
        %v6206 = vsel %vm1006, %v5758, 0.0
        %v6207 = vsel %vm1007, %v5759, 0.0
        %v6208 = vsel %vm1008, %v5760, 0.0
        %v6209 = vsel %vm1009, %v5761, 0.0
        %v6210 = vsel %vm1010, %v5762, 0.0
        %v6211 = vsel %vm1011, %v6179, 0.0
        %v6212 = vsel %vm1012, %v6180, 0.0
        %v6213 = vpack.c.bf16 %v6182, %v6181
        %v6214 = vpack.c.bf16 %v6184, %v6183
        %v6215 = vpack.c.bf16 %v6186, %v6185
        %v6216 = vpack.c.bf16 %v6188, %v6187
        %v6217 = vpack.c.bf16 %v6190, %v6189
        %v6218 = vpack.c.bf16 %v6192, %v6191
        %v6219 = vpack.c.bf16 %v6194, %v6193
        %v6220 = vpack.c.bf16 %v6196, %v6195
        %v6221 = vpack.c.bf16 %v6198, %v6197
        %v6222 = vpack.c.bf16 %v6200, %v6199
        %v6223 = vpack.c.bf16 %v6202, %v6201
        %v6224 = vpack.c.bf16 %v6204, %v6203
        %v6225 = vpack.c.bf16 %v6206, %v6205
        %v6226 = vpack.c.bf16 %v6208, %v6207
        %v6227 = vpack.c.bf16 %v6210, %v6209
        %v6228 = vpack.c.bf16 %v6212, %v6211
        %v6229 = vunpack.c.l.bf16 %v6213
        %v6230 = vunpack.c.h.bf16 %v6213
        %v6231 = vunpack.c.l.bf16 %v6214
        %v6232 = vunpack.c.h.bf16 %v6214
        %v6233 = vunpack.c.l.bf16 %v6215
        %v6234 = vunpack.c.h.bf16 %v6215
        %v6235 = vunpack.c.l.bf16 %v6216
        %v6236 = vunpack.c.h.bf16 %v6216
        %v6237 = vunpack.c.l.bf16 %v6217
        %v6238 = vunpack.c.h.bf16 %v6217
        %v6239 = vunpack.c.l.bf16 %v6218
        %v6240 = vunpack.c.h.bf16 %v6218
        %v6241 = vunpack.c.l.bf16 %v6219
        %v6242 = vunpack.c.h.bf16 %v6219
        %v6243 = vunpack.c.l.bf16 %v6220
        %v6244 = vunpack.c.h.bf16 %v6220
        %v6245 = vunpack.c.l.bf16 %v6221
        %v6246 = vunpack.c.h.bf16 %v6221
        %v6247 = vunpack.c.l.bf16 %v6222
        %v6248 = vunpack.c.h.bf16 %v6222
        %v6249 = vunpack.c.l.bf16 %v6223
        %v6250 = vunpack.c.h.bf16 %v6223
        %v6251 = vunpack.c.l.bf16 %v6224
        %v6252 = vunpack.c.h.bf16 %v6224
        %v6253 = vunpack.c.l.bf16 %v6225
        %v6254 = vunpack.c.h.bf16 %v6225
        %v6255 = vunpack.c.l.bf16 %v6226
        %v6256 = vunpack.c.h.bf16 %v6226
        %v6257 = vunpack.c.l.bf16 %v6227
        %v6258 = vunpack.c.h.bf16 %v6227
        %v6259 = vunpack.c.l.bf16 %v6228
        %v6260 = vunpack.c.h.bf16 %v6228
        %v6261 = vsub.f32 %v6181, %v6229
        %v6262 = vsub.f32 %v6182, %v6230
        %v6263 = vsub.f32 %v6183, %v6231
        %v6264 = vsub.f32 %v6184, %v6232
        %v6265 = vsub.f32 %v6185, %v6233
        %v6266 = vsub.f32 %v6186, %v6234
        %v6267 = vsub.f32 %v6187, %v6235
        %v6268 = vsub.f32 %v6188, %v6236
        %v6269 = vsub.f32 %v6189, %v6237
        %v6270 = vsub.f32 %v6190, %v6238
        %v6271 = vsub.f32 %v6191, %v6239
        %v6272 = vsub.f32 %v6192, %v6240
        %v6273 = vsub.f32 %v6193, %v6241
        %v6274 = vsub.f32 %v6194, %v6242
        %v6275 = vsub.f32 %v6195, %v6243
        %v6276 = vsub.f32 %v6196, %v6244
        %v6277 = vsub.f32 %v6197, %v6245
        %v6278 = vsub.f32 %v6198, %v6246
        %v6279 = vsub.f32 %v6199, %v6247
        %v6280 = vsub.f32 %v6200, %v6248
        %v6281 = vsub.f32 %v6201, %v6249
        %v6282 = vsub.f32 %v6202, %v6250
        %v6283 = vsub.f32 %v6203, %v6251
        %v6284 = vsub.f32 %v6204, %v6252
        %v6285 = vsub.f32 %v6205, %v6253
        %v6286 = vsub.f32 %v6206, %v6254
        %v6287 = vsub.f32 %v6207, %v6255
        %v6288 = vsub.f32 %v6208, %v6256
        %v6289 = vsub.f32 %v6209, %v6257
        %v6290 = vsub.f32 %v6210, %v6258
        %v6291 = vsub.f32 %v6211, %v6259
        %v6292 = vsub.f32 %v6212, %v6260
        %v6293 = vpack.c.bf16 %v6262, %v6261
        %v6294 = vpack.c.bf16 %v6264, %v6263
        %v6295 = vpack.c.bf16 %v6266, %v6265
        %v6296 = vpack.c.bf16 %v6268, %v6267
        %v6297 = vpack.c.bf16 %v6270, %v6269
        %v6298 = vpack.c.bf16 %v6272, %v6271
        %v6299 = vpack.c.bf16 %v6274, %v6273
        %v6300 = vpack.c.bf16 %v6276, %v6275
        %v6301 = vpack.c.bf16 %v6278, %v6277
        %v6302 = vpack.c.bf16 %v6280, %v6279
        %v6303 = vpack.c.bf16 %v6282, %v6281
        %v6304 = vpack.c.bf16 %v6284, %v6283
        %v6305 = vpack.c.bf16 %v6286, %v6285
        %v6306 = vpack.c.bf16 %v6288, %v6287
        %v6307 = vpack.c.bf16 %v6290, %v6289
        %v6308 = vpack.c.bf16 %v6292, %v6291
        %v6309 = vld [vmem:[#allocation3 + $0x110] sm:$0xff]
        %v6310 = vld [vmem:[#allocation3 + $0x118] sm:$0xff]
        %v6311 = vpack.c.bf16 %v6310, %v6309
        %v6312 = vunpack.c.l.bf16 %v6311
        %v6313 = vunpack.c.h.bf16 %v6311
        %v6314 = vsub.f32 %v6309, %v6312
        %v6315 = vsub.f32 %v6310, %v6313
        %v6316 = vpack.c.bf16 %v6315, %v6314
        %v6317 = vld [vmem:[#allocation3 + $0x111] sm:$0xff]
        %v6318 = vld [vmem:[#allocation3 + $0x119] sm:$0xff]
        %v6319 = vsel %vm1333, %v6021, 0.0
        %v6320 = vsel %vm1334, %v6022, 0.0
        %v6321 = vsel %vm1335, %v6023, 0.0
        %v6322 = vsel %vm1336, %v6024, 0.0
        %v6323 = vsel %vm1337, %v6025, 0.0
        %v6324 = vsel %vm1338, %v6026, 0.0
        %v6325 = vsel %vm1339, %v6027, 0.0
        %v6326 = vsel %vm1340, %v6028, 0.0
        %v6327 = vsel %vm1341, %v6029, 0.0
        %v6328 = vsel %vm1342, %v6030, 0.0
        %v6329 = vsel %vm1343, %v6031, 0.0
        %v6330 = vsel %vm1344, %v6032, 0.0
        %v6331 = vsel %vm1345, %v6033, 0.0
        %v6332 = vsel %vm1346, %v6034, 0.0
        %v6333 = vsel %vm1347, %v6035, 0.0
        %v6334 = vsel %vm1348, %v6036, 0.0
        %v6335 = vsel %vm1349, %v6037, 0.0
        %v6336 = vsel %vm1350, %v6038, 0.0
        %v6337 = vsel %vm1351, %v6039, 0.0
        %v6338 = vsel %vm1352, %v6040, 0.0
        %v6339 = vsel %vm1353, %v6041, 0.0
        %v6340 = vsel %vm1354, %v6042, 0.0
        %v6341 = vsel %vm1355, %v6043, 0.0
        %v6342 = vsel %vm1356, %v6044, 0.0
        %v6343 = vsel %vm1357, %v6045, 0.0
        %v6344 = vsel %vm1358, %v6046, 0.0
        %v6345 = vsel %vm1359, %v6047, 0.0
        %v6346 = vsel %vm1360, %v6048, 0.0
        %v6347 = vsel %vm1361, %v6049, 0.0
        %v6348 = vsel %vm1362, %v6050, 0.0
        %v6349 = vsel %vm1363, %v6317, 0.0
        %v6350 = vsel %vm1364, %v6318, 0.0
        %v6351 = vpack.c.bf16 %v6320, %v6319
        %v6352 = vpack.c.bf16 %v6322, %v6321
        %v6353 = vpack.c.bf16 %v6324, %v6323
        %v6354 = vpack.c.bf16 %v6326, %v6325
        %v6355 = vpack.c.bf16 %v6328, %v6327
        %v6356 = vpack.c.bf16 %v6330, %v6329
        %v6357 = vpack.c.bf16 %v6332, %v6331
        %v6358 = vpack.c.bf16 %v6334, %v6333
        %v6359 = vpack.c.bf16 %v6336, %v6335
        %v6360 = vpack.c.bf16 %v6338, %v6337
        %v6361 = vpack.c.bf16 %v6340, %v6339
        %v6362 = vpack.c.bf16 %v6342, %v6341
        %v6363 = vpack.c.bf16 %v6344, %v6343
        %v6364 = vpack.c.bf16 %v6346, %v6345
        %v6365 = vpack.c.bf16 %v6348, %v6347
        %v6366 = vpack.c.bf16 %v6350, %v6349
        %v6367 = vunpack.c.l.bf16 %v6351
        %v6368 = vunpack.c.h.bf16 %v6351
        %v6369 = vunpack.c.l.bf16 %v6352
        %v6370 = vunpack.c.h.bf16 %v6352
        %v6371 = vunpack.c.l.bf16 %v6353
        %v6372 = vunpack.c.h.bf16 %v6353
        %v6373 = vunpack.c.l.bf16 %v6354
        %v6374 = vunpack.c.h.bf16 %v6354
        %v6375 = vunpack.c.l.bf16 %v6355
        %v6376 = vunpack.c.h.bf16 %v6355
        %v6377 = vunpack.c.l.bf16 %v6356
        %v6378 = vunpack.c.h.bf16 %v6356
        %v6379 = vunpack.c.l.bf16 %v6357
        %v6380 = vunpack.c.h.bf16 %v6357
        %v6381 = vunpack.c.l.bf16 %v6358
        %v6382 = vunpack.c.h.bf16 %v6358
        %v6383 = vunpack.c.l.bf16 %v6359
        %v6384 = vunpack.c.h.bf16 %v6359
        %v6385 = vunpack.c.l.bf16 %v6360
        %v6386 = vunpack.c.h.bf16 %v6360
        %v6387 = vunpack.c.l.bf16 %v6361
        %v6388 = vunpack.c.h.bf16 %v6361
        %v6389 = vunpack.c.l.bf16 %v6362
        %v6390 = vunpack.c.h.bf16 %v6362
        %v6391 = vunpack.c.l.bf16 %v6363
        %v6392 = vunpack.c.h.bf16 %v6363
        %v6393 = vunpack.c.l.bf16 %v6364
        %v6394 = vunpack.c.h.bf16 %v6364
        %v6395 = vunpack.c.l.bf16 %v6365
        %v6396 = vunpack.c.h.bf16 %v6365
        %v6397 = vunpack.c.l.bf16 %v6366
        %v6398 = vunpack.c.h.bf16 %v6366
        %v6399 = vsub.f32 %v6319, %v6367
        %v6400 = vsub.f32 %v6320, %v6368
        %v6401 = vsub.f32 %v6321, %v6369
        %v6402 = vsub.f32 %v6322, %v6370
        %v6403 = vsub.f32 %v6323, %v6371
        %v6404 = vsub.f32 %v6324, %v6372
        %v6405 = vsub.f32 %v6325, %v6373
        %v6406 = vsub.f32 %v6326, %v6374
        %v6407 = vsub.f32 %v6327, %v6375
        %v6408 = vsub.f32 %v6328, %v6376
        %v6409 = vsub.f32 %v6329, %v6377
        %v6410 = vsub.f32 %v6330, %v6378
        %v6411 = vsub.f32 %v6331, %v6379
        %v6412 = vsub.f32 %v6332, %v6380
        %v6413 = vsub.f32 %v6333, %v6381
        %v6414 = vsub.f32 %v6334, %v6382
        %v6415 = vsub.f32 %v6335, %v6383
        %v6416 = vsub.f32 %v6336, %v6384
        %v6417 = vsub.f32 %v6337, %v6385
        %v6418 = vsub.f32 %v6338, %v6386
        %v6419 = vsub.f32 %v6339, %v6387
        %v6420 = vsub.f32 %v6340, %v6388
        %v6421 = vsub.f32 %v6341, %v6389
        %v6422 = vsub.f32 %v6342, %v6390
        %v6423 = vsub.f32 %v6343, %v6391
        %v6424 = vsub.f32 %v6344, %v6392
        %v6425 = vsub.f32 %v6345, %v6393
        %v6426 = vsub.f32 %v6346, %v6394
        %v6427 = vsub.f32 %v6347, %v6395
        %v6428 = vsub.f32 %v6348, %v6396
        %v6429 = vsub.f32 %v6349, %v6397
        %v6430 = vsub.f32 %v6350, %v6398
        %v6431 = vpack.c.bf16 %v6400, %v6399
        %v6432 = vpack.c.bf16 %v6402, %v6401
        %v6433 = vpack.c.bf16 %v6404, %v6403
        %v6434 = vpack.c.bf16 %v6406, %v6405
        %v6435 = vpack.c.bf16 %v6408, %v6407
        %v6436 = vpack.c.bf16 %v6410, %v6409
        %v6437 = vpack.c.bf16 %v6412, %v6411
        %v6438 = vpack.c.bf16 %v6414, %v6413
        %v6439 = vpack.c.bf16 %v6416, %v6415
        %v6440 = vpack.c.bf16 %v6418, %v6417
        %v6441 = vpack.c.bf16 %v6420, %v6419
        %v6442 = vpack.c.bf16 %v6422, %v6421
        %v6443 = vpack.c.bf16 %v6424, %v6423
        %v6444 = vpack.c.bf16 %v6426, %v6425
        %v6445 = vpack.c.bf16 %v6428, %v6427
        %v6446 = vpack.c.bf16 %v6430, %v6429
        %v6447 = vld [vmem:[#allocation3 + $0x11f] sm:$0xff]
        %v6448 = vld [vmem:[#allocation3 + $0x127] sm:$0xff]
        %v6449 = vsel %vm981, %v5735, 0.0
        %v6450 = vsel %vm982, %v5736, 0.0
        %v6451 = vsel %vm983, %v5737, 0.0
        %v6452 = vsel %vm984, %v5738, 0.0
        %v6453 = vsel %vm985, %v5739, 0.0
        %v6454 = vsel %vm986, %v5740, 0.0
        %v6455 = vsel %vm987, %v5741, 0.0
        %v6456 = vsel %vm988, %v5742, 0.0
        %v6457 = vsel %vm989, %v5743, 0.0
        %v6458 = vsel %vm990, %v5744, 0.0
        %v6459 = vsel %vm991, %v5745, 0.0
        %v6460 = vsel %vm992, %v5746, 0.0
        %v6461 = vsel %vm993, %v5747, 0.0
        %v6462 = vsel %vm994, %v5748, 0.0
        %v6463 = vsel %vm995, %v5749, 0.0
        %v6464 = vsel %vm996, %v5750, 0.0
        %v6465 = vsel %vm997, %v5751, 0.0
        %v6466 = vsel %vm998, %v5752, 0.0
        %v6467 = vsel %vm999, %v5753, 0.0
        %v6468 = vsel %vm1000, %v5754, 0.0
        %v6469 = vsel %vm1001, %v5755, 0.0
        %v6470 = vsel %vm1002, %v5756, 0.0
        %v6471 = vsel %vm1003, %v5757, 0.0
        %v6472 = vsel %vm1004, %v5758, 0.0
        %v6473 = vsel %vm1005, %v5759, 0.0
        %v6474 = vsel %vm1006, %v5760, 0.0
        %v6475 = vsel %vm1007, %v5761, 0.0
        %v6476 = vsel %vm1008, %v5762, 0.0
        %v6477 = vsel %vm1009, %v6179, 0.0
        %v6478 = vsel %vm1010, %v6180, 0.0
        %v6479 = vsel %vm1011, %v6447, 0.0
        %v6480 = vsel %vm1012, %v6448, 0.0
        %v6481 = vpack.c.bf16 %v6450, %v6449
        %v6482 = vpack.c.bf16 %v6452, %v6451
        %v6483 = vpack.c.bf16 %v6454, %v6453
        %v6484 = vpack.c.bf16 %v6456, %v6455
        %v6485 = vpack.c.bf16 %v6458, %v6457
        %v6486 = vpack.c.bf16 %v6460, %v6459
        %v6487 = vpack.c.bf16 %v6462, %v6461
        %v6488 = vpack.c.bf16 %v6464, %v6463
        %v6489 = vpack.c.bf16 %v6466, %v6465
        %v6490 = vpack.c.bf16 %v6468, %v6467
        %v6491 = vpack.c.bf16 %v6470, %v6469
        %v6492 = vpack.c.bf16 %v6472, %v6471
        %v6493 = vpack.c.bf16 %v6474, %v6473
        %v6494 = vpack.c.bf16 %v6476, %v6475
        %v6495 = vpack.c.bf16 %v6478, %v6477
        %v6496 = vpack.c.bf16 %v6480, %v6479
        %v6497 = vunpack.c.l.bf16 %v6481
        %v6498 = vunpack.c.h.bf16 %v6481
        %v6499 = vunpack.c.l.bf16 %v6482
        %v6500 = vunpack.c.h.bf16 %v6482
        %v6501 = vunpack.c.l.bf16 %v6483
        %v6502 = vunpack.c.h.bf16 %v6483
        %v6503 = vunpack.c.l.bf16 %v6484
        %v6504 = vunpack.c.h.bf16 %v6484
        %v6505 = vunpack.c.l.bf16 %v6485
        %v6506 = vunpack.c.h.bf16 %v6485
        %v6507 = vunpack.c.l.bf16 %v6486
        %v6508 = vunpack.c.h.bf16 %v6486
        %v6509 = vunpack.c.l.bf16 %v6487
        %v6510 = vunpack.c.h.bf16 %v6487
        %v6511 = vunpack.c.l.bf16 %v6488
        %v6512 = vunpack.c.h.bf16 %v6488
        %v6513 = vunpack.c.l.bf16 %v6489
        %v6514 = vunpack.c.h.bf16 %v6489
        %v6515 = vunpack.c.l.bf16 %v6490
        %v6516 = vunpack.c.h.bf16 %v6490
        %v6517 = vunpack.c.l.bf16 %v6491
        %v6518 = vunpack.c.h.bf16 %v6491
        %v6519 = vunpack.c.l.bf16 %v6492
        %v6520 = vunpack.c.h.bf16 %v6492
        %v6521 = vunpack.c.l.bf16 %v6493
        %v6522 = vunpack.c.h.bf16 %v6493
        %v6523 = vunpack.c.l.bf16 %v6494
        %v6524 = vunpack.c.h.bf16 %v6494
        %v6525 = vunpack.c.l.bf16 %v6495
        %v6526 = vunpack.c.h.bf16 %v6495
        %v6527 = vunpack.c.l.bf16 %v6496
        %v6528 = vunpack.c.h.bf16 %v6496
        %v6529 = vsub.f32 %v6449, %v6497
        %v6530 = vsub.f32 %v6450, %v6498
        %v6531 = vsub.f32 %v6451, %v6499
        %v6532 = vsub.f32 %v6452, %v6500
        %v6533 = vsub.f32 %v6453, %v6501
        %v6534 = vsub.f32 %v6454, %v6502
        %v6535 = vsub.f32 %v6455, %v6503
        %v6536 = vsub.f32 %v6456, %v6504
        %v6537 = vsub.f32 %v6457, %v6505
        %v6538 = vsub.f32 %v6458, %v6506
        %v6539 = vsub.f32 %v6459, %v6507
        %v6540 = vsub.f32 %v6460, %v6508
        %v6541 = vsub.f32 %v6461, %v6509
        %v6542 = vsub.f32 %v6462, %v6510
        %v6543 = vsub.f32 %v6463, %v6511
        %v6544 = vsub.f32 %v6464, %v6512
        %v6545 = vsub.f32 %v6465, %v6513
        %v6546 = vsub.f32 %v6466, %v6514
        %v6547 = vsub.f32 %v6467, %v6515
        %v6548 = vsub.f32 %v6468, %v6516
        %v6549 = vsub.f32 %v6469, %v6517
        %v6550 = vsub.f32 %v6470, %v6518
        %v6551 = vsub.f32 %v6471, %v6519
        %v6552 = vsub.f32 %v6472, %v6520
        %v6553 = vsub.f32 %v6473, %v6521
        %v6554 = vsub.f32 %v6474, %v6522
        %v6555 = vsub.f32 %v6475, %v6523
        %v6556 = vsub.f32 %v6476, %v6524
        %v6557 = vsub.f32 %v6477, %v6525
        %v6558 = vsub.f32 %v6478, %v6526
        %v6559 = vsub.f32 %v6479, %v6527
        %v6560 = vsub.f32 %v6480, %v6528
        %v6561 = vpack.c.bf16 %v6530, %v6529
        %v6562 = vpack.c.bf16 %v6532, %v6531
        %v6563 = vpack.c.bf16 %v6534, %v6533
        %v6564 = vpack.c.bf16 %v6536, %v6535
        %v6565 = vpack.c.bf16 %v6538, %v6537
        %v6566 = vpack.c.bf16 %v6540, %v6539
        %v6567 = vpack.c.bf16 %v6542, %v6541
        %v6568 = vpack.c.bf16 %v6544, %v6543
        %v6569 = vpack.c.bf16 %v6546, %v6545
        %v6570 = vpack.c.bf16 %v6548, %v6547
        %v6571 = vpack.c.bf16 %v6550, %v6549
        %v6572 = vpack.c.bf16 %v6552, %v6551
        %v6573 = vpack.c.bf16 %v6554, %v6553
        %v6574 = vpack.c.bf16 %v6556, %v6555
        %v6575 = vpack.c.bf16 %v6558, %v6557
        %v6576 = vpack.c.bf16 %v6560, %v6559
        %v6577 = vld [vmem:[#allocation3 + $0x120] sm:$0xff]
        %v6578 = vld [vmem:[#allocation3 + $0x128] sm:$0xff]
        %v6579 = vpack.c.bf16 %v6578, %v6577
        %v6580 = vunpack.c.l.bf16 %v6579
        %v6581 = vunpack.c.h.bf16 %v6579
        %v6582 = vsub.f32 %v6577, %v6580
        %v6583 = vsub.f32 %v6578, %v6581
        %v6584 = vpack.c.bf16 %v6583, %v6582
        %v6585 = vld [vmem:[#allocation3 + $0x121] sm:$0xff]
        %v6586 = vld [vmem:[#allocation3 + $0x129] sm:$0xff]
        %v6587 = vsel %vm1333, %v6023, 0.0
        %v6588 = vsel %vm1334, %v6024, 0.0
        %v6589 = vsel %vm1335, %v6025, 0.0
        %v6590 = vsel %vm1336, %v6026, 0.0
        %v6591 = vsel %vm1337, %v6027, 0.0
        %v6592 = vsel %vm1338, %v6028, 0.0
        %v6593 = vsel %vm1339, %v6029, 0.0
        %v6594 = vsel %vm1340, %v6030, 0.0
        %v6595 = vsel %vm1341, %v6031, 0.0
        %v6596 = vsel %vm1342, %v6032, 0.0
        %v6597 = vsel %vm1343, %v6033, 0.0
        %v6598 = vsel %vm1344, %v6034, 0.0
        %v6599 = vsel %vm1345, %v6035, 0.0
        %v6600 = vsel %vm1346, %v6036, 0.0
        %v6601 = vsel %vm1347, %v6037, 0.0
        %v6602 = vsel %vm1348, %v6038, 0.0
        %v6603 = vsel %vm1349, %v6039, 0.0
        %v6604 = vsel %vm1350, %v6040, 0.0
        %v6605 = vsel %vm1351, %v6041, 0.0
        %v6606 = vsel %vm1352, %v6042, 0.0
        %v6607 = vsel %vm1353, %v6043, 0.0
        %v6608 = vsel %vm1354, %v6044, 0.0
        %v6609 = vsel %vm1355, %v6045, 0.0
        %v6610 = vsel %vm1356, %v6046, 0.0
        %v6611 = vsel %vm1357, %v6047, 0.0
        %v6612 = vsel %vm1358, %v6048, 0.0
        %v6613 = vsel %vm1359, %v6049, 0.0
        %v6614 = vsel %vm1360, %v6050, 0.0
        %v6615 = vsel %vm1361, %v6317, 0.0
        %v6616 = vsel %vm1362, %v6318, 0.0
        %v6617 = vsel %vm1363, %v6585, 0.0
        %v6618 = vsel %vm1364, %v6586, 0.0
        %v6619 = vpack.c.bf16 %v6588, %v6587
        %v6620 = vpack.c.bf16 %v6590, %v6589
        %v6621 = vpack.c.bf16 %v6592, %v6591
        %v6622 = vpack.c.bf16 %v6594, %v6593
        %v6623 = vpack.c.bf16 %v6596, %v6595
        %v6624 = vpack.c.bf16 %v6598, %v6597
        %v6625 = vpack.c.bf16 %v6600, %v6599
        %v6626 = vpack.c.bf16 %v6602, %v6601
        %v6627 = vpack.c.bf16 %v6604, %v6603
        %v6628 = vpack.c.bf16 %v6606, %v6605
        %v6629 = vpack.c.bf16 %v6608, %v6607
        %v6630 = vpack.c.bf16 %v6610, %v6609
        %v6631 = vpack.c.bf16 %v6612, %v6611
        %v6632 = vpack.c.bf16 %v6614, %v6613
        %v6633 = vpack.c.bf16 %v6616, %v6615
        %v6634 = vpack.c.bf16 %v6618, %v6617
        %v6635 = vunpack.c.l.bf16 %v6619
        %v6636 = vunpack.c.h.bf16 %v6619
        %v6637 = vunpack.c.l.bf16 %v6620
        %v6638 = vunpack.c.h.bf16 %v6620
        %v6639 = vunpack.c.l.bf16 %v6621
        %v6640 = vunpack.c.h.bf16 %v6621
        %v6641 = vunpack.c.l.bf16 %v6622
        %v6642 = vunpack.c.h.bf16 %v6622
        %v6643 = vunpack.c.l.bf16 %v6623
        %v6644 = vunpack.c.h.bf16 %v6623
        %v6645 = vunpack.c.l.bf16 %v6624
        %v6646 = vunpack.c.h.bf16 %v6624
        %v6647 = vunpack.c.l.bf16 %v6625
        %v6648 = vunpack.c.h.bf16 %v6625
        %v6649 = vunpack.c.l.bf16 %v6626
        %v6650 = vunpack.c.h.bf16 %v6626
        %v6651 = vunpack.c.l.bf16 %v6627
        %v6652 = vunpack.c.h.bf16 %v6627
        %v6653 = vunpack.c.l.bf16 %v6628
        %v6654 = vunpack.c.h.bf16 %v6628
        %v6655 = vunpack.c.l.bf16 %v6629
        %v6656 = vunpack.c.h.bf16 %v6629
        %v6657 = vunpack.c.l.bf16 %v6630
        %v6658 = vunpack.c.h.bf16 %v6630
        %v6659 = vunpack.c.l.bf16 %v6631
        %v6660 = vunpack.c.h.bf16 %v6631
        %v6661 = vunpack.c.l.bf16 %v6632
        %v6662 = vunpack.c.h.bf16 %v6632
        %v6663 = vunpack.c.l.bf16 %v6633
        %v6664 = vunpack.c.h.bf16 %v6633
        %v6665 = vunpack.c.l.bf16 %v6634
        %v6666 = vunpack.c.h.bf16 %v6634
        %v6667 = vsub.f32 %v6587, %v6635
        %v6668 = vsub.f32 %v6588, %v6636
        %v6669 = vsub.f32 %v6589, %v6637
        %v6670 = vsub.f32 %v6590, %v6638
        %v6671 = vsub.f32 %v6591, %v6639
        %v6672 = vsub.f32 %v6592, %v6640
        %v6673 = vsub.f32 %v6593, %v6641
        %v6674 = vsub.f32 %v6594, %v6642
        %v6675 = vsub.f32 %v6595, %v6643
        %v6676 = vsub.f32 %v6596, %v6644
        %v6677 = vsub.f32 %v6597, %v6645
        %v6678 = vsub.f32 %v6598, %v6646
        %v6679 = vsub.f32 %v6599, %v6647
        %v6680 = vsub.f32 %v6600, %v6648
        %v6681 = vsub.f32 %v6601, %v6649
        %v6682 = vsub.f32 %v6602, %v6650
        %v6683 = vsub.f32 %v6603, %v6651
        %v6684 = vsub.f32 %v6604, %v6652
        %v6685 = vsub.f32 %v6605, %v6653
        %v6686 = vsub.f32 %v6606, %v6654
        %v6687 = vsub.f32 %v6607, %v6655
        %v6688 = vsub.f32 %v6608, %v6656
        %v6689 = vsub.f32 %v6609, %v6657
        %v6690 = vsub.f32 %v6610, %v6658
        %v6691 = vsub.f32 %v6611, %v6659
        %v6692 = vsub.f32 %v6612, %v6660
        %v6693 = vsub.f32 %v6613, %v6661
        %v6694 = vsub.f32 %v6614, %v6662
        %v6695 = vsub.f32 %v6615, %v6663
        %v6696 = vsub.f32 %v6616, %v6664
        %v6697 = vsub.f32 %v6617, %v6665
        %v6698 = vsub.f32 %v6618, %v6666
        %v6699 = vpack.c.bf16 %v6668, %v6667
        %v6700 = vpack.c.bf16 %v6670, %v6669
        %v6701 = vpack.c.bf16 %v6672, %v6671
        %v6702 = vpack.c.bf16 %v6674, %v6673
        %v6703 = vpack.c.bf16 %v6676, %v6675
        %v6704 = vpack.c.bf16 %v6678, %v6677
        %v6705 = vpack.c.bf16 %v6680, %v6679
        %v6706 = vpack.c.bf16 %v6682, %v6681
        %v6707 = vpack.c.bf16 %v6684, %v6683
        %v6708 = vpack.c.bf16 %v6686, %v6685
        %v6709 = vpack.c.bf16 %v6688, %v6687
        %v6710 = vpack.c.bf16 %v6690, %v6689
        %v6711 = vpack.c.bf16 %v6692, %v6691
        %v6712 = vpack.c.bf16 %v6694, %v6693
        %v6713 = vpack.c.bf16 %v6696, %v6695
        %v6714 = vpack.c.bf16 %v6698, %v6697
        %v6715 = vld [vmem:[#allocation10] sm:$0xf]
        %v6716 = vld [vmem:[#allocation10 + $0x4] sm:$0xf]
        %v6717 = vld [vmem:[#allocation10 + $0x8] sm:$0xf]
        %v6718 = vld [vmem:[#allocation10 + $0xc] sm:$0xf]
        %v6719 = vld [vmem:[#allocation10 + $0x10] sm:$0xf]
        %v6720 = vld [vmem:[#allocation10 + $0x14] sm:$0xf]
        %v6721 = vld [vmem:[#allocation10 + $0x18] sm:$0xf]
        %v6722 = vld [vmem:[#allocation10 + $0x1c] sm:$0xf]
        %v6723 = vld [vmem:[#allocation10 + $0x20] sm:$0xf]
        %v6724 = vld [vmem:[#allocation10 + $0x24] sm:$0xf]
        %v6725 = vld [vmem:[#allocation10 + $0x28] sm:$0xf]
        %v6726 = vld [vmem:[#allocation10 + $0x2c] sm:$0xf]
        %v6727 = vld [vmem:[#allocation10 + $0x30] sm:$0xf]
        %v6728 = vld [vmem:[#allocation10 + $0x34] sm:$0xf]
        %v6729 = vld [vmem:[#allocation10 + $0x38] sm:$0xf]
        %v6730 = vld [vmem:[#allocation10 + $0x3c] sm:$0xf]
        %v6731 = vld [vmem:[#allocation10 + $0x40] sm:$0xf]
        %v6732 = vld [vmem:[#allocation10 + $0x44] sm:$0xf]
        %v6733 = vld [vmem:[#allocation10 + $0x48] sm:$0xf]
        %v6734 = vld [vmem:[#allocation10 + $0x4c] sm:$0xf]
        %v6735 = vld [vmem:[#allocation10 + $0x50] sm:$0xf]
        %v6736 = vld [vmem:[#allocation10 + $0x54] sm:$0xf]
        %v6737 = vld [vmem:[#allocation10 + $0x58] sm:$0xf]
        %v6738 = vld [vmem:[#allocation10 + $0x5c] sm:$0xf]
        %v6739 = vld [vmem:[#allocation10 + $0x60] sm:$0xf]
        %v6740 = vld [vmem:[#allocation10 + $0x64] sm:$0xf]
        %v6741 = vld [vmem:[#allocation10 + $0x68] sm:$0xf]
        %v6742 = vld [vmem:[#allocation10 + $0x6c] sm:$0xf]
        %v6743 = vld [vmem:[#allocation10 + $0x70] sm:$0xf]
        %v6744 = vld [vmem:[#allocation10 + $0x74] sm:$0xf]
        %v6745 = vld [vmem:[#allocation10 + $0x78] sm:$0xf]
        %v6746 = vld [vmem:[#allocation10 + $0x7c] sm:$0xf]
        %v6747 = vld [vmem:[#allocation10 + $0x80] sm:$0xf]
        %v6748 = vld [vmem:[#allocation10 + $0x84] sm:$0xf]
        %v6749 = vld [vmem:[#allocation10 + $0x88] sm:$0xf]
        %v6750 = vld [vmem:[#allocation10 + $0x8c] sm:$0xf]
        %v6751 = vld [vmem:[#allocation10 + $0x90] sm:$0xf]
        %v6752 = vld [vmem:[#allocation10 + $0x94] sm:$0xf]
        %v6753 = vld [vmem:[#allocation10 + $0x98] sm:$0xf]
        %v6754 = vld [vmem:[#allocation10 + $0x9c] sm:$0xf]
        %v6755 = vld [vmem:[#allocation10 + $0xa0] sm:$0xf]
        %v6756 = vld [vmem:[#allocation10 + $0xa4] sm:$0xf]
        %v6757 = vld [vmem:[#allocation10 + $0xa8] sm:$0xf]
        %v6758 = vld [vmem:[#allocation10 + $0xac] sm:$0xf]
        %v6759 = vld [vmem:[#allocation10 + $0xb0] sm:$0xf]
        %v6760 = vld [vmem:[#allocation10 + $0xb4] sm:$0xf]
        %v6761 = vld [vmem:[#allocation10 + $0xb8] sm:$0xf]
        %v6762 = vld [vmem:[#allocation10 + $0xbc] sm:$0xf]
        %v6763 = vld [vmem:[#allocation10 + $0xc0] sm:$0xf]
        %v6764 = vld [vmem:[#allocation10 + $0xc4] sm:$0xf]
        %v6765 = vld [vmem:[#allocation10 + $0xc8] sm:$0xf]
        %v6766 = vld [vmem:[#allocation10 + $0xcc] sm:$0xf]
        %v6767 = vld [vmem:[#allocation10 + $0xd0] sm:$0xf]
        %v6768 = vld [vmem:[#allocation10 + $0xd4] sm:$0xf]
        %v6769 = vld [vmem:[#allocation10 + $0xd8] sm:$0xf]
        %v6770 = vld [vmem:[#allocation10 + $0xdc] sm:$0xf]
        %v6771 = vld [vmem:[#allocation10 + $0xe0] sm:$0xf]
        %v6772 = vld [vmem:[#allocation10 + $0xe4] sm:$0xf]
        %v6773 = vld [vmem:[#allocation10 + $0xe8] sm:$0xf]
        %v6774 = vld [vmem:[#allocation10 + $0xec] sm:$0xf]
        %v6775 = vld [vmem:[#allocation10 + $0xf0] sm:$0xf]
        %v6776 = vld [vmem:[#allocation10 + $0xf4] sm:$0xf]
        %v6777 = vld [vmem:[#allocation10 + $0xf8] sm:$0xf]
        %v6778 = vld [vmem:[#allocation10 + $0xfc] sm:$0xf]
        %v6779 = vld [vmem:[#allocation10 + $0x100] sm:$0xf]
        %v6780 = vld [vmem:[#allocation10 + $0x104] sm:$0xf]
        %v6781 = vld [vmem:[#allocation10 + $0x108] sm:$0xf]
        %v6782 = vld [vmem:[#allocation10 + $0x10c] sm:$0xf]
        %v6783 = vld [vmem:[#allocation10 + $0x110] sm:$0xf]
        %v6784 = vld [vmem:[#allocation10 + $0x114] sm:$0xf]
        %v6785 = vld [vmem:[#allocation10 + $0x118] sm:$0xf]
        %v6786 = vld [vmem:[#allocation10 + $0x11c] sm:$0xf]
        %v6787 = vld [vmem:[#allocation10 + $0x120] sm:$0xf]
        %v6788 = vld [vmem:[#allocation10 + $0x124] sm:$0xf]
        %v6789 = vld [vmem:[#allocation10 + $0x128] sm:$0xf]
        %v6790 = vld [vmem:[#allocation10 + $0x12c] sm:$0xf]
        %v6791 = vld [vmem:[#allocation10 + $0x130] sm:$0xf]
        %v6792 = vld [vmem:[#allocation10 + $0x134] sm:$0xf]
        %v6793 = vld [vmem:[#allocation10 + $0x138] sm:$0xf]
        %v6794 = vld [vmem:[#allocation10 + $0x13c] sm:$0xf]
        %v6795 = vld [vmem:[#allocation10 + $0x140] sm:$0xf]
        %v6796 = vld [vmem:[#allocation10 + $0x144] sm:$0xf]
        %v6797 = vld [vmem:[#allocation10 + $0x148] sm:$0xf]
        %v6798 = vld [vmem:[#allocation10 + $0x14c] sm:$0xf]
        %v6799 = vld [vmem:[#allocation10 + $0x150] sm:$0xf]
        %v6800 = vld [vmem:[#allocation10 + $0x154] sm:$0xf]
        %v6801 = vld [vmem:[#allocation10 + $0x158] sm:$0xf]
        %v6802 = vld [vmem:[#allocation10 + $0x15c] sm:$0xf]
        %v6803 = vld [vmem:[#allocation10 + $0x160] sm:$0xf]
        %v6804 = vld [vmem:[#allocation10 + $0x164] sm:$0xf]
        %v6805 = vld [vmem:[#allocation10 + $0x168] sm:$0xf]
        %v6806 = vld [vmem:[#allocation10 + $0x16c] sm:$0xf]
        %v6807 = vld [vmem:[#allocation10 + $0x170] sm:$0xf]
        %v6808 = vld [vmem:[#allocation10 + $0x174] sm:$0xf]
        %v6809 = vld [vmem:[#allocation10 + $0x178] sm:$0xf]
        %v6810 = vld [vmem:[#allocation10 + $0x17c] sm:$0xf]
        %v6811 = vld [vmem:[#allocation10 + $0x180] sm:$0xf]
        %v6812 = vld [vmem:[#allocation10 + $0x184] sm:$0xf]
        %v6813 = vld [vmem:[#allocation10 + $0x188] sm:$0xf]
        %v6814 = vld [vmem:[#allocation10 + $0x18c] sm:$0xf]
        %v6815 = vld [vmem:[#allocation10 + $0x190] sm:$0xf]
        %v6816 = vld [vmem:[#allocation10 + $0x194] sm:$0xf]
        %v6817 = vld [vmem:[#allocation10 + $0x198] sm:$0xf]
        %v6818 = vld [vmem:[#allocation10 + $0x19c] sm:$0xf]
        %v6819 = vld [vmem:[#allocation10 + $0x1a0] sm:$0xf]
        %v6820 = vld [vmem:[#allocation10 + $0x1a4] sm:$0xf]
        %v6821 = vld [vmem:[#allocation10 + $0x1a8] sm:$0xf]
        %v6822 = vld [vmem:[#allocation10 + $0x1ac] sm:$0xf]
        %v6823 = vld [vmem:[#allocation10 + $0x1b0] sm:$0xf]
        %v6824 = vld [vmem:[#allocation10 + $0x1b4] sm:$0xf]
        %v6825 = vld [vmem:[#allocation10 + $0x1b8] sm:$0xf]
        %v6826 = vld [vmem:[#allocation10 + $0x1bc] sm:$0xf]
        %v6827 = vld [vmem:[#allocation10 + $0x1c0] sm:$0xf]
        %v6828 = vld [vmem:[#allocation10 + $0x1c4] sm:$0xf]
        %v6829 = vld [vmem:[#allocation10 + $0x1c8] sm:$0xf]
        %v6830 = vld [vmem:[#allocation10 + $0x1cc] sm:$0xf]
        %v6831 = vld [vmem:[#allocation10 + $0x1d0] sm:$0xf]
        %v6832 = vld [vmem:[#allocation10 + $0x1d4] sm:$0xf]
        %v6833 = vld [vmem:[#allocation10 + $0x1d8] sm:$0xf]
        %v6834 = vld [vmem:[#allocation10 + $0x1dc] sm:$0xf]
        %v6835 = vld [vmem:[#allocation10 + $0x1e0] sm:$0xf]
        %v6836 = vld [vmem:[#allocation10 + $0x1e4] sm:$0xf]
        %v6837 = vld [vmem:[#allocation10 + $0x1e8] sm:$0xf]
        %v6838 = vld [vmem:[#allocation10 + $0x1ec] sm:$0xf]
        %v6839 = vld [vmem:[#allocation10 + $0x1f0] sm:$0xf]
        %v6840 = vld [vmem:[#allocation10 + $0x1f4] sm:$0xf]
        %v6841 = vld [vmem:[#allocation10 + $0x1f8] sm:$0xf]
        %v6842 = vld [vmem:[#allocation10 + $0x1fc] sm:$0xf]
        %v6843 = vld [vmem:[#allocation10 + $0x200] sm:$0xf]
        %v6844 = vld [vmem:[#allocation10 + $0x204] sm:$0xf]
        %v6845 = vld [vmem:[#allocation10 + $0x208] sm:$0xf]
        %v6846 = vld [vmem:[#allocation10 + $0x20c] sm:$0xf]
        %v6847 = vld [vmem:[#allocation10 + $0x210] sm:$0xf]
        %v6848 = vld [vmem:[#allocation10 + $0x214] sm:$0xf]
        %v6849 = vld [vmem:[#allocation10 + $0x218] sm:$0xf]
        %v6850 = vld [vmem:[#allocation10 + $0x21c] sm:$0xf]
        %v6851 = vld [vmem:[#allocation10 + $0x220] sm:$0xf]
        %v6852 = vld [vmem:[#allocation10 + $0x224] sm:$0xf]
        %v6853 = vld [vmem:[#allocation10 + $0x228] sm:$0xf]
        %v6854 = vld [vmem:[#allocation10 + $0x22c] sm:$0xf]
        %v6855 = vld [vmem:[#allocation10 + $0x230] sm:$0xf]
        %v6856 = vld [vmem:[#allocation10 + $0x234] sm:$0xf]
        %v6857 = vld [vmem:[#allocation10 + $0x238] sm:$0xf]
        %v6858 = vld [vmem:[#allocation10 + $0x23c] sm:$0xf]
        %v6859 = vld [vmem:[#allocation12] sm:$0xf]
        %v6860 = vld [vmem:[#allocation12 + $0x4] sm:$0xf]
        %v6861 = vld [vmem:[#allocation12 + $0x8] sm:$0xf]
        %v6862 = vld [vmem:[#allocation12 + $0xc] sm:$0xf]
        %v6863 = vld [vmem:[#allocation12 + $0x10] sm:$0xf]
        %v6864 = vld [vmem:[#allocation12 + $0x14] sm:$0xf]
        %v6865 = vld [vmem:[#allocation12 + $0x18] sm:$0xf]
        %v6866 = vld [vmem:[#allocation12 + $0x1c] sm:$0xf]
        %v6867 = vld [vmem:[#allocation12 + $0x20] sm:$0xf]
        %v6868 = vld [vmem:[#allocation12 + $0x24] sm:$0xf]
        %v6869 = vld [vmem:[#allocation12 + $0x28] sm:$0xf]
        %v6870 = vld [vmem:[#allocation12 + $0x2c] sm:$0xf]
        %v6871 = vld [vmem:[#allocation12 + $0x30] sm:$0xf]
        %v6872 = vld [vmem:[#allocation12 + $0x34] sm:$0xf]
        %v6873 = vld [vmem:[#allocation12 + $0x38] sm:$0xf]
        %v6874 = vld [vmem:[#allocation12 + $0x3c] sm:$0xf]
        %v6875 = vld [vmem:[#allocation12 + $0x40] sm:$0xf]
        %v6876 = vld [vmem:[#allocation12 + $0x44] sm:$0xf]
        %v6877 = vld [vmem:[#allocation12 + $0x48] sm:$0xf]
        %v6878 = vld [vmem:[#allocation12 + $0x4c] sm:$0xf]
        %v6879 = vld [vmem:[#allocation12 + $0x50] sm:$0xf]
        %v6880 = vld [vmem:[#allocation12 + $0x54] sm:$0xf]
        %v6881 = vld [vmem:[#allocation12 + $0x58] sm:$0xf]
        %v6882 = vld [vmem:[#allocation12 + $0x5c] sm:$0xf]
        %v6883 = vld [vmem:[#allocation12 + $0x60] sm:$0xf]
        %v6884 = vld [vmem:[#allocation12 + $0x64] sm:$0xf]
        %v6885 = vld [vmem:[#allocation12 + $0x68] sm:$0xf]
        %v6886 = vld [vmem:[#allocation12 + $0x6c] sm:$0xf]
        %v6887 = vld [vmem:[#allocation12 + $0x70] sm:$0xf]
        %v6888 = vld [vmem:[#allocation12 + $0x74] sm:$0xf]
        %v6889 = vld [vmem:[#allocation12 + $0x78] sm:$0xf]
        %v6890 = vld [vmem:[#allocation12 + $0x7c] sm:$0xf]
        %v6891 = vld [vmem:[#allocation12 + $0x80] sm:$0xf]
        %v6892 = vld [vmem:[#allocation12 + $0x84] sm:$0xf]
        %v6893 = vld [vmem:[#allocation12 + $0x88] sm:$0xf]
        %v6894 = vld [vmem:[#allocation12 + $0x8c] sm:$0xf]
        %v6895 = vld [vmem:[#allocation12 + $0x90] sm:$0xf]
        %v6896 = vld [vmem:[#allocation12 + $0x94] sm:$0xf]
        %v6897 = vld [vmem:[#allocation12 + $0x98] sm:$0xf]
        %v6898 = vld [vmem:[#allocation12 + $0x9c] sm:$0xf]
        %v6899 = vld [vmem:[#allocation12 + $0xa0] sm:$0xf]
        %v6900 = vld [vmem:[#allocation12 + $0xa4] sm:$0xf]
        %v6901 = vld [vmem:[#allocation12 + $0xa8] sm:$0xf]
        %v6902 = vld [vmem:[#allocation12 + $0xac] sm:$0xf]
        %v6903 = vld [vmem:[#allocation12 + $0xb0] sm:$0xf]
        %v6904 = vld [vmem:[#allocation12 + $0xb4] sm:$0xf]
        %v6905 = vld [vmem:[#allocation12 + $0xb8] sm:$0xf]
        %v6906 = vld [vmem:[#allocation12 + $0xbc] sm:$0xf]
        %v6907 = vld [vmem:[#allocation12 + $0xc0] sm:$0xf]
        %v6908 = vld [vmem:[#allocation12 + $0xc4] sm:$0xf]
        %v6909 = vld [vmem:[#allocation12 + $0xc8] sm:$0xf]
        %v6910 = vld [vmem:[#allocation12 + $0xcc] sm:$0xf]
        %v6911 = vld [vmem:[#allocation12 + $0xd0] sm:$0xf]
        %v6912 = vld [vmem:[#allocation12 + $0xd4] sm:$0xf]
        %v6913 = vld [vmem:[#allocation12 + $0xd8] sm:$0xf]
        %v6914 = vld [vmem:[#allocation12 + $0xdc] sm:$0xf]
        %v6915 = vld [vmem:[#allocation12 + $0xe0] sm:$0xf]
        %v6916 = vld [vmem:[#allocation12 + $0xe4] sm:$0xf]
        %v6917 = vld [vmem:[#allocation12 + $0xe8] sm:$0xf]
        %v6918 = vld [vmem:[#allocation12 + $0xec] sm:$0xf]
        %v6919 = vld [vmem:[#allocation12 + $0xf0] sm:$0xf]
        %v6920 = vld [vmem:[#allocation12 + $0xf4] sm:$0xf]
        %v6921 = vld [vmem:[#allocation12 + $0xf8] sm:$0xf]
        %v6922 = vld [vmem:[#allocation12 + $0xfc] sm:$0xf]
        %v6923 = vld [vmem:[#allocation12 + $0x100] sm:$0xf]
        %v6924 = vld [vmem:[#allocation12 + $0x104] sm:$0xf]
        %v6925 = vld [vmem:[#allocation12 + $0x108] sm:$0xf]
        %v6926 = vld [vmem:[#allocation12 + $0x10c] sm:$0xf]
        %v6927 = vld [vmem:[#allocation12 + $0x110] sm:$0xf]
        %v6928 = vld [vmem:[#allocation12 + $0x114] sm:$0xf]
        %v6929 = vld [vmem:[#allocation12 + $0x118] sm:$0xf]
        %v6930 = vld [vmem:[#allocation12 + $0x11c] sm:$0xf]
        %v6931 = vld [vmem:[#allocation12 + $0x120] sm:$0xf]
        %v6932 = vld [vmem:[#allocation12 + $0x124] sm:$0xf]
        %v6933 = vld [vmem:[#allocation12 + $0x128] sm:$0xf]
        %v6934 = vld [vmem:[#allocation12 + $0x12c] sm:$0xf]
        %v6935 = vld [vmem:[#allocation12 + $0x130] sm:$0xf]
        %v6936 = vld [vmem:[#allocation12 + $0x134] sm:$0xf]
        %v6937 = vld [vmem:[#allocation12 + $0x138] sm:$0xf]
        %v6938 = vld [vmem:[#allocation12 + $0x13c] sm:$0xf]
        %v6939 = vld [vmem:[#allocation12 + $0x140] sm:$0xf]
        %v6940 = vld [vmem:[#allocation12 + $0x144] sm:$0xf]
        %v6941 = vld [vmem:[#allocation12 + $0x148] sm:$0xf]
        %v6942 = vld [vmem:[#allocation12 + $0x14c] sm:$0xf]
        %v6943 = vld [vmem:[#allocation12 + $0x150] sm:$0xf]
        %v6944 = vld [vmem:[#allocation12 + $0x154] sm:$0xf]
        %v6945 = vld [vmem:[#allocation12 + $0x158] sm:$0xf]
        %v6946 = vld [vmem:[#allocation12 + $0x15c] sm:$0xf]
        %v6947 = vld [vmem:[#allocation12 + $0x160] sm:$0xf]
        %v6948 = vld [vmem:[#allocation12 + $0x164] sm:$0xf]
        %v6949 = vld [vmem:[#allocation12 + $0x168] sm:$0xf]
        %v6950 = vld [vmem:[#allocation12 + $0x16c] sm:$0xf]
        %v6951 = vld [vmem:[#allocation12 + $0x170] sm:$0xf]
        %v6952 = vld [vmem:[#allocation12 + $0x174] sm:$0xf]
        %v6953 = vld [vmem:[#allocation12 + $0x178] sm:$0xf]
        %v6954 = vld [vmem:[#allocation12 + $0x17c] sm:$0xf]
        %v6955 = vld [vmem:[#allocation12 + $0x180] sm:$0xf]
        %v6956 = vld [vmem:[#allocation12 + $0x184] sm:$0xf]
        %v6957 = vld [vmem:[#allocation12 + $0x188] sm:$0xf]
        %v6958 = vld [vmem:[#allocation12 + $0x18c] sm:$0xf]
        %v6959 = vld [vmem:[#allocation12 + $0x190] sm:$0xf]
        %v6960 = vld [vmem:[#allocation12 + $0x194] sm:$0xf]
        %v6961 = vld [vmem:[#allocation12 + $0x198] sm:$0xf]
        %v6962 = vld [vmem:[#allocation12 + $0x19c] sm:$0xf]
        %v6963 = vld [vmem:[#allocation12 + $0x1a0] sm:$0xf]
        %v6964 = vld [vmem:[#allocation12 + $0x1a4] sm:$0xf]
        %v6965 = vld [vmem:[#allocation12 + $0x1a8] sm:$0xf]
        %v6966 = vld [vmem:[#allocation12 + $0x1ac] sm:$0xf]
        %v6967 = vld [vmem:[#allocation12 + $0x1b0] sm:$0xf]
        %v6968 = vld [vmem:[#allocation12 + $0x1b4] sm:$0xf]
        %v6969 = vld [vmem:[#allocation12 + $0x1b8] sm:$0xf]
        %v6970 = vld [vmem:[#allocation12 + $0x1bc] sm:$0xf]
        %v6971 = vld [vmem:[#allocation12 + $0x1c0] sm:$0xf]
        %v6972 = vld [vmem:[#allocation12 + $0x1c4] sm:$0xf]
        %v6973 = vld [vmem:[#allocation12 + $0x1c8] sm:$0xf]
        %v6974 = vld [vmem:[#allocation12 + $0x1cc] sm:$0xf]
        %v6975 = vld [vmem:[#allocation12 + $0x1d0] sm:$0xf]
        %v6976 = vld [vmem:[#allocation12 + $0x1d4] sm:$0xf]
        %v6977 = vld [vmem:[#allocation12 + $0x1d8] sm:$0xf]
        %v6978 = vld [vmem:[#allocation12 + $0x1dc] sm:$0xf]
        %v6979 = vld [vmem:[#allocation12 + $0x1e0] sm:$0xf]
        %v6980 = vld [vmem:[#allocation12 + $0x1e4] sm:$0xf]
        %v6981 = vld [vmem:[#allocation12 + $0x1e8] sm:$0xf]
        %v6982 = vld [vmem:[#allocation12 + $0x1ec] sm:$0xf]
        %v6983 = vld [vmem:[#allocation12 + $0x1f0] sm:$0xf]
        %v6984 = vld [vmem:[#allocation12 + $0x1f4] sm:$0xf]
        %v6985 = vld [vmem:[#allocation12 + $0x1f8] sm:$0xf]
        %v6986 = vld [vmem:[#allocation12 + $0x1fc] sm:$0xf]
        %v6987 = vld [vmem:[#allocation12 + $0x200] sm:$0xf]
        %v6988 = vld [vmem:[#allocation12 + $0x204] sm:$0xf]
        %v6989 = vld [vmem:[#allocation12 + $0x208] sm:$0xf]
        %v6990 = vld [vmem:[#allocation12 + $0x20c] sm:$0xf]
        %v6991 = vld [vmem:[#allocation12 + $0x210] sm:$0xf]
        %v6992 = vld [vmem:[#allocation12 + $0x214] sm:$0xf]
        %v6993 = vld [vmem:[#allocation12 + $0x218] sm:$0xf]
        %v6994 = vld [vmem:[#allocation12 + $0x21c] sm:$0xf]
        %v6995 = vld [vmem:[#allocation12 + $0x220] sm:$0xf]
        %v6996 = vld [vmem:[#allocation12 + $0x224] sm:$0xf]
        %v6997 = vld [vmem:[#allocation12 + $0x228] sm:$0xf]
        %v6998 = vld [vmem:[#allocation12 + $0x22c] sm:$0xf]
        %v6999 = vld [vmem:[#allocation12 + $0x230] sm:$0xf]
        %v7000 = vld [vmem:[#allocation12 + $0x234] sm:$0xf]
        %v7001 = vld [vmem:[#allocation12 + $0x238] sm:$0xf]
        %v7002 = vld [vmem:[#allocation12 + $0x23c] sm:$0xf]
        %v7147 = vunpack.c.l.b16 %v6715
        %v7148 = vunpack.c.l.b16 %v6716
        %v7149 = vunpack.c.l.b16 %v6717
        %v7150 = vunpack.c.l.b16 %v6718
        %v7151 = vunpack.c.l.b16 %v6719
        %v7152 = vunpack.c.l.b16 %v6720
        %v7153 = vunpack.c.l.b16 %v6721
        %v7154 = vunpack.c.l.b16 %v6722
        %v7155 = vunpack.c.l.b16 %v6723
        %v7156 = vunpack.c.l.b16 %v6724
        %v7157 = vunpack.c.l.b16 %v6725
        %v7158 = vunpack.c.l.b16 %v6726
        %v7159 = vunpack.c.l.b16 %v6727
        %v7160 = vunpack.c.l.b16 %v6728
        %v7161 = vunpack.c.l.b16 %v6729
        %v7162 = vunpack.c.l.b16 %v6730
        %v7163 = vunpack.c.l.b16 %v6731
        %v7164 = vunpack.c.l.b16 %v6732
        %v7165 = vunpack.c.l.b16 %v6733
        %v7166 = vunpack.c.l.b16 %v6734
        %v7167 = vunpack.c.l.b16 %v6735
        %v7168 = vunpack.c.l.b16 %v6736
        %v7169 = vunpack.c.l.b16 %v6737
        %v7170 = vunpack.c.l.b16 %v6738
        %v7171 = vunpack.c.l.b16 %v6739
        %v7172 = vunpack.c.l.b16 %v6740
        %v7173 = vunpack.c.l.b16 %v6741
        %v7174 = vunpack.c.l.b16 %v6742
        %v7175 = vunpack.c.l.b16 %v6743
        %v7176 = vunpack.c.l.b16 %v6744
        %v7177 = vunpack.c.l.b16 %v6745
        %v7178 = vunpack.c.l.b16 %v6746
        %v7179 = vunpack.c.l.b16 %v6747
        %v7180 = vunpack.c.l.b16 %v6748
        %v7181 = vunpack.c.l.b16 %v6749
        %v7182 = vunpack.c.l.b16 %v6750
        %v7183 = vunpack.c.l.b16 %v6751
        %v7184 = vunpack.c.l.b16 %v6752
        %v7185 = vunpack.c.l.b16 %v6753
        %v7186 = vunpack.c.l.b16 %v6754
        %v7187 = vunpack.c.l.b16 %v6755
        %v7188 = vunpack.c.l.b16 %v6756
        %v7189 = vunpack.c.l.b16 %v6757
        %v7190 = vunpack.c.l.b16 %v6758
        %v7191 = vunpack.c.l.b16 %v6759
        %v7192 = vunpack.c.l.b16 %v6760
        %v7193 = vunpack.c.l.b16 %v6761
        %v7194 = vunpack.c.l.b16 %v6762
        %v7195 = vunpack.c.l.b16 %v6763
        %v7196 = vunpack.c.l.b16 %v6764
        %v7197 = vunpack.c.l.b16 %v6765
        %v7198 = vunpack.c.l.b16 %v6766
        %v7199 = vunpack.c.l.b16 %v6767
        %v7200 = vunpack.c.l.b16 %v6768
        %v7201 = vunpack.c.l.b16 %v6769
        %v7202 = vunpack.c.l.b16 %v6770
        %v7203 = vunpack.c.l.b16 %v6771
        %v7204 = vunpack.c.l.b16 %v6772
        %v7205 = vunpack.c.l.b16 %v6773
        %v7206 = vunpack.c.l.b16 %v6774
        %v7207 = vunpack.c.l.b16 %v6775
        %v7208 = vunpack.c.l.b16 %v6776
        %v7209 = vunpack.c.l.b16 %v6777
        %v7210 = vunpack.c.l.b16 %v6778
        %v7211 = vunpack.c.l.b16 %v6779
        %v7212 = vunpack.c.l.b16 %v6780
        %v7213 = vunpack.c.l.b16 %v6781
        %v7214 = vunpack.c.l.b16 %v6782
        %v7215 = vunpack.c.l.b16 %v6783
        %v7216 = vunpack.c.l.b16 %v6784
        %v7217 = vunpack.c.l.b16 %v6785
        %v7218 = vunpack.c.l.b16 %v6786
        %v7219 = vunpack.c.l.b16 %v6787
        %v7220 = vunpack.c.l.b16 %v6788
        %v7221 = vunpack.c.l.b16 %v6789
        %v7222 = vunpack.c.l.b16 %v6790
        %v7223 = vunpack.c.l.b16 %v6791
        %v7224 = vunpack.c.l.b16 %v6792
        %v7225 = vunpack.c.l.b16 %v6793
        %v7226 = vunpack.c.l.b16 %v6794
        %v7227 = vunpack.c.l.b16 %v6795
        %v7228 = vunpack.c.l.b16 %v6796
        %v7229 = vunpack.c.l.b16 %v6797
        %v7230 = vunpack.c.l.b16 %v6798
        %v7231 = vunpack.c.l.b16 %v6799
        %v7232 = vunpack.c.l.b16 %v6800
        %v7233 = vunpack.c.l.b16 %v6801
        %v7234 = vunpack.c.l.b16 %v6802
        %v7235 = vunpack.c.l.b16 %v6803
        %v7236 = vunpack.c.l.b16 %v6804
        %v7237 = vunpack.c.l.b16 %v6805
        %v7238 = vunpack.c.l.b16 %v6806
        %v7239 = vunpack.c.l.b16 %v6807
        %v7240 = vunpack.c.l.b16 %v6808
        %v7241 = vunpack.c.l.b16 %v6809
        %v7242 = vunpack.c.l.b16 %v6810
        %v7243 = vunpack.c.l.b16 %v6811
        %v7244 = vunpack.c.l.b16 %v6812
        %v7245 = vunpack.c.l.b16 %v6813
        %v7246 = vunpack.c.l.b16 %v6814
        %v7247 = vunpack.c.l.b16 %v6815
        %v7248 = vunpack.c.l.b16 %v6816
        %v7249 = vunpack.c.l.b16 %v6817
        %v7250 = vunpack.c.l.b16 %v6818
        %v7251 = vunpack.c.l.b16 %v6819
        %v7252 = vunpack.c.l.b16 %v6820
        %v7253 = vunpack.c.l.b16 %v6821
        %v7254 = vunpack.c.l.b16 %v6822
        %v7255 = vunpack.c.l.b16 %v6823
        %v7256 = vunpack.c.l.b16 %v6824
        %v7257 = vunpack.c.l.b16 %v6825
        %v7258 = vunpack.c.l.b16 %v6826
        %v7259 = vunpack.c.l.b16 %v6827
        %v7260 = vunpack.c.l.b16 %v6828
        %v7261 = vunpack.c.l.b16 %v6829
        %v7262 = vunpack.c.l.b16 %v6830
        %v7263 = vunpack.c.l.b16 %v6831
        %v7264 = vunpack.c.l.b16 %v6832
        %v7265 = vunpack.c.l.b16 %v6833
        %v7266 = vunpack.c.l.b16 %v6834
        %v7267 = vunpack.c.l.b16 %v6835
        %v7268 = vunpack.c.l.b16 %v6836
        %v7269 = vunpack.c.l.b16 %v6837
        %v7270 = vunpack.c.l.b16 %v6838
        %v7271 = vunpack.c.l.b16 %v6839
        %v7272 = vunpack.c.l.b16 %v6840
        %v7273 = vunpack.c.l.b16 %v6841
        %v7274 = vunpack.c.l.b16 %v6842
        %v7275 = vunpack.c.l.b16 %v6843
        %v7276 = vunpack.c.l.b16 %v6844
        %v7277 = vunpack.c.l.b16 %v6845
        %v7278 = vunpack.c.l.b16 %v6846
        %v7279 = vunpack.c.l.b16 %v6847
        %v7280 = vunpack.c.l.b16 %v6848
        %v7281 = vunpack.c.l.b16 %v6849
        %v7282 = vunpack.c.l.b16 %v6850
        %v7283 = vunpack.c.l.b16 %v6851
        %v7284 = vunpack.c.l.b16 %v6852
        %v7285 = vunpack.c.l.b16 %v6853
        %v7286 = vunpack.c.l.b16 %v6854
        %v7287 = vunpack.c.l.b16 %v6855
        %v7288 = vunpack.c.l.b16 %v6856
        %v7289 = vunpack.c.l.b16 %v6857
        %v7290 = vunpack.c.l.b16 %v6858
        %v7291 = vpack.c.b16 %v7148, %v7147
        %v7292 = vpack.c.b16 %v7150, %v7149
        %v7293 = vpack.c.b16 %v7152, %v7151
        %v7294 = vpack.c.b16 %v7154, %v7153
        %v7295 = vpack.c.b16 %v7156, %v7155
        %v7296 = vpack.c.b16 %v7158, %v7157
        %v7297 = vpack.c.b16 %v7160, %v7159
        %v7298 = vpack.c.b16 %v7162, %v7161
        %v7299 = vpack.c.b16 %v7164, %v7163
        %v7300 = vpack.c.b16 %v7166, %v7165
        %v7301 = vpack.c.b16 %v7168, %v7167
        %v7302 = vpack.c.b16 %v7170, %v7169
        %v7303 = vpack.c.b16 %v7172, %v7171
        %v7304 = vpack.c.b16 %v7174, %v7173
        %v7305 = vpack.c.b16 %v7176, %v7175
        %v7306 = vpack.c.b16 %v7178, %v7177
        %v7307 = vpack.c.b16 %v7180, %v7179
        %v7308 = vpack.c.b16 %v7182, %v7181
        %v7309 = vpack.c.b16 %v7184, %v7183
        %v7310 = vpack.c.b16 %v7186, %v7185
        %v7311 = vpack.c.b16 %v7188, %v7187
        %v7312 = vpack.c.b16 %v7190, %v7189
        %v7313 = vpack.c.b16 %v7192, %v7191
        %v7314 = vpack.c.b16 %v7194, %v7193
        %v7315 = vpack.c.b16 %v7196, %v7195
        %v7316 = vpack.c.b16 %v7198, %v7197
        %v7317 = vpack.c.b16 %v7200, %v7199
        %v7318 = vpack.c.b16 %v7202, %v7201
        %v7319 = vpack.c.b16 %v7204, %v7203
        %v7320 = vpack.c.b16 %v7206, %v7205
        %v7321 = vpack.c.b16 %v7208, %v7207
        %v7322 = vpack.c.b16 %v7210, %v7209
        %v7323 = vpack.c.b16 %v7212, %v7211
        %v7324 = vpack.c.b16 %v7214, %v7213
        %v7325 = vpack.c.b16 %v7216, %v7215
        %v7326 = vpack.c.b16 %v7218, %v7217
        %v7327 = vpack.c.b16 %v7220, %v7219
        %v7328 = vpack.c.b16 %v7222, %v7221
        %v7329 = vpack.c.b16 %v7224, %v7223
        %v7330 = vpack.c.b16 %v7226, %v7225
        %v7331 = vpack.c.b16 %v7228, %v7227
        %v7332 = vpack.c.b16 %v7230, %v7229
        %v7333 = vpack.c.b16 %v7232, %v7231
        %v7334 = vpack.c.b16 %v7234, %v7233
        %v7335 = vpack.c.b16 %v7236, %v7235
        %v7336 = vpack.c.b16 %v7238, %v7237
        %v7337 = vpack.c.b16 %v7240, %v7239
        %v7338 = vpack.c.b16 %v7242, %v7241
        %v7339 = vpack.c.b16 %v7244, %v7243
        %v7340 = vpack.c.b16 %v7246, %v7245
        %v7341 = vpack.c.b16 %v7248, %v7247
        %v7342 = vpack.c.b16 %v7250, %v7249
        %v7343 = vpack.c.b16 %v7252, %v7251
        %v7344 = vpack.c.b16 %v7254, %v7253
        %v7345 = vpack.c.b16 %v7256, %v7255
        %v7346 = vpack.c.b16 %v7258, %v7257
        %v7347 = vpack.c.b16 %v7260, %v7259
        %v7348 = vpack.c.b16 %v7262, %v7261
        %v7349 = vpack.c.b16 %v7264, %v7263
        %v7350 = vpack.c.b16 %v7266, %v7265
        %v7351 = vpack.c.b16 %v7268, %v7267
        %v7352 = vpack.c.b16 %v7270, %v7269
        %v7353 = vpack.c.b16 %v7272, %v7271
        %v7354 = vpack.c.b16 %v7274, %v7273
        %v7355 = vpack.c.b16 %v7276, %v7275
        %v7356 = vpack.c.b16 %v7278, %v7277
        %v7357 = vpack.c.b16 %v7280, %v7279
        %v7358 = vpack.c.b16 %v7282, %v7281
        %v7359 = vpack.c.b16 %v7284, %v7283
        %v7360 = vpack.c.b16 %v7286, %v7285
        %v7361 = vpack.c.b16 %v7288, %v7287
        %v7362 = vpack.c.b16 %v7290, %v7289
        %7435 = vmatprep.subr.bf16.mxu0 0
        %7436 = vmatpush1.bf16.msra.mxu0 %v7291
        %7437 = vmatprep.subr.bf16.mxu0 0
        %7438 = vmatpush1.bf16.msra.mxu0 %v7292
        %7439 = vmatprep.subr.bf16.mxu0 0
        %7440 = vmatpush1.bf16.msra.mxu0 %v7293
        %7441 = vmatprep.subr.bf16.mxu0 0
        %7442 = vmatpush1.bf16.msra.mxu0 %v7294
        %7443 = vmatprep.subr.bf16.mxu0 0
        %7444 = vmatpush1.bf16.msra.mxu0 %v7295
        %7445 = vmatprep.subr.bf16.mxu0 0
        %7446 = vmatpush1.bf16.msra.mxu0 %v7296
        %7447 = vmatprep.subr.bf16.mxu0 0
        %7448 = vmatpush1.bf16.msra.mxu0 %v7297
        %7449 = vmatprep.subr.bf16.mxu0 0
        %7450 = vmatpush1.bf16.msra.mxu0 %v7298
        %7451 = vmatprep.subr.bf16.mxu0 0
        %7452 = vmatpush1.bf16.msra.mxu0 %v7299
        %7453 = vmatprep.subr.bf16.mxu0 0
        %7454 = vmatpush1.bf16.msra.mxu0 %v7300
        %7455 = vmatprep.subr.bf16.mxu0 0
        %7456 = vmatpush1.bf16.msra.mxu0 %v7301
        %7457 = vmatprep.subr.bf16.mxu0 0
        %7458 = vmatpush1.bf16.msra.mxu0 %v7302
        %7459 = vmatprep.subr.bf16.mxu0 0
        %7460 = vmatpush1.bf16.msra.mxu0 %v7303
        %7461 = vmatprep.subr.bf16.mxu0 0
        %7462 = vmatpush1.bf16.msra.mxu0 %v7304
        %7463 = vmatprep.subr.bf16.mxu0 0
        %7464 = vmatpush1.bf16.msra.mxu0 %v7305
        %7465 = vmatprep.subr.bf16.mxu0 0
        %7466 = vmatpush1.bf16.msra.mxu0 %v7306
        %7467 = vmatprep.mubr.bf16.mxu0 %v6003
        %7468 = vmatmul.mubr.bf16.gmra.mrb[0].mxu0 %v5875
        %v7469 = vpop.f32.mrb[0].mxu0
        %v7470 = vadd.f32 0.0, %v7469
        %v7471 = vpop.f32.mrb[0].mxu0
        %v7472 = vpop.f32.mrb[0].mxu0
        %v7473 = vadd.f32 0.0, %v7472
        %v7474 = vpop.f32.mrb[0].mxu0
        %7475 = vmatprep.mubr.bf16.mxu0 %v6004
        %7476 = vmatmul.mubr.bf16.gmra.mrb[0].mxu0 %v5876
        %v7477 = vpop.f32.mrb[0].mxu0
        %v7478 = vadd.f32 0.0, %v7477
        %v7479 = vpop.f32.mrb[0].mxu0
        %v7480 = vpop.f32.mrb[0].mxu0
        %v7481 = vadd.f32 0.0, %v7480
        %v7482 = vpop.f32.mrb[0].mxu0
        %7483 = vmatprep.mubr.bf16.mxu0 %v6005
        %7484 = vmatmul.mubr.bf16.gmra.mrb[0].mxu0 %v5877
        %v7485 = vpop.f32.mrb[0].mxu0
        %v7486 = vadd.f32 0.0, %v7485
        %v7487 = vpop.f32.mrb[0].mxu0
        %v7488 = vpop.f32.mrb[0].mxu0
        %v7489 = vadd.f32 0.0, %v7488
        %v7490 = vpop.f32.mrb[0].mxu0
        %7491 = vmatprep.mubr.bf16.mxu0 %v6006
        %7492 = vmatmul.mubr.bf16.gmra.mrb[0].mxu0 %v5878
        %v7493 = vpop.f32.mrb[0].mxu0
        %v7494 = vadd.f32 0.0, %v7493
        %v7495 = vpop.f32.mrb[0].mxu0
        %v7496 = vpop.f32.mrb[0].mxu0
        %v7497 = vadd.f32 0.0, %v7496
        %v7498 = vpop.f32.mrb[0].mxu0
        %7499 = vmatprep.mubr.bf16.mxu0 %v6007
        %7500 = vmatmul.mubr.bf16.gmra.mrb[0].mxu0 %v5879
        %v7501 = vpop.f32.mrb[0].mxu0
        %v7502 = vadd.f32 0.0, %v7501
        %v7503 = vpop.f32.mrb[0].mxu0
        %v7504 = vpop.f32.mrb[0].mxu0
        %v7505 = vadd.f32 0.0, %v7504
        %v7506 = vpop.f32.mrb[0].mxu0
        %7507 = vmatprep.mubr.bf16.mxu0 %v6008
        %7508 = vmatmul.mubr.bf16.gmra.mrb[0].mxu0 %v5880
        %v7509 = vpop.f32.mrb[0].mxu0
        %v7510 = vadd.f32 0.0, %v7509
        %v7511 = vpop.f32.mrb[0].mxu0
        %v7512 = vpop.f32.mrb[0].mxu0
        %v7513 = vadd.f32 0.0, %v7512
        %v7514 = vpop.f32.mrb[0].mxu0
        %7515 = vmatprep.mubr.bf16.mxu0 %v6009
        %7516 = vmatmul.mubr.bf16.gmra.mrb[0].mxu0 %v5881
        %v7517 = vpop.f32.mrb[0].mxu0
        %v7518 = vadd.f32 0.0, %v7517
        %v7519 = vpop.f32.mrb[0].mxu0
        %v7520 = vpop.f32.mrb[0].mxu0
        %v7521 = vadd.f32 0.0, %v7520
        %v7522 = vpop.f32.mrb[0].mxu0
        %7523 = vmatprep.mubr.bf16.mxu0 %v6010
        %7524 = vmatmul.mubr.bf16.gmra.mrb[0].mxu0 %v5882
        %v7525 = vpop.f32.mrb[0].mxu0
        %v7526 = vadd.f32 0.0, %v7525
        %v7527 = vpop.f32.mrb[0].mxu0
        %v7528 = vpop.f32.mrb[0].mxu0
        %v7529 = vadd.f32 0.0, %v7528
        %v7530 = vpop.f32.mrb[0].mxu0
        %7531 = vmatprep.mubr.bf16.mxu0 %v6011
        %7532 = vmatmul.mubr.bf16.gmra.mrb[0].mxu0 %v5883
        %v7533 = vpop.f32.mrb[0].mxu0
        %v7534 = vadd.f32 0.0, %v7533
        %v7535 = vpop.f32.mrb[0].mxu0
        %v7536 = vpop.f32.mrb[0].mxu0
        %v7537 = vadd.f32 0.0, %v7536
        %v7538 = vpop.f32.mrb[0].mxu0
        %7539 = vmatprep.mubr.bf16.mxu0 %v6012
        %7540 = vmatmul.mubr.bf16.gmra.mrb[0].mxu0 %v5884
        %v7541 = vpop.f32.mrb[0].mxu0
        %v7542 = vadd.f32 0.0, %v7541
        %v7543 = vpop.f32.mrb[0].mxu0
        %v7544 = vpop.f32.mrb[0].mxu0
        %v7545 = vadd.f32 0.0, %v7544
        %v7546 = vpop.f32.mrb[0].mxu0
        %7547 = vmatprep.mubr.bf16.mxu0 %v6013
        %7548 = vmatmul.mubr.bf16.gmra.mrb[0].mxu0 %v5885
        %v7549 = vpop.f32.mrb[0].mxu0
        %v7550 = vadd.f32 0.0, %v7549
        %v7551 = vpop.f32.mrb[0].mxu0
        %v7552 = vpop.f32.mrb[0].mxu0
        %v7553 = vadd.f32 0.0, %v7552
        %v7554 = vpop.f32.mrb[0].mxu0
        %7555 = vmatprep.mubr.bf16.mxu0 %v6014
        %7556 = vmatmul.mubr.bf16.gmra.mrb[0].mxu0 %v5886
        %v7557 = vpop.f32.mrb[0].mxu0
        %v7558 = vadd.f32 0.0, %v7557
        %v7559 = vpop.f32.mrb[0].mxu0
        %v7560 = vpop.f32.mrb[0].mxu0
        %v7561 = vadd.f32 0.0, %v7560
        %v7562 = vpop.f32.mrb[0].mxu0
        %7563 = vmatprep.mubr.bf16.mxu0 %v6015
        %7564 = vmatmul.mubr.bf16.gmra.mrb[0].mxu0 %v5887
        %v7565 = vpop.f32.mrb[0].mxu0
        %v7566 = vadd.f32 0.0, %v7565
        %v7567 = vpop.f32.mrb[0].mxu0
        %v7568 = vpop.f32.mrb[0].mxu0
        %v7569 = vadd.f32 0.0, %v7568
        %v7570 = vpop.f32.mrb[0].mxu0
        %7571 = vmatprep.mubr.bf16.mxu0 %v6016
        %7572 = vmatmul.mubr.bf16.gmra.mrb[0].mxu0 %v5888
        %v7573 = vpop.f32.mrb[0].mxu0
        %v7574 = vadd.f32 0.0, %v7573
        %v7575 = vpop.f32.mrb[0].mxu0
        %v7576 = vpop.f32.mrb[0].mxu0
        %v7577 = vadd.f32 0.0, %v7576
        %v7578 = vpop.f32.mrb[0].mxu0
        %7579 = vmatprep.mubr.bf16.mxu0 %v6017
        %7580 = vmatmul.mubr.bf16.gmra.mrb[0].mxu0 %v5889
        %v7581 = vpop.f32.mrb[0].mxu0
        %v7582 = vadd.f32 0.0, %v7581
        %v7583 = vpop.f32.mrb[0].mxu0
        %v7584 = vpop.f32.mrb[0].mxu0
        %v7585 = vadd.f32 0.0, %v7584
        %v7586 = vpop.f32.mrb[0].mxu0
        %7587 = vmatprep.mubr.bf16.mxu0 %v6018
        %7588 = vmatmul.mubr.bf16.gmra.mrb[0].mxu0 %v5890
        %v7589 = vpop.f32.mrb[0].mxu0
        %v7590 = vadd.f32 0.0, %v7589
        %v7591 = vpop.f32.mrb[0].mxu0
        %v7592 = vpop.f32.mrb[0].mxu0
        %v7593 = vadd.f32 0.0, %v7592
        %v7594 = vpop.f32.mrb[0].mxu0
        %7595 = vdwg.mxu0
        %7596 = vmatprep.subr.bf16.mxu0 0
        %7597 = vmatpush1.bf16.msra.mxu0 %v7307
        %7598 = vmatprep.subr.bf16.mxu0 0
        %7599 = vmatpush1.bf16.msra.mxu0 %v7308
        %7600 = vmatprep.subr.bf16.mxu0 0
        %7601 = vmatpush1.bf16.msra.mxu0 %v7309
        %7602 = vmatprep.subr.bf16.mxu0 0
        %7603 = vmatpush1.bf16.msra.mxu0 %v7310
        %7604 = vmatprep.subr.bf16.mxu0 0
        %7605 = vmatpush1.bf16.msra.mxu0 %v7311
        %7606 = vmatprep.subr.bf16.mxu0 0
        %7607 = vmatpush1.bf16.msra.mxu0 %v7312
        %7608 = vmatprep.subr.bf16.mxu0 0
        %7609 = vmatpush1.bf16.msra.mxu0 %v7313
        %7610 = vmatprep.subr.bf16.mxu0 0
        %7611 = vmatpush1.bf16.msra.mxu0 %v7314
        %7612 = vmatprep.subr.bf16.mxu0 0
        %7613 = vmatpush1.bf16.msra.mxu0 %v7315
        %7614 = vmatprep.subr.bf16.mxu0 0
        %7615 = vmatpush1.bf16.msra.mxu0 %v7316
        %7616 = vmatprep.subr.bf16.mxu0 0
        %7617 = vmatpush1.bf16.msra.mxu0 %v7317
        %7618 = vmatprep.subr.bf16.mxu0 0
        %7619 = vmatpush1.bf16.msra.mxu0 %v7318
        %7620 = vmatprep.subr.bf16.mxu0 0
        %7621 = vmatpush1.bf16.msra.mxu0 %v7319
        %7622 = vmatprep.subr.bf16.mxu0 0
        %7623 = vmatpush1.bf16.msra.mxu0 %v7320
        %7624 = vmatprep.subr.bf16.mxu0 0
        %7625 = vmatpush1.bf16.msra.mxu0 %v7321
        %7626 = vmatprep.subr.bf16.mxu0 0
        %7627 = vmatpush1.bf16.msra.mxu0 %v7322
        %7628 = vmatprep.mubr.bf16.mxu0 %v6293
        %7629 = vmatmul.mubr.bf16.gmra.mrb[0].mxu0 %v6163
        %v7630 = vpop.f32.mrb[0].mxu0
        %v7631 = vadd.f32 %v7470, %v7630
        %v7632 = vpop.f32.mrb[0].mxu0
        %v7633 = vpop.f32.mrb[0].mxu0
        %v7634 = vadd.f32 %v7473, %v7633
        %v7635 = vpop.f32.mrb[0].mxu0
        %7636 = vmatprep.mubr.bf16.mxu0 %v6294
        %7637 = vmatmul.mubr.bf16.gmra.mrb[0].mxu0 %v6164
        %v7638 = vpop.f32.mrb[0].mxu0
        %v7639 = vadd.f32 %v7478, %v7638
        %v7640 = vpop.f32.mrb[0].mxu0
        %v7641 = vpop.f32.mrb[0].mxu0
        %v7642 = vadd.f32 %v7481, %v7641
        %v7643 = vpop.f32.mrb[0].mxu0
        %7644 = vmatprep.mubr.bf16.mxu0 %v6295
        %7645 = vmatmul.mubr.bf16.gmra.mrb[0].mxu0 %v6165
        %v7646 = vpop.f32.mrb[0].mxu0
        %v7647 = vadd.f32 %v7486, %v7646
        %v7648 = vpop.f32.mrb[0].mxu0
        %v7649 = vpop.f32.mrb[0].mxu0
        %v7650 = vadd.f32 %v7489, %v7649
        %v7651 = vpop.f32.mrb[0].mxu0
        %7652 = vmatprep.mubr.bf16.mxu0 %v6296
        %7653 = vmatmul.mubr.bf16.gmra.mrb[0].mxu0 %v6166
        %v7654 = vpop.f32.mrb[0].mxu0
        %v7655 = vadd.f32 %v7494, %v7654
        %v7656 = vpop.f32.mrb[0].mxu0
        %v7657 = vpop.f32.mrb[0].mxu0
        %v7658 = vadd.f32 %v7497, %v7657
        %v7659 = vpop.f32.mrb[0].mxu0
        %7660 = vmatprep.mubr.bf16.mxu0 %v6297
        %7661 = vmatmul.mubr.bf16.gmra.mrb[0].mxu0 %v6167
        %v7662 = vpop.f32.mrb[0].mxu0
        %v7663 = vadd.f32 %v7502, %v7662
        %v7664 = vpop.f32.mrb[0].mxu0
        %v7665 = vpop.f32.mrb[0].mxu0
        %v7666 = vadd.f32 %v7505, %v7665
        %v7667 = vpop.f32.mrb[0].mxu0
        %7668 = vmatprep.mubr.bf16.mxu0 %v6298
        %7669 = vmatmul.mubr.bf16.gmra.mrb[0].mxu0 %v6168
        %v7670 = vpop.f32.mrb[0].mxu0
        %v7671 = vadd.f32 %v7510, %v7670
        %v7672 = vpop.f32.mrb[0].mxu0
        %v7673 = vpop.f32.mrb[0].mxu0
        %v7674 = vadd.f32 %v7513, %v7673
        %v7675 = vpop.f32.mrb[0].mxu0
        %7676 = vmatprep.mubr.bf16.mxu0 %v6299
        %7677 = vmatmul.mubr.bf16.gmra.mrb[0].mxu0 %v6169
        %v7678 = vpop.f32.mrb[0].mxu0
        %v7679 = vadd.f32 %v7518, %v7678
        %v7680 = vpop.f32.mrb[0].mxu0
        %v7681 = vpop.f32.mrb[0].mxu0
        %v7682 = vadd.f32 %v7521, %v7681
        %v7683 = vpop.f32.mrb[0].mxu0
        %7684 = vmatprep.mubr.bf16.mxu0 %v6300
        %7685 = vmatmul.mubr.bf16.gmra.mrb[0].mxu0 %v6170
        %v7686 = vpop.f32.mrb[0].mxu0
        %v7687 = vadd.f32 %v7526, %v7686
        %v7688 = vpop.f32.mrb[0].mxu0
        %v7689 = vpop.f32.mrb[0].mxu0
        %v7690 = vadd.f32 %v7529, %v7689
        %v7691 = vpop.f32.mrb[0].mxu0
        %7692 = vmatprep.mubr.bf16.mxu0 %v6301
        %7693 = vmatmul.mubr.bf16.gmra.mrb[0].mxu0 %v6171
        %v7694 = vpop.f32.mrb[0].mxu0
        %v7695 = vadd.f32 %v7534, %v7694
        %v7696 = vpop.f32.mrb[0].mxu0
        %v7697 = vpop.f32.mrb[0].mxu0
        %v7698 = vadd.f32 %v7537, %v7697
        %v7699 = vpop.f32.mrb[0].mxu0
        %7700 = vmatprep.mubr.bf16.mxu0 %v6302
        %7701 = vmatmul.mubr.bf16.gmra.mrb[0].mxu0 %v6172
        %v7702 = vpop.f32.mrb[0].mxu0
        %v7703 = vadd.f32 %v7542, %v7702
        %v7704 = vpop.f32.mrb[0].mxu0
        %v7705 = vpop.f32.mrb[0].mxu0
        %v7706 = vadd.f32 %v7545, %v7705
        %v7707 = vpop.f32.mrb[0].mxu0
        %7708 = vmatprep.mubr.bf16.mxu0 %v6303
        %7709 = vmatmul.mubr.bf16.gmra.mrb[0].mxu0 %v6173
        %v7710 = vpop.f32.mrb[0].mxu0
        %v7711 = vadd.f32 %v7550, %v7710
        %v7712 = vpop.f32.mrb[0].mxu0
        %v7713 = vpop.f32.mrb[0].mxu0
        %v7714 = vadd.f32 %v7553, %v7713
        %v7715 = vpop.f32.mrb[0].mxu0
        %7716 = vmatprep.mubr.bf16.mxu0 %v6304
        %7717 = vmatmul.mubr.bf16.gmra.mrb[0].mxu0 %v6174
        %v7718 = vpop.f32.mrb[0].mxu0
        %v7719 = vadd.f32 %v7558, %v7718
        %v7720 = vpop.f32.mrb[0].mxu0
        %v7721 = vpop.f32.mrb[0].mxu0
        %v7722 = vadd.f32 %v7561, %v7721
        %v7723 = vpop.f32.mrb[0].mxu0
        %7724 = vmatprep.mubr.bf16.mxu0 %v6305
        %7725 = vmatmul.mubr.bf16.gmra.mrb[0].mxu0 %v6175
        %v7726 = vpop.f32.mrb[0].mxu0
        %v7727 = vadd.f32 %v7566, %v7726
        %v7728 = vpop.f32.mrb[0].mxu0
        %v7729 = vpop.f32.mrb[0].mxu0
        %v7730 = vadd.f32 %v7569, %v7729
        %v7731 = vpop.f32.mrb[0].mxu0
        %7732 = vmatprep.mubr.bf16.mxu0 %v6306
        %7733 = vmatmul.mubr.bf16.gmra.mrb[0].mxu0 %v6176
        %v7734 = vpop.f32.mrb[0].mxu0
        %v7735 = vadd.f32 %v7574, %v7734
        %v7736 = vpop.f32.mrb[0].mxu0
        %v7737 = vpop.f32.mrb[0].mxu0
        %v7738 = vadd.f32 %v7577, %v7737
        %v7739 = vpop.f32.mrb[0].mxu0
        %7740 = vmatprep.mubr.bf16.mxu0 %v6307
        %7741 = vmatmul.mubr.bf16.gmra.mrb[0].mxu0 %v6177
        %v7742 = vpop.f32.mrb[0].mxu0
        %v7743 = vadd.f32 %v7582, %v7742
        %v7744 = vpop.f32.mrb[0].mxu0
        %v7745 = vpop.f32.mrb[0].mxu0
        %v7746 = vadd.f32 %v7585, %v7745
        %v7747 = vpop.f32.mrb[0].mxu0
        %7748 = vmatprep.mubr.bf16.mxu0 %v6308
        %7749 = vmatmul.mubr.bf16.gmra.mrb[0].mxu0 %v6178
        %v7750 = vpop.f32.mrb[0].mxu0
        %v7751 = vadd.f32 %v7590, %v7750
        %v7752 = vpop.f32.mrb[0].mxu0
        %v7753 = vpop.f32.mrb[0].mxu0
        %v7754 = vadd.f32 %v7593, %v7753
        %v7755 = vpop.f32.mrb[0].mxu0
        %7756 = vdwg.mxu0
        %7757 = vmatprep.subr.bf16.mxu0 0
        %7758 = vmatpush1.bf16.msra.mxu0 %v7323
        %7759 = vmatprep.subr.bf16.mxu0 0
        %7760 = vmatpush1.bf16.msra.mxu0 %v7324
        %7761 = vmatprep.subr.bf16.mxu0 0
        %7762 = vmatpush1.bf16.msra.mxu0 %v7325
        %7763 = vmatprep.subr.bf16.mxu0 0
        %7764 = vmatpush1.bf16.msra.mxu0 %v7326
        %7765 = vmatprep.subr.bf16.mxu0 0
        %7766 = vmatpush1.bf16.msra.mxu0 %v7327
        %7767 = vmatprep.subr.bf16.mxu0 0
        %7768 = vmatpush1.bf16.msra.mxu0 %v7328
        %7769 = vmatprep.subr.bf16.mxu0 0
        %7770 = vmatpush1.bf16.msra.mxu0 %v7329
        %7771 = vmatprep.subr.bf16.mxu0 0
        %7772 = vmatpush1.bf16.msra.mxu0 %v7330
        %7773 = vmatprep.subr.bf16.mxu0 0
        %7774 = vmatpush1.bf16.msra.mxu0 %v7331
        %7775 = vmatprep.subr.bf16.mxu0 0
        %7776 = vmatpush1.bf16.msra.mxu0 %v7332
        %7777 = vmatprep.subr.bf16.mxu0 0
        %7778 = vmatpush1.bf16.msra.mxu0 %v7333
        %7779 = vmatprep.subr.bf16.mxu0 0
        %7780 = vmatpush1.bf16.msra.mxu0 %v7334
        %7781 = vmatprep.subr.bf16.mxu0 0
        %7782 = vmatpush1.bf16.msra.mxu0 %v7335
        %7783 = vmatprep.subr.bf16.mxu0 0
        %7784 = vmatpush1.bf16.msra.mxu0 %v7336
        %7785 = vmatprep.subr.bf16.mxu0 0
        %7786 = vmatpush1.bf16.msra.mxu0 %v7337
        %7787 = vmatprep.subr.bf16.mxu0 0
        %7788 = vmatpush1.bf16.msra.mxu0 %v7338
        %7789 = vmatprep.mubr.bf16.mxu0 %v6431
        %7790 = vmatmul.mubr.bf16.gmra.mrb[0].mxu0 %v6004
        %v7791 = vpop.f32.mrb[0].mxu0
        %v7792 = vadd.f32 %v7631, %v7791
        %v7793 = vpop.f32.mrb[0].mxu0
        %v7794 = vpop.f32.mrb[0].mxu0
        %v7795 = vadd.f32 %v7634, %v7794
        %v7796 = vpop.f32.mrb[0].mxu0
        %7797 = vmatprep.mubr.bf16.mxu0 %v6432
        %7798 = vmatmul.mubr.bf16.gmra.mrb[0].mxu0 %v6005
        %v7799 = vpop.f32.mrb[0].mxu0
        %v7800 = vadd.f32 %v7639, %v7799
        %v7801 = vpop.f32.mrb[0].mxu0
        %v7802 = vpop.f32.mrb[0].mxu0
        %v7803 = vadd.f32 %v7642, %v7802
        %v7804 = vpop.f32.mrb[0].mxu0
        %7805 = vmatprep.mubr.bf16.mxu0 %v6433
        %7806 = vmatmul.mubr.bf16.gmra.mrb[0].mxu0 %v6006
        %v7807 = vpop.f32.mrb[0].mxu0
        %v7808 = vadd.f32 %v7647, %v7807
        %v7809 = vpop.f32.mrb[0].mxu0
        %v7810 = vpop.f32.mrb[0].mxu0
        %v7811 = vadd.f32 %v7650, %v7810
        %v7812 = vpop.f32.mrb[0].mxu0
        %7813 = vmatprep.mubr.bf16.mxu0 %v6434
        %7814 = vmatmul.mubr.bf16.gmra.mrb[0].mxu0 %v6007
        %v7815 = vpop.f32.mrb[0].mxu0
        %v7816 = vadd.f32 %v7655, %v7815
        %v7817 = vpop.f32.mrb[0].mxu0
        %v7818 = vpop.f32.mrb[0].mxu0
        %v7819 = vadd.f32 %v7658, %v7818
        %v7820 = vpop.f32.mrb[0].mxu0
        %7821 = vmatprep.mubr.bf16.mxu0 %v6435
        %7822 = vmatmul.mubr.bf16.gmra.mrb[0].mxu0 %v6008
        %v7823 = vpop.f32.mrb[0].mxu0
        %v7824 = vadd.f32 %v7663, %v7823
        %v7825 = vpop.f32.mrb[0].mxu0
        %v7826 = vpop.f32.mrb[0].mxu0
        %v7827 = vadd.f32 %v7666, %v7826
        %v7828 = vpop.f32.mrb[0].mxu0
        %7829 = vmatprep.mubr.bf16.mxu0 %v6436
        %7830 = vmatmul.mubr.bf16.gmra.mrb[0].mxu0 %v6009
        %v7831 = vpop.f32.mrb[0].mxu0
        %v7832 = vadd.f32 %v7671, %v7831
        %v7833 = vpop.f32.mrb[0].mxu0
        %v7834 = vpop.f32.mrb[0].mxu0
        %v7835 = vadd.f32 %v7674, %v7834
        %v7836 = vpop.f32.mrb[0].mxu0
        %7837 = vmatprep.mubr.bf16.mxu0 %v6437
        %7838 = vmatmul.mubr.bf16.gmra.mrb[0].mxu0 %v6010
        %v7839 = vpop.f32.mrb[0].mxu0
        %v7840 = vadd.f32 %v7679, %v7839
        %v7841 = vpop.f32.mrb[0].mxu0
        %v7842 = vpop.f32.mrb[0].mxu0
        %v7843 = vadd.f32 %v7682, %v7842
        %v7844 = vpop.f32.mrb[0].mxu0
        %7845 = vmatprep.mubr.bf16.mxu0 %v6438
        %7846 = vmatmul.mubr.bf16.gmra.mrb[0].mxu0 %v6011
        %v7847 = vpop.f32.mrb[0].mxu0
        %v7848 = vadd.f32 %v7687, %v7847
        %v7849 = vpop.f32.mrb[0].mxu0
        %v7850 = vpop.f32.mrb[0].mxu0
        %v7851 = vadd.f32 %v7690, %v7850
        %v7852 = vpop.f32.mrb[0].mxu0
        %7853 = vmatprep.mubr.bf16.mxu0 %v6439
        %7854 = vmatmul.mubr.bf16.gmra.mrb[0].mxu0 %v6012
        %v7855 = vpop.f32.mrb[0].mxu0
        %v7856 = vadd.f32 %v7695, %v7855
        %v7857 = vpop.f32.mrb[0].mxu0
        %v7858 = vpop.f32.mrb[0].mxu0
        %v7859 = vadd.f32 %v7698, %v7858
        %v7860 = vpop.f32.mrb[0].mxu0
        %7861 = vmatprep.mubr.bf16.mxu0 %v6440
        %7862 = vmatmul.mubr.bf16.gmra.mrb[0].mxu0 %v6013
        %v7863 = vpop.f32.mrb[0].mxu0
        %v7864 = vadd.f32 %v7703, %v7863
        %v7865 = vpop.f32.mrb[0].mxu0
        %v7866 = vpop.f32.mrb[0].mxu0
        %v7867 = vadd.f32 %v7706, %v7866
        %v7868 = vpop.f32.mrb[0].mxu0
        %7869 = vmatprep.mubr.bf16.mxu0 %v6441
        %7870 = vmatmul.mubr.bf16.gmra.mrb[0].mxu0 %v6014
        %v7871 = vpop.f32.mrb[0].mxu0
        %v7872 = vadd.f32 %v7711, %v7871
        %v7873 = vpop.f32.mrb[0].mxu0
        %v7874 = vpop.f32.mrb[0].mxu0
        %v7875 = vadd.f32 %v7714, %v7874
        %v7876 = vpop.f32.mrb[0].mxu0
        %7877 = vmatprep.mubr.bf16.mxu0 %v6442
        %7878 = vmatmul.mubr.bf16.gmra.mrb[0].mxu0 %v6015
        %v7879 = vpop.f32.mrb[0].mxu0
        %v7880 = vadd.f32 %v7719, %v7879
        %v7881 = vpop.f32.mrb[0].mxu0
        %v7882 = vpop.f32.mrb[0].mxu0
        %v7883 = vadd.f32 %v7722, %v7882
        %v7884 = vpop.f32.mrb[0].mxu0
        %7885 = vmatprep.mubr.bf16.mxu0 %v6443
        %7886 = vmatmul.mubr.bf16.gmra.mrb[0].mxu0 %v6016
        %v7887 = vpop.f32.mrb[0].mxu0
        %v7888 = vadd.f32 %v7727, %v7887
        %v7889 = vpop.f32.mrb[0].mxu0
        %v7890 = vpop.f32.mrb[0].mxu0
        %v7891 = vadd.f32 %v7730, %v7890
        %v7892 = vpop.f32.mrb[0].mxu0
        %7893 = vmatprep.mubr.bf16.mxu0 %v6444
        %7894 = vmatmul.mubr.bf16.gmra.mrb[0].mxu0 %v6017
        %v7895 = vpop.f32.mrb[0].mxu0
        %v7896 = vadd.f32 %v7735, %v7895
        %v7897 = vpop.f32.mrb[0].mxu0
        %v7898 = vpop.f32.mrb[0].mxu0
        %v7899 = vadd.f32 %v7738, %v7898
        %v7900 = vpop.f32.mrb[0].mxu0
        %7901 = vmatprep.mubr.bf16.mxu0 %v6445
        %7902 = vmatmul.mubr.bf16.gmra.mrb[0].mxu0 %v6018
        %v7903 = vpop.f32.mrb[0].mxu0
        %v7904 = vadd.f32 %v7743, %v7903
        %v7905 = vpop.f32.mrb[0].mxu0
        %v7906 = vpop.f32.mrb[0].mxu0
        %v7907 = vadd.f32 %v7746, %v7906
        %v7908 = vpop.f32.mrb[0].mxu0
        %7909 = vmatprep.mubr.bf16.mxu0 %v6446
        %7910 = vmatmul.mubr.bf16.gmra.mrb[0].mxu0 %v6316
        %v7911 = vpop.f32.mrb[0].mxu0
        %v7912 = vadd.f32 %v7751, %v7911
        %v7913 = vpop.f32.mrb[0].mxu0
        %v7914 = vpop.f32.mrb[0].mxu0
        %v7915 = vadd.f32 %v7754, %v7914
        %v7916 = vpop.f32.mrb[0].mxu0
        %7917 = vdwg.mxu0
        %7918 = vmatprep.subr.bf16.mxu0 0
        %7919 = vmatpush1.bf16.msra.mxu0 %v7339
        %7920 = vmatprep.subr.bf16.mxu0 0
        %7921 = vmatpush1.bf16.msra.mxu0 %v7340
        %7922 = vmatprep.subr.bf16.mxu0 0
        %7923 = vmatpush1.bf16.msra.mxu0 %v7341
        %7924 = vmatprep.subr.bf16.mxu0 0
        %7925 = vmatpush1.bf16.msra.mxu0 %v7342
        %7926 = vmatprep.subr.bf16.mxu0 0
        %7927 = vmatpush1.bf16.msra.mxu0 %v7343
        %7928 = vmatprep.subr.bf16.mxu0 0
        %7929 = vmatpush1.bf16.msra.mxu0 %v7344
        %7930 = vmatprep.subr.bf16.mxu0 0
        %7931 = vmatpush1.bf16.msra.mxu0 %v7345
        %7932 = vmatprep.subr.bf16.mxu0 0
        %7933 = vmatpush1.bf16.msra.mxu0 %v7346
        %7934 = vmatprep.subr.bf16.mxu0 0
        %7935 = vmatpush1.bf16.msra.mxu0 %v7347
        %7936 = vmatprep.subr.bf16.mxu0 0
        %7937 = vmatpush1.bf16.msra.mxu0 %v7348
        %7938 = vmatprep.subr.bf16.mxu0 0
        %7939 = vmatpush1.bf16.msra.mxu0 %v7349
        %7940 = vmatprep.subr.bf16.mxu0 0
        %7941 = vmatpush1.bf16.msra.mxu0 %v7350
        %7942 = vmatprep.subr.bf16.mxu0 0
        %7943 = vmatpush1.bf16.msra.mxu0 %v7351
        %7944 = vmatprep.subr.bf16.mxu0 0
        %7945 = vmatpush1.bf16.msra.mxu0 %v7352
        %7946 = vmatprep.subr.bf16.mxu0 0
        %7947 = vmatpush1.bf16.msra.mxu0 %v7353
        %7948 = vmatprep.subr.bf16.mxu0 0
        %7949 = vmatpush1.bf16.msra.mxu0 %v7354
        %7950 = vmatprep.mubr.bf16.mxu0 %v6005
        %7951 = vmatmul.mubr.bf16.gmra.mrb[0].mxu0 %v6561
        %v7952 = vpop.f32.mrb[0].mxu0
        %v7953 = vadd.f32 %v7792, %v7952
        %v7954 = vpop.f32.mrb[0].mxu0
        %v7955 = vpop.f32.mrb[0].mxu0
        %v7956 = vadd.f32 %v7795, %v7955
        %v7957 = vpop.f32.mrb[0].mxu0
        %7958 = vmatprep.mubr.bf16.mxu0 %v6006
        %7959 = vmatmul.mubr.bf16.gmra.mrb[0].mxu0 %v6562
        %v7960 = vpop.f32.mrb[0].mxu0
        %v7961 = vadd.f32 %v7800, %v7960
        %v7962 = vpop.f32.mrb[0].mxu0
        %v7963 = vpop.f32.mrb[0].mxu0
        %v7964 = vadd.f32 %v7803, %v7963
        %v7965 = vpop.f32.mrb[0].mxu0
        %7966 = vmatprep.mubr.bf16.mxu0 %v6007
        %7967 = vmatmul.mubr.bf16.gmra.mrb[0].mxu0 %v6563
        %v7968 = vpop.f32.mrb[0].mxu0
        %v7969 = vadd.f32 %v7808, %v7968
        %v7970 = vpop.f32.mrb[0].mxu0
        %v7971 = vpop.f32.mrb[0].mxu0
        %v7972 = vadd.f32 %v7811, %v7971
        %v7973 = vpop.f32.mrb[0].mxu0
        %7974 = vmatprep.mubr.bf16.mxu0 %v6008
        %7975 = vmatmul.mubr.bf16.gmra.mrb[0].mxu0 %v6564
        %v7976 = vpop.f32.mrb[0].mxu0
        %v7977 = vadd.f32 %v7816, %v7976
        %v7978 = vpop.f32.mrb[0].mxu0
        %v7979 = vpop.f32.mrb[0].mxu0
        %v7980 = vadd.f32 %v7819, %v7979
        %v7981 = vpop.f32.mrb[0].mxu0
        %7982 = vmatprep.mubr.bf16.mxu0 %v6009
        %7983 = vmatmul.mubr.bf16.gmra.mrb[0].mxu0 %v6565
        %v7984 = vpop.f32.mrb[0].mxu0
        %v7985 = vadd.f32 %v7824, %v7984
        %v7986 = vpop.f32.mrb[0].mxu0
        %v7987 = vpop.f32.mrb[0].mxu0
        %v7988 = vadd.f32 %v7827, %v7987
        %v7989 = vpop.f32.mrb[0].mxu0
        %7990 = vmatprep.mubr.bf16.mxu0 %v6010
        %7991 = vmatmul.mubr.bf16.gmra.mrb[0].mxu0 %v6566
        %v7992 = vpop.f32.mrb[0].mxu0
        %v7993 = vadd.f32 %v7832, %v7992
        %v7994 = vpop.f32.mrb[0].mxu0
        %v7995 = vpop.f32.mrb[0].mxu0
        %v7996 = vadd.f32 %v7835, %v7995
        %v7997 = vpop.f32.mrb[0].mxu0
        %7998 = vmatprep.mubr.bf16.mxu0 %v6011
        %7999 = vmatmul.mubr.bf16.gmra.mrb[0].mxu0 %v6567
        %v8000 = vpop.f32.mrb[0].mxu0
        %v8001 = vadd.f32 %v7840, %v8000
        %v8002 = vpop.f32.mrb[0].mxu0
        %v8003 = vpop.f32.mrb[0].mxu0
        %v8004 = vadd.f32 %v7843, %v8003
        %v8005 = vpop.f32.mrb[0].mxu0
        %8006 = vmatprep.mubr.bf16.mxu0 %v6012
        %8007 = vmatmul.mubr.bf16.gmra.mrb[0].mxu0 %v6568
        %v8008 = vpop.f32.mrb[0].mxu0
        %v8009 = vadd.f32 %v7848, %v8008
        %v8010 = vpop.f32.mrb[0].mxu0
        %v8011 = vpop.f32.mrb[0].mxu0
        %v8012 = vadd.f32 %v7851, %v8011
        %v8013 = vpop.f32.mrb[0].mxu0
        %8014 = vmatprep.mubr.bf16.mxu0 %v6013
        %8015 = vmatmul.mubr.bf16.gmra.mrb[0].mxu0 %v6569
        %v8016 = vpop.f32.mrb[0].mxu0
        %v8017 = vadd.f32 %v7856, %v8016
        %v8018 = vpop.f32.mrb[0].mxu0
        %v8019 = vpop.f32.mrb[0].mxu0
        %v8020 = vadd.f32 %v7859, %v8019
        %v8021 = vpop.f32.mrb[0].mxu0
        %8022 = vmatprep.mubr.bf16.mxu0 %v6014
        %8023 = vmatmul.mubr.bf16.gmra.mrb[0].mxu0 %v6570
        %v8024 = vpop.f32.mrb[0].mxu0
        %v8025 = vadd.f32 %v7864, %v8024
        %v8026 = vpop.f32.mrb[0].mxu0
        %v8027 = vpop.f32.mrb[0].mxu0
        %v8028 = vadd.f32 %v7867, %v8027
        %v8029 = vpop.f32.mrb[0].mxu0
        %8030 = vmatprep.mubr.bf16.mxu0 %v6015
        %8031 = vmatmul.mubr.bf16.gmra.mrb[0].mxu0 %v6571
        %v8032 = vpop.f32.mrb[0].mxu0
        %v8033 = vadd.f32 %v7872, %v8032
        %v8034 = vpop.f32.mrb[0].mxu0
        %v8035 = vpop.f32.mrb[0].mxu0
        %v8036 = vadd.f32 %v7875, %v8035
        %v8037 = vpop.f32.mrb[0].mxu0
        %8038 = vmatprep.mubr.bf16.mxu0 %v6016
        %8039 = vmatmul.mubr.bf16.gmra.mrb[0].mxu0 %v6572
        %v8040 = vpop.f32.mrb[0].mxu0
        %v8041 = vadd.f32 %v7880, %v8040
        %v8042 = vpop.f32.mrb[0].mxu0
        %v8043 = vpop.f32.mrb[0].mxu0
        %v8044 = vadd.f32 %v7883, %v8043
        %v8045 = vpop.f32.mrb[0].mxu0
        %8046 = vmatprep.mubr.bf16.mxu0 %v6017
        %8047 = vmatmul.mubr.bf16.gmra.mrb[0].mxu0 %v6573
        %v8048 = vpop.f32.mrb[0].mxu0
        %v8049 = vadd.f32 %v7888, %v8048
        %v8050 = vpop.f32.mrb[0].mxu0
        %v8051 = vpop.f32.mrb[0].mxu0
        %v8052 = vadd.f32 %v7891, %v8051
        %v8053 = vpop.f32.mrb[0].mxu0
        %8054 = vmatprep.mubr.bf16.mxu0 %v6018
        %8055 = vmatmul.mubr.bf16.gmra.mrb[0].mxu0 %v6574
        %v8056 = vpop.f32.mrb[0].mxu0
        %v8057 = vadd.f32 %v7896, %v8056
        %v8058 = vpop.f32.mrb[0].mxu0
        %v8059 = vpop.f32.mrb[0].mxu0
        %v8060 = vadd.f32 %v7899, %v8059
        %v8061 = vpop.f32.mrb[0].mxu0
        %8062 = vmatprep.mubr.bf16.mxu0 %v6316
        %8063 = vmatmul.mubr.bf16.gmra.mrb[0].mxu0 %v6575
        %v8064 = vpop.f32.mrb[0].mxu0
        %v8065 = vadd.f32 %v7904, %v8064
        %v8066 = vpop.f32.mrb[0].mxu0
        %v8067 = vpop.f32.mrb[0].mxu0
        %v8068 = vadd.f32 %v7907, %v8067
        %v8069 = vpop.f32.mrb[0].mxu0
        %8070 = vmatprep.mubr.bf16.mxu0 %v6584
        %8071 = vmatmul.mubr.bf16.gmra.mrb[0].mxu0 %v6576
        %v8072 = vpop.f32.mrb[0].mxu0
        %v8073 = vadd.f32 %v7912, %v8072
        %v8074 = vpop.f32.mrb[0].mxu0
        %v8075 = vpop.f32.mrb[0].mxu0
        %v8076 = vadd.f32 %v7915, %v8075
        %v8077 = vpop.f32.mrb[0].mxu0
        %8078 = vdwg.mxu0
        %8079 = vmatprep.subr.bf16.mxu0 0
        %8080 = vmatpush1.bf16.msra.mxu0 %v7355
        %8081 = vmatprep.subr.bf16.mxu0 0
        %8082 = vmatpush1.bf16.msra.mxu0 %v7356
        %8083 = vmatprep.subr.bf16.mxu0 0
        %8084 = vmatpush1.bf16.msra.mxu0 %v7357
        %8085 = vmatprep.subr.bf16.mxu0 0
        %8086 = vmatpush1.bf16.msra.mxu0 %v7358
        %8087 = vmatprep.subr.bf16.mxu0 0
        %8088 = vmatpush1.bf16.msra.mxu0 %v7359
        %8089 = vmatprep.subr.bf16.mxu0 0
        %8090 = vmatpush1.bf16.msra.mxu0 %v7360
        %8091 = vmatprep.subr.bf16.mxu0 0
        %8092 = vmatpush1.bf16.msra.mxu0 %v7361
        %8093 = vmatprep.subr.bf16.mxu0 0
        %8094 = vmatpush1.bf16.msra.mxu0 %v7362
        %8095 = vmatprep.subr.bf16.mxu0 0
        %8096 = vmatpush1.bf16.msra.mxu0 0
        %8097 = vmatprep.subr.bf16.mxu0 0
        %8098 = vmatpush1.bf16.msra.mxu0 0
        %8099 = vmatprep.subr.bf16.mxu0 0
        %8100 = vmatpush1.bf16.msra.mxu0 0
        %8101 = vmatprep.subr.bf16.mxu0 0
        %8102 = vmatpush1.bf16.msra.mxu0 0
        %8103 = vmatprep.subr.bf16.mxu0 0
        %8104 = vmatpush1.bf16.msra.mxu0 0
        %8105 = vmatprep.subr.bf16.mxu0 0
        %8106 = vmatpush1.bf16.msra.mxu0 0
        %8107 = vmatprep.subr.bf16.mxu0 0
        %8108 = vmatpush1.bf16.msra.mxu0 0
        %8109 = vmatprep.subr.bf16.mxu0 0
        %8110 = vmatpush1.bf16.msra.mxu0 0
        %8111 = vmatprep.mubr.bf16.mxu0 0
        %8112 = vmatmul.mubr.bf16.gmra.mrb[0].mxu0 %v6699
        %v8113 = vpop.f32.mrb[0].mxu0
        %v8114 = vadd.f32 %v7953, %v8113
        %v8115 = vpop.f32.mrb[0].mxu0
        %v8116 = vpop.f32.mrb[0].mxu0
        %v8117 = vadd.f32 %v7956, %v8116
        %v8118 = vpop.f32.mrb[0].mxu0
        %8119 = vmatprep.mubr.bf16.mxu0 0
        %8120 = vmatmul.mubr.bf16.gmra.mrb[0].mxu0 %v6700
        %v8121 = vpop.f32.mrb[0].mxu0
        %v8122 = vadd.f32 %v7961, %v8121
        %v8123 = vpop.f32.mrb[0].mxu0
        %v8124 = vpop.f32.mrb[0].mxu0
        %v8125 = vadd.f32 %v7964, %v8124
        %v8126 = vpop.f32.mrb[0].mxu0
        %8127 = vmatprep.mubr.bf16.mxu0 0
        %8128 = vmatmul.mubr.bf16.gmra.mrb[0].mxu0 %v6701
        %v8129 = vpop.f32.mrb[0].mxu0
        %v8130 = vadd.f32 %v7969, %v8129
        %v8131 = vpop.f32.mrb[0].mxu0
        %v8132 = vpop.f32.mrb[0].mxu0
        %v8133 = vadd.f32 %v7972, %v8132
        %v8134 = vpop.f32.mrb[0].mxu0
        %8135 = vmatprep.mubr.bf16.mxu0 0
        %8136 = vmatmul.mubr.bf16.gmra.mrb[0].mxu0 %v6702
        %v8137 = vpop.f32.mrb[0].mxu0
        %v8138 = vadd.f32 %v7977, %v8137
        %v8139 = vpop.f32.mrb[0].mxu0
        %v8140 = vpop.f32.mrb[0].mxu0
        %v8141 = vadd.f32 %v7980, %v8140
        %v8142 = vpop.f32.mrb[0].mxu0
        %8143 = vmatprep.mubr.bf16.mxu0 0
        %8144 = vmatmul.mubr.bf16.gmra.mrb[0].mxu0 %v6703
        %v8145 = vpop.f32.mrb[0].mxu0
        %v8146 = vadd.f32 %v7985, %v8145
        %v8147 = vpop.f32.mrb[0].mxu0
        %v8148 = vpop.f32.mrb[0].mxu0
        %v8149 = vadd.f32 %v7988, %v8148
        %v8150 = vpop.f32.mrb[0].mxu0
        %8151 = vmatprep.mubr.bf16.mxu0 0
        %8152 = vmatmul.mubr.bf16.gmra.mrb[0].mxu0 %v6704
        %v8153 = vpop.f32.mrb[0].mxu0
        %v8154 = vadd.f32 %v7993, %v8153
        %v8155 = vpop.f32.mrb[0].mxu0
        %v8156 = vpop.f32.mrb[0].mxu0
        %v8157 = vadd.f32 %v7996, %v8156
        %v8158 = vpop.f32.mrb[0].mxu0
        %8159 = vmatprep.mubr.bf16.mxu0 0
        %8160 = vmatmul.mubr.bf16.gmra.mrb[0].mxu0 %v6705
        %v8161 = vpop.f32.mrb[0].mxu0
        %v8162 = vadd.f32 %v8001, %v8161
        %v8163 = vpop.f32.mrb[0].mxu0
        %v8164 = vpop.f32.mrb[0].mxu0
        %v8165 = vadd.f32 %v8004, %v8164
        %v8166 = vpop.f32.mrb[0].mxu0
        %8167 = vmatprep.mubr.bf16.mxu0 0
        %8168 = vmatmul.mubr.bf16.gmra.mrb[0].mxu0 %v6706
        %v8169 = vpop.f32.mrb[0].mxu0
        %v8170 = vadd.f32 %v8009, %v8169
        %v8171 = vpop.f32.mrb[0].mxu0
        %v8172 = vpop.f32.mrb[0].mxu0
        %v8173 = vadd.f32 %v8012, %v8172
        %v8174 = vpop.f32.mrb[0].mxu0
        %8175 = vmatprep.mubr.bf16.mxu0 0
        %8176 = vmatmul.mubr.bf16.gmra.mrb[0].mxu0 %v6707
        %v8177 = vpop.f32.mrb[0].mxu0
        %v8178 = vadd.f32 %v8017, %v8177
        %v8179 = vpop.f32.mrb[0].mxu0
        %v8180 = vpop.f32.mrb[0].mxu0
        %v8181 = vadd.f32 %v8020, %v8180
        %v8182 = vpop.f32.mrb[0].mxu0
        %8183 = vmatprep.mubr.bf16.mxu0 0
        %8184 = vmatmul.mubr.bf16.gmra.mrb[0].mxu0 %v6708
        %v8185 = vpop.f32.mrb[0].mxu0
        %v8186 = vadd.f32 %v8025, %v8185
        %v8187 = vpop.f32.mrb[0].mxu0
        %v8188 = vpop.f32.mrb[0].mxu0
        %v8189 = vadd.f32 %v8028, %v8188
        %v8190 = vpop.f32.mrb[0].mxu0
        %8191 = vmatprep.mubr.bf16.mxu0 0
        %8192 = vmatmul.mubr.bf16.gmra.mrb[0].mxu0 %v6709
        %v8193 = vpop.f32.mrb[0].mxu0
        %v8194 = vadd.f32 %v8033, %v8193
        %v8195 = vpop.f32.mrb[0].mxu0
        %v8196 = vpop.f32.mrb[0].mxu0
        %v8197 = vadd.f32 %v8036, %v8196
        %v8198 = vpop.f32.mrb[0].mxu0
        %8199 = vmatprep.mubr.bf16.mxu0 0
        %8200 = vmatmul.mubr.bf16.gmra.mrb[0].mxu0 %v6710
        %v8201 = vpop.f32.mrb[0].mxu0
        %v8202 = vadd.f32 %v8041, %v8201
        %v8203 = vpop.f32.mrb[0].mxu0
        %v8204 = vpop.f32.mrb[0].mxu0
        %v8205 = vadd.f32 %v8044, %v8204
        %v8206 = vpop.f32.mrb[0].mxu0
        %8207 = vmatprep.mubr.bf16.mxu0 0
        %8208 = vmatmul.mubr.bf16.gmra.mrb[0].mxu0 %v6711
        %v8209 = vpop.f32.mrb[0].mxu0
        %v8210 = vadd.f32 %v8049, %v8209
        %v8211 = vpop.f32.mrb[0].mxu0
        %v8212 = vpop.f32.mrb[0].mxu0
        %v8213 = vadd.f32 %v8052, %v8212
        %v8214 = vpop.f32.mrb[0].mxu0
        %8215 = vmatprep.mubr.bf16.mxu0 0
        %8216 = vmatmul.mubr.bf16.gmra.mrb[0].mxu0 %v6712
        %v8217 = vpop.f32.mrb[0].mxu0
        %v8218 = vadd.f32 %v8057, %v8217
        %v8219 = vpop.f32.mrb[0].mxu0
        %v8220 = vpop.f32.mrb[0].mxu0
        %v8221 = vadd.f32 %v8060, %v8220
        %v8222 = vpop.f32.mrb[0].mxu0
        %8223 = vmatprep.mubr.bf16.mxu0 0
        %8224 = vmatmul.mubr.bf16.gmra.mrb[0].mxu0 %v6713
        %v8225 = vpop.f32.mrb[0].mxu0
        %v8226 = vadd.f32 %v8065, %v8225
        %v8227 = vpop.f32.mrb[0].mxu0
        %v8228 = vpop.f32.mrb[0].mxu0
        %v8229 = vadd.f32 %v8068, %v8228
        %v8230 = vpop.f32.mrb[0].mxu0
        %8231 = vmatprep.mubr.bf16.mxu0 0
        %8232 = vmatmul.mubr.bf16.gmra.mrb[0].mxu0 %v6714
        %v8233 = vpop.f32.mrb[0].mxu0
        %v8234 = vadd.f32 %v8073, %v8233
        %v8235 = vpop.f32.mrb[0].mxu0
        %v8236 = vpop.f32.mrb[0].mxu0
        %v8237 = vadd.f32 %v8076, %v8236
        %v8238 = vpop.f32.mrb[0].mxu0
        %8239 = vdwg.mxu0
        %8240 = vmatprep.subr.bf16.mxu0 0
        %8241 = vmatpush1.bf16.msra.mxu0 %v7291
        %8242 = vmatprep.subr.bf16.mxu0 0
        %8243 = vmatpush1.bf16.msra.mxu0 %v7292
        %8244 = vmatprep.subr.bf16.mxu0 0
        %8245 = vmatpush1.bf16.msra.mxu0 %v7293
        %8246 = vmatprep.subr.bf16.mxu0 0
        %8247 = vmatpush1.bf16.msra.mxu0 %v7294
        %8248 = vmatprep.subr.bf16.mxu0 0
        %8249 = vmatpush1.bf16.msra.mxu0 %v7295
        %8250 = vmatprep.subr.bf16.mxu0 0
        %8251 = vmatpush1.bf16.msra.mxu0 %v7296
        %8252 = vmatprep.subr.bf16.mxu0 0
        %8253 = vmatpush1.bf16.msra.mxu0 %v7297
        %8254 = vmatprep.subr.bf16.mxu0 0
        %8255 = vmatpush1.bf16.msra.mxu0 %v7298
        %8256 = vmatprep.subr.bf16.mxu0 0
        %8257 = vmatpush1.bf16.msra.mxu0 %v7299
        %8258 = vmatprep.subr.bf16.mxu0 0
        %8259 = vmatpush1.bf16.msra.mxu0 %v7300
        %8260 = vmatprep.subr.bf16.mxu0 0
        %8261 = vmatpush1.bf16.msra.mxu0 %v7301
        %8262 = vmatprep.subr.bf16.mxu0 0
        %8263 = vmatpush1.bf16.msra.mxu0 %v7302
        %8264 = vmatprep.subr.bf16.mxu0 0
        %8265 = vmatpush1.bf16.msra.mxu0 %v7303
        %8266 = vmatprep.subr.bf16.mxu0 0
        %8267 = vmatpush1.bf16.msra.mxu0 %v7304
        %8268 = vmatprep.subr.bf16.mxu0 0
        %8269 = vmatpush1.bf16.msra.mxu0 %v7305
        %8270 = vmatprep.subr.bf16.mxu0 0
        %8271 = vmatpush1.bf16.msra.mxu0 %v7306
        %8272 = vmatprep.mubr.bf16.mxu0 %v5923
        %8273 = vmatmul.mubr.bf16.gmra.mrb[0].mxu0 %v5795
        %v8274 = vpop.f32.mrb[0].mxu0
        %v8275 = vadd.f32 %v8114, %v8274
        %v8276 = vpop.f32.mrb[0].mxu0
        %v8277 = vpop.f32.mrb[0].mxu0
        %v8278 = vadd.f32 %v8117, %v8277
        %v8279 = vpop.f32.mrb[0].mxu0
        %8280 = vmatprep.mubr.bf16.mxu0 %v5924
        %8281 = vmatmul.mubr.bf16.gmra.mrb[0].mxu0 %v5796
        %v8282 = vpop.f32.mrb[0].mxu0
        %v8283 = vadd.f32 %v8122, %v8282
        %v8284 = vpop.f32.mrb[0].mxu0
        %v8285 = vpop.f32.mrb[0].mxu0
        %v8286 = vadd.f32 %v8125, %v8285
        %v8287 = vpop.f32.mrb[0].mxu0
        %8288 = vmatprep.mubr.bf16.mxu0 %v5925
        %8289 = vmatmul.mubr.bf16.gmra.mrb[0].mxu0 %v5797
        %v8290 = vpop.f32.mrb[0].mxu0
        %v8291 = vadd.f32 %v8130, %v8290
        %v8292 = vpop.f32.mrb[0].mxu0
        %v8293 = vpop.f32.mrb[0].mxu0
        %v8294 = vadd.f32 %v8133, %v8293
        %v8295 = vpop.f32.mrb[0].mxu0
        %8296 = vmatprep.mubr.bf16.mxu0 %v5926
        %8297 = vmatmul.mubr.bf16.gmra.mrb[0].mxu0 %v5798
        %v8298 = vpop.f32.mrb[0].mxu0
        %v8299 = vadd.f32 %v8138, %v8298
        %v8300 = vpop.f32.mrb[0].mxu0
        %v8301 = vpop.f32.mrb[0].mxu0
        %v8302 = vadd.f32 %v8141, %v8301
        %v8303 = vpop.f32.mrb[0].mxu0
        %8304 = vmatprep.mubr.bf16.mxu0 %v5927
        %8305 = vmatmul.mubr.bf16.gmra.mrb[0].mxu0 %v5799
        %v8306 = vpop.f32.mrb[0].mxu0
        %v8307 = vadd.f32 %v8146, %v8306
        %v8308 = vpop.f32.mrb[0].mxu0
        %v8309 = vpop.f32.mrb[0].mxu0
        %v8310 = vadd.f32 %v8149, %v8309
        %v8311 = vpop.f32.mrb[0].mxu0
        %8312 = vmatprep.mubr.bf16.mxu0 %v5928
        %8313 = vmatmul.mubr.bf16.gmra.mrb[0].mxu0 %v5800
        %v8314 = vpop.f32.mrb[0].mxu0
        %v8315 = vadd.f32 %v8154, %v8314
        %v8316 = vpop.f32.mrb[0].mxu0
        %v8317 = vpop.f32.mrb[0].mxu0
        %v8318 = vadd.f32 %v8157, %v8317
        %v8319 = vpop.f32.mrb[0].mxu0
        %8320 = vmatprep.mubr.bf16.mxu0 %v5929
        %8321 = vmatmul.mubr.bf16.gmra.mrb[0].mxu0 %v5801
        %v8322 = vpop.f32.mrb[0].mxu0
        %v8323 = vadd.f32 %v8162, %v8322
        %v8324 = vpop.f32.mrb[0].mxu0
        %v8325 = vpop.f32.mrb[0].mxu0
        %v8326 = vadd.f32 %v8165, %v8325
        %v8327 = vpop.f32.mrb[0].mxu0
        %8328 = vmatprep.mubr.bf16.mxu0 %v5930
        %8329 = vmatmul.mubr.bf16.gmra.mrb[0].mxu0 %v5802
        %v8330 = vpop.f32.mrb[0].mxu0
        %v8331 = vadd.f32 %v8170, %v8330
        %v8332 = vpop.f32.mrb[0].mxu0
        %v8333 = vpop.f32.mrb[0].mxu0
        %v8334 = vadd.f32 %v8173, %v8333
        %v8335 = vpop.f32.mrb[0].mxu0
        %8336 = vmatprep.mubr.bf16.mxu0 %v5931
        %8337 = vmatmul.mubr.bf16.gmra.mrb[0].mxu0 %v5803
        %v8338 = vpop.f32.mrb[0].mxu0
        %v8339 = vadd.f32 %v8178, %v8338
        %v8340 = vpop.f32.mrb[0].mxu0
        %v8341 = vpop.f32.mrb[0].mxu0
        %v8342 = vadd.f32 %v8181, %v8341
        %v8343 = vpop.f32.mrb[0].mxu0
        %8344 = vmatprep.mubr.bf16.mxu0 %v5932
        %8345 = vmatmul.mubr.bf16.gmra.mrb[0].mxu0 %v5804
        %v8346 = vpop.f32.mrb[0].mxu0
        %v8347 = vadd.f32 %v8186, %v8346
        %v8348 = vpop.f32.mrb[0].mxu0
        %v8349 = vpop.f32.mrb[0].mxu0
        %v8350 = vadd.f32 %v8189, %v8349
        %v8351 = vpop.f32.mrb[0].mxu0
        %8352 = vmatprep.mubr.bf16.mxu0 %v5933
        %8353 = vmatmul.mubr.bf16.gmra.mrb[0].mxu0 %v5805
        %v8354 = vpop.f32.mrb[0].mxu0
        %v8355 = vadd.f32 %v8194, %v8354
        %v8356 = vpop.f32.mrb[0].mxu0
        %v8357 = vpop.f32.mrb[0].mxu0
        %v8358 = vadd.f32 %v8197, %v8357
        %v8359 = vpop.f32.mrb[0].mxu0
        %8360 = vmatprep.mubr.bf16.mxu0 %v5934
        %8361 = vmatmul.mubr.bf16.gmra.mrb[0].mxu0 %v5806
        %v8362 = vpop.f32.mrb[0].mxu0
        %v8363 = vadd.f32 %v8202, %v8362
        %v8364 = vpop.f32.mrb[0].mxu0
        %v8365 = vpop.f32.mrb[0].mxu0
        %v8366 = vadd.f32 %v8205, %v8365
        %v8367 = vpop.f32.mrb[0].mxu0
        %8368 = vmatprep.mubr.bf16.mxu0 %v5935
        %8369 = vmatmul.mubr.bf16.gmra.mrb[0].mxu0 %v5807
        %v8370 = vpop.f32.mrb[0].mxu0
        %v8371 = vadd.f32 %v8210, %v8370
        %v8372 = vpop.f32.mrb[0].mxu0
        %v8373 = vpop.f32.mrb[0].mxu0
        %v8374 = vadd.f32 %v8213, %v8373
        %v8375 = vpop.f32.mrb[0].mxu0
        %8376 = vmatprep.mubr.bf16.mxu0 %v5936
        %8377 = vmatmul.mubr.bf16.gmra.mrb[0].mxu0 %v5808
        %v8378 = vpop.f32.mrb[0].mxu0
        %v8379 = vadd.f32 %v8218, %v8378
        %v8380 = vpop.f32.mrb[0].mxu0
        %v8381 = vpop.f32.mrb[0].mxu0
        %v8382 = vadd.f32 %v8221, %v8381
        %v8383 = vpop.f32.mrb[0].mxu0
        %8384 = vmatprep.mubr.bf16.mxu0 %v5937
        %8385 = vmatmul.mubr.bf16.gmra.mrb[0].mxu0 %v5809
        %v8386 = vpop.f32.mrb[0].mxu0
        %v8387 = vadd.f32 %v8226, %v8386
        %v8388 = vpop.f32.mrb[0].mxu0
        %v8389 = vpop.f32.mrb[0].mxu0
        %v8390 = vadd.f32 %v8229, %v8389
        %v8391 = vpop.f32.mrb[0].mxu0
        %8392 = vmatprep.mubr.bf16.mxu0 %v5938
        %8393 = vmatmul.mubr.bf16.gmra.mrb[0].mxu0 %v5810
        %v8394 = vpop.f32.mrb[0].mxu0
        %v8395 = vadd.f32 %v8234, %v8394
        %v8396 = vpop.f32.mrb[0].mxu0
        %v8397 = vpop.f32.mrb[0].mxu0
        %v8398 = vadd.f32 %v8237, %v8397
        %v8399 = vpop.f32.mrb[0].mxu0
        %8400 = vdwg.mxu0
        %8401 = vmatprep.subr.bf16.mxu0 0
        %8402 = vmatpush1.bf16.msra.mxu0 %v7307
        %8403 = vmatprep.subr.bf16.mxu0 0
        %8404 = vmatpush1.bf16.msra.mxu0 %v7308
        %8405 = vmatprep.subr.bf16.mxu0 0
        %8406 = vmatpush1.bf16.msra.mxu0 %v7309
        %8407 = vmatprep.subr.bf16.mxu0 0
        %8408 = vmatpush1.bf16.msra.mxu0 %v7310
        %8409 = vmatprep.subr.bf16.mxu0 0
        %8410 = vmatpush1.bf16.msra.mxu0 %v7311
        %8411 = vmatprep.subr.bf16.mxu0 0
        %8412 = vmatpush1.bf16.msra.mxu0 %v7312
        %8413 = vmatprep.subr.bf16.mxu0 0
        %8414 = vmatpush1.bf16.msra.mxu0 %v7313
        %8415 = vmatprep.subr.bf16.mxu0 0
        %8416 = vmatpush1.bf16.msra.mxu0 %v7314
        %8417 = vmatprep.subr.bf16.mxu0 0
        %8418 = vmatpush1.bf16.msra.mxu0 %v7315
        %8419 = vmatprep.subr.bf16.mxu0 0
        %8420 = vmatpush1.bf16.msra.mxu0 %v7316
        %8421 = vmatprep.subr.bf16.mxu0 0
        %8422 = vmatpush1.bf16.msra.mxu0 %v7317
        %8423 = vmatprep.subr.bf16.mxu0 0
        %8424 = vmatpush1.bf16.msra.mxu0 %v7318
        %8425 = vmatprep.subr.bf16.mxu0 0
        %8426 = vmatpush1.bf16.msra.mxu0 %v7319
        %8427 = vmatprep.subr.bf16.mxu0 0
        %8428 = vmatpush1.bf16.msra.mxu0 %v7320
        %8429 = vmatprep.subr.bf16.mxu0 0
        %8430 = vmatpush1.bf16.msra.mxu0 %v7321
        %8431 = vmatprep.subr.bf16.mxu0 0
        %8432 = vmatpush1.bf16.msra.mxu0 %v7322
        %8433 = vmatprep.mubr.bf16.mxu0 %v6213
        %8434 = vmatmul.mubr.bf16.gmra.mrb[0].mxu0 %v6083
        %v8435 = vpop.f32.mrb[0].mxu0
        %v8436 = vadd.f32 %v8275, %v8435
        %v8437 = vpop.f32.mrb[0].mxu0
        %v8438 = vpop.f32.mrb[0].mxu0
        %v8439 = vadd.f32 %v8278, %v8438
        %v8440 = vpop.f32.mrb[0].mxu0
        %8441 = vmatprep.mubr.bf16.mxu0 %v6214
        %8442 = vmatmul.mubr.bf16.gmra.mrb[0].mxu0 %v6084
        %v8443 = vpop.f32.mrb[0].mxu0
        %v8444 = vadd.f32 %v8283, %v8443
        %v8445 = vpop.f32.mrb[0].mxu0
        %v8446 = vpop.f32.mrb[0].mxu0
        %v8447 = vadd.f32 %v8286, %v8446
        %v8448 = vpop.f32.mrb[0].mxu0
        %8449 = vmatprep.mubr.bf16.mxu0 %v6215
        %8450 = vmatmul.mubr.bf16.gmra.mrb[0].mxu0 %v6085
        %v8451 = vpop.f32.mrb[0].mxu0
        %v8452 = vadd.f32 %v8291, %v8451
        %v8453 = vpop.f32.mrb[0].mxu0
        %v8454 = vpop.f32.mrb[0].mxu0
        %v8455 = vadd.f32 %v8294, %v8454
        %v8456 = vpop.f32.mrb[0].mxu0
        %8457 = vmatprep.mubr.bf16.mxu0 %v6216
        %8458 = vmatmul.mubr.bf16.gmra.mrb[0].mxu0 %v6086
        %v8459 = vpop.f32.mrb[0].mxu0
        %v8460 = vadd.f32 %v8299, %v8459
        %v8461 = vpop.f32.mrb[0].mxu0
        %v8462 = vpop.f32.mrb[0].mxu0
        %v8463 = vadd.f32 %v8302, %v8462
        %v8464 = vpop.f32.mrb[0].mxu0
        %8465 = vmatprep.mubr.bf16.mxu0 %v6217
        %8466 = vmatmul.mubr.bf16.gmra.mrb[0].mxu0 %v6087
        %v8467 = vpop.f32.mrb[0].mxu0
        %v8468 = vadd.f32 %v8307, %v8467
        %v8469 = vpop.f32.mrb[0].mxu0
        %v8470 = vpop.f32.mrb[0].mxu0
        %v8471 = vadd.f32 %v8310, %v8470
        %v8472 = vpop.f32.mrb[0].mxu0
        %8473 = vmatprep.mubr.bf16.mxu0 %v6218
        %8474 = vmatmul.mubr.bf16.gmra.mrb[0].mxu0 %v6088
        %v8475 = vpop.f32.mrb[0].mxu0
        %v8476 = vadd.f32 %v8315, %v8475
        %v8477 = vpop.f32.mrb[0].mxu0
        %v8478 = vpop.f32.mrb[0].mxu0
        %v8479 = vadd.f32 %v8318, %v8478
        %v8480 = vpop.f32.mrb[0].mxu0
        %8481 = vmatprep.mubr.bf16.mxu0 %v6219
        %8482 = vmatmul.mubr.bf16.gmra.mrb[0].mxu0 %v6089
        %v8483 = vpop.f32.mrb[0].mxu0
        %v8484 = vadd.f32 %v8323, %v8483
        %v8485 = vpop.f32.mrb[0].mxu0
        %v8486 = vpop.f32.mrb[0].mxu0
        %v8487 = vadd.f32 %v8326, %v8486
        %v8488 = vpop.f32.mrb[0].mxu0
        %8489 = vmatprep.mubr.bf16.mxu0 %v6220
        %8490 = vmatmul.mubr.bf16.gmra.mrb[0].mxu0 %v6090
        %v8491 = vpop.f32.mrb[0].mxu0
        %v8492 = vadd.f32 %v8331, %v8491
        %v8493 = vpop.f32.mrb[0].mxu0
        %v8494 = vpop.f32.mrb[0].mxu0
        %v8495 = vadd.f32 %v8334, %v8494
        %v8496 = vpop.f32.mrb[0].mxu0
        %8497 = vmatprep.mubr.bf16.mxu0 %v6221
        %8498 = vmatmul.mubr.bf16.gmra.mrb[0].mxu0 %v6091
        %v8499 = vpop.f32.mrb[0].mxu0
        %v8500 = vadd.f32 %v8339, %v8499
        %v8501 = vpop.f32.mrb[0].mxu0
        %v8502 = vpop.f32.mrb[0].mxu0
        %v8503 = vadd.f32 %v8342, %v8502
        %v8504 = vpop.f32.mrb[0].mxu0
        %8505 = vmatprep.mubr.bf16.mxu0 %v6222
        %8506 = vmatmul.mubr.bf16.gmra.mrb[0].mxu0 %v6092
        %v8507 = vpop.f32.mrb[0].mxu0
        %v8508 = vadd.f32 %v8347, %v8507
        %v8509 = vpop.f32.mrb[0].mxu0
        %v8510 = vpop.f32.mrb[0].mxu0
        %v8511 = vadd.f32 %v8350, %v8510
        %v8512 = vpop.f32.mrb[0].mxu0
        %8513 = vmatprep.mubr.bf16.mxu0 %v6223
        %8514 = vmatmul.mubr.bf16.gmra.mrb[0].mxu0 %v6093
        %v8515 = vpop.f32.mrb[0].mxu0
        %v8516 = vadd.f32 %v8355, %v8515
        %v8517 = vpop.f32.mrb[0].mxu0
        %v8518 = vpop.f32.mrb[0].mxu0
        %v8519 = vadd.f32 %v8358, %v8518
        %v8520 = vpop.f32.mrb[0].mxu0
        %8521 = vmatprep.mubr.bf16.mxu0 %v6224
        %8522 = vmatmul.mubr.bf16.gmra.mrb[0].mxu0 %v6094
        %v8523 = vpop.f32.mrb[0].mxu0
        %v8524 = vadd.f32 %v8363, %v8523
        %v8525 = vpop.f32.mrb[0].mxu0
        %v8526 = vpop.f32.mrb[0].mxu0
        %v8527 = vadd.f32 %v8366, %v8526
        %v8528 = vpop.f32.mrb[0].mxu0
        %8529 = vmatprep.mubr.bf16.mxu0 %v6225
        %8530 = vmatmul.mubr.bf16.gmra.mrb[0].mxu0 %v6095
        %v8531 = vpop.f32.mrb[0].mxu0
        %v8532 = vadd.f32 %v8371, %v8531
        %v8533 = vpop.f32.mrb[0].mxu0
        %v8534 = vpop.f32.mrb[0].mxu0
        %v8535 = vadd.f32 %v8374, %v8534
        %v8536 = vpop.f32.mrb[0].mxu0
        %8537 = vmatprep.mubr.bf16.mxu0 %v6226
        %8538 = vmatmul.mubr.bf16.gmra.mrb[0].mxu0 %v6096
        %v8539 = vpop.f32.mrb[0].mxu0
        %v8540 = vadd.f32 %v8379, %v8539
        %v8541 = vpop.f32.mrb[0].mxu0
        %v8542 = vpop.f32.mrb[0].mxu0
        %v8543 = vadd.f32 %v8382, %v8542
        %v8544 = vpop.f32.mrb[0].mxu0
        %8545 = vmatprep.mubr.bf16.mxu0 %v6227
        %8546 = vmatmul.mubr.bf16.gmra.mrb[0].mxu0 %v6097
        %v8547 = vpop.f32.mrb[0].mxu0
        %v8548 = vadd.f32 %v8387, %v8547
        %v8549 = vpop.f32.mrb[0].mxu0
        %v8550 = vpop.f32.mrb[0].mxu0
        %v8551 = vadd.f32 %v8390, %v8550
        %v8552 = vpop.f32.mrb[0].mxu0
        %8553 = vmatprep.mubr.bf16.mxu0 %v6228
        %8554 = vmatmul.mubr.bf16.gmra.mrb[0].mxu0 %v6098
        %v8555 = vpop.f32.mrb[0].mxu0
        %v8556 = vadd.f32 %v8395, %v8555
        %v8557 = vpop.f32.mrb[0].mxu0
        %v8558 = vpop.f32.mrb[0].mxu0
        %v8559 = vadd.f32 %v8398, %v8558
        %v8560 = vpop.f32.mrb[0].mxu0
        %8561 = vdwg.mxu0
        %8562 = vmatprep.subr.bf16.mxu0 0
        %8563 = vmatpush1.bf16.msra.mxu0 %v7323
        %8564 = vmatprep.subr.bf16.mxu0 0
        %8565 = vmatpush1.bf16.msra.mxu0 %v7324
        %8566 = vmatprep.subr.bf16.mxu0 0
        %8567 = vmatpush1.bf16.msra.mxu0 %v7325
        %8568 = vmatprep.subr.bf16.mxu0 0
        %8569 = vmatpush1.bf16.msra.mxu0 %v7326
        %8570 = vmatprep.subr.bf16.mxu0 0
        %8571 = vmatpush1.bf16.msra.mxu0 %v7327
        %8572 = vmatprep.subr.bf16.mxu0 0
        %8573 = vmatpush1.bf16.msra.mxu0 %v7328
        %8574 = vmatprep.subr.bf16.mxu0 0
        %8575 = vmatpush1.bf16.msra.mxu0 %v7329
        %8576 = vmatprep.subr.bf16.mxu0 0
        %8577 = vmatpush1.bf16.msra.mxu0 %v7330
        %8578 = vmatprep.subr.bf16.mxu0 0
        %8579 = vmatpush1.bf16.msra.mxu0 %v7331
        %8580 = vmatprep.subr.bf16.mxu0 0
        %8581 = vmatpush1.bf16.msra.mxu0 %v7332
        %8582 = vmatprep.subr.bf16.mxu0 0
        %8583 = vmatpush1.bf16.msra.mxu0 %v7333
        %8584 = vmatprep.subr.bf16.mxu0 0
        %8585 = vmatpush1.bf16.msra.mxu0 %v7334
        %8586 = vmatprep.subr.bf16.mxu0 0
        %8587 = vmatpush1.bf16.msra.mxu0 %v7335
        %8588 = vmatprep.subr.bf16.mxu0 0
        %8589 = vmatpush1.bf16.msra.mxu0 %v7336
        %8590 = vmatprep.subr.bf16.mxu0 0
        %8591 = vmatpush1.bf16.msra.mxu0 %v7337
        %8592 = vmatprep.subr.bf16.mxu0 0
        %8593 = vmatpush1.bf16.msra.mxu0 %v7338
        %8594 = vmatprep.mubr.bf16.mxu0 %v6351
        %8595 = vmatmul.mubr.bf16.gmra.mrb[0].mxu0 %v5924
        %v8596 = vpop.f32.mrb[0].mxu0
        %v8597 = vadd.f32 %v8436, %v8596
        %v8598 = vpop.f32.mrb[0].mxu0
        %v8599 = vpop.f32.mrb[0].mxu0
        %v8600 = vadd.f32 %v8439, %v8599
        %v8601 = vpop.f32.mrb[0].mxu0
        %8602 = vmatprep.mubr.bf16.mxu0 %v6352
        %8603 = vmatmul.mubr.bf16.gmra.mrb[0].mxu0 %v5925
        %v8604 = vpop.f32.mrb[0].mxu0
        %v8605 = vadd.f32 %v8444, %v8604
        %v8606 = vpop.f32.mrb[0].mxu0
        %v8607 = vpop.f32.mrb[0].mxu0
        %v8608 = vadd.f32 %v8447, %v8607
        %v8609 = vpop.f32.mrb[0].mxu0
        %8610 = vmatprep.mubr.bf16.mxu0 %v6353
        %8611 = vmatmul.mubr.bf16.gmra.mrb[0].mxu0 %v5926
        %v8612 = vpop.f32.mrb[0].mxu0
        %v8613 = vadd.f32 %v8452, %v8612
        %v8614 = vpop.f32.mrb[0].mxu0
        %v8615 = vpop.f32.mrb[0].mxu0
        %v8616 = vadd.f32 %v8455, %v8615
        %v8617 = vpop.f32.mrb[0].mxu0
        %8618 = vmatprep.mubr.bf16.mxu0 %v6354
        %8619 = vmatmul.mubr.bf16.gmra.mrb[0].mxu0 %v5927
        %v8620 = vpop.f32.mrb[0].mxu0
        %v8621 = vadd.f32 %v8460, %v8620
        %v8622 = vpop.f32.mrb[0].mxu0
        %v8623 = vpop.f32.mrb[0].mxu0
        %v8624 = vadd.f32 %v8463, %v8623
        %v8625 = vpop.f32.mrb[0].mxu0
        %8626 = vmatprep.mubr.bf16.mxu0 %v6355
        %8627 = vmatmul.mubr.bf16.gmra.mrb[0].mxu0 %v5928
        %v8628 = vpop.f32.mrb[0].mxu0
        %v8629 = vadd.f32 %v8468, %v8628
        %v8630 = vpop.f32.mrb[0].mxu0
        %v8631 = vpop.f32.mrb[0].mxu0
        %v8632 = vadd.f32 %v8471, %v8631
        %v8633 = vpop.f32.mrb[0].mxu0
        %8634 = vmatprep.mubr.bf16.mxu0 %v6356
        %8635 = vmatmul.mubr.bf16.gmra.mrb[0].mxu0 %v5929
        %v8636 = vpop.f32.mrb[0].mxu0
        %v8637 = vadd.f32 %v8476, %v8636
        %v8638 = vpop.f32.mrb[0].mxu0
        %v8639 = vpop.f32.mrb[0].mxu0
        %v8640 = vadd.f32 %v8479, %v8639
        %v8641 = vpop.f32.mrb[0].mxu0
        %8642 = vmatprep.mubr.bf16.mxu0 %v6357
        %8643 = vmatmul.mubr.bf16.gmra.mrb[0].mxu0 %v5930
        %v8644 = vpop.f32.mrb[0].mxu0
        %v8645 = vadd.f32 %v8484, %v8644
        %v8646 = vpop.f32.mrb[0].mxu0
        %v8647 = vpop.f32.mrb[0].mxu0
        %v8648 = vadd.f32 %v8487, %v8647
        %v8649 = vpop.f32.mrb[0].mxu0
        %8650 = vmatprep.mubr.bf16.mxu0 %v6358
        %8651 = vmatmul.mubr.bf16.gmra.mrb[0].mxu0 %v5931
        %v8652 = vpop.f32.mrb[0].mxu0
        %v8653 = vadd.f32 %v8492, %v8652
        %v8654 = vpop.f32.mrb[0].mxu0
        %v8655 = vpop.f32.mrb[0].mxu0
        %v8656 = vadd.f32 %v8495, %v8655
        %v8657 = vpop.f32.mrb[0].mxu0
        %8658 = vmatprep.mubr.bf16.mxu0 %v6359
        %8659 = vmatmul.mubr.bf16.gmra.mrb[0].mxu0 %v5932
        %v8660 = vpop.f32.mrb[0].mxu0
        %v8661 = vadd.f32 %v8500, %v8660
        %v8662 = vpop.f32.mrb[0].mxu0
        %v8663 = vpop.f32.mrb[0].mxu0
        %v8664 = vadd.f32 %v8503, %v8663
        %v8665 = vpop.f32.mrb[0].mxu0
        %8666 = vmatprep.mubr.bf16.mxu0 %v6360
        %8667 = vmatmul.mubr.bf16.gmra.mrb[0].mxu0 %v5933
        %v8668 = vpop.f32.mrb[0].mxu0
        %v8669 = vadd.f32 %v8508, %v8668
        %v8670 = vpop.f32.mrb[0].mxu0
        %v8671 = vpop.f32.mrb[0].mxu0
        %v8672 = vadd.f32 %v8511, %v8671
        %v8673 = vpop.f32.mrb[0].mxu0
        %8674 = vmatprep.mubr.bf16.mxu0 %v6361
        %8675 = vmatmul.mubr.bf16.gmra.mrb[0].mxu0 %v5934
        %v8676 = vpop.f32.mrb[0].mxu0
        %v8677 = vadd.f32 %v8516, %v8676
        %v8678 = vpop.f32.mrb[0].mxu0
        %v8679 = vpop.f32.mrb[0].mxu0
        %v8680 = vadd.f32 %v8519, %v8679
        %v8681 = vpop.f32.mrb[0].mxu0
        %8682 = vmatprep.mubr.bf16.mxu0 %v6362
        %8683 = vmatmul.mubr.bf16.gmra.mrb[0].mxu0 %v5935
        %v8684 = vpop.f32.mrb[0].mxu0
        %v8685 = vadd.f32 %v8524, %v8684
        %v8686 = vpop.f32.mrb[0].mxu0
        %v8687 = vpop.f32.mrb[0].mxu0
        %v8688 = vadd.f32 %v8527, %v8687
        %v8689 = vpop.f32.mrb[0].mxu0
        %8690 = vmatprep.mubr.bf16.mxu0 %v6363
        %8691 = vmatmul.mubr.bf16.gmra.mrb[0].mxu0 %v5936
        %v8692 = vpop.f32.mrb[0].mxu0
        %v8693 = vadd.f32 %v8532, %v8692
        %v8694 = vpop.f32.mrb[0].mxu0
        %v8695 = vpop.f32.mrb[0].mxu0
        %v8696 = vadd.f32 %v8535, %v8695
        %v8697 = vpop.f32.mrb[0].mxu0
        %8698 = vmatprep.mubr.bf16.mxu0 %v6364
        %8699 = vmatmul.mubr.bf16.gmra.mrb[0].mxu0 %v5937
        %v8700 = vpop.f32.mrb[0].mxu0
        %v8701 = vadd.f32 %v8540, %v8700
        %v8702 = vpop.f32.mrb[0].mxu0
        %v8703 = vpop.f32.mrb[0].mxu0
        %v8704 = vadd.f32 %v8543, %v8703
        %v8705 = vpop.f32.mrb[0].mxu0
        %8706 = vmatprep.mubr.bf16.mxu0 %v6365
        %8707 = vmatmul.mubr.bf16.gmra.mrb[0].mxu0 %v5938
        %v8708 = vpop.f32.mrb[0].mxu0
        %v8709 = vadd.f32 %v8548, %v8708
        %v8710 = vpop.f32.mrb[0].mxu0
        %v8711 = vpop.f32.mrb[0].mxu0
        %v8712 = vadd.f32 %v8551, %v8711
        %v8713 = vpop.f32.mrb[0].mxu0
        %8714 = vmatprep.mubr.bf16.mxu0 %v6366
        %8715 = vmatmul.mubr.bf16.gmra.mrb[0].mxu0 %v6311
        %v8716 = vpop.f32.mrb[0].mxu0
        %v8717 = vadd.f32 %v8556, %v8716
        %v8718 = vpop.f32.mrb[0].mxu0
        %v8719 = vpop.f32.mrb[0].mxu0
        %v8720 = vadd.f32 %v8559, %v8719
        %v8721 = vpop.f32.mrb[0].mxu0
        %8722 = vdwg.mxu0
        %8723 = vmatprep.subr.bf16.mxu0 0
        %8724 = vmatpush1.bf16.msra.mxu0 %v7339
        %8725 = vmatprep.subr.bf16.mxu0 0
        %8726 = vmatpush1.bf16.msra.mxu0 %v7340
        %8727 = vmatprep.subr.bf16.mxu0 0
        %8728 = vmatpush1.bf16.msra.mxu0 %v7341
        %8729 = vmatprep.subr.bf16.mxu0 0
        %8730 = vmatpush1.bf16.msra.mxu0 %v7342
        %8731 = vmatprep.subr.bf16.mxu0 0
        %8732 = vmatpush1.bf16.msra.mxu0 %v7343
        %8733 = vmatprep.subr.bf16.mxu0 0
        %8734 = vmatpush1.bf16.msra.mxu0 %v7344
        %8735 = vmatprep.subr.bf16.mxu0 0
        %8736 = vmatpush1.bf16.msra.mxu0 %v7345
        %8737 = vmatprep.subr.bf16.mxu0 0
        %8738 = vmatpush1.bf16.msra.mxu0 %v7346
        %8739 = vmatprep.subr.bf16.mxu0 0
        %8740 = vmatpush1.bf16.msra.mxu0 %v7347
        %8741 = vmatprep.subr.bf16.mxu0 0
        %8742 = vmatpush1.bf16.msra.mxu0 %v7348
        %8743 = vmatprep.subr.bf16.mxu0 0
        %8744 = vmatpush1.bf16.msra.mxu0 %v7349
        %8745 = vmatprep.subr.bf16.mxu0 0
        %8746 = vmatpush1.bf16.msra.mxu0 %v7350
        %8747 = vmatprep.subr.bf16.mxu0 0
        %8748 = vmatpush1.bf16.msra.mxu0 %v7351
        %8749 = vmatprep.subr.bf16.mxu0 0
        %8750 = vmatpush1.bf16.msra.mxu0 %v7352
        %8751 = vmatprep.subr.bf16.mxu0 0
        %8752 = vmatpush1.bf16.msra.mxu0 %v7353
        %8753 = vmatprep.subr.bf16.mxu0 0
        %8754 = vmatpush1.bf16.msra.mxu0 %v7354
        %8755 = vmatprep.mubr.bf16.mxu0 %v5925
        %8756 = vmatmul.mubr.bf16.gmra.mrb[0].mxu0 %v6481
        %v8757 = vpop.f32.mrb[0].mxu0
        %v8758 = vadd.f32 %v8597, %v8757
        %v8759 = vpop.f32.mrb[0].mxu0
        %v8760 = vpop.f32.mrb[0].mxu0
        %v8761 = vadd.f32 %v8600, %v8760
        %v8762 = vpop.f32.mrb[0].mxu0
        %8763 = vmatprep.mubr.bf16.mxu0 %v5926
        %8764 = vmatmul.mubr.bf16.gmra.mrb[0].mxu0 %v6482
        %v8765 = vpop.f32.mrb[0].mxu0
        %v8766 = vadd.f32 %v8605, %v8765
        %v8767 = vpop.f32.mrb[0].mxu0
        %v8768 = vpop.f32.mrb[0].mxu0
        %v8769 = vadd.f32 %v8608, %v8768
        %v8770 = vpop.f32.mrb[0].mxu0
        %8771 = vmatprep.mubr.bf16.mxu0 %v5927
        %8772 = vmatmul.mubr.bf16.gmra.mrb[0].mxu0 %v6483
        %v8773 = vpop.f32.mrb[0].mxu0
        %v8774 = vadd.f32 %v8613, %v8773
        %v8775 = vpop.f32.mrb[0].mxu0
        %v8776 = vpop.f32.mrb[0].mxu0
        %v8777 = vadd.f32 %v8616, %v8776
        %v8778 = vpop.f32.mrb[0].mxu0
        %8779 = vmatprep.mubr.bf16.mxu0 %v5928
        %8780 = vmatmul.mubr.bf16.gmra.mrb[0].mxu0 %v6484
        %v8781 = vpop.f32.mrb[0].mxu0
        %v8782 = vadd.f32 %v8621, %v8781
        %v8783 = vpop.f32.mrb[0].mxu0
        %v8784 = vpop.f32.mrb[0].mxu0
        %v8785 = vadd.f32 %v8624, %v8784
        %v8786 = vpop.f32.mrb[0].mxu0
        %8787 = vmatprep.mubr.bf16.mxu0 %v5929
        %8788 = vmatmul.mubr.bf16.gmra.mrb[0].mxu0 %v6485
        %v8789 = vpop.f32.mrb[0].mxu0
        %v8790 = vadd.f32 %v8629, %v8789
        %v8791 = vpop.f32.mrb[0].mxu0
        %v8792 = vpop.f32.mrb[0].mxu0
        %v8793 = vadd.f32 %v8632, %v8792
        %v8794 = vpop.f32.mrb[0].mxu0
        %8795 = vmatprep.mubr.bf16.mxu0 %v5930
        %8796 = vmatmul.mubr.bf16.gmra.mrb[0].mxu0 %v6486
        %v8797 = vpop.f32.mrb[0].mxu0
        %v8798 = vadd.f32 %v8637, %v8797
        %v8799 = vpop.f32.mrb[0].mxu0
        %v8800 = vpop.f32.mrb[0].mxu0
        %v8801 = vadd.f32 %v8640, %v8800
        %v8802 = vpop.f32.mrb[0].mxu0
        %8803 = vmatprep.mubr.bf16.mxu0 %v5931
        %8804 = vmatmul.mubr.bf16.gmra.mrb[0].mxu0 %v6487
        %v8805 = vpop.f32.mrb[0].mxu0
        %v8806 = vadd.f32 %v8645, %v8805
        %v8807 = vpop.f32.mrb[0].mxu0
        %v8808 = vpop.f32.mrb[0].mxu0
        %v8809 = vadd.f32 %v8648, %v8808
        %v8810 = vpop.f32.mrb[0].mxu0
        %8811 = vmatprep.mubr.bf16.mxu0 %v5932
        %8812 = vmatmul.mubr.bf16.gmra.mrb[0].mxu0 %v6488
        %v8813 = vpop.f32.mrb[0].mxu0
        %v8814 = vadd.f32 %v8653, %v8813
        %v8815 = vpop.f32.mrb[0].mxu0
        %v8816 = vpop.f32.mrb[0].mxu0
        %v8817 = vadd.f32 %v8656, %v8816
        %v8818 = vpop.f32.mrb[0].mxu0
        %8819 = vmatprep.mubr.bf16.mxu0 %v5933
        %8820 = vmatmul.mubr.bf16.gmra.mrb[0].mxu0 %v6489
        %v8821 = vpop.f32.mrb[0].mxu0
        %v8822 = vadd.f32 %v8661, %v8821
        %v8823 = vpop.f32.mrb[0].mxu0
        %v8824 = vpop.f32.mrb[0].mxu0
        %v8825 = vadd.f32 %v8664, %v8824
        %v8826 = vpop.f32.mrb[0].mxu0
        %8827 = vmatprep.mubr.bf16.mxu0 %v5934
        %8828 = vmatmul.mubr.bf16.gmra.mrb[0].mxu0 %v6490
        %v8829 = vpop.f32.mrb[0].mxu0
        %v8830 = vadd.f32 %v8669, %v8829
        %v8831 = vpop.f32.mrb[0].mxu0
        %v8832 = vpop.f32.mrb[0].mxu0
        %v8833 = vadd.f32 %v8672, %v8832
        %v8834 = vpop.f32.mrb[0].mxu0
        %8835 = vmatprep.mubr.bf16.mxu0 %v5935
        %8836 = vmatmul.mubr.bf16.gmra.mrb[0].mxu0 %v6491
        %v8837 = vpop.f32.mrb[0].mxu0
        %v8838 = vadd.f32 %v8677, %v8837
        %v8839 = vpop.f32.mrb[0].mxu0
        %v8840 = vpop.f32.mrb[0].mxu0
        %v8841 = vadd.f32 %v8680, %v8840
        %v8842 = vpop.f32.mrb[0].mxu0
        %8843 = vmatprep.mubr.bf16.mxu0 %v5936
        %8844 = vmatmul.mubr.bf16.gmra.mrb[0].mxu0 %v6492
        %v8845 = vpop.f32.mrb[0].mxu0
        %v8846 = vadd.f32 %v8685, %v8845
        %v8847 = vpop.f32.mrb[0].mxu0
        %v8848 = vpop.f32.mrb[0].mxu0
        %v8849 = vadd.f32 %v8688, %v8848
        %v8850 = vpop.f32.mrb[0].mxu0
        %8851 = vmatprep.mubr.bf16.mxu0 %v5937
        %8852 = vmatmul.mubr.bf16.gmra.mrb[0].mxu0 %v6493
        %v8853 = vpop.f32.mrb[0].mxu0
        %v8854 = vadd.f32 %v8693, %v8853
        %v8855 = vpop.f32.mrb[0].mxu0
        %v8856 = vpop.f32.mrb[0].mxu0
        %v8857 = vadd.f32 %v8696, %v8856
        %v8858 = vpop.f32.mrb[0].mxu0
        %8859 = vmatprep.mubr.bf16.mxu0 %v5938
        %8860 = vmatmul.mubr.bf16.gmra.mrb[0].mxu0 %v6494
        %v8861 = vpop.f32.mrb[0].mxu0
        %v8862 = vadd.f32 %v8701, %v8861
        %v8863 = vpop.f32.mrb[0].mxu0
        %v8864 = vpop.f32.mrb[0].mxu0
        %v8865 = vadd.f32 %v8704, %v8864
        %v8866 = vpop.f32.mrb[0].mxu0
        %8867 = vmatprep.mubr.bf16.mxu0 %v6311
        %8868 = vmatmul.mubr.bf16.gmra.mrb[0].mxu0 %v6495
        %v8869 = vpop.f32.mrb[0].mxu0
        %v8870 = vadd.f32 %v8709, %v8869
        %v8871 = vpop.f32.mrb[0].mxu0
        %v8872 = vpop.f32.mrb[0].mxu0
        %v8873 = vadd.f32 %v8712, %v8872
        %v8874 = vpop.f32.mrb[0].mxu0
        %8875 = vmatprep.mubr.bf16.mxu0 %v6579
        %8876 = vmatmul.mubr.bf16.gmra.mrb[0].mxu0 %v6496
        %v8877 = vpop.f32.mrb[0].mxu0
        %v8878 = vadd.f32 %v8717, %v8877
        %v8879 = vpop.f32.mrb[0].mxu0
        %v8880 = vpop.f32.mrb[0].mxu0
        %v8881 = vadd.f32 %v8720, %v8880
        %v8882 = vpop.f32.mrb[0].mxu0
        %8883 = vdwg.mxu0
        %8884 = vmatprep.subr.bf16.mxu0 0
        %8885 = vmatpush1.bf16.msra.mxu0 %v7355
        %8886 = vmatprep.subr.bf16.mxu0 0
        %8887 = vmatpush1.bf16.msra.mxu0 %v7356
        %8888 = vmatprep.subr.bf16.mxu0 0
        %8889 = vmatpush1.bf16.msra.mxu0 %v7357
        %8890 = vmatprep.subr.bf16.mxu0 0
        %8891 = vmatpush1.bf16.msra.mxu0 %v7358
        %8892 = vmatprep.subr.bf16.mxu0 0
        %8893 = vmatpush1.bf16.msra.mxu0 %v7359
        %8894 = vmatprep.subr.bf16.mxu0 0
        %8895 = vmatpush1.bf16.msra.mxu0 %v7360
        %8896 = vmatprep.subr.bf16.mxu0 0
        %8897 = vmatpush1.bf16.msra.mxu0 %v7361
        %8898 = vmatprep.subr.bf16.mxu0 0
        %8899 = vmatpush1.bf16.msra.mxu0 %v7362
        %8900 = vmatprep.subr.bf16.mxu0 0
        %8901 = vmatpush1.bf16.msra.mxu0 0
        %8902 = vmatprep.subr.bf16.mxu0 0
        %8903 = vmatpush1.bf16.msra.mxu0 0
        %8904 = vmatprep.subr.bf16.mxu0 0
        %8905 = vmatpush1.bf16.msra.mxu0 0
        %8906 = vmatprep.subr.bf16.mxu0 0
        %8907 = vmatpush1.bf16.msra.mxu0 0
        %8908 = vmatprep.subr.bf16.mxu0 0
        %8909 = vmatpush1.bf16.msra.mxu0 0
        %8910 = vmatprep.subr.bf16.mxu0 0
        %8911 = vmatpush1.bf16.msra.mxu0 0
        %8912 = vmatprep.subr.bf16.mxu0 0
        %8913 = vmatpush1.bf16.msra.mxu0 0
        %8914 = vmatprep.subr.bf16.mxu0 0
        %8915 = vmatpush1.bf16.msra.mxu0 0
        %8916 = vmatprep.mubr.bf16.mxu0 0
        %8917 = vmatmul.mubr.bf16.gmra.mrb[0].mxu0 %v6619
        %v8918 = vpop.f32.mrb[0].mxu0
        %v8919 = vadd.f32 %v8758, %v8918
        %v8920 = vpop.f32.mrb[0].mxu0
        %v8921 = vpop.f32.mrb[0].mxu0
        %v8922 = vadd.f32 %v8761, %v8921
        %v8923 = vpop.f32.mrb[0].mxu0
        %8924 = vmatprep.mubr.bf16.mxu0 0
        %8925 = vmatmul.mubr.bf16.gmra.mrb[0].mxu0 %v6620
        %v8926 = vpop.f32.mrb[0].mxu0
        %v8927 = vadd.f32 %v8766, %v8926
        %v8928 = vpop.f32.mrb[0].mxu0
        %v8929 = vpop.f32.mrb[0].mxu0
        %v8930 = vadd.f32 %v8769, %v8929
        %v8931 = vpop.f32.mrb[0].mxu0
        %8932 = vmatprep.mubr.bf16.mxu0 0
        %8933 = vmatmul.mubr.bf16.gmra.mrb[0].mxu0 %v6621
        %v8934 = vpop.f32.mrb[0].mxu0
        %v8935 = vadd.f32 %v8774, %v8934
        %v8936 = vpop.f32.mrb[0].mxu0
        %v8937 = vpop.f32.mrb[0].mxu0
        %v8938 = vadd.f32 %v8777, %v8937
        %v8939 = vpop.f32.mrb[0].mxu0
        %8940 = vmatprep.mubr.bf16.mxu0 0
        %8941 = vmatmul.mubr.bf16.gmra.mrb[0].mxu0 %v6622
        %v8942 = vpop.f32.mrb[0].mxu0
        %v8943 = vadd.f32 %v8782, %v8942
        %v8944 = vpop.f32.mrb[0].mxu0
        %v8945 = vpop.f32.mrb[0].mxu0
        %v8946 = vadd.f32 %v8785, %v8945
        %v8947 = vpop.f32.mrb[0].mxu0
        %8948 = vmatprep.mubr.bf16.mxu0 0
        %8949 = vmatmul.mubr.bf16.gmra.mrb[0].mxu0 %v6623
        %v8950 = vpop.f32.mrb[0].mxu0
        %v8951 = vadd.f32 %v8790, %v8950
        %v8952 = vpop.f32.mrb[0].mxu0
        %v8953 = vpop.f32.mrb[0].mxu0
        %v8954 = vadd.f32 %v8793, %v8953
        %v8955 = vpop.f32.mrb[0].mxu0
        %8956 = vmatprep.mubr.bf16.mxu0 0
        %8957 = vmatmul.mubr.bf16.gmra.mrb[0].mxu0 %v6624
        %v8958 = vpop.f32.mrb[0].mxu0
        %v8959 = vadd.f32 %v8798, %v8958
        %v8960 = vpop.f32.mrb[0].mxu0
        %v8961 = vpop.f32.mrb[0].mxu0
        %v8962 = vadd.f32 %v8801, %v8961
        %v8963 = vpop.f32.mrb[0].mxu0
        %8964 = vmatprep.mubr.bf16.mxu0 0
        %8965 = vmatmul.mubr.bf16.gmra.mrb[0].mxu0 %v6625
        %v8966 = vpop.f32.mrb[0].mxu0
        %v8967 = vadd.f32 %v8806, %v8966
        %v8968 = vpop.f32.mrb[0].mxu0
        %v8969 = vpop.f32.mrb[0].mxu0
        %v8970 = vadd.f32 %v8809, %v8969
        %v8971 = vpop.f32.mrb[0].mxu0
        %8972 = vmatprep.mubr.bf16.mxu0 0
        %8973 = vmatmul.mubr.bf16.gmra.mrb[0].mxu0 %v6626
        %v8974 = vpop.f32.mrb[0].mxu0
        %v8975 = vadd.f32 %v8814, %v8974
        %v8976 = vpop.f32.mrb[0].mxu0
        %v8977 = vpop.f32.mrb[0].mxu0
        %v8978 = vadd.f32 %v8817, %v8977
        %v8979 = vpop.f32.mrb[0].mxu0
        %8980 = vmatprep.mubr.bf16.mxu0 0
        %8981 = vmatmul.mubr.bf16.gmra.mrb[0].mxu0 %v6627
        %v8982 = vpop.f32.mrb[0].mxu0
        %v8983 = vadd.f32 %v8822, %v8982
        %v8984 = vpop.f32.mrb[0].mxu0
        %v8985 = vpop.f32.mrb[0].mxu0
        %v8986 = vadd.f32 %v8825, %v8985
        %v8987 = vpop.f32.mrb[0].mxu0
        %8988 = vmatprep.mubr.bf16.mxu0 0
        %8989 = vmatmul.mubr.bf16.gmra.mrb[0].mxu0 %v6628
        %v8990 = vpop.f32.mrb[0].mxu0
        %v8991 = vadd.f32 %v8830, %v8990
        %v8992 = vpop.f32.mrb[0].mxu0
        %v8993 = vpop.f32.mrb[0].mxu0
        %v8994 = vadd.f32 %v8833, %v8993
        %v8995 = vpop.f32.mrb[0].mxu0
        %8996 = vmatprep.mubr.bf16.mxu0 0
        %8997 = vmatmul.mubr.bf16.gmra.mrb[0].mxu0 %v6629
        %v8998 = vpop.f32.mrb[0].mxu0
        %v8999 = vadd.f32 %v8838, %v8998
        %v9000 = vpop.f32.mrb[0].mxu0
        %v9001 = vpop.f32.mrb[0].mxu0
        %v9002 = vadd.f32 %v8841, %v9001
        %v9003 = vpop.f32.mrb[0].mxu0
        %9004 = vmatprep.mubr.bf16.mxu0 0
        %9005 = vmatmul.mubr.bf16.gmra.mrb[0].mxu0 %v6630
        %v9006 = vpop.f32.mrb[0].mxu0
        %v9007 = vadd.f32 %v8846, %v9006
        %v9008 = vpop.f32.mrb[0].mxu0
        %v9009 = vpop.f32.mrb[0].mxu0
        %v9010 = vadd.f32 %v8849, %v9009
        %v9011 = vpop.f32.mrb[0].mxu0
        %9012 = vmatprep.mubr.bf16.mxu0 0
        %9013 = vmatmul.mubr.bf16.gmra.mrb[0].mxu0 %v6631
        %v9014 = vpop.f32.mrb[0].mxu0
        %v9015 = vadd.f32 %v8854, %v9014
        %v9016 = vpop.f32.mrb[0].mxu0
        %v9017 = vpop.f32.mrb[0].mxu0
        %v9018 = vadd.f32 %v8857, %v9017
        %v9019 = vpop.f32.mrb[0].mxu0
        %9020 = vmatprep.mubr.bf16.mxu0 0
        %9021 = vmatmul.mubr.bf16.gmra.mrb[0].mxu0 %v6632
        %v9022 = vpop.f32.mrb[0].mxu0
        %v9023 = vadd.f32 %v8862, %v9022
        %v9024 = vpop.f32.mrb[0].mxu0
        %v9025 = vpop.f32.mrb[0].mxu0
        %v9026 = vadd.f32 %v8865, %v9025
        %v9027 = vpop.f32.mrb[0].mxu0
        %9028 = vmatprep.mubr.bf16.mxu0 0
        %9029 = vmatmul.mubr.bf16.gmra.mrb[0].mxu0 %v6633
        %v9030 = vpop.f32.mrb[0].mxu0
        %v9031 = vadd.f32 %v8870, %v9030
        %v9032 = vpop.f32.mrb[0].mxu0
        %v9033 = vpop.f32.mrb[0].mxu0
        %v9034 = vadd.f32 %v8873, %v9033
        %v9035 = vpop.f32.mrb[0].mxu0
        %9036 = vmatprep.mubr.bf16.mxu0 0
        %9037 = vmatmul.mubr.bf16.gmra.mrb[0].mxu0 %v6634
        %v9038 = vpop.f32.mrb[0].mxu0
        %v9039 = vadd.f32 %v8878, %v9038
        %v9040 = vpop.f32.mrb[0].mxu0
        %v9041 = vpop.f32.mrb[0].mxu0
        %v9042 = vadd.f32 %v8881, %v9041
        %v9043 = vpop.f32.mrb[0].mxu0
        %9044 = vdwg.mxu0
        %v9189 = vunpack.c.l.b16 %v6859
        %v9190 = vunpack.c.l.b16 %v6860
        %v9191 = vunpack.c.l.b16 %v6861
        %v9192 = vunpack.c.l.b16 %v6862
        %v9193 = vunpack.c.l.b16 %v6863
        %v9194 = vunpack.c.l.b16 %v6864
        %v9195 = vunpack.c.l.b16 %v6865
        %v9196 = vunpack.c.l.b16 %v6866
        %v9197 = vunpack.c.l.b16 %v6867
        %v9198 = vunpack.c.l.b16 %v6868
        %v9199 = vunpack.c.l.b16 %v6869
        %v9200 = vunpack.c.l.b16 %v6870
        %v9201 = vunpack.c.l.b16 %v6871
        %v9202 = vunpack.c.l.b16 %v6872
        %v9203 = vunpack.c.l.b16 %v6873
        %v9204 = vunpack.c.l.b16 %v6874
        %v9205 = vunpack.c.l.b16 %v6875
        %v9206 = vunpack.c.l.b16 %v6876
        %v9207 = vunpack.c.l.b16 %v6877
        %v9208 = vunpack.c.l.b16 %v6878
        %v9209 = vunpack.c.l.b16 %v6879
        %v9210 = vunpack.c.l.b16 %v6880
        %v9211 = vunpack.c.l.b16 %v6881
        %v9212 = vunpack.c.l.b16 %v6882
        %v9213 = vunpack.c.l.b16 %v6883
        %v9214 = vunpack.c.l.b16 %v6884
        %v9215 = vunpack.c.l.b16 %v6885
        %v9216 = vunpack.c.l.b16 %v6886
        %v9217 = vunpack.c.l.b16 %v6887
        %v9218 = vunpack.c.l.b16 %v6888
        %v9219 = vunpack.c.l.b16 %v6889
        %v9220 = vunpack.c.l.b16 %v6890
        %v9221 = vunpack.c.l.b16 %v6891
        %v9222 = vunpack.c.l.b16 %v6892
        %v9223 = vunpack.c.l.b16 %v6893
        %v9224 = vunpack.c.l.b16 %v6894
        %v9225 = vunpack.c.l.b16 %v6895
        %v9226 = vunpack.c.l.b16 %v6896
        %v9227 = vunpack.c.l.b16 %v6897
        %v9228 = vunpack.c.l.b16 %v6898
        %v9229 = vunpack.c.l.b16 %v6899
        %v9230 = vunpack.c.l.b16 %v6900
        %v9231 = vunpack.c.l.b16 %v6901
        %v9232 = vunpack.c.l.b16 %v6902
        %v9233 = vunpack.c.l.b16 %v6903
        %v9234 = vunpack.c.l.b16 %v6904
        %v9235 = vunpack.c.l.b16 %v6905
        %v9236 = vunpack.c.l.b16 %v6906
        %v9237 = vunpack.c.l.b16 %v6907
        %v9238 = vunpack.c.l.b16 %v6908
        %v9239 = vunpack.c.l.b16 %v6909
        %v9240 = vunpack.c.l.b16 %v6910
        %v9241 = vunpack.c.l.b16 %v6911
        %v9242 = vunpack.c.l.b16 %v6912
        %v9243 = vunpack.c.l.b16 %v6913
        %v9244 = vunpack.c.l.b16 %v6914
        %v9245 = vunpack.c.l.b16 %v6915
        %v9246 = vunpack.c.l.b16 %v6916
        %v9247 = vunpack.c.l.b16 %v6917
        %v9248 = vunpack.c.l.b16 %v6918
        %v9249 = vunpack.c.l.b16 %v6919
        %v9250 = vunpack.c.l.b16 %v6920
        %v9251 = vunpack.c.l.b16 %v6921
        %v9252 = vunpack.c.l.b16 %v6922
        %v9253 = vunpack.c.l.b16 %v6923
        %v9254 = vunpack.c.l.b16 %v6924
        %v9255 = vunpack.c.l.b16 %v6925
        %v9256 = vunpack.c.l.b16 %v6926
        %v9257 = vunpack.c.l.b16 %v6927
        %v9258 = vunpack.c.l.b16 %v6928
        %v9259 = vunpack.c.l.b16 %v6929
        %v9260 = vunpack.c.l.b16 %v6930
        %v9261 = vunpack.c.l.b16 %v6931
        %v9262 = vunpack.c.l.b16 %v6932
        %v9263 = vunpack.c.l.b16 %v6933
        %v9264 = vunpack.c.l.b16 %v6934
        %v9265 = vunpack.c.l.b16 %v6935
        %v9266 = vunpack.c.l.b16 %v6936
        %v9267 = vunpack.c.l.b16 %v6937
        %v9268 = vunpack.c.l.b16 %v6938
        %v9269 = vunpack.c.l.b16 %v6939
        %v9270 = vunpack.c.l.b16 %v6940
        %v9271 = vunpack.c.l.b16 %v6941
        %v9272 = vunpack.c.l.b16 %v6942
        %v9273 = vunpack.c.l.b16 %v6943
        %v9274 = vunpack.c.l.b16 %v6944
        %v9275 = vunpack.c.l.b16 %v6945
        %v9276 = vunpack.c.l.b16 %v6946
        %v9277 = vunpack.c.l.b16 %v6947
        %v9278 = vunpack.c.l.b16 %v6948
        %v9279 = vunpack.c.l.b16 %v6949
        %v9280 = vunpack.c.l.b16 %v6950
        %v9281 = vunpack.c.l.b16 %v6951
        %v9282 = vunpack.c.l.b16 %v6952
        %v9283 = vunpack.c.l.b16 %v6953
        %v9284 = vunpack.c.l.b16 %v6954
        %v9285 = vunpack.c.l.b16 %v6955
        %v9286 = vunpack.c.l.b16 %v6956
        %v9287 = vunpack.c.l.b16 %v6957
        %v9288 = vunpack.c.l.b16 %v6958
        %v9289 = vunpack.c.l.b16 %v6959
        %v9290 = vunpack.c.l.b16 %v6960
        %v9291 = vunpack.c.l.b16 %v6961
        %v9292 = vunpack.c.l.b16 %v6962
        %v9293 = vunpack.c.l.b16 %v6963
        %v9294 = vunpack.c.l.b16 %v6964
        %v9295 = vunpack.c.l.b16 %v6965
        %v9296 = vunpack.c.l.b16 %v6966
        %v9297 = vunpack.c.l.b16 %v6967
        %v9298 = vunpack.c.l.b16 %v6968
        %v9299 = vunpack.c.l.b16 %v6969
        %v9300 = vunpack.c.l.b16 %v6970
        %v9301 = vunpack.c.l.b16 %v6971
        %v9302 = vunpack.c.l.b16 %v6972
        %v9303 = vunpack.c.l.b16 %v6973
        %v9304 = vunpack.c.l.b16 %v6974
        %v9305 = vunpack.c.l.b16 %v6975
        %v9306 = vunpack.c.l.b16 %v6976
        %v9307 = vunpack.c.l.b16 %v6977
        %v9308 = vunpack.c.l.b16 %v6978
        %v9309 = vunpack.c.l.b16 %v6979
        %v9310 = vunpack.c.l.b16 %v6980
        %v9311 = vunpack.c.l.b16 %v6981
        %v9312 = vunpack.c.l.b16 %v6982
        %v9313 = vunpack.c.l.b16 %v6983
        %v9314 = vunpack.c.l.b16 %v6984
        %v9315 = vunpack.c.l.b16 %v6985
        %v9316 = vunpack.c.l.b16 %v6986
        %v9317 = vunpack.c.l.b16 %v6987
        %v9318 = vunpack.c.l.b16 %v6988
        %v9319 = vunpack.c.l.b16 %v6989
        %v9320 = vunpack.c.l.b16 %v6990
        %v9321 = vunpack.c.l.b16 %v6991
        %v9322 = vunpack.c.l.b16 %v6992
        %v9323 = vunpack.c.l.b16 %v6993
        %v9324 = vunpack.c.l.b16 %v6994
        %v9325 = vunpack.c.l.b16 %v6995
        %v9326 = vunpack.c.l.b16 %v6996
        %v9327 = vunpack.c.l.b16 %v6997
        %v9328 = vunpack.c.l.b16 %v6998
        %v9329 = vunpack.c.l.b16 %v6999
        %v9330 = vunpack.c.l.b16 %v7000
        %v9331 = vunpack.c.l.b16 %v7001
        %v9332 = vunpack.c.l.b16 %v7002
        %v9333 = vpack.c.b16 %v9190, %v9189
        %v9334 = vpack.c.b16 %v9192, %v9191
        %v9335 = vpack.c.b16 %v9194, %v9193
        %v9336 = vpack.c.b16 %v9196, %v9195
        %v9337 = vpack.c.b16 %v9198, %v9197
        %v9338 = vpack.c.b16 %v9200, %v9199
        %v9339 = vpack.c.b16 %v9202, %v9201
        %v9340 = vpack.c.b16 %v9204, %v9203
        %v9341 = vpack.c.b16 %v9206, %v9205
        %v9342 = vpack.c.b16 %v9208, %v9207
        %v9343 = vpack.c.b16 %v9210, %v9209
        %v9344 = vpack.c.b16 %v9212, %v9211
        %v9345 = vpack.c.b16 %v9214, %v9213
        %v9346 = vpack.c.b16 %v9216, %v9215
        %v9347 = vpack.c.b16 %v9218, %v9217
        %v9348 = vpack.c.b16 %v9220, %v9219
        %v9349 = vpack.c.b16 %v9222, %v9221
        %v9350 = vpack.c.b16 %v9224, %v9223
        %v9351 = vpack.c.b16 %v9226, %v9225
        %v9352 = vpack.c.b16 %v9228, %v9227
        %v9353 = vpack.c.b16 %v9230, %v9229
        %v9354 = vpack.c.b16 %v9232, %v9231
        %v9355 = vpack.c.b16 %v9234, %v9233
        %v9356 = vpack.c.b16 %v9236, %v9235
        %v9357 = vpack.c.b16 %v9238, %v9237
        %v9358 = vpack.c.b16 %v9240, %v9239
        %v9359 = vpack.c.b16 %v9242, %v9241
        %v9360 = vpack.c.b16 %v9244, %v9243
        %v9361 = vpack.c.b16 %v9246, %v9245
        %v9362 = vpack.c.b16 %v9248, %v9247
        %v9363 = vpack.c.b16 %v9250, %v9249
        %v9364 = vpack.c.b16 %v9252, %v9251
        %v9365 = vpack.c.b16 %v9254, %v9253
        %v9366 = vpack.c.b16 %v9256, %v9255
        %v9367 = vpack.c.b16 %v9258, %v9257
        %v9368 = vpack.c.b16 %v9260, %v9259
        %v9369 = vpack.c.b16 %v9262, %v9261
        %v9370 = vpack.c.b16 %v9264, %v9263
        %v9371 = vpack.c.b16 %v9266, %v9265
        %v9372 = vpack.c.b16 %v9268, %v9267
        %v9373 = vpack.c.b16 %v9270, %v9269
        %v9374 = vpack.c.b16 %v9272, %v9271
        %v9375 = vpack.c.b16 %v9274, %v9273
        %v9376 = vpack.c.b16 %v9276, %v9275
        %v9377 = vpack.c.b16 %v9278, %v9277
        %v9378 = vpack.c.b16 %v9280, %v9279
        %v9379 = vpack.c.b16 %v9282, %v9281
        %v9380 = vpack.c.b16 %v9284, %v9283
        %v9381 = vpack.c.b16 %v9286, %v9285
        %v9382 = vpack.c.b16 %v9288, %v9287
        %v9383 = vpack.c.b16 %v9290, %v9289
        %v9384 = vpack.c.b16 %v9292, %v9291
        %v9385 = vpack.c.b16 %v9294, %v9293
        %v9386 = vpack.c.b16 %v9296, %v9295
        %v9387 = vpack.c.b16 %v9298, %v9297
        %v9388 = vpack.c.b16 %v9300, %v9299
        %v9389 = vpack.c.b16 %v9302, %v9301
        %v9390 = vpack.c.b16 %v9304, %v9303
        %v9391 = vpack.c.b16 %v9306, %v9305
        %v9392 = vpack.c.b16 %v9308, %v9307
        %v9393 = vpack.c.b16 %v9310, %v9309
        %v9394 = vpack.c.b16 %v9312, %v9311
        %v9395 = vpack.c.b16 %v9314, %v9313
        %v9396 = vpack.c.b16 %v9316, %v9315
        %v9397 = vpack.c.b16 %v9318, %v9317
        %v9398 = vpack.c.b16 %v9320, %v9319
        %v9399 = vpack.c.b16 %v9322, %v9321
        %v9400 = vpack.c.b16 %v9324, %v9323
        %v9401 = vpack.c.b16 %v9326, %v9325
        %v9402 = vpack.c.b16 %v9328, %v9327
        %v9403 = vpack.c.b16 %v9330, %v9329
        %v9404 = vpack.c.b16 %v9332, %v9331
        %9477 = vmatprep.subr.bf16.mxu0 0
        %9478 = vmatpush1.bf16.msra.mxu0 %v9333
        %9479 = vmatprep.subr.bf16.mxu0 0
        %9480 = vmatpush1.bf16.msra.mxu0 %v9334
        %9481 = vmatprep.subr.bf16.mxu0 0
        %9482 = vmatpush1.bf16.msra.mxu0 %v9335
        %9483 = vmatprep.subr.bf16.mxu0 0
        %9484 = vmatpush1.bf16.msra.mxu0 %v9336
        %9485 = vmatprep.subr.bf16.mxu0 0
        %9486 = vmatpush1.bf16.msra.mxu0 %v9337
        %9487 = vmatprep.subr.bf16.mxu0 0
        %9488 = vmatpush1.bf16.msra.mxu0 %v9338
        %9489 = vmatprep.subr.bf16.mxu0 0
        %9490 = vmatpush1.bf16.msra.mxu0 %v9339
        %9491 = vmatprep.subr.bf16.mxu0 0
        %9492 = vmatpush1.bf16.msra.mxu0 %v9340
        %9493 = vmatprep.subr.bf16.mxu0 0
        %9494 = vmatpush1.bf16.msra.mxu0 %v9341
        %9495 = vmatprep.subr.bf16.mxu0 0
        %9496 = vmatpush1.bf16.msra.mxu0 %v9342
        %9497 = vmatprep.subr.bf16.mxu0 0
        %9498 = vmatpush1.bf16.msra.mxu0 %v9343
        %9499 = vmatprep.subr.bf16.mxu0 0
        %9500 = vmatpush1.bf16.msra.mxu0 %v9344
        %9501 = vmatprep.subr.bf16.mxu0 0
        %9502 = vmatpush1.bf16.msra.mxu0 %v9345
        %9503 = vmatprep.subr.bf16.mxu0 0
        %9504 = vmatpush1.bf16.msra.mxu0 %v9346
        %9505 = vmatprep.subr.bf16.mxu0 0
        %9506 = vmatpush1.bf16.msra.mxu0 %v9347
        %9507 = vmatprep.subr.bf16.mxu0 0
        %9508 = vmatpush1.bf16.msra.mxu0 %v9348
        %9509 = vmatprep.mubr.bf16.mxu0 %v5923
        %9510 = vmatmul.mubr.bf16.gmra.mrb[0].mxu0 %v5795
        %v9511 = vpop.f32.mrb[0].mxu0
        %v9512 = vadd.f32 0.0, %v9511
        %v9513 = vpop.f32.mrb[0].mxu0
        %v9514 = vpop.f32.mrb[0].mxu0
        %v9515 = vadd.f32 0.0, %v9514
        %v9516 = vpop.f32.mrb[0].mxu0
        %9517 = vmatprep.mubr.bf16.mxu0 %v5924
        %9518 = vmatmul.mubr.bf16.gmra.mrb[0].mxu0 %v5796
        %v9519 = vpop.f32.mrb[0].mxu0
        %v9520 = vadd.f32 0.0, %v9519
        %v9521 = vpop.f32.mrb[0].mxu0
        %v9522 = vpop.f32.mrb[0].mxu0
        %v9523 = vadd.f32 0.0, %v9522
        %v9524 = vpop.f32.mrb[0].mxu0
        %9525 = vmatprep.mubr.bf16.mxu0 %v5925
        %9526 = vmatmul.mubr.bf16.gmra.mrb[0].mxu0 %v5797
        %v9527 = vpop.f32.mrb[0].mxu0
        %v9528 = vadd.f32 0.0, %v9527
        %v9529 = vpop.f32.mrb[0].mxu0
        %v9530 = vpop.f32.mrb[0].mxu0
        %v9531 = vadd.f32 0.0, %v9530
        %v9532 = vpop.f32.mrb[0].mxu0
        %9533 = vmatprep.mubr.bf16.mxu0 %v5926
        %9534 = vmatmul.mubr.bf16.gmra.mrb[0].mxu0 %v5798
        %v9535 = vpop.f32.mrb[0].mxu0
        %v9536 = vadd.f32 0.0, %v9535
        %v9537 = vpop.f32.mrb[0].mxu0
        %v9538 = vpop.f32.mrb[0].mxu0
        %v9539 = vadd.f32 0.0, %v9538
        %v9540 = vpop.f32.mrb[0].mxu0
        %9541 = vmatprep.mubr.bf16.mxu0 %v5927
        %9542 = vmatmul.mubr.bf16.gmra.mrb[0].mxu0 %v5799
        %v9543 = vpop.f32.mrb[0].mxu0
        %v9544 = vadd.f32 0.0, %v9543
        %v9545 = vpop.f32.mrb[0].mxu0
        %v9546 = vpop.f32.mrb[0].mxu0
        %v9547 = vadd.f32 0.0, %v9546
        %v9548 = vpop.f32.mrb[0].mxu0
        %9549 = vmatprep.mubr.bf16.mxu0 %v5928
        %9550 = vmatmul.mubr.bf16.gmra.mrb[0].mxu0 %v5800
        %v9551 = vpop.f32.mrb[0].mxu0
        %v9552 = vadd.f32 0.0, %v9551
        %v9553 = vpop.f32.mrb[0].mxu0
        %v9554 = vpop.f32.mrb[0].mxu0
        %v9555 = vadd.f32 0.0, %v9554
        %v9556 = vpop.f32.mrb[0].mxu0
        %9557 = vmatprep.mubr.bf16.mxu0 %v5929
        %9558 = vmatmul.mubr.bf16.gmra.mrb[0].mxu0 %v5801
        %v9559 = vpop.f32.mrb[0].mxu0
        %v9560 = vadd.f32 0.0, %v9559
        %v9561 = vpop.f32.mrb[0].mxu0
        %v9562 = vpop.f32.mrb[0].mxu0
        %v9563 = vadd.f32 0.0, %v9562
        %v9564 = vpop.f32.mrb[0].mxu0
        %9565 = vmatprep.mubr.bf16.mxu0 %v5930
        %9566 = vmatmul.mubr.bf16.gmra.mrb[0].mxu0 %v5802
        %v9567 = vpop.f32.mrb[0].mxu0
        %v9568 = vadd.f32 0.0, %v9567
        %v9569 = vpop.f32.mrb[0].mxu0
        %v9570 = vpop.f32.mrb[0].mxu0
        %v9571 = vadd.f32 0.0, %v9570
        %v9572 = vpop.f32.mrb[0].mxu0
        %9573 = vmatprep.mubr.bf16.mxu0 %v5931
        %9574 = vmatmul.mubr.bf16.gmra.mrb[0].mxu0 %v5803
        %v9575 = vpop.f32.mrb[0].mxu0
        %v9576 = vadd.f32 0.0, %v9575
        %v9577 = vpop.f32.mrb[0].mxu0
        %v9578 = vpop.f32.mrb[0].mxu0
        %v9579 = vadd.f32 0.0, %v9578
        %v9580 = vpop.f32.mrb[0].mxu0
        %9581 = vmatprep.mubr.bf16.mxu0 %v5932
        %9582 = vmatmul.mubr.bf16.gmra.mrb[0].mxu0 %v5804
        %v9583 = vpop.f32.mrb[0].mxu0
        %v9584 = vadd.f32 0.0, %v9583
        %v9585 = vpop.f32.mrb[0].mxu0
        %v9586 = vpop.f32.mrb[0].mxu0
        %v9587 = vadd.f32 0.0, %v9586
        %v9588 = vpop.f32.mrb[0].mxu0
        %9589 = vmatprep.mubr.bf16.mxu0 %v5933
        %9590 = vmatmul.mubr.bf16.gmra.mrb[0].mxu0 %v5805
        %v9591 = vpop.f32.mrb[0].mxu0
        %v9592 = vadd.f32 0.0, %v9591
        %v9593 = vpop.f32.mrb[0].mxu0
        %v9594 = vpop.f32.mrb[0].mxu0
        %v9595 = vadd.f32 0.0, %v9594
        %v9596 = vpop.f32.mrb[0].mxu0
        %9597 = vmatprep.mubr.bf16.mxu0 %v5934
        %9598 = vmatmul.mubr.bf16.gmra.mrb[0].mxu0 %v5806
        %v9599 = vpop.f32.mrb[0].mxu0
        %v9600 = vadd.f32 0.0, %v9599
        %v9601 = vpop.f32.mrb[0].mxu0
        %v9602 = vpop.f32.mrb[0].mxu0
        %v9603 = vadd.f32 0.0, %v9602
        %v9604 = vpop.f32.mrb[0].mxu0
        %9605 = vmatprep.mubr.bf16.mxu0 %v5935
        %9606 = vmatmul.mubr.bf16.gmra.mrb[0].mxu0 %v5807
        %v9607 = vpop.f32.mrb[0].mxu0
        %v9608 = vadd.f32 0.0, %v9607
        %v9609 = vpop.f32.mrb[0].mxu0
        %v9610 = vpop.f32.mrb[0].mxu0
        %v9611 = vadd.f32 0.0, %v9610
        %v9612 = vpop.f32.mrb[0].mxu0
        %9613 = vmatprep.mubr.bf16.mxu0 %v5936
        %9614 = vmatmul.mubr.bf16.gmra.mrb[0].mxu0 %v5808
        %v9615 = vpop.f32.mrb[0].mxu0
        %v9616 = vadd.f32 0.0, %v9615
        %v9617 = vpop.f32.mrb[0].mxu0
        %v9618 = vpop.f32.mrb[0].mxu0
        %v9619 = vadd.f32 0.0, %v9618
        %v9620 = vpop.f32.mrb[0].mxu0
        %9621 = vmatprep.mubr.bf16.mxu0 %v5937
        %9622 = vmatmul.mubr.bf16.gmra.mrb[0].mxu0 %v5809
        %v9623 = vpop.f32.mrb[0].mxu0
        %v9624 = vadd.f32 0.0, %v9623
        %v9625 = vpop.f32.mrb[0].mxu0
        %v9626 = vpop.f32.mrb[0].mxu0
        %v9627 = vadd.f32 0.0, %v9626
        %v9628 = vpop.f32.mrb[0].mxu0
        %9629 = vmatprep.mubr.bf16.mxu0 %v5938
        %9630 = vmatmul.mubr.bf16.gmra.mrb[0].mxu0 %v5810
        %v9631 = vpop.f32.mrb[0].mxu0
        %v9632 = vadd.f32 0.0, %v9631
        %v9633 = vpop.f32.mrb[0].mxu0
        %v9634 = vpop.f32.mrb[0].mxu0
        %v9635 = vadd.f32 0.0, %v9634
        %v9636 = vpop.f32.mrb[0].mxu0
        %9637 = vdwg.mxu0
        %9638 = vmatprep.subr.bf16.mxu0 0
        %9639 = vmatpush1.bf16.msra.mxu0 %v9349
        %9640 = vmatprep.subr.bf16.mxu0 0
        %9641 = vmatpush1.bf16.msra.mxu0 %v9350
        %9642 = vmatprep.subr.bf16.mxu0 0
        %9643 = vmatpush1.bf16.msra.mxu0 %v9351
        %9644 = vmatprep.subr.bf16.mxu0 0
        %9645 = vmatpush1.bf16.msra.mxu0 %v9352
        %9646 = vmatprep.subr.bf16.mxu0 0
        %9647 = vmatpush1.bf16.msra.mxu0 %v9353
        %9648 = vmatprep.subr.bf16.mxu0 0
        %9649 = vmatpush1.bf16.msra.mxu0 %v9354
        %9650 = vmatprep.subr.bf16.mxu0 0
        %9651 = vmatpush1.bf16.msra.mxu0 %v9355
        %9652 = vmatprep.subr.bf16.mxu0 0
        %9653 = vmatpush1.bf16.msra.mxu0 %v9356
        %9654 = vmatprep.subr.bf16.mxu0 0
        %9655 = vmatpush1.bf16.msra.mxu0 %v9357
        %9656 = vmatprep.subr.bf16.mxu0 0
        %9657 = vmatpush1.bf16.msra.mxu0 %v9358
        %9658 = vmatprep.subr.bf16.mxu0 0
        %9659 = vmatpush1.bf16.msra.mxu0 %v9359
        %9660 = vmatprep.subr.bf16.mxu0 0
        %9661 = vmatpush1.bf16.msra.mxu0 %v9360
        %9662 = vmatprep.subr.bf16.mxu0 0
        %9663 = vmatpush1.bf16.msra.mxu0 %v9361
        %9664 = vmatprep.subr.bf16.mxu0 0
        %9665 = vmatpush1.bf16.msra.mxu0 %v9362
        %9666 = vmatprep.subr.bf16.mxu0 0
        %9667 = vmatpush1.bf16.msra.mxu0 %v9363
        %9668 = vmatprep.subr.bf16.mxu0 0
        %9669 = vmatpush1.bf16.msra.mxu0 %v9364
        %9670 = vmatprep.mubr.bf16.mxu0 %v6213
        %9671 = vmatmul.mubr.bf16.gmra.mrb[0].mxu0 %v6083
        %v9672 = vpop.f32.mrb[0].mxu0
        %v9673 = vadd.f32 %v9512, %v9672
        %v9674 = vpop.f32.mrb[0].mxu0
        %v9675 = vpop.f32.mrb[0].mxu0
        %v9676 = vadd.f32 %v9515, %v9675
        %v9677 = vpop.f32.mrb[0].mxu0
        %9678 = vmatprep.mubr.bf16.mxu0 %v6214
        %9679 = vmatmul.mubr.bf16.gmra.mrb[0].mxu0 %v6084
        %v9680 = vpop.f32.mrb[0].mxu0
        %v9681 = vadd.f32 %v9520, %v9680
        %v9682 = vpop.f32.mrb[0].mxu0
        %v9683 = vpop.f32.mrb[0].mxu0
        %v9684 = vadd.f32 %v9523, %v9683
        %v9685 = vpop.f32.mrb[0].mxu0
        %9686 = vmatprep.mubr.bf16.mxu0 %v6215
        %9687 = vmatmul.mubr.bf16.gmra.mrb[0].mxu0 %v6085
        %v9688 = vpop.f32.mrb[0].mxu0
        %v9689 = vadd.f32 %v9528, %v9688
        %v9690 = vpop.f32.mrb[0].mxu0
        %v9691 = vpop.f32.mrb[0].mxu0
        %v9692 = vadd.f32 %v9531, %v9691
        %v9693 = vpop.f32.mrb[0].mxu0
        %9694 = vmatprep.mubr.bf16.mxu0 %v6216
        %9695 = vmatmul.mubr.bf16.gmra.mrb[0].mxu0 %v6086
        %v9696 = vpop.f32.mrb[0].mxu0
        %v9697 = vadd.f32 %v9536, %v9696
        %v9698 = vpop.f32.mrb[0].mxu0
        %v9699 = vpop.f32.mrb[0].mxu0
        %v9700 = vadd.f32 %v9539, %v9699
        %v9701 = vpop.f32.mrb[0].mxu0
        %9702 = vmatprep.mubr.bf16.mxu0 %v6217
        %9703 = vmatmul.mubr.bf16.gmra.mrb[0].mxu0 %v6087
        %v9704 = vpop.f32.mrb[0].mxu0
        %v9705 = vadd.f32 %v9544, %v9704
        %v9706 = vpop.f32.mrb[0].mxu0
        %v9707 = vpop.f32.mrb[0].mxu0
        %v9708 = vadd.f32 %v9547, %v9707
        %v9709 = vpop.f32.mrb[0].mxu0
        %9710 = vmatprep.mubr.bf16.mxu0 %v6218
        %9711 = vmatmul.mubr.bf16.gmra.mrb[0].mxu0 %v6088
        %v9712 = vpop.f32.mrb[0].mxu0
        %v9713 = vadd.f32 %v9552, %v9712
        %v9714 = vpop.f32.mrb[0].mxu0
        %v9715 = vpop.f32.mrb[0].mxu0
        %v9716 = vadd.f32 %v9555, %v9715
        %v9717 = vpop.f32.mrb[0].mxu0
        %9718 = vmatprep.mubr.bf16.mxu0 %v6219
        %9719 = vmatmul.mubr.bf16.gmra.mrb[0].mxu0 %v6089
        %v9720 = vpop.f32.mrb[0].mxu0
        %v9721 = vadd.f32 %v9560, %v9720
        %v9722 = vpop.f32.mrb[0].mxu0
        %v9723 = vpop.f32.mrb[0].mxu0
        %v9724 = vadd.f32 %v9563, %v9723
        %v9725 = vpop.f32.mrb[0].mxu0
        %9726 = vmatprep.mubr.bf16.mxu0 %v6220
        %9727 = vmatmul.mubr.bf16.gmra.mrb[0].mxu0 %v6090
        %v9728 = vpop.f32.mrb[0].mxu0
        %v9729 = vadd.f32 %v9568, %v9728
        %v9730 = vpop.f32.mrb[0].mxu0
        %v9731 = vpop.f32.mrb[0].mxu0
        %v9732 = vadd.f32 %v9571, %v9731
        %v9733 = vpop.f32.mrb[0].mxu0
        %9734 = vmatprep.mubr.bf16.mxu0 %v6221
        %9735 = vmatmul.mubr.bf16.gmra.mrb[0].mxu0 %v6091
        %v9736 = vpop.f32.mrb[0].mxu0
        %v9737 = vadd.f32 %v9576, %v9736
        %v9738 = vpop.f32.mrb[0].mxu0
        %v9739 = vpop.f32.mrb[0].mxu0
        %v9740 = vadd.f32 %v9579, %v9739
        %v9741 = vpop.f32.mrb[0].mxu0
        %9742 = vmatprep.mubr.bf16.mxu0 %v6222
        %9743 = vmatmul.mubr.bf16.gmra.mrb[0].mxu0 %v6092
        %v9744 = vpop.f32.mrb[0].mxu0
        %v9745 = vadd.f32 %v9584, %v9744
        %v9746 = vpop.f32.mrb[0].mxu0
        %v9747 = vpop.f32.mrb[0].mxu0
        %v9748 = vadd.f32 %v9587, %v9747
        %v9749 = vpop.f32.mrb[0].mxu0
        %9750 = vmatprep.mubr.bf16.mxu0 %v6223
        %9751 = vmatmul.mubr.bf16.gmra.mrb[0].mxu0 %v6093
        %v9752 = vpop.f32.mrb[0].mxu0
        %v9753 = vadd.f32 %v9592, %v9752
        %v9754 = vpop.f32.mrb[0].mxu0
        %v9755 = vpop.f32.mrb[0].mxu0
        %v9756 = vadd.f32 %v9595, %v9755
        %v9757 = vpop.f32.mrb[0].mxu0
        %9758 = vmatprep.mubr.bf16.mxu0 %v6224
        %9759 = vmatmul.mubr.bf16.gmra.mrb[0].mxu0 %v6094
        %v9760 = vpop.f32.mrb[0].mxu0
        %v9761 = vadd.f32 %v9600, %v9760
        %v9762 = vpop.f32.mrb[0].mxu0
        %v9763 = vpop.f32.mrb[0].mxu0
        %v9764 = vadd.f32 %v9603, %v9763
        %v9765 = vpop.f32.mrb[0].mxu0
        %9766 = vmatprep.mubr.bf16.mxu0 %v6225
        %9767 = vmatmul.mubr.bf16.gmra.mrb[0].mxu0 %v6095
        %v9768 = vpop.f32.mrb[0].mxu0
        %v9769 = vadd.f32 %v9608, %v9768
        %v9770 = vpop.f32.mrb[0].mxu0
        %v9771 = vpop.f32.mrb[0].mxu0
        %v9772 = vadd.f32 %v9611, %v9771
        %v9773 = vpop.f32.mrb[0].mxu0
        %9774 = vmatprep.mubr.bf16.mxu0 %v6226
        %9775 = vmatmul.mubr.bf16.gmra.mrb[0].mxu0 %v6096
        %v9776 = vpop.f32.mrb[0].mxu0
        %v9777 = vadd.f32 %v9616, %v9776
        %v9778 = vpop.f32.mrb[0].mxu0
        %v9779 = vpop.f32.mrb[0].mxu0
        %v9780 = vadd.f32 %v9619, %v9779
        %v9781 = vpop.f32.mrb[0].mxu0
        %9782 = vmatprep.mubr.bf16.mxu0 %v6227
        %9783 = vmatmul.mubr.bf16.gmra.mrb[0].mxu0 %v6097
        %v9784 = vpop.f32.mrb[0].mxu0
        %v9785 = vadd.f32 %v9624, %v9784
        %v9786 = vpop.f32.mrb[0].mxu0
        %v9787 = vpop.f32.mrb[0].mxu0
        %v9788 = vadd.f32 %v9627, %v9787
        %v9789 = vpop.f32.mrb[0].mxu0
        %9790 = vmatprep.mubr.bf16.mxu0 %v6228
        %9791 = vmatmul.mubr.bf16.gmra.mrb[0].mxu0 %v6098
        %v9792 = vpop.f32.mrb[0].mxu0
        %v9793 = vadd.f32 %v9632, %v9792
        %v9794 = vpop.f32.mrb[0].mxu0
        %v9795 = vpop.f32.mrb[0].mxu0
        %v9796 = vadd.f32 %v9635, %v9795
        %v9797 = vpop.f32.mrb[0].mxu0
        %9798 = vdwg.mxu0
        %9799 = vmatprep.subr.bf16.mxu0 0
        %9800 = vmatpush1.bf16.msra.mxu0 %v9365
        %9801 = vmatprep.subr.bf16.mxu0 0
        %9802 = vmatpush1.bf16.msra.mxu0 %v9366
        %9803 = vmatprep.subr.bf16.mxu0 0
        %9804 = vmatpush1.bf16.msra.mxu0 %v9367
        %9805 = vmatprep.subr.bf16.mxu0 0
        %9806 = vmatpush1.bf16.msra.mxu0 %v9368
        %9807 = vmatprep.subr.bf16.mxu0 0
        %9808 = vmatpush1.bf16.msra.mxu0 %v9369
        %9809 = vmatprep.subr.bf16.mxu0 0
        %9810 = vmatpush1.bf16.msra.mxu0 %v9370
        %9811 = vmatprep.subr.bf16.mxu0 0
        %9812 = vmatpush1.bf16.msra.mxu0 %v9371
        %9813 = vmatprep.subr.bf16.mxu0 0
        %9814 = vmatpush1.bf16.msra.mxu0 %v9372
        %9815 = vmatprep.subr.bf16.mxu0 0
        %9816 = vmatpush1.bf16.msra.mxu0 %v9373
        %9817 = vmatprep.subr.bf16.mxu0 0
        %9818 = vmatpush1.bf16.msra.mxu0 %v9374
        %9819 = vmatprep.subr.bf16.mxu0 0
        %9820 = vmatpush1.bf16.msra.mxu0 %v9375
        %9821 = vmatprep.subr.bf16.mxu0 0
        %9822 = vmatpush1.bf16.msra.mxu0 %v9376
        %9823 = vmatprep.subr.bf16.mxu0 0
        %9824 = vmatpush1.bf16.msra.mxu0 %v9377
        %9825 = vmatprep.subr.bf16.mxu0 0
        %9826 = vmatpush1.bf16.msra.mxu0 %v9378
        %9827 = vmatprep.subr.bf16.mxu0 0
        %9828 = vmatpush1.bf16.msra.mxu0 %v9379
        %9829 = vmatprep.subr.bf16.mxu0 0
        %9830 = vmatpush1.bf16.msra.mxu0 %v9380
        %9831 = vmatprep.mubr.bf16.mxu0 %v6351
        %9832 = vmatmul.mubr.bf16.gmra.mrb[0].mxu0 %v5924
        %v9833 = vpop.f32.mrb[0].mxu0
        %v9834 = vadd.f32 %v9673, %v9833
        %v9835 = vpop.f32.mrb[0].mxu0
        %v9836 = vpop.f32.mrb[0].mxu0
        %v9837 = vadd.f32 %v9676, %v9836
        %v9838 = vpop.f32.mrb[0].mxu0
        %9839 = vmatprep.mubr.bf16.mxu0 %v6352
        %9840 = vmatmul.mubr.bf16.gmra.mrb[0].mxu0 %v5925
        %v9841 = vpop.f32.mrb[0].mxu0
        %v9842 = vadd.f32 %v9681, %v9841
        %v9843 = vpop.f32.mrb[0].mxu0
        %v9844 = vpop.f32.mrb[0].mxu0
        %v9845 = vadd.f32 %v9684, %v9844
        %v9846 = vpop.f32.mrb[0].mxu0
        %9847 = vmatprep.mubr.bf16.mxu0 %v6353
        %9848 = vmatmul.mubr.bf16.gmra.mrb[0].mxu0 %v5926
        %v9849 = vpop.f32.mrb[0].mxu0
        %v9850 = vadd.f32 %v9689, %v9849
        %v9851 = vpop.f32.mrb[0].mxu0
        %v9852 = vpop.f32.mrb[0].mxu0
        %v9853 = vadd.f32 %v9692, %v9852
        %v9854 = vpop.f32.mrb[0].mxu0
        %9855 = vmatprep.mubr.bf16.mxu0 %v6354
        %9856 = vmatmul.mubr.bf16.gmra.mrb[0].mxu0 %v5927
        %v9857 = vpop.f32.mrb[0].mxu0
        %v9858 = vadd.f32 %v9697, %v9857
        %v9859 = vpop.f32.mrb[0].mxu0
        %v9860 = vpop.f32.mrb[0].mxu0
        %v9861 = vadd.f32 %v9700, %v9860
        %v9862 = vpop.f32.mrb[0].mxu0
        %9863 = vmatprep.mubr.bf16.mxu0 %v6355
        %9864 = vmatmul.mubr.bf16.gmra.mrb[0].mxu0 %v5928
        %v9865 = vpop.f32.mrb[0].mxu0
        %v9866 = vadd.f32 %v9705, %v9865
        %v9867 = vpop.f32.mrb[0].mxu0
        %v9868 = vpop.f32.mrb[0].mxu0
        %v9869 = vadd.f32 %v9708, %v9868
        %v9870 = vpop.f32.mrb[0].mxu0
        %9871 = vmatprep.mubr.bf16.mxu0 %v6356
        %9872 = vmatmul.mubr.bf16.gmra.mrb[0].mxu0 %v5929
        %v9873 = vpop.f32.mrb[0].mxu0
        %v9874 = vadd.f32 %v9713, %v9873
        %v9875 = vpop.f32.mrb[0].mxu0
        %v9876 = vpop.f32.mrb[0].mxu0
        %v9877 = vadd.f32 %v9716, %v9876
        %v9878 = vpop.f32.mrb[0].mxu0
        %9879 = vmatprep.mubr.bf16.mxu0 %v6357
        %9880 = vmatmul.mubr.bf16.gmra.mrb[0].mxu0 %v5930
        %v9881 = vpop.f32.mrb[0].mxu0
        %v9882 = vadd.f32 %v9721, %v9881
        %v9883 = vpop.f32.mrb[0].mxu0
        %v9884 = vpop.f32.mrb[0].mxu0
        %v9885 = vadd.f32 %v9724, %v9884
        %v9886 = vpop.f32.mrb[0].mxu0
        %9887 = vmatprep.mubr.bf16.mxu0 %v6358
        %9888 = vmatmul.mubr.bf16.gmra.mrb[0].mxu0 %v5931
        %v9889 = vpop.f32.mrb[0].mxu0
        %v9890 = vadd.f32 %v9729, %v9889
        %v9891 = vpop.f32.mrb[0].mxu0
        %v9892 = vpop.f32.mrb[0].mxu0
        %v9893 = vadd.f32 %v9732, %v9892
        %v9894 = vpop.f32.mrb[0].mxu0
        %9895 = vmatprep.mubr.bf16.mxu0 %v6359
        %9896 = vmatmul.mubr.bf16.gmra.mrb[0].mxu0 %v5932
        %v9897 = vpop.f32.mrb[0].mxu0
        %v9898 = vadd.f32 %v9737, %v9897
        %v9899 = vpop.f32.mrb[0].mxu0
        %v9900 = vpop.f32.mrb[0].mxu0
        %v9901 = vadd.f32 %v9740, %v9900
        %v9902 = vpop.f32.mrb[0].mxu0
        %9903 = vmatprep.mubr.bf16.mxu0 %v6360
        %9904 = vmatmul.mubr.bf16.gmra.mrb[0].mxu0 %v5933
        %v9905 = vpop.f32.mrb[0].mxu0
        %v9906 = vadd.f32 %v9745, %v9905
        %v9907 = vpop.f32.mrb[0].mxu0
        %v9908 = vpop.f32.mrb[0].mxu0
        %v9909 = vadd.f32 %v9748, %v9908
        %v9910 = vpop.f32.mrb[0].mxu0
        %9911 = vmatprep.mubr.bf16.mxu0 %v6361
        %9912 = vmatmul.mubr.bf16.gmra.mrb[0].mxu0 %v5934
        %v9913 = vpop.f32.mrb[0].mxu0
        %v9914 = vadd.f32 %v9753, %v9913
        %v9915 = vpop.f32.mrb[0].mxu0
        %v9916 = vpop.f32.mrb[0].mxu0
        %v9917 = vadd.f32 %v9756, %v9916
        %v9918 = vpop.f32.mrb[0].mxu0
        %9919 = vmatprep.mubr.bf16.mxu0 %v6362
        %9920 = vmatmul.mubr.bf16.gmra.mrb[0].mxu0 %v5935
        %v9921 = vpop.f32.mrb[0].mxu0
        %v9922 = vadd.f32 %v9761, %v9921
        %v9923 = vpop.f32.mrb[0].mxu0
        %v9924 = vpop.f32.mrb[0].mxu0
        %v9925 = vadd.f32 %v9764, %v9924
        %v9926 = vpop.f32.mrb[0].mxu0
        %9927 = vmatprep.mubr.bf16.mxu0 %v6363
        %9928 = vmatmul.mubr.bf16.gmra.mrb[0].mxu0 %v5936
        %v9929 = vpop.f32.mrb[0].mxu0
        %v9930 = vadd.f32 %v9769, %v9929
        %v9931 = vpop.f32.mrb[0].mxu0
        %v9932 = vpop.f32.mrb[0].mxu0
        %v9933 = vadd.f32 %v9772, %v9932
        %v9934 = vpop.f32.mrb[0].mxu0
        %9935 = vmatprep.mubr.bf16.mxu0 %v6364
        %9936 = vmatmul.mubr.bf16.gmra.mrb[0].mxu0 %v5937
        %v9937 = vpop.f32.mrb[0].mxu0
        %v9938 = vadd.f32 %v9777, %v9937
        %v9939 = vpop.f32.mrb[0].mxu0
        %v9940 = vpop.f32.mrb[0].mxu0
        %v9941 = vadd.f32 %v9780, %v9940
        %v9942 = vpop.f32.mrb[0].mxu0
        %9943 = vmatprep.mubr.bf16.mxu0 %v6365
        %9944 = vmatmul.mubr.bf16.gmra.mrb[0].mxu0 %v5938
        %v9945 = vpop.f32.mrb[0].mxu0
        %v9946 = vadd.f32 %v9785, %v9945
        %v9947 = vpop.f32.mrb[0].mxu0
        %v9948 = vpop.f32.mrb[0].mxu0
        %v9949 = vadd.f32 %v9788, %v9948
        %v9950 = vpop.f32.mrb[0].mxu0
        %9951 = vmatprep.mubr.bf16.mxu0 %v6366
        %9952 = vmatmul.mubr.bf16.gmra.mrb[0].mxu0 %v6311
        %v9953 = vpop.f32.mrb[0].mxu0
        %v9954 = vadd.f32 %v9793, %v9953
        %v9955 = vpop.f32.mrb[0].mxu0
        %v9956 = vpop.f32.mrb[0].mxu0
        %v9957 = vadd.f32 %v9796, %v9956
        %v9958 = vpop.f32.mrb[0].mxu0
        %9959 = vdwg.mxu0
        %9960 = vmatprep.subr.bf16.mxu0 0
        %9961 = vmatpush1.bf16.msra.mxu0 %v9381
        %9962 = vmatprep.subr.bf16.mxu0 0
        %9963 = vmatpush1.bf16.msra.mxu0 %v9382
        %9964 = vmatprep.subr.bf16.mxu0 0
        %9965 = vmatpush1.bf16.msra.mxu0 %v9383
        %9966 = vmatprep.subr.bf16.mxu0 0
        %9967 = vmatpush1.bf16.msra.mxu0 %v9384
        %9968 = vmatprep.subr.bf16.mxu0 0
        %9969 = vmatpush1.bf16.msra.mxu0 %v9385
        %9970 = vmatprep.subr.bf16.mxu0 0
        %9971 = vmatpush1.bf16.msra.mxu0 %v9386
        %9972 = vmatprep.subr.bf16.mxu0 0
        %9973 = vmatpush1.bf16.msra.mxu0 %v9387
        %9974 = vmatprep.subr.bf16.mxu0 0
        %9975 = vmatpush1.bf16.msra.mxu0 %v9388
        %9976 = vmatprep.subr.bf16.mxu0 0
        %9977 = vmatpush1.bf16.msra.mxu0 %v9389
        %9978 = vmatprep.subr.bf16.mxu0 0
        %9979 = vmatpush1.bf16.msra.mxu0 %v9390
        %9980 = vmatprep.subr.bf16.mxu0 0
        %9981 = vmatpush1.bf16.msra.mxu0 %v9391
        %9982 = vmatprep.subr.bf16.mxu0 0
        %9983 = vmatpush1.bf16.msra.mxu0 %v9392
        %9984 = vmatprep.subr.bf16.mxu0 0
        %9985 = vmatpush1.bf16.msra.mxu0 %v9393
        %9986 = vmatprep.subr.bf16.mxu0 0
        %9987 = vmatpush1.bf16.msra.mxu0 %v9394
        %9988 = vmatprep.subr.bf16.mxu0 0
        %9989 = vmatpush1.bf16.msra.mxu0 %v9395
        %9990 = vmatprep.subr.bf16.mxu0 0
        %9991 = vmatpush1.bf16.msra.mxu0 %v9396
        %9992 = vmatprep.mubr.bf16.mxu0 %v5925
        %9993 = vmatmul.mubr.bf16.gmra.mrb[0].mxu0 %v6481
        %v9994 = vpop.f32.mrb[0].mxu0
        %v9995 = vadd.f32 %v9834, %v9994
        %v9996 = vpop.f32.mrb[0].mxu0
        %v9997 = vpop.f32.mrb[0].mxu0
        %v9998 = vadd.f32 %v9837, %v9997
        %v9999 = vpop.f32.mrb[0].mxu0
        %10000 = vmatprep.mubr.bf16.mxu0 %v5926
        %10001 = vmatmul.mubr.bf16.gmra.mrb[0].mxu0 %v6482
        %v10002 = vpop.f32.mrb[0].mxu0
        %v10003 = vadd.f32 %v9842, %v10002
        %v10004 = vpop.f32.mrb[0].mxu0
        %v10005 = vpop.f32.mrb[0].mxu0
        %v10006 = vadd.f32 %v9845, %v10005
        %v10007 = vpop.f32.mrb[0].mxu0
        %10008 = vmatprep.mubr.bf16.mxu0 %v5927
        %10009 = vmatmul.mubr.bf16.gmra.mrb[0].mxu0 %v6483
        %v10010 = vpop.f32.mrb[0].mxu0
        %v10011 = vadd.f32 %v9850, %v10010
        %v10012 = vpop.f32.mrb[0].mxu0
        %v10013 = vpop.f32.mrb[0].mxu0
        %v10014 = vadd.f32 %v9853, %v10013
        %v10015 = vpop.f32.mrb[0].mxu0
        %10016 = vmatprep.mubr.bf16.mxu0 %v5928
        %10017 = vmatmul.mubr.bf16.gmra.mrb[0].mxu0 %v6484
        %v10018 = vpop.f32.mrb[0].mxu0
        %v10019 = vadd.f32 %v9858, %v10018
        %v10020 = vpop.f32.mrb[0].mxu0
        %v10021 = vpop.f32.mrb[0].mxu0
        %v10022 = vadd.f32 %v9861, %v10021
        %v10023 = vpop.f32.mrb[0].mxu0
        %10024 = vmatprep.mubr.bf16.mxu0 %v5929
        %10025 = vmatmul.mubr.bf16.gmra.mrb[0].mxu0 %v6485
        %v10026 = vpop.f32.mrb[0].mxu0
        %v10027 = vadd.f32 %v9866, %v10026
        %v10028 = vpop.f32.mrb[0].mxu0
        %v10029 = vpop.f32.mrb[0].mxu0
        %v10030 = vadd.f32 %v9869, %v10029
        %v10031 = vpop.f32.mrb[0].mxu0
        %10032 = vmatprep.mubr.bf16.mxu0 %v5930
        %10033 = vmatmul.mubr.bf16.gmra.mrb[0].mxu0 %v6486
        %v10034 = vpop.f32.mrb[0].mxu0
        %v10035 = vadd.f32 %v9874, %v10034
        %v10036 = vpop.f32.mrb[0].mxu0
        %v10037 = vpop.f32.mrb[0].mxu0
        %v10038 = vadd.f32 %v9877, %v10037
        %v10039 = vpop.f32.mrb[0].mxu0
        %10040 = vmatprep.mubr.bf16.mxu0 %v5931
        %10041 = vmatmul.mubr.bf16.gmra.mrb[0].mxu0 %v6487
        %v10042 = vpop.f32.mrb[0].mxu0
        %v10043 = vadd.f32 %v9882, %v10042
        %v10044 = vpop.f32.mrb[0].mxu0
        %v10045 = vpop.f32.mrb[0].mxu0
        %v10046 = vadd.f32 %v9885, %v10045
        %v10047 = vpop.f32.mrb[0].mxu0
        %10048 = vmatprep.mubr.bf16.mxu0 %v5932
        %10049 = vmatmul.mubr.bf16.gmra.mrb[0].mxu0 %v6488
        %v10050 = vpop.f32.mrb[0].mxu0
        %v10051 = vadd.f32 %v9890, %v10050
        %v10052 = vpop.f32.mrb[0].mxu0
        %v10053 = vpop.f32.mrb[0].mxu0
        %v10054 = vadd.f32 %v9893, %v10053
        %v10055 = vpop.f32.mrb[0].mxu0
        %10056 = vmatprep.mubr.bf16.mxu0 %v5933
        %10057 = vmatmul.mubr.bf16.gmra.mrb[0].mxu0 %v6489
        %v10058 = vpop.f32.mrb[0].mxu0
        %v10059 = vadd.f32 %v9898, %v10058
        %v10060 = vpop.f32.mrb[0].mxu0
        %v10061 = vpop.f32.mrb[0].mxu0
        %v10062 = vadd.f32 %v9901, %v10061
        %v10063 = vpop.f32.mrb[0].mxu0
        %10064 = vmatprep.mubr.bf16.mxu0 %v5934
        %10065 = vmatmul.mubr.bf16.gmra.mrb[0].mxu0 %v6490
        %v10066 = vpop.f32.mrb[0].mxu0
        %v10067 = vadd.f32 %v9906, %v10066
        %v10068 = vpop.f32.mrb[0].mxu0
        %v10069 = vpop.f32.mrb[0].mxu0
        %v10070 = vadd.f32 %v9909, %v10069
        %v10071 = vpop.f32.mrb[0].mxu0
        %10072 = vmatprep.mubr.bf16.mxu0 %v5935
        %10073 = vmatmul.mubr.bf16.gmra.mrb[0].mxu0 %v6491
        %v10074 = vpop.f32.mrb[0].mxu0
        %v10075 = vadd.f32 %v9914, %v10074
        %v10076 = vpop.f32.mrb[0].mxu0
        %v10077 = vpop.f32.mrb[0].mxu0
        %v10078 = vadd.f32 %v9917, %v10077
        %v10079 = vpop.f32.mrb[0].mxu0
        %10080 = vmatprep.mubr.bf16.mxu0 %v5936
        %10081 = vmatmul.mubr.bf16.gmra.mrb[0].mxu0 %v6492
        %v10082 = vpop.f32.mrb[0].mxu0
        %v10083 = vadd.f32 %v9922, %v10082
        %v10084 = vpop.f32.mrb[0].mxu0
        %v10085 = vpop.f32.mrb[0].mxu0
        %v10086 = vadd.f32 %v9925, %v10085
        %v10087 = vpop.f32.mrb[0].mxu0
        %10088 = vmatprep.mubr.bf16.mxu0 %v5937
        %10089 = vmatmul.mubr.bf16.gmra.mrb[0].mxu0 %v6493
        %v10090 = vpop.f32.mrb[0].mxu0
        %v10091 = vadd.f32 %v9930, %v10090
        %v10092 = vpop.f32.mrb[0].mxu0
        %v10093 = vpop.f32.mrb[0].mxu0
        %v10094 = vadd.f32 %v9933, %v10093
        %v10095 = vpop.f32.mrb[0].mxu0
        %10096 = vmatprep.mubr.bf16.mxu0 %v5938
        %10097 = vmatmul.mubr.bf16.gmra.mrb[0].mxu0 %v6494
        %v10098 = vpop.f32.mrb[0].mxu0
        %v10099 = vadd.f32 %v9938, %v10098
        %v10100 = vpop.f32.mrb[0].mxu0
        %v10101 = vpop.f32.mrb[0].mxu0
        %v10102 = vadd.f32 %v9941, %v10101
        %v10103 = vpop.f32.mrb[0].mxu0
        %10104 = vmatprep.mubr.bf16.mxu0 %v6311
        %10105 = vmatmul.mubr.bf16.gmra.mrb[0].mxu0 %v6495
        %v10106 = vpop.f32.mrb[0].mxu0
        %v10107 = vadd.f32 %v9946, %v10106
        %v10108 = vpop.f32.mrb[0].mxu0
        %v10109 = vpop.f32.mrb[0].mxu0
        %v10110 = vadd.f32 %v9949, %v10109
        %v10111 = vpop.f32.mrb[0].mxu0
        %10112 = vmatprep.mubr.bf16.mxu0 %v6579
        %10113 = vmatmul.mubr.bf16.gmra.mrb[0].mxu0 %v6496
        %v10114 = vpop.f32.mrb[0].mxu0
        %v10115 = vadd.f32 %v9954, %v10114
        %v10116 = vpop.f32.mrb[0].mxu0
        %v10117 = vpop.f32.mrb[0].mxu0
        %v10118 = vadd.f32 %v9957, %v10117
        %v10119 = vpop.f32.mrb[0].mxu0
        %10120 = vdwg.mxu0
        %10121 = vmatprep.subr.bf16.mxu0 0
        %10122 = vmatpush1.bf16.msra.mxu0 %v9397
        %10123 = vmatprep.subr.bf16.mxu0 0
        %10124 = vmatpush1.bf16.msra.mxu0 %v9398
        %10125 = vmatprep.subr.bf16.mxu0 0
        %10126 = vmatpush1.bf16.msra.mxu0 %v9399
        %10127 = vmatprep.subr.bf16.mxu0 0
        %10128 = vmatpush1.bf16.msra.mxu0 %v9400
        %10129 = vmatprep.subr.bf16.mxu0 0
        %10130 = vmatpush1.bf16.msra.mxu0 %v9401
        %10131 = vmatprep.subr.bf16.mxu0 0
        %10132 = vmatpush1.bf16.msra.mxu0 %v9402
        %10133 = vmatprep.subr.bf16.mxu0 0
        %10134 = vmatpush1.bf16.msra.mxu0 %v9403
        %10135 = vmatprep.subr.bf16.mxu0 0
        %10136 = vmatpush1.bf16.msra.mxu0 %v9404
        %10137 = vmatprep.subr.bf16.mxu0 0
        %10138 = vmatpush1.bf16.msra.mxu0 0
        %10139 = vmatprep.subr.bf16.mxu0 0
        %10140 = vmatpush1.bf16.msra.mxu0 0
        %10141 = vmatprep.subr.bf16.mxu0 0
        %10142 = vmatpush1.bf16.msra.mxu0 0
        %10143 = vmatprep.subr.bf16.mxu0 0
        %10144 = vmatpush1.bf16.msra.mxu0 0
        %10145 = vmatprep.subr.bf16.mxu0 0
        %10146 = vmatpush1.bf16.msra.mxu0 0
        %10147 = vmatprep.subr.bf16.mxu0 0
        %10148 = vmatpush1.bf16.msra.mxu0 0
        %10149 = vmatprep.subr.bf16.mxu0 0
        %10150 = vmatpush1.bf16.msra.mxu0 0
        %10151 = vmatprep.subr.bf16.mxu0 0
        %10152 = vmatpush1.bf16.msra.mxu0 0
        %10153 = vmatprep.mubr.bf16.mxu0 0
        %10154 = vmatmul.mubr.bf16.gmra.mrb[0].mxu0 %v6619
        %v10155 = vpop.f32.mrb[0].mxu0
        %v10156 = vadd.f32 %v9995, %v10155
        %v10157 = vpop.f32.mrb[0].mxu0
        %v10158 = vpop.f32.mrb[0].mxu0
        %v10159 = vadd.f32 %v9998, %v10158
        %v10160 = vpop.f32.mrb[0].mxu0
        %10161 = vmatprep.mubr.bf16.mxu0 0
        %10162 = vmatmul.mubr.bf16.gmra.mrb[0].mxu0 %v6620
        %v10163 = vpop.f32.mrb[0].mxu0
        %v10164 = vadd.f32 %v10003, %v10163
        %v10165 = vpop.f32.mrb[0].mxu0
        %v10166 = vpop.f32.mrb[0].mxu0
        %v10167 = vadd.f32 %v10006, %v10166
        %v10168 = vpop.f32.mrb[0].mxu0
        %10169 = vmatprep.mubr.bf16.mxu0 0
        %10170 = vmatmul.mubr.bf16.gmra.mrb[0].mxu0 %v6621
        %v10171 = vpop.f32.mrb[0].mxu0
        %v10172 = vadd.f32 %v10011, %v10171
        %v10173 = vpop.f32.mrb[0].mxu0
        %v10174 = vpop.f32.mrb[0].mxu0
        %v10175 = vadd.f32 %v10014, %v10174
        %v10176 = vpop.f32.mrb[0].mxu0
        %10177 = vmatprep.mubr.bf16.mxu0 0
        %10178 = vmatmul.mubr.bf16.gmra.mrb[0].mxu0 %v6622
        %v10179 = vpop.f32.mrb[0].mxu0
        %v10180 = vadd.f32 %v10019, %v10179
        %v10181 = vpop.f32.mrb[0].mxu0
        %v10182 = vpop.f32.mrb[0].mxu0
        %v10183 = vadd.f32 %v10022, %v10182
        %v10184 = vpop.f32.mrb[0].mxu0
        %10185 = vmatprep.mubr.bf16.mxu0 0
        %10186 = vmatmul.mubr.bf16.gmra.mrb[0].mxu0 %v6623
        %v10187 = vpop.f32.mrb[0].mxu0
        %v10188 = vadd.f32 %v10027, %v10187
        %v10189 = vpop.f32.mrb[0].mxu0
        %v10190 = vpop.f32.mrb[0].mxu0
        %v10191 = vadd.f32 %v10030, %v10190
        %v10192 = vpop.f32.mrb[0].mxu0
        %10193 = vmatprep.mubr.bf16.mxu0 0
        %10194 = vmatmul.mubr.bf16.gmra.mrb[0].mxu0 %v6624
        %v10195 = vpop.f32.mrb[0].mxu0
        %v10196 = vadd.f32 %v10035, %v10195
        %v10197 = vpop.f32.mrb[0].mxu0
        %v10198 = vpop.f32.mrb[0].mxu0
        %v10199 = vadd.f32 %v10038, %v10198
        %v10200 = vpop.f32.mrb[0].mxu0
        %10201 = vmatprep.mubr.bf16.mxu0 0
        %10202 = vmatmul.mubr.bf16.gmra.mrb[0].mxu0 %v6625
        %v10203 = vpop.f32.mrb[0].mxu0
        %v10204 = vadd.f32 %v10043, %v10203
        %v10205 = vpop.f32.mrb[0].mxu0
        %v10206 = vpop.f32.mrb[0].mxu0
        %v10207 = vadd.f32 %v10046, %v10206
        %v10208 = vpop.f32.mrb[0].mxu0
        %10209 = vmatprep.mubr.bf16.mxu0 0
        %10210 = vmatmul.mubr.bf16.gmra.mrb[0].mxu0 %v6626
        %v10211 = vpop.f32.mrb[0].mxu0
        %v10212 = vadd.f32 %v10051, %v10211
        %v10213 = vpop.f32.mrb[0].mxu0
        %v10214 = vpop.f32.mrb[0].mxu0
        %v10215 = vadd.f32 %v10054, %v10214
        %v10216 = vpop.f32.mrb[0].mxu0
        %10217 = vmatprep.mubr.bf16.mxu0 0
        %10218 = vmatmul.mubr.bf16.gmra.mrb[0].mxu0 %v6627
        %v10219 = vpop.f32.mrb[0].mxu0
        %v10220 = vadd.f32 %v10059, %v10219
        %v10221 = vpop.f32.mrb[0].mxu0
        %v10222 = vpop.f32.mrb[0].mxu0
        %v10223 = vadd.f32 %v10062, %v10222
        %v10224 = vpop.f32.mrb[0].mxu0
        %10225 = vmatprep.mubr.bf16.mxu0 0
        %10226 = vmatmul.mubr.bf16.gmra.mrb[0].mxu0 %v6628
        %v10227 = vpop.f32.mrb[0].mxu0
        %v10228 = vadd.f32 %v10067, %v10227
        %v10229 = vpop.f32.mrb[0].mxu0
        %v10230 = vpop.f32.mrb[0].mxu0
        %v10231 = vadd.f32 %v10070, %v10230
        %v10232 = vpop.f32.mrb[0].mxu0
        %10233 = vmatprep.mubr.bf16.mxu0 0
        %10234 = vmatmul.mubr.bf16.gmra.mrb[0].mxu0 %v6629
        %v10235 = vpop.f32.mrb[0].mxu0
        %v10236 = vadd.f32 %v10075, %v10235
        %v10237 = vpop.f32.mrb[0].mxu0
        %v10238 = vpop.f32.mrb[0].mxu0
        %v10239 = vadd.f32 %v10078, %v10238
        %v10240 = vpop.f32.mrb[0].mxu0
        %10241 = vmatprep.mubr.bf16.mxu0 0
        %10242 = vmatmul.mubr.bf16.gmra.mrb[0].mxu0 %v6630
        %v10243 = vpop.f32.mrb[0].mxu0
        %v10244 = vadd.f32 %v10083, %v10243
        %v10245 = vpop.f32.mrb[0].mxu0
        %v10246 = vpop.f32.mrb[0].mxu0
        %v10247 = vadd.f32 %v10086, %v10246
        %v10248 = vpop.f32.mrb[0].mxu0
        %10249 = vmatprep.mubr.bf16.mxu0 0
        %10250 = vmatmul.mubr.bf16.gmra.mrb[0].mxu0 %v6631
        %v10251 = vpop.f32.mrb[0].mxu0
        %v10252 = vadd.f32 %v10091, %v10251
        %v10253 = vpop.f32.mrb[0].mxu0
        %v10254 = vpop.f32.mrb[0].mxu0
        %v10255 = vadd.f32 %v10094, %v10254
        %v10256 = vpop.f32.mrb[0].mxu0
        %10257 = vmatprep.mubr.bf16.mxu0 0
        %10258 = vmatmul.mubr.bf16.gmra.mrb[0].mxu0 %v6632
        %v10259 = vpop.f32.mrb[0].mxu0
        %v10260 = vadd.f32 %v10099, %v10259
        %v10261 = vpop.f32.mrb[0].mxu0
        %v10262 = vpop.f32.mrb[0].mxu0
        %v10263 = vadd.f32 %v10102, %v10262
        %v10264 = vpop.f32.mrb[0].mxu0
        %10265 = vmatprep.mubr.bf16.mxu0 0
        %10266 = vmatmul.mubr.bf16.gmra.mrb[0].mxu0 %v6633
        %v10267 = vpop.f32.mrb[0].mxu0
        %v10268 = vadd.f32 %v10107, %v10267
        %v10269 = vpop.f32.mrb[0].mxu0
        %v10270 = vpop.f32.mrb[0].mxu0
        %v10271 = vadd.f32 %v10110, %v10270
        %v10272 = vpop.f32.mrb[0].mxu0
        %10273 = vmatprep.mubr.bf16.mxu0 0
        %10274 = vmatmul.mubr.bf16.gmra.mrb[0].mxu0 %v6634
        %v10275 = vpop.f32.mrb[0].mxu0
        %v10276 = vadd.f32 %v10115, %v10275
        %v10277 = vpop.f32.mrb[0].mxu0
        %v10278 = vpop.f32.mrb[0].mxu0
        %v10279 = vadd.f32 %v10118, %v10278
        %v10280 = vpop.f32.mrb[0].mxu0
        %10281 = vdwg.mxu0
        %v10282 = vadd.f32 %v8919, %v10156
        %v10283 = vadd.f32 %v8922, %v10159
        %v10284 = vadd.f32 %v8927, %v10164
        %v10285 = vadd.f32 %v8930, %v10167
        %v10286 = vadd.f32 %v8935, %v10172
        %v10287 = vadd.f32 %v8938, %v10175
        %v10288 = vadd.f32 %v8943, %v10180
        %v10289 = vadd.f32 %v8946, %v10183
        %v10290 = vadd.f32 %v8951, %v10188
        %v10291 = vadd.f32 %v8954, %v10191
        %v10292 = vadd.f32 %v8959, %v10196
        %v10293 = vadd.f32 %v8962, %v10199
        %v10294 = vadd.f32 %v8967, %v10204
        %v10295 = vadd.f32 %v8970, %v10207
        %v10296 = vadd.f32 %v8975, %v10212
        %v10297 = vadd.f32 %v8978, %v10215
        %v10298 = vadd.f32 %v8983, %v10220
        %v10299 = vadd.f32 %v8986, %v10223
        %v10300 = vadd.f32 %v8991, %v10228
        %v10301 = vadd.f32 %v8994, %v10231
        %v10302 = vadd.f32 %v8999, %v10236
        %v10303 = vadd.f32 %v9002, %v10239
        %v10304 = vadd.f32 %v9007, %v10244
        %v10305 = vadd.f32 %v9010, %v10247
        %v10306 = vadd.f32 %v9015, %v10252
        %v10307 = vadd.f32 %v9018, %v10255
        %v10308 = vadd.f32 %v9023, %v10260
        %v10309 = vadd.f32 %v9026, %v10263
        %v10310 = vadd.f32 %v9031, %v10268
        %v10311 = vadd.f32 %v9034, %v10271
        %v10312 = vadd.f32 %v9039, %v10276
        %v10313 = vadd.f32 %v9042, %v10279
        %v10314 = vld [vmem:[%s6] sm:$0x1]
        %v10316 = vlaneseq
        %v10317 = vshrl.u32 %v10316, 7
        %v10318 = vsub.s32 0, %v10317
        %v10319 = vrot.slane %v10314, %v10318
        %v10321 = vadd.f32 %v10282, %v10319
        %v10322 = vadd.f32 %v10283, %v10319
        %v10323 = vadd.f32 %v10284, %v10319
        %v10324 = vadd.f32 %v10285, %v10319
        %v10325 = vadd.f32 %v10286, %v10319
        %v10326 = vadd.f32 %v10287, %v10319
        %v10327 = vadd.f32 %v10288, %v10319
        %v10328 = vadd.f32 %v10289, %v10319
        %v10329 = vadd.f32 %v10290, %v10319
        %v10330 = vadd.f32 %v10291, %v10319
        %v10331 = vadd.f32 %v10292, %v10319
        %v10332 = vadd.f32 %v10293, %v10319
        %v10333 = vadd.f32 %v10294, %v10319
        %v10334 = vadd.f32 %v10295, %v10319
        %v10335 = vadd.f32 %v10296, %v10319
        %v10336 = vadd.f32 %v10297, %v10319
        %v10337 = vadd.f32 %v10298, %v10319
        %v10338 = vadd.f32 %v10299, %v10319
        %v10339 = vadd.f32 %v10300, %v10319
        %v10340 = vadd.f32 %v10301, %v10319
        %v10341 = vadd.f32 %v10302, %v10319
        %v10342 = vadd.f32 %v10303, %v10319
        %v10343 = vadd.f32 %v10304, %v10319
        %v10344 = vadd.f32 %v10305, %v10319
        %v10345 = vadd.f32 %v10306, %v10319
        %v10346 = vadd.f32 %v10307, %v10319
        %v10347 = vadd.f32 %v10308, %v10319
        %v10348 = vadd.f32 %v10309, %v10319
        %v10349 = vadd.f32 %v10310, %v10319
        %v10350 = vadd.f32 %v10311, %v10319
        %v10351 = vadd.f32 %v10312, %v10319
        %v10352 = vadd.f32 %v10313, %v10319
        %v10353 = vmax.f32 %v10321, 0.0
        %v10354 = vmax.f32 %v10322, 0.0
        %v10355 = vmax.f32 %v10323, 0.0
        %v10356 = vmax.f32 %v10324, 0.0
        %v10357 = vmax.f32 %v10325, 0.0
        %v10358 = vmax.f32 %v10326, 0.0
        %v10359 = vmax.f32 %v10327, 0.0
        %v10360 = vmax.f32 %v10328, 0.0
        %v10361 = vmax.f32 %v10329, 0.0
        %v10362 = vmax.f32 %v10330, 0.0
        %v10363 = vmax.f32 %v10331, 0.0
        %v10364 = vmax.f32 %v10332, 0.0
        %v10365 = vmax.f32 %v10333, 0.0
        %v10366 = vmax.f32 %v10334, 0.0
        %v10367 = vmax.f32 %v10335, 0.0
        %v10368 = vmax.f32 %v10336, 0.0
        %v10369 = vmax.f32 %v10337, 0.0
        %v10370 = vmax.f32 %v10338, 0.0
        %v10371 = vmax.f32 %v10339, 0.0
        %v10372 = vmax.f32 %v10340, 0.0
        %v10373 = vmax.f32 %v10341, 0.0
        %v10374 = vmax.f32 %v10342, 0.0
        %v10375 = vmax.f32 %v10343, 0.0
        %v10376 = vmax.f32 %v10344, 0.0
        %v10377 = vmax.f32 %v10345, 0.0
        %v10378 = vmax.f32 %v10346, 0.0
        %v10379 = vmax.f32 %v10347, 0.0
        %v10380 = vmax.f32 %v10348, 0.0
        %v10381 = vmax.f32 %v10349, 0.0
        %v10382 = vmax.f32 %v10350, 0.0
        %v10383 = vmax.f32 %v10351, 0.0
        %v10384 = vmax.f32 %v10352, 0.0
        %v10385 = vld [vmem:[%s308] sm:$0xff]
        %v10386 = vld [vmem:[%s308 + $0x8] sm:$0xff]
        %v10387 = vld [vmem:[%s308 + $0x10] sm:$0xff]
        %v10388 = vld [vmem:[%s308 + $0x18] sm:$0xff]
        %v10389 = vld [vmem:[%s308 + $0x20] sm:$0xff]
        %v10390 = vld [vmem:[%s308 + $0x28] sm:$0xff]
        %v10391 = vld [vmem:[%s308 + $0x30] sm:$0xff]
        %v10392 = vld [vmem:[%s308 + $0x38] sm:$0xff]
        %v10393 = vld [vmem:[%s308 + $0x40] sm:$0xff]
        %v10394 = vld [vmem:[%s308 + $0x48] sm:$0xff]
        %v10395 = vld [vmem:[%s308 + $0x50] sm:$0xff]
        %v10396 = vld [vmem:[%s308 + $0x58] sm:$0xff]
        %v10397 = vld [vmem:[%s308 + $0x60] sm:$0xff]
        %v10398 = vld [vmem:[%s308 + $0x68] sm:$0xff]
        %v10399 = vld [vmem:[%s308 + $0x70] sm:$0xff]
        %v10400 = vld [vmem:[%s308 + $0x78] sm:$0xff]
        %v10401 = vld [vmem:[%s308 + $0x80] sm:$0xff]
        %v10402 = vld [vmem:[%s308 + $0x88] sm:$0xff]
        %v10403 = vld [vmem:[%s308 + $0x90] sm:$0xff]
        %v10404 = vld [vmem:[%s308 + $0x98] sm:$0xff]
        %v10405 = vld [vmem:[%s308 + $0xa0] sm:$0xff]
        %v10406 = vld [vmem:[%s308 + $0xa8] sm:$0xff]
        %v10407 = vld [vmem:[%s308 + $0xb0] sm:$0xff]
        %v10408 = vld [vmem:[%s308 + $0xb8] sm:$0xff]
        %v10409 = vld [vmem:[%s308 + $0xc0] sm:$0xff]
        %v10410 = vld [vmem:[%s308 + $0xc8] sm:$0xff]
        %v10411 = vld [vmem:[%s308 + $0xd0] sm:$0xff]
        %v10412 = vld [vmem:[%s308 + $0xd8] sm:$0xff]
        %v10413 = vld [vmem:[%s308 + $0xe0] sm:$0xff]
        %v10414 = vld [vmem:[%s308 + $0xe8] sm:$0xff]
        %v10415 = vld [vmem:[%s308 + $0xf0] sm:$0xff]
        %v10416 = vld [vmem:[%s308 + $0xf8] sm:$0xff]
        %v10417 = vadd.f32 %v10353, %v10385
        %v10418 = vadd.f32 %v10354, %v10386
        %v10419 = vadd.f32 %v10355, %v10387
        %v10420 = vadd.f32 %v10356, %v10388
        %v10421 = vadd.f32 %v10357, %v10389
        %v10422 = vadd.f32 %v10358, %v10390
        %v10423 = vadd.f32 %v10359, %v10391
        %v10424 = vadd.f32 %v10360, %v10392
        %v10425 = vadd.f32 %v10361, %v10393
        %v10426 = vadd.f32 %v10362, %v10394
        %v10427 = vadd.f32 %v10363, %v10395
        %v10428 = vadd.f32 %v10364, %v10396
        %v10429 = vadd.f32 %v10365, %v10397
        %v10430 = vadd.f32 %v10366, %v10398
        %v10431 = vadd.f32 %v10367, %v10399
        %v10432 = vadd.f32 %v10368, %v10400
        %v10433 = vadd.f32 %v10369, %v10401
        %v10434 = vadd.f32 %v10370, %v10402
        %v10435 = vadd.f32 %v10371, %v10403
        %v10436 = vadd.f32 %v10372, %v10404
        %v10437 = vadd.f32 %v10373, %v10405
        %v10438 = vadd.f32 %v10374, %v10406
        %v10439 = vadd.f32 %v10375, %v10407
        %v10440 = vadd.f32 %v10376, %v10408
        %v10441 = vadd.f32 %v10377, %v10409
        %v10442 = vadd.f32 %v10378, %v10410
        %v10443 = vadd.f32 %v10379, %v10411
        %v10444 = vadd.f32 %v10380, %v10412
        %v10445 = vadd.f32 %v10381, %v10413
        %v10446 = vadd.f32 %v10382, %v10414
        %v10447 = vadd.f32 %v10383, %v10415
        %v10448 = vadd.f32 %v10384, %v10416
        %v10449 = vmax.f32 %v10417, 0.0
        %v10450 = vmax.f32 %v10418, 0.0
        %v10451 = vmax.f32 %v10419, 0.0
        %v10452 = vmax.f32 %v10420, 0.0
        %v10453 = vmax.f32 %v10421, 0.0
        %v10454 = vmax.f32 %v10422, 0.0
        %v10455 = vmax.f32 %v10423, 0.0
        %v10456 = vmax.f32 %v10424, 0.0
        %v10457 = vmax.f32 %v10425, 0.0
        %v10458 = vmax.f32 %v10426, 0.0
        %v10459 = vmax.f32 %v10427, 0.0
        %v10460 = vmax.f32 %v10428, 0.0
        %v10461 = vmax.f32 %v10429, 0.0
        %v10462 = vmax.f32 %v10430, 0.0
        %v10463 = vmax.f32 %v10431, 0.0
        %v10464 = vmax.f32 %v10432, 0.0
        %v10465 = vmax.f32 %v10433, 0.0
        %v10466 = vmax.f32 %v10434, 0.0
        %v10467 = vmax.f32 %v10435, 0.0
        %v10468 = vmax.f32 %v10436, 0.0
        %v10469 = vmax.f32 %v10437, 0.0
        %v10470 = vmax.f32 %v10438, 0.0
        %v10471 = vmax.f32 %v10439, 0.0
        %v10472 = vmax.f32 %v10440, 0.0
        %v10473 = vmax.f32 %v10441, 0.0
        %v10474 = vmax.f32 %v10442, 0.0
        %v10475 = vmax.f32 %v10443, 0.0
        %v10476 = vmax.f32 %v10444, 0.0
        %v10477 = vmax.f32 %v10445, 0.0
        %v10478 = vmax.f32 %v10446, 0.0
        %v10479 = vmax.f32 %v10447, 0.0
        %v10480 = vmax.f32 %v10448, 0.0
        %10481 = vst [vmem:[%s354] sm:$0xff] %v10449
        %10482 = vst [vmem:[%s354 + $0x8] sm:$0xff] %v10450
        %10483 = vst [vmem:[%s354 + $0x10] sm:$0xff] %v10451
        %10484 = vst [vmem:[%s354 + $0x18] sm:$0xff] %v10452
        %10485 = vst [vmem:[%s354 + $0x20] sm:$0xff] %v10453
        %10486 = vst [vmem:[%s354 + $0x28] sm:$0xff] %v10454
        %10487 = vst [vmem:[%s354 + $0x30] sm:$0xff] %v10455
        %10488 = vst [vmem:[%s354 + $0x38] sm:$0xff] %v10456
        %10489 = vst [vmem:[%s354 + $0x40] sm:$0xff] %v10457
        %10490 = vst [vmem:[%s354 + $0x48] sm:$0xff] %v10458
        %10491 = vst [vmem:[%s354 + $0x50] sm:$0xff] %v10459
        %10492 = vst [vmem:[%s354 + $0x58] sm:$0xff] %v10460
        %10493 = vst [vmem:[%s354 + $0x60] sm:$0xff] %v10461
        %10494 = vst [vmem:[%s354 + $0x68] sm:$0xff] %v10462
        %10495 = vst [vmem:[%s354 + $0x70] sm:$0xff] %v10463
        %10496 = vst [vmem:[%s354 + $0x78] sm:$0xff] %v10464
        %10497 = vst [vmem:[%s354 + $0x80] sm:$0xff] %v10465
        %10498 = vst [vmem:[%s354 + $0x88] sm:$0xff] %v10466
        %10499 = vst [vmem:[%s354 + $0x90] sm:$0xff] %v10467
        %10500 = vst [vmem:[%s354 + $0x98] sm:$0xff] %v10468
        %10501 = vst [vmem:[%s354 + $0xa0] sm:$0xff] %v10469
        %10502 = vst [vmem:[%s354 + $0xa8] sm:$0xff] %v10470
        %10503 = vst [vmem:[%s354 + $0xb0] sm:$0xff] %v10471
        %10504 = vst [vmem:[%s354 + $0xb8] sm:$0xff] %v10472
        %10505 = vst [vmem:[%s354 + $0xc0] sm:$0xff] %v10473
        %10506 = vst [vmem:[%s354 + $0xc8] sm:$0xff] %v10474
        %10507 = vst [vmem:[%s354 + $0xd0] sm:$0xff] %v10475
        %10508 = vst [vmem:[%s354 + $0xd8] sm:$0xff] %v10476
        %10509 = vst [vmem:[%s354 + $0xe0] sm:$0xff] %v10477
        %10510 = vst [vmem:[%s354 + $0xe8] sm:$0xff] %v10478
        %10511 = vst [vmem:[%s354 + $0xf0] sm:$0xff] %v10479
        %10512 = vst [vmem:[%s354 + $0xf8] sm:$0xff] %v10480
        %s10513 = sand.u32 %s186, 1
        %s10514 = scalar_lea.sflag [#allocation6], %s10513
        %s10515 = sand.u32 %s186, 1
        %s10516 = smul.addr %s10515, 256
        %s10517 = scalar_lea.vmem [#allocation13], %s10516
        // Predicated region
        $region69: #{tpu_custom_call.1} parent=47 // pred_check
          %p10518 = pneg %p196
        $region70: #{tpu_custom_call.1} parent=47 // pred_check_branch
          %10520 = sbr.rel (%p10518) target = $region72
        $region71: #{tpu_custom_call.1} parent=47 // pred_region
          %s10522 = ssub.s32 4096, 4096
          %10523 = vsyncadd %s10514, %s10522
          %s10524 = smul.addr %s26, 32
          %s10525 = smul.addr %s10524, 128
          %s10526 = scalar_lea.hbm %s7, %s10525
          %s10527 = sshll.u32 %s10517, 4
          %s10528 = int_to_ptr.vmem [resolvable:$true] %s10527
          %10533 = dma.vmem_to_hbm [thread:$0]  %s10528, 4096, %s10526, %s10514, 128, 128, 8
        $region72: #{tpu_custom_call.1} parent=47 // pred_fallthru
          _
      $region48: #{tpu_custom_call.1} parent=5 // pred_fallthru
        _
      %p10534 = scmp.le.s32.totalorder 2, %s21
      // Predicated region
      $region73: #{tpu_custom_call.1} parent=5 // pred_check
        %p10535 = pneg %p10534
      $region74: #{tpu_custom_call.1} parent=5 // pred_check_branch
        %10537 = sbr.rel (%p10535) target = $region76
      $region75: #{tpu_custom_call.1} parent=5 // pred_region
        %s10538 = ssub.s32 %s21, 2
        // Predicated region
        $region77: #{tpu_custom_call.1} parent=75 // pred_check
          %p10539 = pneg %p202
        $region78: #{tpu_custom_call.1} parent=75 // pred_check_branch
          %10541 = sbr.rel (%p10539) target = $region80
        $region79: #{tpu_custom_call.1} parent=75 // pred_region
          %s10542 = sand.u32 %s187, 1
          %s10543 = scalar_lea.sflag [#allocation6], %s10542
          %s10544 = sand.u32 %s187, 1
          %s10545 = smul.addr %s10544, 256
          %s10546 = scalar_lea.vmem [#allocation13], %s10545
          %10547 = dma.done %s10543, 4096
        $region80: #{tpu_custom_call.1} parent=75 // pred_fallthru
          _
      $region76: #{tpu_custom_call.1} parent=5 // pred_fallthru
        _
    $region6: #{tpu_custom_call.1} parent=1 // loop_footer
      %s25 = sadd.s32 1, %s21
    $region7: #{tpu_custom_call.1} parent=1 // loop_footer_branch
      %20 = sbr.rel target = $region3
    $region8: #{tpu_custom_call.1} parent=1 // loop_exit
      _
    %10548 = vsyncpa [#allocation5], 1
    %s10549 = scalar_lea.sflag [#allocation5], 1
    %10550 = vsyncpa %s10549, 1
    %10551 = vsyncpa [#allocation8], 1
    %10552 = vsyncpa [#allocation11], 1
    %10553 = vsyncpa [#allocation6], 1
    %s10554 = scalar_lea.sflag [#allocation6], 1
    %10555 = vsyncpa %s10554, 1

</llo_original>
